<compile_context>
chip_gen: v6e
topology: v6e:2x2x1
jax: 0.10.0
libtpu: 0.0.40
codegen_flags: <defaults>
</compile_context>

<pallas_src>
import functools

import numpy as np

import jax
import jax.numpy as jnp
from jax import lax
from jax.experimental import pallas as pl
from jax.experimental.pallas import tpu as pltpu


def _round_up(x, m):
    return (x + m - 1) // m * m


# ---------------------------------------------------------------------------
# Static geometry of one BasicBlock (Python ints only -> baked into the kernel)
# ---------------------------------------------------------------------------

def _block_geometry(D, H, W, stride):
    s = stride
    Do = (D + 2 - 3) // s + 1
    Ho = (H + 2 - 3) // s + 1
    Wo = (W + 2 - 3) // s + 1
    # Work grid = zero-padded h1 grid (+1 spare high row so no valid read row-wraps).
    Dg, Hg, Wg = Do + 3, Ho + 3, Wo + 3
    Qg = Dg * Hg * Wg                              # work-grid positions
    G2 = 2 * (Hg * Wg + Wg + 1)                    # conv2 max flat tap offset
    G1 = (2 // s) * (Hg * Wg + Wg + 1)             # conv1 max within-phase tap offset
    Qo = _round_up(Qg, 128)                        # output columns (lane-dense)
    Qh = _round_up(Qo + G2, 128)                   # h1 / conv1-output columns
    Lp = _round_up(Qh + G1, 128)                   # per-phase stride in input buffer
    L = (s ** 3) * Lp                              # total input-buffer columns

    pad_lo = 1 + s                                 # xpadded[i] = x[i - pad_lo]
    pad_hi = (Dg * s - D - pad_lo, Hg * s - H - pad_lo, Wg * s - W - pad_lo)
    assert min(pad_hi) >= 0

    # conv1 taps: phase (k % s), within-phase offset (k // s)  [work-grid strides].
    starts1 = []
    for kd in range(3):
        for kh in range(3):
            for kw in range(3):
                phase = ((kd % s) * s + (kh % s)) * s + (kw % s)
                off = (kd // s) * Hg * Wg + (kh // s) * Wg + (kw // s)
                starts1.append(phase * Lp + off)
    # conv2 taps: stride 1 over the h1 work grid.
    starts2 = [kd * Hg * Wg + kh * Wg + kw
               for kd in range(3) for kh in range(3) for kw in range(3)]

    # Shortcut sample x[:, ::s, ::s, ::s] lives in phase ((1+s)%s,)*3 at a constant
    # lane offset from the output position (the identity shortcut is the s=1 case).
    pd = (1 + s) % s
    oj = (1 + s) // s
    res_off = pd * (s * s + s + 1) * Lp + oj * (Hg * Wg + Wg + 1)

    # Valid-region mask over the h1 columns (zero => exact zero padding for conv2).
    ar = np.arange(Qh)
    iqd = ar // (Hg * Wg)
    iqh = (ar // Wg) % Hg
    iqw = ar % Wg
    valid = ((1 <= iqd) & (iqd <= Do) & (1 <= iqh) & (iqh <= Ho)
             & (1 <= iqw) & (iqw <= Wo))
    mask = valid.astype(np.float32).reshape(1, Qh)

    return dict(s=s, Do=Do, Ho=Ho, Wo=Wo, Dg=Dg, Hg=Hg, Wg=Wg,
                Qg=Qg, Qo=Qo, Qh=Qh, Lp=Lp, L=L,
                pad_lo=pad_lo, pad_hi=pad_hi,
                starts1=tuple(starts1), starts2=tuple(starts2),
                res_off=res_off, mask=mask)


def _build_input_buffer(x, g):
    """Pad, stride-phase-decompose, flatten and guard the NCDHW input -> (N,C,L) bf16."""
    # TODO(synk): fold this padding/phase gather into the kernel (or a BlockSpec
    #             index_map) to avoid materializing one extra copy of x in HBM.
    N, C = x.shape[:2]
    s = g["s"]
    phi = g["pad_hi"]
    xp = jnp.pad(x, ((0, 0), (0, 0), (g["pad_lo"], phi[0]),
                     (g["pad_lo"], phi[1]), (g["pad_lo"], phi[2])))
    slabs = []
    for pd in range(s):
        for p_h in range(s):
            for pw in range(s):
                slab = xp[:, :, pd::s, p_h::s, pw::s].reshape(N, C, g["Qg"])
                slabs.append(jnp.pad(slab, ((0, 0), (0, 0),
                                            (0, g["Lp"] - g["Qg"]))))
    buf = slabs[0] if len(slabs) == 1 else jnp.concatenate(slabs, axis=2)
    return buf.astype(jnp.bfloat16)


# ---------------------------------------------------------------------------
# Fused BasicBlock3d kernel
# ---------------------------------------------------------------------------

def _basic_block3d_kernel(x_ref, w1_ref, b1_ref, w2_ref, b2_ref, mask_ref, *rest,
                          cin, cout, starts1, starts2, res_off, Qh, Qo, has_sc):
    if has_sc:
        wsc_ref, bsc_ref, o_ref, patch_ref = rest
    else:
        o_ref, patch_ref = rest

    xv = x_ref[0]                                            # (Cin, L) bf16

    # -- conv1 (+ folded BN1) + ReLU over the whole guarded work grid ------------
    for t, st in enumerate(starts1):                         # (27*Cin, Qh) patch
        patch_ref[t * cin:(t + 1) * cin, :] = xv[:, st:st + Qh]
    acc1 = jnp.dot(w1_ref[...], patch_ref[:27 * cin, :],
                   preferred_element_type=jnp.float32)       # (Cout, Qh) f32
    h1 = jnp.maximum(acc1 + b1_ref[...], 0.0) * mask_ref[...]
    h1 = h1.astype(jnp.bfloat16)                             # zero outside valid

    # -- conv2 (+ folded BN2) -----------------------------------------------------
    for t, st in enumerate(starts2):                         # (27*Cout, Qo) patch
        patch_ref[t * cout:(t + 1) * cout, :Qo] = h1[:, st:st + Qo]
    acc2 = jnp.dot(w2_ref[...], patch_ref[:27 * cout, :Qo],
                   preferred_element_type=jnp.float32) + b2_ref[...]

    # -- shortcut (read straight from the resident input buffer) ------------------
    res = xv[:, res_off:res_off + Qo]                        # (Cin, Qo) bf16
    if has_sc:                                               # fused 1x1x1 conv + BN
        acc2 = acc2 + jnp.dot(wsc_ref[...], res,
                              preferred_element_type=jnp.float32) + bsc_ref[...]
    else:                                                    # identity shortcut
        acc2 = acc2 + res.astype(jnp.float32)

    o_ref[0] = jnp.maximum(acc2, 0.0).astype(o_ref.dtype)


def basic_block3d_forward(prm, x, *, stride):
    """x: (N, Cin, D, H, W) f32.  Returns (N, Cout, Do, Ho, Wo) f32."""
    N, cin, D, H, W = x.shape
    cout = prm["w1"].shape[0]
    has_sc = "wsc" in prm
    g = _block_geometry(D, H, W, stride)

    xbuf = _build_input_buffer(x, g)                         # (N, Cin, L) bf16
    mask = jnp.asarray(g["mask"])                            # (1, Qh) f32

    kernel = functools.partial(
        _basic_block3d_kernel, cin=cin, cout=cout,
        starts1=g["starts1"], starts2=g["starts2"], res_off=g["res_off"],
        Qh=g["Qh"], Qo=g["Qo"], has_sc=has_sc)

    # NOTE: weight/bias/mask blocks are grid-invariant; at realistic channel widths
    # they could be single-buffered to save VMEM (negligible at these sizes).
    in_specs = [
        pl.BlockSpec((1, cin, g["L"]), lambda n: (n, 0, 0)),
        pl.BlockSpec((cout, 27 * cin), lambda n: (0, 0)),
        pl.BlockSpec((cout, 1), lambda n: (0, 0)),
        pl.BlockSpec((cout, 27 * cout), lambda n: (0, 0)),
        pl.BlockSpec((cout, 1), lambda n: (0, 0)),
        pl.BlockSpec((1, g["Qh"]), lambda n: (0, 0)),
    ]
    args = [xbuf, prm["w1"], prm["b1"], prm["w2"], prm["b2"], mask]
    if has_sc:
        in_specs += [pl.BlockSpec((cout, cin), lambda n: (0, 0)),
                     pl.BlockSpec((cout, 1), lambda n: (0, 0))]
        args += [prm["wsc"], prm["bsc"]]

    kmax = 27 * max(cin, cout)
    # TODO(synk): add an output-spatial grid axis (halo'd tiles) before scaling to
    #             realistic D*H*W so the per-step tile fits v7x's 64 MiB VMEM and
    #             the auto-pipeliner has several steps per core.
    out_flat = pl.pallas_call(
        kernel,
        out_shape=jax.ShapeDtypeStruct((N, cout, g["Qo"]), jnp.float32),
        grid=(N,),
        in_specs=in_specs,
        out_specs=pl.BlockSpec((1, cout, g["Qo"]), lambda n: (n, 0, 0)),
        scratch_shapes=[pltpu.VMEM((kmax, g["Qh"]), jnp.bfloat16)],
        compiler_params=pltpu.CompilerParams(dimension_semantics=("parallel",)),
    )(*args)

    # Valid outputs live in the [0,Do)x[0,Ho)x[0,Wo) corner of the work grid.
    y = out_flat[:, :, :g["Qg"]].reshape(N, cout, g["Dg"], g["Hg"], g["Wg"])
    return y[:, :, :g["Do"], :g["Ho"], :g["Wo"]]


# ---------------------------------------------------------------------------
# Parameters (deterministic, synthetic; BN folded for inference)
# ---------------------------------------------------------------------------

def _folded_bn(key, c, eps=1e-5):
    k1, k2, k3, k4 = jax.random.split(key, 4)
    gamma = 1.0 + 0.1 * jax.random.normal(k1, (c,), jnp.float32)
    beta = 0.1 * jax.random.normal(k2, (c,), jnp.float32)
    mean = 0.1 * jax.random.normal(k3, (c,), jnp.float32)
    var = 1.0 + 0.1 * jax.random.uniform(k4, (c,), jnp.float32)
    scale = gamma / jnp.sqrt(var + eps)
    return scale, beta - mean * scale


def make_basic_block3d_params(key, cin, cout, stride):
    """Raw f32 parameters in PyTorch layouts (used by the pure-JAX reference)."""
    ks = jax.random.split(key, 6)
    p = {
        "w1": jax.random.normal(ks[0], (cout, cin, 3, 3, 3), jnp.float32)
              / jnp.sqrt(cin * 27.0),
        "w2": jax.random.normal(ks[1], (cout, cout, 3, 3, 3), jnp.float32)
              / jnp.sqrt(cout * 27.0),
    }
    p["s1"], p["b1"] = _folded_bn(ks[2], cout)
    p["s2"], p["b2"] = _folded_bn(ks[3], cout)
    if stride != 1 or cin != cout:
        p["wsc"] = (jax.random.normal(ks[4], (cout, cin, 1, 1, 1), jnp.float32)
                    / jnp.sqrt(float(cin)))
        p["ssc"], p["bsc"] = _folded_bn(ks[5], cout)
    return p


def prep_basic_block3d_params(raw):
    """Fold BN scale into the conv weights, flatten the 27 taps into the matmul
    contraction dim (K index = tap*Cin + cin, matching the in-kernel patch build),
    and cast the matmul operands to bf16 (accumulation stays f32 in-kernel)."""
    def fold3(w, scale):               # (Cout,Cin,3,3,3) -> (Cout, 27*Cin) bf16
        co, ci = w.shape[:2]
        wt = jnp.transpose(w, (0, 2, 3, 4, 1)).reshape(co, 27 * ci)
        return (wt * scale[:, None]).astype(jnp.bfloat16)

    prm = {
        "w1": fold3(raw["w1"], raw["s1"]), "b1": raw["b1"].reshape(-1, 1),
        "w2": fold3(raw["w2"], raw["s2"]), "b2": raw["b2"].reshape(-1, 1),
    }
    if "wsc" in raw:
        prm["wsc"] = (raw["wsc"][:, :, 0, 0, 0]
                      * raw["ssc"][:, None]).astype(jnp.bfloat16)
        prm["bsc"] = raw["bsc"].reshape(-1, 1)
    return prm


# ---------------------------------------------------------------------------
# Model forward (Pallas) and pure-JAX reference  (both stay in NCDHW layout)
# ---------------------------------------------------------------------------

# (cin, cout, stride) -- static Python config.
BLOCK_CONFIGS = ((8, 8, 1), (8, 16, 2))


def model_forward(prms, x_ncdhw):
    x = x_ncdhw.astype(jnp.float32)
    for (_, _, stride), prm in zip(BLOCK_CONFIGS, prms):
        x = basic_block3d_forward(prm, x, stride=stride)
    return x


def _conv3d_ref(x, w, stride, pad):
    return lax.conv_general_dilated(
        x, w, window_strides=(stride,) * 3, padding=[(pad, pad)] * 3,
        dimension_numbers=("NCDHW", "OIDHW", "NCDHW"),
        precision=lax.Precision.HIGHEST)


def _bnb(v):
    return v.reshape(1, -1, 1, 1, 1)


def basic_block3d_ref(raw, x, *, stride):
    h = jax.nn.relu(_conv3d_ref(x, raw["w1"], stride, 1) * _bnb(raw["s1"])
                    + _bnb(raw["b1"]))
    h = _conv3d_ref(h, raw["w2"], 1, 1) * _bnb(raw["s2"]) + _bnb(raw["b2"])
    if "wsc" in raw:
        sc = (_conv3d_ref(x, raw["wsc"], stride, 0) * _bnb(raw["ssc"])
              + _bnb(raw["bsc"]))
    else:
        sc = x
    return jax.nn.relu(h + sc)


def model_ref(raws, x_ncdhw):
    x = x_ncdhw.astype(jnp.float32)
    for (_, _, stride), raw in zip(BLOCK_CONFIGS, raws):
        x = basic_block3d_ref(raw, x, stride=stride)
    return x


# ---------------------------------------------------------------------------

if __name__ == "__main__":
    key = jax.random.PRNGKey(0)
    k_p, k_x = jax.random.split(key)

    raws = [make_basic_block3d_params(jax.random.fold_in(k_p, i), ci, co, s)
            for i, (ci, co, s) in enumerate(BLOCK_CONFIGS)]
    prms = [prep_basic_block3d_params(r) for r in raws]

    # Small deterministic NCDHW input: (N=2, C=8, D=8, H=8, W=8)
    x = jax.random.normal(k_x, (2, 8, 8, 8, 8), jnp.float32)

    fwd = jax.jit(model_forward)
    out = jax.block_until_ready(fwd(prms, x))
    assert out.shape == (2, 16, 4, 4, 4), out.shape

    # Pure-JAX f32 reference (covers both identity and conv-shortcut branches).
    ref = model_ref(raws, x)
    err = float(jnp.max(jnp.abs(out - ref)))
    assert err < 1e-1, f"max abs error vs reference: {err}"

    print("KERNEL_OK")
</pallas_src>

<mosaic_0001>
module attributes {stable_mosaic.version = 11 : i64} {
  func.func @_basic_block3d_kernel(%arg0: i32, %arg1: memref<1x8x2176xbf16, #tpu.memory_space<vmem>>, %arg2: memref<8x216xbf16, #tpu.memory_space<vmem>>, %arg3: memref<8x1xf32, #tpu.memory_space<vmem>>, %arg4: memref<8x216xbf16, #tpu.memory_space<vmem>>, %arg5: memref<8x1xf32, #tpu.memory_space<vmem>>, %arg6: memref<1x1792xf32, #tpu.memory_space<vmem>>, %arg7: memref<1x8x1408xf32, #tpu.memory_space<vmem>>, %arg8: memref<216x1792xbf16, #tpu.memory_space<vmem>>) attributes {dimension_semantics = [#tpu.dimension_semantics<parallel>], iteration_bounds = array<i64: 2>, scalar_prefetch = 0 : i64, scratch_operands = 1 : i64, tpu.core_type = #tpu.core_type<tc>, window_params = [{transform_indices = @transform_0, window_bounds = array<i64: 1, 8, 2176>}, {pipeline_mode = #tpu.pipeline_mode<synchronous>, transform_indices = @transform_1, window_bounds = array<i64: 8, 216>}, {pipeline_mode = #tpu.pipeline_mode<synchronous>, transform_indices = @transform_2, window_bounds = array<i64: 8, 1>}, {pipeline_mode = #tpu.pipeline_mode<synchronous>, transform_indices = @transform_3, window_bounds = array<i64: 8, 216>}, {pipeline_mode = #tpu.pipeline_mode<synchronous>, transform_indices = @transform_4, window_bounds = array<i64: 8, 1>}, {pipeline_mode = #tpu.pipeline_mode<synchronous>, transform_indices = @transform_5, window_bounds = array<i64: 1, 1792>}, {transform_indices = @transform_6, window_bounds = array<i64: 1, 8, 1408>}]} {
    %c0 = arith.constant 0 : index
    %c0_0 = arith.constant 0 : index
    %c0_1 = arith.constant 0 : index
    %0 = vector.load %arg1[%c0, %c0_0, %c0_1] : memref<1x8x2176xbf16, #tpu.memory_space<vmem>>, vector<1x8x2176xbf16>
    %1 = vector.shape_cast %0 : vector<1x8x2176xbf16> to vector<8x2176xbf16>
    %2 = vector.extract_strided_slice %1 {offsets = [0, 0], sizes = [8, 1792], strides = [1, 1]} : vector<8x2176xbf16> to vector<8x1792xbf16>
    %c0_2 = arith.constant 0 : index
    %c0_3 = arith.constant 0 : index
    %3 = vector.load %arg8[%c0_2, %c0_3] : memref<216x1792xbf16, #tpu.memory_space<vmem>>, vector<8x1792xbf16>
    tpu.vector_store %arg8[%c0_2, %c0_3], %2 {strides = array<i32>} : memref<216x1792xbf16, #tpu.memory_space<vmem>>, vector<8x1792xbf16>,
    %4 = vector.extract_strided_slice %1 {offsets = [0, 1], sizes = [8, 1792], strides = [1, 1]} : vector<8x2176xbf16> to vector<8x1792xbf16>
    %c8 = arith.constant 8 : index
    %c0_4 = arith.constant 0 : index
    %5 = vector.load %arg8[%c8, %c0_4] : memref<216x1792xbf16, #tpu.memory_space<vmem>>, vector<8x1792xbf16>
    tpu.vector_store %arg8[%c8, %c0_4], %4 {strides = array<i32>} : memref<216x1792xbf16, #tpu.memory_space<vmem>>, vector<8x1792xbf16>,
    %6 = vector.extract_strided_slice %1 {offsets = [0, 2], sizes = [8, 1792], strides = [1, 1]} : vector<8x2176xbf16> to vector<8x1792xbf16>
    %c16 = arith.constant 16 : index
    %c0_5 = arith.constant 0 : index
    %7 = vector.load %arg8[%c16, %c0_5] : memref<216x1792xbf16, #tpu.memory_space<vmem>>, vector<8x1792xbf16>
    tpu.vector_store %arg8[%c16, %c0_5], %6 {strides = array<i32>} : memref<216x1792xbf16, #tpu.memory_space<vmem>>, vector<8x1792xbf16>,
    %8 = vector.extract_strided_slice %1 {offsets = [0, 11], sizes = [8, 1792], strides = [1, 1]} : vector<8x2176xbf16> to vector<8x1792xbf16>
    %c24 = arith.constant 24 : index
    %c0_6 = arith.constant 0 : index
    %9 = vector.load %arg8[%c24, %c0_6] : memref<216x1792xbf16, #tpu.memory_space<vmem>>, vector<8x1792xbf16>
    tpu.vector_store %arg8[%c24, %c0_6], %8 {strides = array<i32>} : memref<216x1792xbf16, #tpu.memory_space<vmem>>, vector<8x1792xbf16>,
    %10 = vector.extract_strided_slice %1 {offsets = [0, 12], sizes = [8, 1792], strides = [1, 1]} : vector<8x2176xbf16> to vector<8x1792xbf16>
    %c32 = arith.constant 32 : index
    %c0_7 = arith.constant 0 : index
    %11 = vector.load %arg8[%c32, %c0_7] : memref<216x1792xbf16, #tpu.memory_space<vmem>>, vector<8x1792xbf16>
    tpu.vector_store %arg8[%c32, %c0_7], %10 {strides = array<i32>} : memref<216x1792xbf16, #tpu.memory_space<vmem>>, vector<8x1792xbf16>,
    %12 = vector.extract_strided_slice %1 {offsets = [0, 13], sizes = [8, 1792], strides = [1, 1]} : vector<8x2176xbf16> to vector<8x1792xbf16>
    %c40 = arith.constant 40 : index
    %c0_8 = arith.constant 0 : index
    %13 = vector.load %arg8[%c40, %c0_8] : memref<216x1792xbf16, #tpu.memory_space<vmem>>, vector<8x1792xbf16>
    tpu.vector_store %arg8[%c40, %c0_8], %12 {strides = array<i32>} : memref<216x1792xbf16, #tpu.memory_space<vmem>>, vector<8x1792xbf16>,
    %14 = vector.extract_strided_slice %1 {offsets = [0, 22], sizes = [8, 1792], strides = [1, 1]} : vector<8x2176xbf16> to vector<8x1792xbf16>
    %c48 = arith.constant 48 : index
    %c0_9 = arith.constant 0 : index
    %15 = vector.load %arg8[%c48, %c0_9] : memref<216x1792xbf16, #tpu.memory_space<vmem>>, vector<8x1792xbf16>
    tpu.vector_store %arg8[%c48, %c0_9], %14 {strides = array<i32>} : memref<216x1792xbf16, #tpu.memory_space<vmem>>, vector<8x1792xbf16>,
    %16 = vector.extract_strided_slice %1 {offsets = [0, 23], sizes = [8, 1792], strides = [1, 1]} : vector<8x2176xbf16> to vector<8x1792xbf16>
    %c56 = arith.constant 56 : index
    %c0_10 = arith.constant 0 : index
    %17 = vector.load %arg8[%c56, %c0_10] : memref<216x1792xbf16, #tpu.memory_space<vmem>>, vector<8x1792xbf16>
    tpu.vector_store %arg8[%c56, %c0_10], %16 {strides = array<i32>} : memref<216x1792xbf16, #tpu.memory_space<vmem>>, vector<8x1792xbf16>,
    %18 = vector.extract_strided_slice %1 {offsets = [0, 24], sizes = [8, 1792], strides = [1, 1]} : vector<8x2176xbf16> to vector<8x1792xbf16>
    %c64 = arith.constant 64 : index
    %c0_11 = arith.constant 0 : index
    %19 = vector.load %arg8[%c64, %c0_11] : memref<216x1792xbf16, #tpu.memory_space<vmem>>, vector<8x1792xbf16>
    tpu.vector_store %arg8[%c64, %c0_11], %18 {strides = array<i32>} : memref<216x1792xbf16, #tpu.memory_space<vmem>>, vector<8x1792xbf16>,
    %20 = vector.extract_strided_slice %1 {offsets = [0, 121], sizes = [8, 1792], strides = [1, 1]} : vector<8x2176xbf16> to vector<8x1792xbf16>
    %c72 = arith.constant 72 : index
    %c0_12 = arith.constant 0 : index
    %21 = vector.load %arg8[%c72, %c0_12] : memref<216x1792xbf16, #tpu.memory_space<vmem>>, vector<8x1792xbf16>
    tpu.vector_store %arg8[%c72, %c0_12], %20 {strides = array<i32>} : memref<216x1792xbf16, #tpu.memory_space<vmem>>, vector<8x1792xbf16>,
    %22 = vector.extract_strided_slice %1 {offsets = [0, 122], sizes = [8, 1792], strides = [1, 1]} : vector<8x2176xbf16> to vector<8x1792xbf16>
    %c80 = arith.constant 80 : index
    %c0_13 = arith.constant 0 : index
    %23 = vector.load %arg8[%c80, %c0_13] : memref<216x1792xbf16, #tpu.memory_space<vmem>>, vector<8x1792xbf16>
    tpu.vector_store %arg8[%c80, %c0_13], %22 {strides = array<i32>} : memref<216x1792xbf16, #tpu.memory_space<vmem>>, vector<8x1792xbf16>,
    %24 = vector.extract_strided_slice %1 {offsets = [0, 123], sizes = [8, 1792], strides = [1, 1]} : vector<8x2176xbf16> to vector<8x1792xbf16>
    %c88 = arith.constant 88 : index
    %c0_14 = arith.constant 0 : index
    %25 = vector.load %arg8[%c88, %c0_14] : memref<216x1792xbf16, #tpu.memory_space<vmem>>, vector<8x1792xbf16>
    tpu.vector_store %arg8[%c88, %c0_14], %24 {strides = array<i32>} : memref<216x1792xbf16, #tpu.memory_space<vmem>>, vector<8x1792xbf16>,
    %26 = vector.extract_strided_slice %1 {offsets = [0, 132], sizes = [8, 1792], strides = [1, 1]} : vector<8x2176xbf16> to vector<8x1792xbf16>
    %c96 = arith.constant 96 : index
    %c0_15 = arith.constant 0 : index
    %27 = vector.load %arg8[%c96, %c0_15] : memref<216x1792xbf16, #tpu.memory_space<vmem>>, vector<8x1792xbf16>
    tpu.vector_store %arg8[%c96, %c0_15], %26 {strides = array<i32>} : memref<216x1792xbf16, #tpu.memory_space<vmem>>, vector<8x1792xbf16>,
    %28 = vector.extract_strided_slice %1 {offsets = [0, 133], sizes = [8, 1792], strides = [1, 1]} : vector<8x2176xbf16> to vector<8x1792xbf16>
    %c104 = arith.constant 104 : index
    %c0_16 = arith.constant 0 : index
    %29 = vector.load %arg8[%c104, %c0_16] : memref<216x1792xbf16, #tpu.memory_space<vmem>>, vector<8x1792xbf16>
    tpu.vector_store %arg8[%c104, %c0_16], %28 {strides = array<i32>} : memref<216x1792xbf16, #tpu.memory_space<vmem>>, vector<8x1792xbf16>,
    %30 = vector.extract_strided_slice %1 {offsets = [0, 134], sizes = [8, 1792], strides = [1, 1]} : vector<8x2176xbf16> to vector<8x1792xbf16>
    %c112 = arith.constant 112 : index
    %c0_17 = arith.constant 0 : index
    %31 = vector.load %arg8[%c112, %c0_17] : memref<216x1792xbf16, #tpu.memory_space<vmem>>, vector<8x1792xbf16>
    tpu.vector_store %arg8[%c112, %c0_17], %30 {strides = array<i32>} : memref<216x1792xbf16, #tpu.memory_space<vmem>>, vector<8x1792xbf16>,
    %32 = vector.extract_strided_slice %1 {offsets = [0, 143], sizes = [8, 1792], strides = [1, 1]} : vector<8x2176xbf16> to vector<8x1792xbf16>
    %c120 = arith.constant 120 : index
    %c0_18 = arith.constant 0 : index
    %33 = vector.load %arg8[%c120, %c0_18] : memref<216x1792xbf16, #tpu.memory_space<vmem>>, vector<8x1792xbf16>
    tpu.vector_store %arg8[%c120, %c0_18], %32 {strides = array<i32>} : memref<216x1792xbf16, #tpu.memory_space<vmem>>, vector<8x1792xbf16>,
    %34 = vector.extract_strided_slice %1 {offsets = [0, 144], sizes = [8, 1792], strides = [1, 1]} : vector<8x2176xbf16> to vector<8x1792xbf16>
    %c128 = arith.constant 128 : index
    %c0_19 = arith.constant 0 : index
    %35 = vector.load %arg8[%c128, %c0_19] : memref<216x1792xbf16, #tpu.memory_space<vmem>>, vector<8x1792xbf16>
    tpu.vector_store %arg8[%c128, %c0_19], %34 {strides = array<i32>} : memref<216x1792xbf16, #tpu.memory_space<vmem>>, vector<8x1792xbf16>,
    %36 = vector.extract_strided_slice %1 {offsets = [0, 145], sizes = [8, 1792], strides = [1, 1]} : vector<8x2176xbf16> to vector<8x1792xbf16>
    %c136 = arith.constant 136 : index
    %c0_20 = arith.constant 0 : index
    %37 = vector.load %arg8[%c136, %c0_20] : memref<216x1792xbf16, #tpu.memory_space<vmem>>, vector<8x1792xbf16>
    tpu.vector_store %arg8[%c136, %c0_20], %36 {strides = array<i32>} : memref<216x1792xbf16, #tpu.memory_space<vmem>>, vector<8x1792xbf16>,
    %38 = vector.extract_strided_slice %1 {offsets = [0, 242], sizes = [8, 1792], strides = [1, 1]} : vector<8x2176xbf16> to vector<8x1792xbf16>
    %c144 = arith.constant 144 : index
    %c0_21 = arith.constant 0 : index
    %39 = vector.load %arg8[%c144, %c0_21] : memref<216x1792xbf16, #tpu.memory_space<vmem>>, vector<8x1792xbf16>
    tpu.vector_store %arg8[%c144, %c0_21], %38 {strides = array<i32>} : memref<216x1792xbf16, #tpu.memory_space<vmem>>, vector<8x1792xbf16>,
    %40 = vector.extract_strided_slice %1 {offsets = [0, 243], sizes = [8, 1792], strides = [1, 1]} : vector<8x2176xbf16> to vector<8x1792xbf16>
    %c152 = arith.constant 152 : index
    %c0_22 = arith.constant 0 : index
    %41 = vector.load %arg8[%c152, %c0_22] : memref<216x1792xbf16, #tpu.memory_space<vmem>>, vector<8x1792xbf16>
    tpu.vector_store %arg8[%c152, %c0_22], %40 {strides = array<i32>} : memref<216x1792xbf16, #tpu.memory_space<vmem>>, vector<8x1792xbf16>,
    %42 = vector.extract_strided_slice %1 {offsets = [0, 244], sizes = [8, 1792], strides = [1, 1]} : vector<8x2176xbf16> to vector<8x1792xbf16>
    %c160 = arith.constant 160 : index
    %c0_23 = arith.constant 0 : index
    %43 = vector.load %arg8[%c160, %c0_23] : memref<216x1792xbf16, #tpu.memory_space<vmem>>, vector<8x1792xbf16>
    tpu.vector_store %arg8[%c160, %c0_23], %42 {strides = array<i32>} : memref<216x1792xbf16, #tpu.memory_space<vmem>>, vector<8x1792xbf16>,
    %44 = vector.extract_strided_slice %1 {offsets = [0, 253], sizes = [8, 1792], strides = [1, 1]} : vector<8x2176xbf16> to vector<8x1792xbf16>
    %c168 = arith.constant 168 : index
    %c0_24 = arith.constant 0 : index
    %45 = vector.load %arg8[%c168, %c0_24] : memref<216x1792xbf16, #tpu.memory_space<vmem>>, vector<8x1792xbf16>
    tpu.vector_store %arg8[%c168, %c0_24], %44 {strides = array<i32>} : memref<216x1792xbf16, #tpu.memory_space<vmem>>, vector<8x1792xbf16>,
    %46 = vector.extract_strided_slice %1 {offsets = [0, 254], sizes = [8, 1792], strides = [1, 1]} : vector<8x2176xbf16> to vector<8x1792xbf16>
    %c176 = arith.constant 176 : index
    %c0_25 = arith.constant 0 : index
    %47 = vector.load %arg8[%c176, %c0_25] : memref<216x1792xbf16, #tpu.memory_space<vmem>>, vector<8x1792xbf16>
    tpu.vector_store %arg8[%c176, %c0_25], %46 {strides = array<i32>} : memref<216x1792xbf16, #tpu.memory_space<vmem>>, vector<8x1792xbf16>,
    %48 = vector.extract_strided_slice %1 {offsets = [0, 255], sizes = [8, 1792], strides = [1, 1]} : vector<8x2176xbf16> to vector<8x1792xbf16>
    %c184 = arith.constant 184 : index
    %c0_26 = arith.constant 0 : index
    %49 = vector.load %arg8[%c184, %c0_26] : memref<216x1792xbf16, #tpu.memory_space<vmem>>, vector<8x1792xbf16>
    tpu.vector_store %arg8[%c184, %c0_26], %48 {strides = array<i32>} : memref<216x1792xbf16, #tpu.memory_space<vmem>>, vector<8x1792xbf16>,
    %50 = vector.extract_strided_slice %1 {offsets = [0, 264], sizes = [8, 1792], strides = [1, 1]} : vector<8x2176xbf16> to vector<8x1792xbf16>
    %c192 = arith.constant 192 : index
    %c0_27 = arith.constant 0 : index
    %51 = vector.load %arg8[%c192, %c0_27] : memref<216x1792xbf16, #tpu.memory_space<vmem>>, vector<8x1792xbf16>
    tpu.vector_store %arg8[%c192, %c0_27], %50 {strides = array<i32>} : memref<216x1792xbf16, #tpu.memory_space<vmem>>, vector<8x1792xbf16>,
    %52 = vector.extract_strided_slice %1 {offsets = [0, 265], sizes = [8, 1792], strides = [1, 1]} : vector<8x2176xbf16> to vector<8x1792xbf16>
    %c200 = arith.constant 200 : index
    %c0_28 = arith.constant 0 : index
    %53 = vector.load %arg8[%c200, %c0_28] : memref<216x1792xbf16, #tpu.memory_space<vmem>>, vector<8x1792xbf16>
    tpu.vector_store %arg8[%c200, %c0_28], %52 {strides = array<i32>} : memref<216x1792xbf16, #tpu.memory_space<vmem>>, vector<8x1792xbf16>,
    %54 = vector.extract_strided_slice %1 {offsets = [0, 266], sizes = [8, 1792], strides = [1, 1]} : vector<8x2176xbf16> to vector<8x1792xbf16>
    %c208 = arith.constant 208 : index
    %c0_29 = arith.constant 0 : index
    %55 = vector.load %arg8[%c208, %c0_29] : memref<216x1792xbf16, #tpu.memory_space<vmem>>, vector<8x1792xbf16>
    tpu.vector_store %arg8[%c208, %c0_29], %54 {strides = array<i32>} : memref<216x1792xbf16, #tpu.memory_space<vmem>>, vector<8x1792xbf16>,
    %c0_30 = arith.constant 0 : index
    %c0_31 = arith.constant 0 : index
    %56 = vector.load %arg2[%c0_30, %c0_31] : memref<8x216xbf16, #tpu.memory_space<vmem>>, vector<8x216xbf16>
    %c0_32 = arith.constant 0 : index
    %c0_33 = arith.constant 0 : index
    %57 = vector.load %arg8[%c0_32, %c0_33] : memref<216x1792xbf16, #tpu.memory_space<vmem>>, vector<216x1792xbf16>
    %cst = arith.constant dense<0.000000e+00> : vector<8x1792xf32>
    %58 = tpu.matmul %56, %57, %cst {dimension_numbers = #tpu.dot_dimension_numbers<[1], [0], [0], [1], [0, 0, 1, 1], [], []>} : vector<8x216xbf16>, vector<216x1792xbf16>, vector<8x1792xf32> -> vector<8x1792xf32>
    %c0_34 = arith.constant 0 : index
    %c0_35 = arith.constant 0 : index
    %59 = vector.load %arg3[%c0_34, %c0_35] : memref<8x1xf32, #tpu.memory_space<vmem>>, vector<8x1xf32>
    %60 = vector.broadcast %59 : vector<8x1xf32> to vector<8x1792xf32>
    %61 = arith.addf %58, %60 : vector<8x1792xf32>
    %cst_36 = arith.constant 0.000000e+00 : f32
    %62 = vector.broadcast %cst_36 : f32 to vector<8x1792xf32>
    %63 = arith.maximumf %61, %62 : vector<8x1792xf32>
    %c0_37 = arith.constant 0 : index
    %c0_38 = arith.constant 0 : index
    %64 = vector.load %arg6[%c0_37, %c0_38] : memref<1x1792xf32, #tpu.memory_space<vmem>>, vector<1x1792xf32>
    %65 = vector.broadcast %64 : vector<1x1792xf32> to vector<8x1792xf32>
    %66 = arith.mulf %63, %65 : vector<8x1792xf32>
    %67 = arith.truncf %66 : vector<8x1792xf32> to vector<8x1792xbf16>
    %68 = vector.extract_strided_slice %67 {offsets = [0, 0], sizes = [8, 1408], strides = [1, 1]} : vector<8x1792xbf16> to vector<8x1408xbf16>
    %c0_39 = arith.constant 0 : index
    %c0_40 = arith.constant 0 : index
    %69 = vector.load %arg8[%c0_39, %c0_40] : memref<216x1792xbf16, #tpu.memory_space<vmem>>, vector<8x1408xbf16>
    tpu.vector_store %arg8[%c0_39, %c0_40], %68 {strides = array<i32>} : memref<216x1792xbf16, #tpu.memory_space<vmem>>, vector<8x1408xbf16>,
    %70 = vector.extract_strided_slice %67 {offsets = [0, 1], sizes = [8, 1408], strides = [1, 1]} : vector<8x1792xbf16> to vector<8x1408xbf16>
    %c8_41 = arith.constant 8 : index
    %c0_42 = arith.constant 0 : index
    %71 = vector.load %arg8[%c8_41, %c0_42] : memref<216x1792xbf16, #tpu.memory_space<vmem>>, vector<8x1408xbf16>
    tpu.vector_store %arg8[%c8_41, %c0_42], %70 {strides = array<i32>} : memref<216x1792xbf16, #tpu.memory_space<vmem>>, vector<8x1408xbf16>,
    %72 = vector.extract_strided_slice %67 {offsets = [0, 2], sizes = [8, 1408], strides = [1, 1]} : vector<8x1792xbf16> to vector<8x1408xbf16>
    %c16_43 = arith.constant 16 : index
    %c0_44 = arith.constant 0 : index
    %73 = vector.load %arg8[%c16_43, %c0_44] : memref<216x1792xbf16, #tpu.memory_space<vmem>>, vector<8x1408xbf16>
    tpu.vector_store %arg8[%c16_43, %c0_44], %72 {strides = array<i32>} : memref<216x1792xbf16, #tpu.memory_space<vmem>>, vector<8x1408xbf16>,
    %74 = vector.extract_strided_slice %67 {offsets = [0, 11], sizes = [8, 1408], strides = [1, 1]} : vector<8x1792xbf16> to vector<8x1408xbf16>
    %c24_45 = arith.constant 24 : index
    %c0_46 = arith.constant 0 : index
    %75 = vector.load %arg8[%c24_45, %c0_46] : memref<216x1792xbf16, #tpu.memory_space<vmem>>, vector<8x1408xbf16>
    tpu.vector_store %arg8[%c24_45, %c0_46], %74 {strides = array<i32>} : memref<216x1792xbf16, #tpu.memory_space<vmem>>, vector<8x1408xbf16>,
    %76 = vector.extract_strided_slice %67 {offsets = [0, 12], sizes = [8, 1408], strides = [1, 1]} : vector<8x1792xbf16> to vector<8x1408xbf16>
    %c32_47 = arith.constant 32 : index
    %c0_48 = arith.constant 0 : index
    %77 = vector.load %arg8[%c32_47, %c0_48] : memref<216x1792xbf16, #tpu.memory_space<vmem>>, vector<8x1408xbf16>
    tpu.vector_store %arg8[%c32_47, %c0_48], %76 {strides = array<i32>} : memref<216x1792xbf16, #tpu.memory_space<vmem>>, vector<8x1408xbf16>,
    %78 = vector.extract_strided_slice %67 {offsets = [0, 13], sizes = [8, 1408], strides = [1, 1]} : vector<8x1792xbf16> to vector<8x1408xbf16>
    %c40_49 = arith.constant 40 : index
    %c0_50 = arith.constant 0 : index
    %79 = vector.load %arg8[%c40_49, %c0_50] : memref<216x1792xbf16, #tpu.memory_space<vmem>>, vector<8x1408xbf16>
    tpu.vector_store %arg8[%c40_49, %c0_50], %78 {strides = array<i32>} : memref<216x1792xbf16, #tpu.memory_space<vmem>>, vector<8x1408xbf16>,
    %80 = vector.extract_strided_slice %67 {offsets = [0, 22], sizes = [8, 1408], strides = [1, 1]} : vector<8x1792xbf16> to vector<8x1408xbf16>
    %c48_51 = arith.constant 48 : index
    %c0_52 = arith.constant 0 : index
    %81 = vector.load %arg8[%c48_51, %c0_52] : memref<216x1792xbf16, #tpu.memory_space<vmem>>, vector<8x1408xbf16>
    tpu.vector_store %arg8[%c48_51, %c0_52], %80 {strides = array<i32>} : memref<216x1792xbf16, #tpu.memory_space<vmem>>, vector<8x1408xbf16>,
    %82 = vector.extract_strided_slice %67 {offsets = [0, 23], sizes = [8, 1408], strides = [1, 1]} : vector<8x1792xbf16> to vector<8x1408xbf16>
    %c56_53 = arith.constant 56 : index
    %c0_54 = arith.constant 0 : index
    %83 = vector.load %arg8[%c56_53, %c0_54] : memref<216x1792xbf16, #tpu.memory_space<vmem>>, vector<8x1408xbf16>
    tpu.vector_store %arg8[%c56_53, %c0_54], %82 {strides = array<i32>} : memref<216x1792xbf16, #tpu.memory_space<vmem>>, vector<8x1408xbf16>,
    %84 = vector.extract_strided_slice %67 {offsets = [0, 24], sizes = [8, 1408], strides = [1, 1]} : vector<8x1792xbf16> to vector<8x1408xbf16>
    %c64_55 = arith.constant 64 : index
    %c0_56 = arith.constant 0 : index
    %85 = vector.load %arg8[%c64_55, %c0_56] : memref<216x1792xbf16, #tpu.memory_space<vmem>>, vector<8x1408xbf16>
    tpu.vector_store %arg8[%c64_55, %c0_56], %84 {strides = array<i32>} : memref<216x1792xbf16, #tpu.memory_space<vmem>>, vector<8x1408xbf16>,
    %86 = vector.extract_strided_slice %67 {offsets = [0, 121], sizes = [8, 1408], strides = [1, 1]} : vector<8x1792xbf16> to vector<8x1408xbf16>
    %c72_57 = arith.constant 72 : index
    %c0_58 = arith.constant 0 : index
    %87 = vector.load %arg8[%c72_57, %c0_58] : memref<216x1792xbf16, #tpu.memory_space<vmem>>, vector<8x1408xbf16>
    tpu.vector_store %arg8[%c72_57, %c0_58], %86 {strides = array<i32>} : memref<216x1792xbf16, #tpu.memory_space<vmem>>, vector<8x1408xbf16>,
    %88 = vector.extract_strided_slice %67 {offsets = [0, 122], sizes = [8, 1408], strides = [1, 1]} : vector<8x1792xbf16> to vector<8x1408xbf16>
    %c80_59 = arith.constant 80 : index
    %c0_60 = arith.constant 0 : index
    %89 = vector.load %arg8[%c80_59, %c0_60] : memref<216x1792xbf16, #tpu.memory_space<vmem>>, vector<8x1408xbf16>
    tpu.vector_store %arg8[%c80_59, %c0_60], %88 {strides = array<i32>} : memref<216x1792xbf16, #tpu.memory_space<vmem>>, vector<8x1408xbf16>,
    %90 = vector.extract_strided_slice %67 {offsets = [0, 123], sizes = [8, 1408], strides = [1, 1]} : vector<8x1792xbf16> to vector<8x1408xbf16>
    %c88_61 = arith.constant 88 : index
    %c0_62 = arith.constant 0 : index
    %91 = vector.load %arg8[%c88_61, %c0_62] : memref<216x1792xbf16, #tpu.memory_space<vmem>>, vector<8x1408xbf16>
    tpu.vector_store %arg8[%c88_61, %c0_62], %90 {strides = array<i32>} : memref<216x1792xbf16, #tpu.memory_space<vmem>>, vector<8x1408xbf16>,
    %92 = vector.extract_strided_slice %67 {offsets = [0, 132], sizes = [8, 1408], strides = [1, 1]} : vector<8x1792xbf16> to vector<8x1408xbf16>
    %c96_63 = arith.constant 96 : index
    %c0_64 = arith.constant 0 : index
    %93 = vector.load %arg8[%c96_63, %c0_64] : memref<216x1792xbf16, #tpu.memory_space<vmem>>, vector<8x1408xbf16>
    tpu.vector_store %arg8[%c96_63, %c0_64], %92 {strides = array<i32>} : memref<216x1792xbf16, #tpu.memory_space<vmem>>, vector<8x1408xbf16>,
    %94 = vector.extract_strided_slice %67 {offsets = [0, 133], sizes = [8, 1408], strides = [1, 1]} : vector<8x1792xbf16> to vector<8x1408xbf16>
    %c104_65 = arith.constant 104 : index
    %c0_66 = arith.constant 0 : index
    %95 = vector.load %arg8[%c104_65, %c0_66] : memref<216x1792xbf16, #tpu.memory_space<vmem>>, vector<8x1408xbf16>
    tpu.vector_store %arg8[%c104_65, %c0_66], %94 {strides = array<i32>} : memref<216x1792xbf16, #tpu.memory_space<vmem>>, vector<8x1408xbf16>,
    %96 = vector.extract_strided_slice %67 {offsets = [0, 134], sizes = [8, 1408], strides = [1, 1]} : vector<8x1792xbf16> to vector<8x1408xbf16>
    %c112_67 = arith.constant 112 : index
    %c0_68 = arith.constant 0 : index
    %97 = vector.load %arg8[%c112_67, %c0_68] : memref<216x1792xbf16, #tpu.memory_space<vmem>>, vector<8x1408xbf16>
    tpu.vector_store %arg8[%c112_67, %c0_68], %96 {strides = array<i32>} : memref<216x1792xbf16, #tpu.memory_space<vmem>>, vector<8x1408xbf16>,
    %98 = vector.extract_strided_slice %67 {offsets = [0, 143], sizes = [8, 1408], strides = [1, 1]} : vector<8x1792xbf16> to vector<8x1408xbf16>
    %c120_69 = arith.constant 120 : index
    %c0_70 = arith.constant 0 : index
    %99 = vector.load %arg8[%c120_69, %c0_70] : memref<216x1792xbf16, #tpu.memory_space<vmem>>, vector<8x1408xbf16>
    tpu.vector_store %arg8[%c120_69, %c0_70], %98 {strides = array<i32>} : memref<216x1792xbf16, #tpu.memory_space<vmem>>, vector<8x1408xbf16>,
    %100 = vector.extract_strided_slice %67 {offsets = [0, 144], sizes = [8, 1408], strides = [1, 1]} : vector<8x1792xbf16> to vector<8x1408xbf16>
    %c128_71 = arith.constant 128 : index
    %c0_72 = arith.constant 0 : index
    %101 = vector.load %arg8[%c128_71, %c0_72] : memref<216x1792xbf16, #tpu.memory_space<vmem>>, vector<8x1408xbf16>
    tpu.vector_store %arg8[%c128_71, %c0_72], %100 {strides = array<i32>} : memref<216x1792xbf16, #tpu.memory_space<vmem>>, vector<8x1408xbf16>,
    %102 = vector.extract_strided_slice %67 {offsets = [0, 145], sizes = [8, 1408], strides = [1, 1]} : vector<8x1792xbf16> to vector<8x1408xbf16>
    %c136_73 = arith.constant 136 : index
    %c0_74 = arith.constant 0 : index
    %103 = vector.load %arg8[%c136_73, %c0_74] : memref<216x1792xbf16, #tpu.memory_space<vmem>>, vector<8x1408xbf16>
    tpu.vector_store %arg8[%c136_73, %c0_74], %102 {strides = array<i32>} : memref<216x1792xbf16, #tpu.memory_space<vmem>>, vector<8x1408xbf16>,
    %104 = vector.extract_strided_slice %67 {offsets = [0, 242], sizes = [8, 1408], strides = [1, 1]} : vector<8x1792xbf16> to vector<8x1408xbf16>
    %c144_75 = arith.constant 144 : index
    %c0_76 = arith.constant 0 : index
    %105 = vector.load %arg8[%c144_75, %c0_76] : memref<216x1792xbf16, #tpu.memory_space<vmem>>, vector<8x1408xbf16>
    tpu.vector_store %arg8[%c144_75, %c0_76], %104 {strides = array<i32>} : memref<216x1792xbf16, #tpu.memory_space<vmem>>, vector<8x1408xbf16>,
    %106 = vector.extract_strided_slice %67 {offsets = [0, 243], sizes = [8, 1408], strides = [1, 1]} : vector<8x1792xbf16> to vector<8x1408xbf16>
    %c152_77 = arith.constant 152 : index
    %c0_78 = arith.constant 0 : index
    %107 = vector.load %arg8[%c152_77, %c0_78] : memref<216x1792xbf16, #tpu.memory_space<vmem>>, vector<8x1408xbf16>
    tpu.vector_store %arg8[%c152_77, %c0_78], %106 {strides = array<i32>} : memref<216x1792xbf16, #tpu.memory_space<vmem>>, vector<8x1408xbf16>,
    %108 = vector.extract_strided_slice %67 {offsets = [0, 244], sizes = [8, 1408], strides = [1, 1]} : vector<8x1792xbf16> to vector<8x1408xbf16>
    %c160_79 = arith.constant 160 : index
    %c0_80 = arith.constant 0 : index
    %109 = vector.load %arg8[%c160_79, %c0_80] : memref<216x1792xbf16, #tpu.memory_space<vmem>>, vector<8x1408xbf16>
    tpu.vector_store %arg8[%c160_79, %c0_80], %108 {strides = array<i32>} : memref<216x1792xbf16, #tpu.memory_space<vmem>>, vector<8x1408xbf16>,
    %110 = vector.extract_strided_slice %67 {offsets = [0, 253], sizes = [8, 1408], strides = [1, 1]} : vector<8x1792xbf16> to vector<8x1408xbf16>
    %c168_81 = arith.constant 168 : index
    %c0_82 = arith.constant 0 : index
    %111 = vector.load %arg8[%c168_81, %c0_82] : memref<216x1792xbf16, #tpu.memory_space<vmem>>, vector<8x1408xbf16>
    tpu.vector_store %arg8[%c168_81, %c0_82], %110 {strides = array<i32>} : memref<216x1792xbf16, #tpu.memory_space<vmem>>, vector<8x1408xbf16>,
    %112 = vector.extract_strided_slice %67 {offsets = [0, 254], sizes = [8, 1408], strides = [1, 1]} : vector<8x1792xbf16> to vector<8x1408xbf16>
    %c176_83 = arith.constant 176 : index
    %c0_84 = arith.constant 0 : index
    %113 = vector.load %arg8[%c176_83, %c0_84] : memref<216x1792xbf16, #tpu.memory_space<vmem>>, vector<8x1408xbf16>
    tpu.vector_store %arg8[%c176_83, %c0_84], %112 {strides = array<i32>} : memref<216x1792xbf16, #tpu.memory_space<vmem>>, vector<8x1408xbf16>,
    %114 = vector.extract_strided_slice %67 {offsets = [0, 255], sizes = [8, 1408], strides = [1, 1]} : vector<8x1792xbf16> to vector<8x1408xbf16>
    %c184_85 = arith.constant 184 : index
    %c0_86 = arith.constant 0 : index
    %115 = vector.load %arg8[%c184_85, %c0_86] : memref<216x1792xbf16, #tpu.memory_space<vmem>>, vector<8x1408xbf16>
    tpu.vector_store %arg8[%c184_85, %c0_86], %114 {strides = array<i32>} : memref<216x1792xbf16, #tpu.memory_space<vmem>>, vector<8x1408xbf16>,
    %116 = vector.extract_strided_slice %67 {offsets = [0, 264], sizes = [8, 1408], strides = [1, 1]} : vector<8x1792xbf16> to vector<8x1408xbf16>
    %c192_87 = arith.constant 192 : index
    %c0_88 = arith.constant 0 : index
    %117 = vector.load %arg8[%c192_87, %c0_88] : memref<216x1792xbf16, #tpu.memory_space<vmem>>, vector<8x1408xbf16>
    tpu.vector_store %arg8[%c192_87, %c0_88], %116 {strides = array<i32>} : memref<216x1792xbf16, #tpu.memory_space<vmem>>, vector<8x1408xbf16>,
    %118 = vector.extract_strided_slice %67 {offsets = [0, 265], sizes = [8, 1408], strides = [1, 1]} : vector<8x1792xbf16> to vector<8x1408xbf16>
    %c200_89 = arith.constant 200 : index
    %c0_90 = arith.constant 0 : index
    %119 = vector.load %arg8[%c200_89, %c0_90] : memref<216x1792xbf16, #tpu.memory_space<vmem>>, vector<8x1408xbf16>
    tpu.vector_store %arg8[%c200_89, %c0_90], %118 {strides = array<i32>} : memref<216x1792xbf16, #tpu.memory_space<vmem>>, vector<8x1408xbf16>,
    %120 = vector.extract_strided_slice %67 {offsets = [0, 266], sizes = [8, 1408], strides = [1, 1]} : vector<8x1792xbf16> to vector<8x1408xbf16>
    %c208_91 = arith.constant 208 : index
    %c0_92 = arith.constant 0 : index
    %121 = vector.load %arg8[%c208_91, %c0_92] : memref<216x1792xbf16, #tpu.memory_space<vmem>>, vector<8x1408xbf16>
    tpu.vector_store %arg8[%c208_91, %c0_92], %120 {strides = array<i32>} : memref<216x1792xbf16, #tpu.memory_space<vmem>>, vector<8x1408xbf16>,
    %c0_93 = arith.constant 0 : index
    %c0_94 = arith.constant 0 : index
    %122 = vector.load %arg4[%c0_93, %c0_94] : memref<8x216xbf16, #tpu.memory_space<vmem>>, vector<8x216xbf16>
    %c0_95 = arith.constant 0 : index
    %c0_96 = arith.constant 0 : index
    %123 = vector.load %arg8[%c0_95, %c0_96] : memref<216x1792xbf16, #tpu.memory_space<vmem>>, vector<216x1408xbf16>
    %cst_97 = arith.constant dense<0.000000e+00> : vector<8x1408xf32>
    %124 = tpu.matmul %122, %123, %cst_97 {dimension_numbers = #tpu.dot_dimension_numbers<[1], [0], [0], [1], [0, 0, 1, 1], [], []>} : vector<8x216xbf16>, vector<216x1408xbf16>, vector<8x1408xf32> -> vector<8x1408xf32>
    %c0_98 = arith.constant 0 : index
    %c0_99 = arith.constant 0 : index
    %125 = vector.load %arg5[%c0_98, %c0_99] : memref<8x1xf32, #tpu.memory_space<vmem>>, vector<8x1xf32>
    %126 = vector.broadcast %125 : vector<8x1xf32> to vector<8x1408xf32>
    %127 = arith.addf %124, %126 : vector<8x1408xf32>
    %128 = vector.extract_strided_slice %1 {offsets = [0, 266], sizes = [8, 1408], strides = [1, 1]} : vector<8x2176xbf16> to vector<8x1408xbf16>
    %129 = arith.extf %128 : vector<8x1408xbf16> to vector<8x1408xf32>
    %130 = arith.addf %127, %129 : vector<8x1408xf32>
    %cst_100 = arith.constant 0.000000e+00 : f32
    %131 = vector.broadcast %cst_100 : f32 to vector<8x1408xf32>
    %132 = arith.maximumf %130, %131 : vector<8x1408xf32>
    %c0_101 = arith.constant 0 : index
    %c0_102 = arith.constant 0 : index
    %c0_103 = arith.constant 0 : index
    %133 = vector.load %arg7[%c0_101, %c0_102, %c0_103] : memref<1x8x1408xf32, #tpu.memory_space<vmem>>, vector<1x8x1408xf32>
    %134 = vector.shape_cast %133 : vector<1x8x1408xf32> to vector<8x1408xf32>
    %135 = vector.shape_cast %132 : vector<8x1408xf32> to vector<1x8x1408xf32>
    tpu.vector_store %arg7[%c0_101, %c0_102, %c0_103], %135 {strides = array<i32>} : memref<1x8x1408xf32, #tpu.memory_space<vmem>>, vector<1x8x1408xf32>,
    return
  }
  func.func @transform_0(%arg0: i32) -> (i32, i32, i32) {
    %c0_i32 = arith.constant 0 : i32
    %c0_i32_0 = arith.constant 0 : i32
    %c0_i32_1 = arith.constant 0 : i32
    return %arg0, %c0_i32, %c0_i32_0 : i32, i32, i32
  }
  func.func @transform_1(%arg0: i32) -> (i32, i32) {
    %c0_i32 = arith.constant 0 : i32
    %c0_i32_0 = arith.constant 0 : i32
    %c0_i32_1 = arith.constant 0 : i32
    return %c0_i32, %c0_i32_0 : i32, i32
  }
  func.func @transform_2(%arg0: i32) -> (i32, i32) {
    %c0_i32 = arith.constant 0 : i32
    %c0_i32_0 = arith.constant 0 : i32
    %c0_i32_1 = arith.constant 0 : i32
    return %c0_i32, %c0_i32_0 : i32, i32
  }
  func.func @transform_3(%arg0: i32) -> (i32, i32) {
    %c0_i32 = arith.constant 0 : i32
    %c0_i32_0 = arith.constant 0 : i32
    %c0_i32_1 = arith.constant 0 : i32
    return %c0_i32, %c0_i32_0 : i32, i32
  }
  func.func @transform_4(%arg0: i32) -> (i32, i32) {
    %c0_i32 = arith.constant 0 : i32
    %c0_i32_0 = arith.constant 0 : i32
    %c0_i32_1 = arith.constant 0 : i32
    return %c0_i32, %c0_i32_0 : i32, i32
  }
  func.func @transform_5(%arg0: i32) -> (i32, i32) {
    %c0_i32 = arith.constant 0 : i32
    %c0_i32_0 = arith.constant 0 : i32
    %c0_i32_1 = arith.constant 0 : i32
    return %c0_i32, %c0_i32_0 : i32, i32
  }
  func.func @transform_6(%arg0: i32) -> (i32, i32, i32) {
    %c0_i32 = arith.constant 0 : i32
    %c0_i32_0 = arith.constant 0 : i32
    %c0_i32_1 = arith.constant 0 : i32
    return %arg0, %c0_i32, %c0_i32_0 : i32, i32, i32
  }
}

module attributes {stable_mosaic.version = 11 : i64} {
  func.func @_basic_block3d_kernel(%arg0: i32, %arg1: memref<1x8x5120xbf16, #tpu.memory_space<vmem>>, %arg2: memref<16x216xbf16, #tpu.memory_space<vmem>>, %arg3: memref<16x1xf32, #tpu.memory_space<vmem>>, %arg4: memref<16x432xbf16, #tpu.memory_space<vmem>>, %arg5: memref<16x1xf32, #tpu.memory_space<vmem>>, %arg6: memref<1x512xf32, #tpu.memory_space<vmem>>, %arg7: memref<16x8xbf16, #tpu.memory_space<vmem>>, %arg8: memref<16x1xf32, #tpu.memory_space<vmem>>, %arg9: memref<1x16x384xf32, #tpu.memory_space<vmem>>, %arg10: memref<432x512xbf16, #tpu.memory_space<vmem>>) attributes {dimension_semantics = [#tpu.dimension_semantics<parallel>], iteration_bounds = array<i64: 2>, scalar_prefetch = 0 : i64, scratch_operands = 1 : i64, tpu.core_type = #tpu.core_type<tc>, window_params = [{transform_indices = @transform_0, window_bounds = array<i64: 1, 8, 5120>}, {pipeline_mode = #tpu.pipeline_mode<synchronous>, transform_indices = @transform_1, window_bounds = array<i64: 16, 216>}, {pipeline_mode = #tpu.pipeline_mode<synchronous>, transform_indices = @transform_2, window_bounds = array<i64: 16, 1>}, {pipeline_mode = #tpu.pipeline_mode<synchronous>, transform_indices = @transform_3, window_bounds = array<i64: 16, 432>}, {pipeline_mode = #tpu.pipeline_mode<synchronous>, transform_indices = @transform_4, window_bounds = array<i64: 16, 1>}, {pipeline_mode = #tpu.pipeline_mode<synchronous>, transform_indices = @transform_5, window_bounds = array<i64: 1, 512>}, {pipeline_mode = #tpu.pipeline_mode<synchronous>, transform_indices = @transform_6, window_bounds = array<i64: 16, 8>}, {pipeline_mode = #tpu.pipeline_mode<synchronous>, transform_indices = @transform_7, window_bounds = array<i64: 16, 1>}, {transform_indices = @transform_8, window_bounds = array<i64: 1, 16, 384>}]} {
    %c0 = arith.constant 0 : index
    %c0_0 = arith.constant 0 : index
    %c0_1 = arith.constant 0 : index
    %0 = vector.load %arg1[%c0, %c0_0, %c0_1] : memref<1x8x5120xbf16, #tpu.memory_space<vmem>>, vector<1x8x5120xbf16>
    %1 = vector.shape_cast %0 : vector<1x8x5120xbf16> to vector<8x5120xbf16>
    %2 = vector.extract_strided_slice %1 {offsets = [0, 0], sizes = [8, 512], strides = [1, 1]} : vector<8x5120xbf16> to vector<8x512xbf16>
    %c0_2 = arith.constant 0 : index
    %c0_3 = arith.constant 0 : index
    %3 = vector.load %arg10[%c0_2, %c0_3] : memref<432x512xbf16, #tpu.memory_space<vmem>>, vector<8x512xbf16>
    tpu.vector_store %arg10[%c0_2, %c0_3], %2 {strides = array<i32>} : memref<432x512xbf16, #tpu.memory_space<vmem>>, vector<8x512xbf16>,
    %4 = vector.extract_strided_slice %1 {offsets = [0, 640], sizes = [8, 512], strides = [1, 1]} : vector<8x5120xbf16> to vector<8x512xbf16>
    %c8 = arith.constant 8 : index
    %c0_4 = arith.constant 0 : index
    %5 = vector.load %arg10[%c8, %c0_4] : memref<432x512xbf16, #tpu.memory_space<vmem>>, vector<8x512xbf16>
    tpu.vector_store %arg10[%c8, %c0_4], %4 {strides = array<i32>} : memref<432x512xbf16, #tpu.memory_space<vmem>>, vector<8x512xbf16>,
    %6 = vector.extract_strided_slice %1 {offsets = [0, 1], sizes = [8, 512], strides = [1, 1]} : vector<8x5120xbf16> to vector<8x512xbf16>
    %c16 = arith.constant 16 : index
    %c0_5 = arith.constant 0 : index
    %7 = vector.load %arg10[%c16, %c0_5] : memref<432x512xbf16, #tpu.memory_space<vmem>>, vector<8x512xbf16>
    tpu.vector_store %arg10[%c16, %c0_5], %6 {strides = array<i32>} : memref<432x512xbf16, #tpu.memory_space<vmem>>, vector<8x512xbf16>,
    %8 = vector.extract_strided_slice %1 {offsets = [0, 1280], sizes = [8, 512], strides = [1, 1]} : vector<8x5120xbf16> to vector<8x512xbf16>
    %c24 = arith.constant 24 : index
    %c0_6 = arith.constant 0 : index
    %9 = vector.load %arg10[%c24, %c0_6] : memref<432x512xbf16, #tpu.memory_space<vmem>>, vector<8x512xbf16>
    tpu.vector_store %arg10[%c24, %c0_6], %8 {strides = array<i32>} : memref<432x512xbf16, #tpu.memory_space<vmem>>, vector<8x512xbf16>,
    %10 = vector.extract_strided_slice %1 {offsets = [0, 1920], sizes = [8, 512], strides = [1, 1]} : vector<8x5120xbf16> to vector<8x512xbf16>
    %c32 = arith.constant 32 : index
    %c0_7 = arith.constant 0 : index
    %11 = vector.load %arg10[%c32, %c0_7] : memref<432x512xbf16, #tpu.memory_space<vmem>>, vector<8x512xbf16>
    tpu.vector_store %arg10[%c32, %c0_7], %10 {strides = array<i32>} : memref<432x512xbf16, #tpu.memory_space<vmem>>, vector<8x512xbf16>,
    %12 = vector.extract_strided_slice %1 {offsets = [0, 1281], sizes = [8, 512], strides = [1, 1]} : vector<8x5120xbf16> to vector<8x512xbf16>
    %c40 = arith.constant 40 : index
    %c0_8 = arith.constant 0 : index
    %13 = vector.load %arg10[%c40, %c0_8] : memref<432x512xbf16, #tpu.memory_space<vmem>>, vector<8x512xbf16>
    tpu.vector_store %arg10[%c40, %c0_8], %12 {strides = array<i32>} : memref<432x512xbf16, #tpu.memory_space<vmem>>, vector<8x512xbf16>,
    %14 = vector.extract_strided_slice %1 {offsets = [0, 7], sizes = [8, 512], strides = [1, 1]} : vector<8x5120xbf16> to vector<8x512xbf16>
    %c48 = arith.constant 48 : index
    %c0_9 = arith.constant 0 : index
    %15 = vector.load %arg10[%c48, %c0_9] : memref<432x512xbf16, #tpu.memory_space<vmem>>, vector<8x512xbf16>
    tpu.vector_store %arg10[%c48, %c0_9], %14 {strides = array<i32>} : memref<432x512xbf16, #tpu.memory_space<vmem>>, vector<8x512xbf16>,
    %16 = vector.extract_strided_slice %1 {offsets = [0, 647], sizes = [8, 512], strides = [1, 1]} : vector<8x5120xbf16> to vector<8x512xbf16>
    %c56 = arith.constant 56 : index
    %c0_10 = arith.constant 0 : index
    %17 = vector.load %arg10[%c56, %c0_10] : memref<432x512xbf16, #tpu.memory_space<vmem>>, vector<8x512xbf16>
    tpu.vector_store %arg10[%c56, %c0_10], %16 {strides = array<i32>} : memref<432x512xbf16, #tpu.memory_space<vmem>>, vector<8x512xbf16>,
    %18 = vector.extract_strided_slice %1 {offsets = [0, 8], sizes = [8, 512], strides = [1, 1]} : vector<8x5120xbf16> to vector<8x512xbf16>
    %c64 = arith.constant 64 : index
    %c0_11 = arith.constant 0 : index
    %19 = vector.load %arg10[%c64, %c0_11] : memref<432x512xbf16, #tpu.memory_space<vmem>>, vector<8x512xbf16>
    tpu.vector_store %arg10[%c64, %c0_11], %18 {strides = array<i32>} : memref<432x512xbf16, #tpu.memory_space<vmem>>, vector<8x512xbf16>,
    %20 = vector.extract_strided_slice %1 {offsets = [0, 2560], sizes = [8, 512], strides = [1, 1]} : vector<8x5120xbf16> to vector<8x512xbf16>
    %c72 = arith.constant 72 : index
    %c0_12 = arith.constant 0 : index
    %21 = vector.load %arg10[%c72, %c0_12] : memref<432x512xbf16, #tpu.memory_space<vmem>>, vector<8x512xbf16>
    tpu.vector_store %arg10[%c72, %c0_12], %20 {strides = array<i32>} : memref<432x512xbf16, #tpu.memory_space<vmem>>, vector<8x512xbf16>,
    %22 = vector.extract_strided_slice %1 {offsets = [0, 3200], sizes = [8, 512], strides = [1, 1]} : vector<8x5120xbf16> to vector<8x512xbf16>
    %c80 = arith.constant 80 : index
    %c0_13 = arith.constant 0 : index
    %23 = vector.load %arg10[%c80, %c0_13] : memref<432x512xbf16, #tpu.memory_space<vmem>>, vector<8x512xbf16>
    tpu.vector_store %arg10[%c80, %c0_13], %22 {strides = array<i32>} : memref<432x512xbf16, #tpu.memory_space<vmem>>, vector<8x512xbf16>,
    %24 = vector.extract_strided_slice %1 {offsets = [0, 2561], sizes = [8, 512], strides = [1, 1]} : vector<8x5120xbf16> to vector<8x512xbf16>
    %c88 = arith.constant 88 : index
    %c0_14 = arith.constant 0 : index
    %25 = vector.load %arg10[%c88, %c0_14] : memref<432x512xbf16, #tpu.memory_space<vmem>>, vector<8x512xbf16>
    tpu.vector_store %arg10[%c88, %c0_14], %24 {strides = array<i32>} : memref<432x512xbf16, #tpu.memory_space<vmem>>, vector<8x512xbf16>,
    %26 = vector.extract_strided_slice %1 {offsets = [0, 3840], sizes = [8, 512], strides = [1, 1]} : vector<8x5120xbf16> to vector<8x512xbf16>
    %c96 = arith.constant 96 : index
    %c0_15 = arith.constant 0 : index
    %27 = vector.load %arg10[%c96, %c0_15] : memref<432x512xbf16, #tpu.memory_space<vmem>>, vector<8x512xbf16>
    tpu.vector_store %arg10[%c96, %c0_15], %26 {strides = array<i32>} : memref<432x512xbf16, #tpu.memory_space<vmem>>, vector<8x512xbf16>,
    %28 = vector.extract_strided_slice %1 {offsets = [0, 4480], sizes = [8, 512], strides = [1, 1]} : vector<8x5120xbf16> to vector<8x512xbf16>
    %c104 = arith.constant 104 : index
    %c0_16 = arith.constant 0 : index
    %29 = vector.load %arg10[%c104, %c0_16] : memref<432x512xbf16, #tpu.memory_space<vmem>>, vector<8x512xbf16>
    tpu.vector_store %arg10[%c104, %c0_16], %28 {strides = array<i32>} : memref<432x512xbf16, #tpu.memory_space<vmem>>, vector<8x512xbf16>,
    %30 = vector.extract_strided_slice %1 {offsets = [0, 3841], sizes = [8, 512], strides = [1, 1]} : vector<8x5120xbf16> to vector<8x512xbf16>
    %c112 = arith.constant 112 : index
    %c0_17 = arith.constant 0 : index
    %31 = vector.load %arg10[%c112, %c0_17] : memref<432x512xbf16, #tpu.memory_space<vmem>>, vector<8x512xbf16>
    tpu.vector_store %arg10[%c112, %c0_17], %30 {strides = array<i32>} : memref<432x512xbf16, #tpu.memory_space<vmem>>, vector<8x512xbf16>,
    %32 = vector.extract_strided_slice %1 {offsets = [0, 2567], sizes = [8, 512], strides = [1, 1]} : vector<8x5120xbf16> to vector<8x512xbf16>
    %c120 = arith.constant 120 : index
    %c0_18 = arith.constant 0 : index
    %33 = vector.load %arg10[%c120, %c0_18] : memref<432x512xbf16, #tpu.memory_space<vmem>>, vector<8x512xbf16>
    tpu.vector_store %arg10[%c120, %c0_18], %32 {strides = array<i32>} : memref<432x512xbf16, #tpu.memory_space<vmem>>, vector<8x512xbf16>,
    %34 = vector.extract_strided_slice %1 {offsets = [0, 3207], sizes = [8, 512], strides = [1, 1]} : vector<8x5120xbf16> to vector<8x512xbf16>
    %c128 = arith.constant 128 : index
    %c0_19 = arith.constant 0 : index
    %35 = vector.load %arg10[%c128, %c0_19] : memref<432x512xbf16, #tpu.memory_space<vmem>>, vector<8x512xbf16>
    tpu.vector_store %arg10[%c128, %c0_19], %34 {strides = array<i32>} : memref<432x512xbf16, #tpu.memory_space<vmem>>, vector<8x512xbf16>,
    %36 = vector.extract_strided_slice %1 {offsets = [0, 2568], sizes = [8, 512], strides = [1, 1]} : vector<8x5120xbf16> to vector<8x512xbf16>
    %c136 = arith.constant 136 : index
    %c0_20 = arith.constant 0 : index
    %37 = vector.load %arg10[%c136, %c0_20] : memref<432x512xbf16, #tpu.memory_space<vmem>>, vector<8x512xbf16>
    tpu.vector_store %arg10[%c136, %c0_20], %36 {strides = array<i32>} : memref<432x512xbf16, #tpu.memory_space<vmem>>, vector<8x512xbf16>,
    %38 = vector.extract_strided_slice %1 {offsets = [0, 49], sizes = [8, 512], strides = [1, 1]} : vector<8x5120xbf16> to vector<8x512xbf16>
    %c144 = arith.constant 144 : index
    %c0_21 = arith.constant 0 : index
    %39 = vector.load %arg10[%c144, %c0_21] : memref<432x512xbf16, #tpu.memory_space<vmem>>, vector<8x512xbf16>
    tpu.vector_store %arg10[%c144, %c0_21], %38 {strides = array<i32>} : memref<432x512xbf16, #tpu.memory_space<vmem>>, vector<8x512xbf16>,
    %40 = vector.extract_strided_slice %1 {offsets = [0, 689], sizes = [8, 512], strides = [1, 1]} : vector<8x5120xbf16> to vector<8x512xbf16>
    %c152 = arith.constant 152 : index
    %c0_22 = arith.constant 0 : index
    %41 = vector.load %arg10[%c152, %c0_22] : memref<432x512xbf16, #tpu.memory_space<vmem>>, vector<8x512xbf16>
    tpu.vector_store %arg10[%c152, %c0_22], %40 {strides = array<i32>} : memref<432x512xbf16, #tpu.memory_space<vmem>>, vector<8x512xbf16>,
    %42 = vector.extract_strided_slice %1 {offsets = [0, 50], sizes = [8, 512], strides = [1, 1]} : vector<8x5120xbf16> to vector<8x512xbf16>
    %c160 = arith.constant 160 : index
    %c0_23 = arith.constant 0 : index
    %43 = vector.load %arg10[%c160, %c0_23] : memref<432x512xbf16, #tpu.memory_space<vmem>>, vector<8x512xbf16>
    tpu.vector_store %arg10[%c160, %c0_23], %42 {strides = array<i32>} : memref<432x512xbf16, #tpu.memory_space<vmem>>, vector<8x512xbf16>,
    %44 = vector.extract_strided_slice %1 {offsets = [0, 1329], sizes = [8, 512], strides = [1, 1]} : vector<8x5120xbf16> to vector<8x512xbf16>
    %c168 = arith.constant 168 : index
    %c0_24 = arith.constant 0 : index
    %45 = vector.load %arg10[%c168, %c0_24] : memref<432x512xbf16, #tpu.memory_space<vmem>>, vector<8x512xbf16>
    tpu.vector_store %arg10[%c168, %c0_24], %44 {strides = array<i32>} : memref<432x512xbf16, #tpu.memory_space<vmem>>, vector<8x512xbf16>,
    %46 = vector.extract_strided_slice %1 {offsets = [0, 1969], sizes = [8, 512], strides = [1, 1]} : vector<8x5120xbf16> to vector<8x512xbf16>
    %c176 = arith.constant 176 : index
    %c0_25 = arith.constant 0 : index
    %47 = vector.load %arg10[%c176, %c0_25] : memref<432x512xbf16, #tpu.memory_space<vmem>>, vector<8x512xbf16>
    tpu.vector_store %arg10[%c176, %c0_25], %46 {strides = array<i32>} : memref<432x512xbf16, #tpu.memory_space<vmem>>, vector<8x512xbf16>,
    %48 = vector.extract_strided_slice %1 {offsets = [0, 1330], sizes = [8, 512], strides = [1, 1]} : vector<8x5120xbf16> to vector<8x512xbf16>
    %c184 = arith.constant 184 : index
    %c0_26 = arith.constant 0 : index
    %49 = vector.load %arg10[%c184, %c0_26] : memref<432x512xbf16, #tpu.memory_space<vmem>>, vector<8x512xbf16>
    tpu.vector_store %arg10[%c184, %c0_26], %48 {strides = array<i32>} : memref<432x512xbf16, #tpu.memory_space<vmem>>, vector<8x512xbf16>,
    %50 = vector.extract_strided_slice %1 {offsets = [0, 56], sizes = [8, 512], strides = [1, 1]} : vector<8x5120xbf16> to vector<8x512xbf16>
    %c192 = arith.constant 192 : index
    %c0_27 = arith.constant 0 : index
    %51 = vector.load %arg10[%c192, %c0_27] : memref<432x512xbf16, #tpu.memory_space<vmem>>, vector<8x512xbf16>
    tpu.vector_store %arg10[%c192, %c0_27], %50 {strides = array<i32>} : memref<432x512xbf16, #tpu.memory_space<vmem>>, vector<8x512xbf16>,
    %52 = vector.extract_strided_slice %1 {offsets = [0, 696], sizes = [8, 512], strides = [1, 1]} : vector<8x5120xbf16> to vector<8x512xbf16>
    %c200 = arith.constant 200 : index
    %c0_28 = arith.constant 0 : index
    %53 = vector.load %arg10[%c200, %c0_28] : memref<432x512xbf16, #tpu.memory_space<vmem>>, vector<8x512xbf16>
    tpu.vector_store %arg10[%c200, %c0_28], %52 {strides = array<i32>} : memref<432x512xbf16, #tpu.memory_space<vmem>>, vector<8x512xbf16>,
    %54 = vector.extract_strided_slice %1 {offsets = [0, 57], sizes = [8, 512], strides = [1, 1]} : vector<8x5120xbf16> to vector<8x512xbf16>
    %c208 = arith.constant 208 : index
    %c0_29 = arith.constant 0 : index
    %55 = vector.load %arg10[%c208, %c0_29] : memref<432x512xbf16, #tpu.memory_space<vmem>>, vector<8x512xbf16>
    tpu.vector_store %arg10[%c208, %c0_29], %54 {strides = array<i32>} : memref<432x512xbf16, #tpu.memory_space<vmem>>, vector<8x512xbf16>,
    %c0_30 = arith.constant 0 : index
    %c0_31 = arith.constant 0 : index
    %56 = vector.load %arg2[%c0_30, %c0_31] : memref<16x216xbf16, #tpu.memory_space<vmem>>, vector<16x216xbf16>
    %c0_32 = arith.constant 0 : index
    %c0_33 = arith.constant 0 : index
    %57 = vector.load %arg10[%c0_32, %c0_33] : memref<432x512xbf16, #tpu.memory_space<vmem>>, vector<216x512xbf16>
    %cst = arith.constant dense<0.000000e+00> : vector<16x512xf32>
    %58 = tpu.matmul %56, %57, %cst {dimension_numbers = #tpu.dot_dimension_numbers<[1], [0], [0], [1], [0, 0, 1, 1], [], []>} : vector<16x216xbf16>, vector<216x512xbf16>, vector<16x512xf32> -> vector<16x512xf32>
    %c0_34 = arith.constant 0 : index
    %c0_35 = arith.constant 0 : index
    %59 = vector.load %arg3[%c0_34, %c0_35] : memref<16x1xf32, #tpu.memory_space<vmem>>, vector<16x1xf32>
    %60 = vector.broadcast %59 : vector<16x1xf32> to vector<16x512xf32>
    %61 = arith.addf %58, %60 : vector<16x512xf32>
    %cst_36 = arith.constant 0.000000e+00 : f32
    %62 = vector.broadcast %cst_36 : f32 to vector<16x512xf32>
    %63 = arith.maximumf %61, %62 : vector<16x512xf32>
    %c0_37 = arith.constant 0 : index
    %c0_38 = arith.constant 0 : index
    %64 = vector.load %arg6[%c0_37, %c0_38] : memref<1x512xf32, #tpu.memory_space<vmem>>, vector<1x512xf32>
    %65 = vector.broadcast %64 : vector<1x512xf32> to vector<16x512xf32>
    %66 = arith.mulf %63, %65 : vector<16x512xf32>
    %67 = arith.truncf %66 : vector<16x512xf32> to vector<16x512xbf16>
    %68 = vector.extract_strided_slice %67 {offsets = [0, 0], sizes = [16, 384], strides = [1, 1]} : vector<16x512xbf16> to vector<16x384xbf16>
    %c0_39 = arith.constant 0 : index
    %c0_40 = arith.constant 0 : index
    %69 = vector.load %arg10[%c0_39, %c0_40] : memref<432x512xbf16, #tpu.memory_space<vmem>>, vector<16x384xbf16>
    tpu.vector_store %arg10[%c0_39, %c0_40], %68 {strides = array<i32>} : memref<432x512xbf16, #tpu.memory_space<vmem>>, vector<16x384xbf16>,
    %70 = vector.extract_strided_slice %67 {offsets = [0, 1], sizes = [16, 384], strides = [1, 1]} : vector<16x512xbf16> to vector<16x384xbf16>
    %c16_41 = arith.constant 16 : index
    %c0_42 = arith.constant 0 : index
    %71 = vector.load %arg10[%c16_41, %c0_42] : memref<432x512xbf16, #tpu.memory_space<vmem>>, vector<16x384xbf16>
    tpu.vector_store %arg10[%c16_41, %c0_42], %70 {strides = array<i32>} : memref<432x512xbf16, #tpu.memory_space<vmem>>, vector<16x384xbf16>,
    %72 = vector.extract_strided_slice %67 {offsets = [0, 2], sizes = [16, 384], strides = [1, 1]} : vector<16x512xbf16> to vector<16x384xbf16>
    %c32_43 = arith.constant 32 : index
    %c0_44 = arith.constant 0 : index
    %73 = vector.load %arg10[%c32_43, %c0_44] : memref<432x512xbf16, #tpu.memory_space<vmem>>, vector<16x384xbf16>
    tpu.vector_store %arg10[%c32_43, %c0_44], %72 {strides = array<i32>} : memref<432x512xbf16, #tpu.memory_space<vmem>>, vector<16x384xbf16>,
    %74 = vector.extract_strided_slice %67 {offsets = [0, 7], sizes = [16, 384], strides = [1, 1]} : vector<16x512xbf16> to vector<16x384xbf16>
    %c48_45 = arith.constant 48 : index
    %c0_46 = arith.constant 0 : index
    %75 = vector.load %arg10[%c48_45, %c0_46] : memref<432x512xbf16, #tpu.memory_space<vmem>>, vector<16x384xbf16>
    tpu.vector_store %arg10[%c48_45, %c0_46], %74 {strides = array<i32>} : memref<432x512xbf16, #tpu.memory_space<vmem>>, vector<16x384xbf16>,
    %76 = vector.extract_strided_slice %67 {offsets = [0, 8], sizes = [16, 384], strides = [1, 1]} : vector<16x512xbf16> to vector<16x384xbf16>
    %c64_47 = arith.constant 64 : index
    %c0_48 = arith.constant 0 : index
    %77 = vector.load %arg10[%c64_47, %c0_48] : memref<432x512xbf16, #tpu.memory_space<vmem>>, vector<16x384xbf16>
    tpu.vector_store %arg10[%c64_47, %c0_48], %76 {strides = array<i32>} : memref<432x512xbf16, #tpu.memory_space<vmem>>, vector<16x384xbf16>,
    %78 = vector.extract_strided_slice %67 {offsets = [0, 9], sizes = [16, 384], strides = [1, 1]} : vector<16x512xbf16> to vector<16x384xbf16>
    %c80_49 = arith.constant 80 : index
    %c0_50 = arith.constant 0 : index
    %79 = vector.load %arg10[%c80_49, %c0_50] : memref<432x512xbf16, #tpu.memory_space<vmem>>, vector<16x384xbf16>
    tpu.vector_store %arg10[%c80_49, %c0_50], %78 {strides = array<i32>} : memref<432x512xbf16, #tpu.memory_space<vmem>>, vector<16x384xbf16>,
    %80 = vector.extract_strided_slice %67 {offsets = [0, 14], sizes = [16, 384], strides = [1, 1]} : vector<16x512xbf16> to vector<16x384xbf16>
    %c96_51 = arith.constant 96 : index
    %c0_52 = arith.constant 0 : index
    %81 = vector.load %arg10[%c96_51, %c0_52] : memref<432x512xbf16, #tpu.memory_space<vmem>>, vector<16x384xbf16>
    tpu.vector_store %arg10[%c96_51, %c0_52], %80 {strides = array<i32>} : memref<432x512xbf16, #tpu.memory_space<vmem>>, vector<16x384xbf16>,
    %82 = vector.extract_strided_slice %67 {offsets = [0, 15], sizes = [16, 384], strides = [1, 1]} : vector<16x512xbf16> to vector<16x384xbf16>
    %c112_53 = arith.constant 112 : index
    %c0_54 = arith.constant 0 : index
    %83 = vector.load %arg10[%c112_53, %c0_54] : memref<432x512xbf16, #tpu.memory_space<vmem>>, vector<16x384xbf16>
    tpu.vector_store %arg10[%c112_53, %c0_54], %82 {strides = array<i32>} : memref<432x512xbf16, #tpu.memory_space<vmem>>, vector<16x384xbf16>,
    %84 = vector.extract_strided_slice %67 {offsets = [0, 16], sizes = [16, 384], strides = [1, 1]} : vector<16x512xbf16> to vector<16x384xbf16>
    %c128_55 = arith.constant 128 : index
    %c0_56 = arith.constant 0 : index
    %85 = vector.load %arg10[%c128_55, %c0_56] : memref<432x512xbf16, #tpu.memory_space<vmem>>, vector<16x384xbf16>
    tpu.vector_store %arg10[%c128_55, %c0_56], %84 {strides = array<i32>} : memref<432x512xbf16, #tpu.memory_space<vmem>>, vector<16x384xbf16>,
    %86 = vector.extract_strided_slice %67 {offsets = [0, 49], sizes = [16, 384], strides = [1, 1]} : vector<16x512xbf16> to vector<16x384xbf16>
    %c144_57 = arith.constant 144 : index
    %c0_58 = arith.constant 0 : index
    %87 = vector.load %arg10[%c144_57, %c0_58] : memref<432x512xbf16, #tpu.memory_space<vmem>>, vector<16x384xbf16>
    tpu.vector_store %arg10[%c144_57, %c0_58], %86 {strides = array<i32>} : memref<432x512xbf16, #tpu.memory_space<vmem>>, vector<16x384xbf16>,
    %88 = vector.extract_strided_slice %67 {offsets = [0, 50], sizes = [16, 384], strides = [1, 1]} : vector<16x512xbf16> to vector<16x384xbf16>
    %c160_59 = arith.constant 160 : index
    %c0_60 = arith.constant 0 : index
    %89 = vector.load %arg10[%c160_59, %c0_60] : memref<432x512xbf16, #tpu.memory_space<vmem>>, vector<16x384xbf16>
    tpu.vector_store %arg10[%c160_59, %c0_60], %88 {strides = array<i32>} : memref<432x512xbf16, #tpu.memory_space<vmem>>, vector<16x384xbf16>,
    %90 = vector.extract_strided_slice %67 {offsets = [0, 51], sizes = [16, 384], strides = [1, 1]} : vector<16x512xbf16> to vector<16x384xbf16>
    %c176_61 = arith.constant 176 : index
    %c0_62 = arith.constant 0 : index
    %91 = vector.load %arg10[%c176_61, %c0_62] : memref<432x512xbf16, #tpu.memory_space<vmem>>, vector<16x384xbf16>
    tpu.vector_store %arg10[%c176_61, %c0_62], %90 {strides = array<i32>} : memref<432x512xbf16, #tpu.memory_space<vmem>>, vector<16x384xbf16>,
    %92 = vector.extract_strided_slice %67 {offsets = [0, 56], sizes = [16, 384], strides = [1, 1]} : vector<16x512xbf16> to vector<16x384xbf16>
    %c192_63 = arith.constant 192 : index
    %c0_64 = arith.constant 0 : index
    %93 = vector.load %arg10[%c192_63, %c0_64] : memref<432x512xbf16, #tpu.memory_space<vmem>>, vector<16x384xbf16>
    tpu.vector_store %arg10[%c192_63, %c0_64], %92 {strides = array<i32>} : memref<432x512xbf16, #tpu.memory_space<vmem>>, vector<16x384xbf16>,
    %94 = vector.extract_strided_slice %67 {offsets = [0, 57], sizes = [16, 384], strides = [1, 1]} : vector<16x512xbf16> to vector<16x384xbf16>
    %c208_65 = arith.constant 208 : index
    %c0_66 = arith.constant 0 : index
    %95 = vector.load %arg10[%c208_65, %c0_66] : memref<432x512xbf16, #tpu.memory_space<vmem>>, vector<16x384xbf16>
    tpu.vector_store %arg10[%c208_65, %c0_66], %94 {strides = array<i32>} : memref<432x512xbf16, #tpu.memory_space<vmem>>, vector<16x384xbf16>,
    %96 = vector.extract_strided_slice %67 {offsets = [0, 58], sizes = [16, 384], strides = [1, 1]} : vector<16x512xbf16> to vector<16x384xbf16>
    %c224 = arith.constant 224 : index
    %c0_67 = arith.constant 0 : index
    %97 = vector.load %arg10[%c224, %c0_67] : memref<432x512xbf16, #tpu.memory_space<vmem>>, vector<16x384xbf16>
    tpu.vector_store %arg10[%c224, %c0_67], %96 {strides = array<i32>} : memref<432x512xbf16, #tpu.memory_space<vmem>>, vector<16x384xbf16>,
    %98 = vector.extract_strided_slice %67 {offsets = [0, 63], sizes = [16, 384], strides = [1, 1]} : vector<16x512xbf16> to vector<16x384xbf16>
    %c240 = arith.constant 240 : index
    %c0_68 = arith.constant 0 : index
    %99 = vector.load %arg10[%c240, %c0_68] : memref<432x512xbf16, #tpu.memory_space<vmem>>, vector<16x384xbf16>
    tpu.vector_store %arg10[%c240, %c0_68], %98 {strides = array<i32>} : memref<432x512xbf16, #tpu.memory_space<vmem>>, vector<16x384xbf16>,
    %100 = vector.extract_strided_slice %67 {offsets = [0, 64], sizes = [16, 384], strides = [1, 1]} : vector<16x512xbf16> to vector<16x384xbf16>
    %c256 = arith.constant 256 : index
    %c0_69 = arith.constant 0 : index
    %101 = vector.load %arg10[%c256, %c0_69] : memref<432x512xbf16, #tpu.memory_space<vmem>>, vector<16x384xbf16>
    tpu.vector_store %arg10[%c256, %c0_69], %100 {strides = array<i32>} : memref<432x512xbf16, #tpu.memory_space<vmem>>, vector<16x384xbf16>,
    %102 = vector.extract_strided_slice %67 {offsets = [0, 65], sizes = [16, 384], strides = [1, 1]} : vector<16x512xbf16> to vector<16x384xbf16>
    %c272 = arith.constant 272 : index
    %c0_70 = arith.constant 0 : index
    %103 = vector.load %arg10[%c272, %c0_70] : memref<432x512xbf16, #tpu.memory_space<vmem>>, vector<16x384xbf16>
    tpu.vector_store %arg10[%c272, %c0_70], %102 {strides = array<i32>} : memref<432x512xbf16, #tpu.memory_space<vmem>>, vector<16x384xbf16>,
    %104 = vector.extract_strided_slice %67 {offsets = [0, 98], sizes = [16, 384], strides = [1, 1]} : vector<16x512xbf16> to vector<16x384xbf16>
    %c288 = arith.constant 288 : index
    %c0_71 = arith.constant 0 : index
    %105 = vector.load %arg10[%c288, %c0_71] : memref<432x512xbf16, #tpu.memory_space<vmem>>, vector<16x384xbf16>
    tpu.vector_store %arg10[%c288, %c0_71], %104 {strides = array<i32>} : memref<432x512xbf16, #tpu.memory_space<vmem>>, vector<16x384xbf16>,
    %106 = vector.extract_strided_slice %67 {offsets = [0, 99], sizes = [16, 384], strides = [1, 1]} : vector<16x512xbf16> to vector<16x384xbf16>
    %c304 = arith.constant 304 : index
    %c0_72 = arith.constant 0 : index
    %107 = vector.load %arg10[%c304, %c0_72] : memref<432x512xbf16, #tpu.memory_space<vmem>>, vector<16x384xbf16>
    tpu.vector_store %arg10[%c304, %c0_72], %106 {strides = array<i32>} : memref<432x512xbf16, #tpu.memory_space<vmem>>, vector<16x384xbf16>,
    %108 = vector.extract_strided_slice %67 {offsets = [0, 100], sizes = [16, 384], strides = [1, 1]} : vector<16x512xbf16> to vector<16x384xbf16>
    %c320 = arith.constant 320 : index
    %c0_73 = arith.constant 0 : index
    %109 = vector.load %arg10[%c320, %c0_73] : memref<432x512xbf16, #tpu.memory_space<vmem>>, vector<16x384xbf16>
    tpu.vector_store %arg10[%c320, %c0_73], %108 {strides = array<i32>} : memref<432x512xbf16, #tpu.memory_space<vmem>>, vector<16x384xbf16>,
    %110 = vector.extract_strided_slice %67 {offsets = [0, 105], sizes = [16, 384], strides = [1, 1]} : vector<16x512xbf16> to vector<16x384xbf16>
    %c336 = arith.constant 336 : index
    %c0_74 = arith.constant 0 : index
    %111 = vector.load %arg10[%c336, %c0_74] : memref<432x512xbf16, #tpu.memory_space<vmem>>, vector<16x384xbf16>
    tpu.vector_store %arg10[%c336, %c0_74], %110 {strides = array<i32>} : memref<432x512xbf16, #tpu.memory_space<vmem>>, vector<16x384xbf16>,
    %112 = vector.extract_strided_slice %67 {offsets = [0, 106], sizes = [16, 384], strides = [1, 1]} : vector<16x512xbf16> to vector<16x384xbf16>
    %c352 = arith.constant 352 : index
    %c0_75 = arith.constant 0 : index
    %113 = vector.load %arg10[%c352, %c0_75] : memref<432x512xbf16, #tpu.memory_space<vmem>>, vector<16x384xbf16>
    tpu.vector_store %arg10[%c352, %c0_75], %112 {strides = array<i32>} : memref<432x512xbf16, #tpu.memory_space<vmem>>, vector<16x384xbf16>,
    %114 = vector.extract_strided_slice %67 {offsets = [0, 107], sizes = [16, 384], strides = [1, 1]} : vector<16x512xbf16> to vector<16x384xbf16>
    %c368 = arith.constant 368 : index
    %c0_76 = arith.constant 0 : index
    %115 = vector.load %arg10[%c368, %c0_76] : memref<432x512xbf16, #tpu.memory_space<vmem>>, vector<16x384xbf16>
    tpu.vector_store %arg10[%c368, %c0_76], %114 {strides = array<i32>} : memref<432x512xbf16, #tpu.memory_space<vmem>>, vector<16x384xbf16>,
    %116 = vector.extract_strided_slice %67 {offsets = [0, 112], sizes = [16, 384], strides = [1, 1]} : vector<16x512xbf16> to vector<16x384xbf16>
    %c384 = arith.constant 384 : index
    %c0_77 = arith.constant 0 : index
    %117 = vector.load %arg10[%c384, %c0_77] : memref<432x512xbf16, #tpu.memory_space<vmem>>, vector<16x384xbf16>
    tpu.vector_store %arg10[%c384, %c0_77], %116 {strides = array<i32>} : memref<432x512xbf16, #tpu.memory_space<vmem>>, vector<16x384xbf16>,
    %118 = vector.extract_strided_slice %67 {offsets = [0, 113], sizes = [16, 384], strides = [1, 1]} : vector<16x512xbf16> to vector<16x384xbf16>
    %c400 = arith.constant 400 : index
    %c0_78 = arith.constant 0 : index
    %119 = vector.load %arg10[%c400, %c0_78] : memref<432x512xbf16, #tpu.memory_space<vmem>>, vector<16x384xbf16>
    tpu.vector_store %arg10[%c400, %c0_78], %118 {strides = array<i32>} : memref<432x512xbf16, #tpu.memory_space<vmem>>, vector<16x384xbf16>,
    %120 = vector.extract_strided_slice %67 {offsets = [0, 114], sizes = [16, 384], strides = [1, 1]} : vector<16x512xbf16> to vector<16x384xbf16>
    %c416 = arith.constant 416 : index
    %c0_79 = arith.constant 0 : index
    %121 = vector.load %arg10[%c416, %c0_79] : memref<432x512xbf16, #tpu.memory_space<vmem>>, vector<16x384xbf16>
    tpu.vector_store %arg10[%c416, %c0_79], %120 {strides = array<i32>} : memref<432x512xbf16, #tpu.memory_space<vmem>>, vector<16x384xbf16>,
    %c0_80 = arith.constant 0 : index
    %c0_81 = arith.constant 0 : index
    %122 = vector.load %arg4[%c0_80, %c0_81] : memref<16x432xbf16, #tpu.memory_space<vmem>>, vector<16x432xbf16>
    %c0_82 = arith.constant 0 : index
    %c0_83 = arith.constant 0 : index
    %123 = vector.load %arg10[%c0_82, %c0_83] : memref<432x512xbf16, #tpu.memory_space<vmem>>, vector<432x384xbf16>
    %cst_84 = arith.constant dense<0.000000e+00> : vector<16x384xf32>
    %124 = tpu.matmul %122, %123, %cst_84 {dimension_numbers = #tpu.dot_dimension_numbers<[1], [0], [0], [1], [0, 0, 1, 1], [], []>} : vector<16x432xbf16>, vector<432x384xbf16>, vector<16x384xf32> -> vector<16x384xf32>
    %c0_85 = arith.constant 0 : index
    %c0_86 = arith.constant 0 : index
    %125 = vector.load %arg5[%c0_85, %c0_86] : memref<16x1xf32, #tpu.memory_space<vmem>>, vector<16x1xf32>
    %126 = vector.broadcast %125 : vector<16x1xf32> to vector<16x384xf32>
    %127 = arith.addf %124, %126 : vector<16x384xf32>
    %128 = vector.extract_strided_slice %1 {offsets = [0, 4537], sizes = [8, 384], strides = [1, 1]} : vector<8x5120xbf16> to vector<8x384xbf16>
    %c0_87 = arith.constant 0 : index
    %c0_88 = arith.constant 0 : index
    %129 = vector.load %arg7[%c0_87, %c0_88] : memref<16x8xbf16, #tpu.memory_space<vmem>>, vector<16x8xbf16>
    %cst_89 = arith.constant dense<0.000000e+00> : vector<16x384xf32>
    %130 = tpu.matmul %129, %128, %cst_89 {dimension_numbers = #tpu.dot_dimension_numbers<[1], [0], [0], [1], [0, 0, 1, 1], [], []>} : vector<16x8xbf16>, vector<8x384xbf16>, vector<16x384xf32> -> vector<16x384xf32>
    %131 = arith.addf %127, %130 : vector<16x384xf32>
    %c0_90 = arith.constant 0 : index
    %c0_91 = arith.constant 0 : index
    %132 = vector.load %arg8[%c0_90, %c0_91] : memref<16x1xf32, #tpu.memory_space<vmem>>, vector<16x1xf32>
    %133 = vector.broadcast %132 : vector<16x1xf32> to vector<16x384xf32>
    %134 = arith.addf %131, %133 : vector<16x384xf32>
    %cst_92 = arith.constant 0.000000e+00 : f32
    %135 = vector.broadcast %cst_92 : f32 to vector<16x384xf32>
    %136 = arith.maximumf %134, %135 : vector<16x384xf32>
    %c0_93 = arith.constant 0 : index
    %c0_94 = arith.constant 0 : index
    %c0_95 = arith.constant 0 : index
    %137 = vector.load %arg9[%c0_93, %c0_94, %c0_95] : memref<1x16x384xf32, #tpu.memory_space<vmem>>, vector<1x16x384xf32>
    %138 = vector.shape_cast %137 : vector<1x16x384xf32> to vector<16x384xf32>
    %139 = vector.shape_cast %136 : vector<16x384xf32> to vector<1x16x384xf32>
    tpu.vector_store %arg9[%c0_93, %c0_94, %c0_95], %139 {strides = array<i32>} : memref<1x16x384xf32, #tpu.memory_space<vmem>>, vector<1x16x384xf32>,
    return
  }
  func.func @transform_0(%arg0: i32) -> (i32, i32, i32) {
    %c0_i32 = arith.constant 0 : i32
    %c0_i32_0 = arith.constant 0 : i32
    %c0_i32_1 = arith.constant 0 : i32
    return %arg0, %c0_i32, %c0_i32_0 : i32, i32, i32
  }
  func.func @transform_1(%arg0: i32) -> (i32, i32) {
    %c0_i32 = arith.constant 0 : i32
    %c0_i32_0 = arith.constant 0 : i32
    %c0_i32_1 = arith.constant 0 : i32
    return %c0_i32, %c0_i32_0 : i32, i32
  }
  func.func @transform_2(%arg0: i32) -> (i32, i32) {
    %c0_i32 = arith.constant 0 : i32
    %c0_i32_0 = arith.constant 0 : i32
    %c0_i32_1 = arith.constant 0 : i32
    return %c0_i32, %c0_i32_0 : i32, i32
  }
  func.func @transform_3(%arg0: i32) -> (i32, i32) {
    %c0_i32 = arith.constant 0 : i32
    %c0_i32_0 = arith.constant 0 : i32
    %c0_i32_1 = arith.constant 0 : i32
    return %c0_i32, %c0_i32_0 : i32, i32
  }
  func.func @transform_4(%arg0: i32) -> (i32, i32) {
    %c0_i32 = arith.constant 0 : i32
    %c0_i32_0 = arith.constant 0 : i32
    %c0_i32_1 = arith.constant 0 : i32
    return %c0_i32, %c0_i32_0 : i32, i32
  }
  func.func @transform_5(%arg0: i32) -> (i32, i32) {
    %c0_i32 = arith.constant 0 : i32
    %c0_i32_0 = arith.constant 0 : i32
    %c0_i32_1 = arith.constant 0 : i32
    return %c0_i32, %c0_i32_0 : i32, i32
  }
  func.func @transform_6(%arg0: i32) -> (i32, i32) {
    %c0_i32 = arith.constant 0 : i32
    %c0_i32_0 = arith.constant 0 : i32
    %c0_i32_1 = arith.constant 0 : i32
    return %c0_i32, %c0_i32_0 : i32, i32
  }
  func.func @transform_7(%arg0: i32) -> (i32, i32) {
    %c0_i32 = arith.constant 0 : i32
    %c0_i32_0 = arith.constant 0 : i32
    %c0_i32_1 = arith.constant 0 : i32
    return %c0_i32, %c0_i32_0 : i32, i32
  }
  func.func @transform_8(%arg0: i32) -> (i32, i32, i32) {
    %c0_i32 = arith.constant 0 : i32
    %c0_i32_0 = arith.constant 0 : i32
    %c0_i32_1 = arith.constant 0 : i32
    return %arg0, %c0_i32, %c0_i32_0 : i32, i32, i32
  }
}

</mosaic_0001>

<llo_original>
// kernel: model_forward.2
$region0: #{model_forward.2}
  #allocation0 [shape = 'u32[]', space=smem, size = 0x4, offset = 0x4, fixed_abs, tag = 'smem constant byte address 0x4 - core index']
  #allocation1 [shape = 'u32[144,128]{1,0:T(1,128)}', space=vmem, size = 0x12000, scoped, tag = 'internal scratch']
  #allocation2 [shape = 'bf16[216,1792]{1,0:T(8,128)(2,1)}', space=vmem, size = 0xbd000, scoped, tag = 'scratch operand']
  %s0 = inlined_call_operand.vmem [shape: bf16[2,8,2176], index: 0, kind: input, shape index: {}]
  %s1 = inlined_call_operand.vmem [shape: bf16[8,216], index: 1, kind: input, shape index: {}]
  %s2 = inlined_call_operand.vmem [shape: f32[8,1], index: 2, kind: input, shape index: {}]
  %s3 = inlined_call_operand.vmem [shape: bf16[8,216], index: 3, kind: input, shape index: {}]
  %s4 = inlined_call_operand.vmem [shape: f32[8,1], index: 4, kind: input, shape index: {}]
  %s5 = inlined_call_operand.vmem [shape: f32[1,1792], index: 5, kind: input, shape index: {}]
  %s6 = inlined_call_operand.vmem [shape: f32[2,8,1408], index: 6, kind: output, shape index: {}]
  %s7 = sld [smem:[#allocation0]]
  $region57: #{model_forward.2} parent=0
    _
  %s9 = ssub.s32 1, %s7
  %s10 = scalar_select 0, %s9, %s7
  loop: start=0, step=1, limit=4
  $region2: #{model_forward.2} parent=0 // loop_pre_header
    _
  $region3: #{model_forward.2} parent=0 // loop_header
    %s12 = sphi 0, %s16
    %p13 = scmp.ge.s32.totalorder %s12, 4
    %s22 = sphi 0, %s24
    %s25 = sphi 0, %s22
    %s26 = sphi 0, %s25
    %s42 = sphi 0, %s26
    %s46 = sphi 0, %s46
    %s48 = sphi 0, %s46
    %s49 = sphi 0, %s48
    %s63 = sphi 0, %s49
    %s67 = sphi 0, %s67
    %s69 = sphi 0, %s67
    %s70 = sphi 0, %s69
    %s84 = sphi 0, %s70
    %s88 = sphi 0, %s88
    %s90 = sphi 0, %s88
    %s91 = sphi 0, %s90
    %s105 = sphi 0, %s91
    %s109 = sphi 0, %s109
    %s111 = sphi 0, %s109
    %s112 = sphi 0, %s111
    %s126 = sphi 0, %s112
    %s130 = sphi 0, %s130
    %s132 = sphi 0, %s130
    %s133 = sphi 0, %s132
    %s147 = sphi 0, %s133
    %s153 = sphi 0, %s155
    %s156 = sphi 0, %s153
    %s157 = sphi 0, %s156
    %s173 = sphi 0, %s157
  $region4: #{model_forward.2} parent=0 // loop_header_branch
    %15 = sbr.rel (%p13) target = $region8
  $region5: #{model_forward.2} parent=0 // loop_body
    %s17 = ssub.s32 %s12, 1
    %s18 = ssub.s32 %s12, 2
    %s19 = sadd.s32 %s12, 1
    %s20 = ssub.s32 %s12, %s19
    %p21 = scmp.eq.s32.totalorder %s20, 0
    %s23 = sadd.s32 %s22, 1
    %s24 = scalar_select %p21, %s22, %s23
    %p27 = pneg %p21
    %p28 = scmp.eq.s32.totalorder %s12, 1
    %p29 = por %p27, %p28
    %p30 = scmp.ne.s32.totalorder %s22, %s25
    %p31 = scmp.eq.s32.totalorder %s12, 0
    %p32 = por %p30, %p31
    %p33 = scmp.ne.s32.totalorder %s22, %s25
    %p34 = scmp.eq.s32.totalorder %s17, 1
    %p35 = por %p33, %p34
    %p36 = scmp.ne.s32.totalorder %s25, %s26
    %p37 = scmp.eq.s32.totalorder %s17, 0
    %p38 = por %p36, %p37
    %p39 = scmp.ne.s32.totalorder %s25, %s26
    %p40 = scmp.eq.s32.totalorder %s18, 1
    %p41 = por %p39, %p40
    %p43 = scmp.ne.s32.totalorder %s26, %s42
    %p44 = scmp.eq.s32.totalorder %s18, 0
    %p45 = por %p43, %p44
    %s47 = sadd.s32 %s46, 1
    %p50 = scmp.eq.s32.totalorder %s12, 1
    %p51 = scmp.ne.s32.totalorder %s46, %s48
    %p52 = scmp.eq.s32.totalorder %s12, 0
    %p53 = por %p51, %p52
    %p54 = scmp.ne.s32.totalorder %s46, %s48
    %p55 = scmp.eq.s32.totalorder %s17, 1
    %p56 = por %p54, %p55
    %p57 = scmp.ne.s32.totalorder %s48, %s49
    %p58 = scmp.eq.s32.totalorder %s17, 0
    %p59 = por %p57, %p58
    %p60 = scmp.ne.s32.totalorder %s48, %s49
    %p61 = scmp.eq.s32.totalorder %s18, 1
    %p62 = por %p60, %p61
    %p64 = scmp.ne.s32.totalorder %s49, %s63
    %p65 = scmp.eq.s32.totalorder %s18, 0
    %p66 = por %p64, %p65
    %s68 = sadd.s32 %s67, 1
    %p71 = scmp.eq.s32.totalorder %s12, 1
    %p72 = scmp.ne.s32.totalorder %s67, %s69
    %p73 = scmp.eq.s32.totalorder %s12, 0
    %p74 = por %p72, %p73
    %p75 = scmp.ne.s32.totalorder %s67, %s69
    %p76 = scmp.eq.s32.totalorder %s17, 1
    %p77 = por %p75, %p76
    %p78 = scmp.ne.s32.totalorder %s69, %s70
    %p79 = scmp.eq.s32.totalorder %s17, 0
    %p80 = por %p78, %p79
    %p81 = scmp.ne.s32.totalorder %s69, %s70
    %p82 = scmp.eq.s32.totalorder %s18, 1
    %p83 = por %p81, %p82
    %p85 = scmp.ne.s32.totalorder %s70, %s84
    %p86 = scmp.eq.s32.totalorder %s18, 0
    %p87 = por %p85, %p86
    %s89 = sadd.s32 %s88, 1
    %p92 = scmp.eq.s32.totalorder %s12, 1
    %p93 = scmp.ne.s32.totalorder %s88, %s90
    %p94 = scmp.eq.s32.totalorder %s12, 0
    %p95 = por %p93, %p94
    %p96 = scmp.ne.s32.totalorder %s88, %s90
    %p97 = scmp.eq.s32.totalorder %s17, 1
    %p98 = por %p96, %p97
    %p99 = scmp.ne.s32.totalorder %s90, %s91
    %p100 = scmp.eq.s32.totalorder %s17, 0
    %p101 = por %p99, %p100
    %p102 = scmp.ne.s32.totalorder %s90, %s91
    %p103 = scmp.eq.s32.totalorder %s18, 1
    %p104 = por %p102, %p103
    %p106 = scmp.ne.s32.totalorder %s91, %s105
    %p107 = scmp.eq.s32.totalorder %s18, 0
    %p108 = por %p106, %p107
    %s110 = sadd.s32 %s109, 1
    %p113 = scmp.eq.s32.totalorder %s12, 1
    %p114 = scmp.ne.s32.totalorder %s109, %s111
    %p115 = scmp.eq.s32.totalorder %s12, 0
    %p116 = por %p114, %p115
    %p117 = scmp.ne.s32.totalorder %s109, %s111
    %p118 = scmp.eq.s32.totalorder %s17, 1
    %p119 = por %p117, %p118
    %p120 = scmp.ne.s32.totalorder %s111, %s112
    %p121 = scmp.eq.s32.totalorder %s17, 0
    %p122 = por %p120, %p121
    %p123 = scmp.ne.s32.totalorder %s111, %s112
    %p124 = scmp.eq.s32.totalorder %s18, 1
    %p125 = por %p123, %p124
    %p127 = scmp.ne.s32.totalorder %s112, %s126
    %p128 = scmp.eq.s32.totalorder %s18, 0
    %p129 = por %p127, %p128
    %s131 = sadd.s32 %s130, 1
    %p134 = scmp.eq.s32.totalorder %s12, 1
    %p135 = scmp.ne.s32.totalorder %s130, %s132
    %p136 = scmp.eq.s32.totalorder %s12, 0
    %p137 = por %p135, %p136
    %p138 = scmp.ne.s32.totalorder %s130, %s132
    %p139 = scmp.eq.s32.totalorder %s17, 1
    %p140 = por %p138, %p139
    %p141 = scmp.ne.s32.totalorder %s132, %s133
    %p142 = scmp.eq.s32.totalorder %s17, 0
    %p143 = por %p141, %p142
    %p144 = scmp.ne.s32.totalorder %s132, %s133
    %p145 = scmp.eq.s32.totalorder %s18, 1
    %p146 = por %p144, %p145
    %p148 = scmp.ne.s32.totalorder %s133, %s147
    %p149 = scmp.eq.s32.totalorder %s18, 0
    %p150 = por %p148, %p149
    %s151 = ssub.s32 %s12, %s19
    %p152 = scmp.eq.s32.totalorder %s151, 0
    %s154 = sadd.s32 %s153, 1
    %s155 = scalar_select %p152, %s153, %s154
    %p158 = pneg %p152
    %p159 = scmp.eq.s32.totalorder %s12, 1
    %p160 = por %p158, %p159
    %p161 = scmp.ne.s32.totalorder %s153, %s156
    %p162 = scmp.eq.s32.totalorder %s12, 0
    %p163 = por %p161, %p162
    %p164 = scmp.ne.s32.totalorder %s153, %s156
    %p165 = scmp.eq.s32.totalorder %s17, 1
    %p166 = por %p164, %p165
    %p167 = scmp.ne.s32.totalorder %s156, %s157
    %p168 = scmp.eq.s32.totalorder %s17, 0
    %p169 = por %p167, %p168
    %p170 = scmp.ne.s32.totalorder %s156, %s157
    %p171 = scmp.eq.s32.totalorder %s18, 1
    %p172 = por %p170, %p171
    %p174 = scmp.ne.s32.totalorder %s157, %s173
    %p175 = scmp.eq.s32.totalorder %s18, 0
    %p176 = por %p174, %p175
    %p177 = scmp.le.s32.totalorder 1, %s12
    %p178 = scmp.lt.s32.totalorder %s12, 3
    %p179 = pnand %p177, %p178
    %p180 = pneg %p179
    // Predicated region
    $region9: #{model_forward.2} parent=5 // pred_check
      _
    $region10: #{model_forward.2} parent=5 // pred_check_branch
      %182 = sbr.rel (%p179) target = $region12
    $region11: #{model_forward.2} parent=5 // pred_region
      %s183 = ssub.s32 %s12, 1
      // Predicated region
      $region13: #{model_forward.2} parent=11 // pred_check
        %p184 = pneg %p59
      $region14: #{model_forward.2} parent=11 // pred_check_branch
        %186 = sbr.rel (%p184) target = $region16
      $region15: #{model_forward.2} parent=11 // pred_region
        _
      $region16: #{model_forward.2} parent=11 // pred_fallthru
        _
      // Predicated region
      $region17: #{model_forward.2} parent=11 // pred_check
        %p187 = pneg %p80
      $region18: #{model_forward.2} parent=11 // pred_check_branch
        %189 = sbr.rel (%p187) target = $region20
      $region19: #{model_forward.2} parent=11 // pred_region
        _
      $region20: #{model_forward.2} parent=11 // pred_fallthru
        _
      // Predicated region
      $region21: #{model_forward.2} parent=11 // pred_check
        %p190 = pneg %p101
      $region22: #{model_forward.2} parent=11 // pred_check_branch
        %192 = sbr.rel (%p190) target = $region24
      $region23: #{model_forward.2} parent=11 // pred_region
        _
      $region24: #{model_forward.2} parent=11 // pred_fallthru
        _
      // Predicated region
      $region25: #{model_forward.2} parent=11 // pred_check
        %p193 = pneg %p122
      $region26: #{model_forward.2} parent=11 // pred_check_branch
        %195 = sbr.rel (%p193) target = $region28
      $region27: #{model_forward.2} parent=11 // pred_region
        _
      $region28: #{model_forward.2} parent=11 // pred_fallthru
        _
      // Predicated region
      $region29: #{model_forward.2} parent=11 // pred_check
        %p196 = pneg %p143
      $region30: #{model_forward.2} parent=11 // pred_check_branch
        %198 = sbr.rel (%p196) target = $region32
      $region31: #{model_forward.2} parent=11 // pred_region
        _
      $region32: #{model_forward.2} parent=11 // pred_fallthru
        _
    $region12: #{model_forward.2} parent=5 // pred_fallthru
      _
    %p199 = scmp.lt.s32.totalorder %s12, 2
    // Predicated region
    $region33: #{model_forward.2} parent=5 // pred_check
      %p200 = pneg %p199
    $region34: #{model_forward.2} parent=5 // pred_check_branch
      %202 = sbr.rel (%p200) target = $region36
    $region35: #{model_forward.2} parent=5 // pred_region
      // Predicated region
      $region37: #{model_forward.2} parent=35 // pred_check
        %p203 = pneg %p32
      $region38: #{model_forward.2} parent=35 // pred_check_branch
        %205 = sbr.rel (%p203) target = $region40
      $region39: #{model_forward.2} parent=35 // pred_region
        %p206 = scmp.lt.s32.totalorder %s12, 1
        %s207 = scalar_select %p206, %s12, 1
        %s208 = smul.addr %s207, 17
        %s209 = smul.addr %s208, 4
        %s210 = scalar_lea.vmem %s0, %s209
      $region40: #{model_forward.2} parent=35 // pred_fallthru
        _
    $region36: #{model_forward.2} parent=5 // pred_fallthru
      _
    %p211 = scmp.le.s32.totalorder 1, %s12
    %p212 = scmp.lt.s32.totalorder %s12, 3
    %p213 = pnand %p211, %p212
    %p214 = pneg %p213
    // Predicated region
    $region41: #{model_forward.2} parent=5 // pred_check
      _
    $region42: #{model_forward.2} parent=5 // pred_check_branch
      %216 = sbr.rel (%p213) target = $region44
    $region43: #{model_forward.2} parent=5 // pred_region
      %s217 = ssub.s32 %s12, 1
      %p218 = scmp.lt.s32.totalorder %s17, 1
      %s219 = scalar_select %p218, %s17, 1
      %s220 = smul.addr %s219, 17
      %s221 = smul.addr %s220, 4
      %s222 = scalar_lea.vmem %s0, %s221
      %p223 = pneg %p38
      %p224 = pneg %p35
      %p225 = pneg %p59
      %p226 = pneg %p56
      %p227 = pneg %p80
      %p228 = pneg %p77
      %p229 = pneg %p101
      %p230 = pneg %p98
      %p231 = pneg %p122
      %p232 = pneg %p119
      %p233 = pneg %p143
      %p234 = pneg %p140
      %p235 = pneg %p169
      %p236 = pneg %p166
      %p237 = scmp.lt.s32.totalorder %s17, 1
      %s238 = scalar_select %p237, %s17, 1
      %s239 = smul.addr %s238, 11
      %s240 = smul.addr %s239, 8
      %s241 = scalar_lea.vmem %s6, %s240
      %p242 = scmp.lt.s32.totalorder %s17, 1
      %s243 = scalar_select %p242, %s17, 1
      %s244 = smul.addr %s243, 17
      %s245 = smul.addr %s244, 4
      %s246 = scalar_lea.vmem %s0, %s245
      %p247 = scmp.lt.s32.totalorder %s17, 1
      %s248 = scalar_select %p247, %s17, 1
      %s249 = smul.addr %s248, 11
      %s250 = smul.addr %s249, 8
      %s251 = scalar_lea.vmem %s6, %s250
      %v253 = vld [vmem:[%s246] sm:$0xff]
      %v254 = vld [vmem:[%s246 + $0x8] sm:$0xff]
      %v255 = vld [vmem:[%s246 + $0x10] sm:$0xff]
      %v256 = vld [vmem:[%s246 + $0x18] sm:$0xff]
      %v257 = vld [vmem:[%s246 + $0x20] sm:$0xff]
      %v258 = vld [vmem:[%s246 + $0x28] sm:$0xff]
      %v259 = vld [vmem:[%s246 + $0x30] sm:$0xff]
      %v260 = vld [vmem:[%s246 + $0x38] sm:$0xff]
      %v261 = vld [vmem:[%s246 + $0x40] sm:$0xf]
      %262 = vst [vmem:[#allocation2] sm:$0xff] %v253
      %263 = vst [vmem:[#allocation2 + $0x8] sm:$0xff] %v254
      %264 = vst [vmem:[#allocation2 + $0x10] sm:$0xff] %v255
      %265 = vst [vmem:[#allocation2 + $0x18] sm:$0xff] %v256
      %266 = vst [vmem:[#allocation2 + $0x20] sm:$0xff] %v257
      %267 = vst [vmem:[#allocation2 + $0x28] sm:$0xff] %v258
      %268 = vst [vmem:[#allocation2 + $0x30] sm:$0xff] %v259
      %277 = vrot.lane.b32.xlu0 %v253, 127
      %v278 = vpop.permute.xlu0 %277
      %279 = vrot.lane.b32.xlu0 %v254, 127
      %v280 = vpop.permute.xlu0 %279
      %281 = vrot.lane.b32.xlu0 %v255, 127
      %v282 = vpop.permute.xlu0 %281
      %283 = vrot.lane.b32.xlu0 %v256, 127
      %v284 = vpop.permute.xlu0 %283
      %285 = vrot.lane.b32.xlu0 %v257, 127
      %v286 = vpop.permute.xlu0 %285
      %287 = vrot.lane.b32.xlu0 %v258, 127
      %v288 = vpop.permute.xlu0 %287
      %289 = vrot.lane.b32.xlu0 %v259, 127
      %v290 = vpop.permute.xlu0 %289
      %291 = vrot.lane.b32.xlu0 %v260, 127
      %v292 = vpop.permute.xlu0 %291
      %v293 = vrot.slane %v278, 4
      %v294 = vrot.slane %v280, 4
      %v295 = vrot.slane %v282, 4
      %v296 = vrot.slane %v284, 4
      %v297 = vrot.slane %v286, 4
      %v298 = vrot.slane %v288, 4
      %v299 = vrot.slane %v290, 4
      %v300 = vrot.slane %v292, 4
      %vm301 = vcmask 1043456
      %v302 = vsel %vm301, %v293, %v294
      %vm303 = vcmask 1039360
      %v304 = vsel %vm303, %v278, %v302
      %v305 = vsel %vm301, %v294, %v295
      %v306 = vsel %vm303, %v280, %v305
      %v307 = vsel %vm301, %v295, %v296
      %v308 = vsel %vm303, %v282, %v307
      %v309 = vsel %vm301, %v296, %v297
      %v310 = vsel %vm303, %v284, %v309
      %v311 = vsel %vm301, %v297, %v298
      %v312 = vsel %vm303, %v286, %v311
      %v313 = vsel %vm301, %v298, %v299
      %v314 = vsel %vm303, %v288, %v313
      %v315 = vsel %vm301, %v299, %v300
      %v316 = vsel %vm303, %v290, %v315
      %324 = vst [vmem:[#allocation2 + $0x38] sm:$0xff] %v304
      %325 = vst [vmem:[#allocation2 + $0x40] sm:$0xff] %v306
      %326 = vst [vmem:[#allocation2 + $0x48] sm:$0xff] %v308
      %327 = vst [vmem:[#allocation2 + $0x50] sm:$0xff] %v310
      %328 = vst [vmem:[#allocation2 + $0x58] sm:$0xff] %v312
      %329 = vst [vmem:[#allocation2 + $0x60] sm:$0xff] %v314
      %330 = vst [vmem:[#allocation2 + $0x68] sm:$0xff] %v316
      %331 = vrot.lane.b32.xlu0 %v253, 126
      %v332 = vpop.permute.xlu0 %331
      %333 = vrot.lane.b32.xlu0 %v254, 126
      %v334 = vpop.permute.xlu0 %333
      %335 = vrot.lane.b32.xlu0 %v255, 126
      %v336 = vpop.permute.xlu0 %335
      %337 = vrot.lane.b32.xlu0 %v256, 126
      %v338 = vpop.permute.xlu0 %337
      %339 = vrot.lane.b32.xlu0 %v257, 126
      %v340 = vpop.permute.xlu0 %339
      %341 = vrot.lane.b32.xlu0 %v258, 126
      %v342 = vpop.permute.xlu0 %341
      %343 = vrot.lane.b32.xlu0 %v259, 126
      %v344 = vpop.permute.xlu0 %343
      %345 = vrot.lane.b32.xlu0 %v260, 126
      %v346 = vpop.permute.xlu0 %345
      %v347 = vrot.slane %v332, 4
      %v348 = vrot.slane %v334, 4
      %v349 = vrot.slane %v336, 4
      %v350 = vrot.slane %v338, 4
      %v351 = vrot.slane %v340, 4
      %v352 = vrot.slane %v342, 4
      %v353 = vrot.slane %v344, 4
      %v354 = vrot.slane %v346, 4
      %v355 = vsel %vm301, %v347, %v348
      %vm356 = vcmask 1031168
      %v357 = vsel %vm356, %v332, %v355
      %v358 = vsel %vm301, %v348, %v349
      %v359 = vsel %vm356, %v334, %v358
      %v360 = vsel %vm301, %v349, %v350
      %v361 = vsel %vm356, %v336, %v360
      %v362 = vsel %vm301, %v350, %v351
      %v363 = vsel %vm356, %v338, %v362
      %v364 = vsel %vm301, %v351, %v352
      %v365 = vsel %vm356, %v340, %v364
      %v366 = vsel %vm301, %v352, %v353
      %v367 = vsel %vm356, %v342, %v366
      %v368 = vsel %vm301, %v353, %v354
      %v369 = vsel %vm356, %v344, %v368
      %377 = vst [vmem:[#allocation2 + $0x70] sm:$0xff] %v357
      %378 = vst [vmem:[#allocation2 + $0x78] sm:$0xff] %v359
      %379 = vst [vmem:[#allocation2 + $0x80] sm:$0xff] %v361
      %380 = vst [vmem:[#allocation2 + $0x88] sm:$0xff] %v363
      %381 = vst [vmem:[#allocation2 + $0x90] sm:$0xff] %v365
      %382 = vst [vmem:[#allocation2 + $0x98] sm:$0xff] %v367
      %383 = vst [vmem:[#allocation2 + $0xa0] sm:$0xff] %v369
      %384 = vrot.lane.b32.xlu0 %v253, 117
      %v385 = vpop.permute.xlu0 %384
      %386 = vrot.lane.b32.xlu0 %v254, 117
      %v387 = vpop.permute.xlu0 %386
      %388 = vrot.lane.b32.xlu0 %v255, 117
      %v389 = vpop.permute.xlu0 %388
      %390 = vrot.lane.b32.xlu0 %v256, 117
      %v391 = vpop.permute.xlu0 %390
      %392 = vrot.lane.b32.xlu0 %v257, 117
      %v393 = vpop.permute.xlu0 %392
      %394 = vrot.lane.b32.xlu0 %v258, 117
      %v395 = vpop.permute.xlu0 %394
      %396 = vrot.lane.b32.xlu0 %v259, 117
      %v397 = vpop.permute.xlu0 %396
      %398 = vrot.lane.b32.xlu0 %v260, 117
      %v399 = vpop.permute.xlu0 %398
      %v400 = vrot.slane %v385, 4
      %v401 = vrot.slane %v387, 4
      %v402 = vrot.slane %v389, 4
      %v403 = vrot.slane %v391, 4
      %v404 = vrot.slane %v393, 4
      %v405 = vrot.slane %v395, 4
      %v406 = vrot.slane %v397, 4
      %v407 = vrot.slane %v399, 4
      %v408 = vsel %vm301, %v400, %v401
      %vm409 = vcmask 957440
      %v410 = vsel %vm409, %v385, %v408
      %v411 = vsel %vm301, %v401, %v402
      %v412 = vsel %vm409, %v387, %v411
      %v413 = vsel %vm301, %v402, %v403
      %v414 = vsel %vm409, %v389, %v413
      %v415 = vsel %vm301, %v403, %v404
      %v416 = vsel %vm409, %v391, %v415
      %v417 = vsel %vm301, %v404, %v405
      %v418 = vsel %vm409, %v393, %v417
      %v419 = vsel %vm301, %v405, %v406
      %v420 = vsel %vm409, %v395, %v419
      %v421 = vsel %vm301, %v406, %v407
      %v422 = vsel %vm409, %v397, %v421
      %430 = vst [vmem:[#allocation2 + $0xa8] sm:$0xff] %v410
      %431 = vst [vmem:[#allocation2 + $0xb0] sm:$0xff] %v412
      %432 = vst [vmem:[#allocation2 + $0xb8] sm:$0xff] %v414
      %433 = vst [vmem:[#allocation2 + $0xc0] sm:$0xff] %v416
      %434 = vst [vmem:[#allocation2 + $0xc8] sm:$0xff] %v418
      %435 = vst [vmem:[#allocation2 + $0xd0] sm:$0xff] %v420
      %436 = vst [vmem:[#allocation2 + $0xd8] sm:$0xff] %v422
      %437 = vrot.lane.b32.xlu0 %v253, 116
      %v438 = vpop.permute.xlu0 %437
      %439 = vrot.lane.b32.xlu0 %v254, 116
      %v440 = vpop.permute.xlu0 %439
      %441 = vrot.lane.b32.xlu0 %v255, 116
      %v442 = vpop.permute.xlu0 %441
      %443 = vrot.lane.b32.xlu0 %v256, 116
      %v444 = vpop.permute.xlu0 %443
      %445 = vrot.lane.b32.xlu0 %v257, 116
      %v446 = vpop.permute.xlu0 %445
      %447 = vrot.lane.b32.xlu0 %v258, 116
      %v448 = vpop.permute.xlu0 %447
      %449 = vrot.lane.b32.xlu0 %v259, 116
      %v450 = vpop.permute.xlu0 %449
      %451 = vrot.lane.b32.xlu0 %v260, 116
      %v452 = vpop.permute.xlu0 %451
      %v453 = vrot.slane %v438, 4
      %v454 = vrot.slane %v440, 4
      %v455 = vrot.slane %v442, 4
      %v456 = vrot.slane %v444, 4
      %v457 = vrot.slane %v446, 4
      %v458 = vrot.slane %v448, 4
      %v459 = vrot.slane %v450, 4
      %v460 = vrot.slane %v452, 4
      %v461 = vsel %vm301, %v453, %v454
      %vm462 = vcmask 949248
      %v463 = vsel %vm462, %v438, %v461
      %v464 = vsel %vm301, %v454, %v455
      %v465 = vsel %vm462, %v440, %v464
      %v466 = vsel %vm301, %v455, %v456
      %v467 = vsel %vm462, %v442, %v466
      %v468 = vsel %vm301, %v456, %v457
      %v469 = vsel %vm462, %v444, %v468
      %v470 = vsel %vm301, %v457, %v458
      %v471 = vsel %vm462, %v446, %v470
      %v472 = vsel %vm301, %v458, %v459
      %v473 = vsel %vm462, %v448, %v472
      %v474 = vsel %vm301, %v459, %v460
      %v475 = vsel %vm462, %v450, %v474
      %483 = vst [vmem:[#allocation2 + $0xe0] sm:$0xff] %v463
      %484 = vst [vmem:[#allocation2 + $0xe8] sm:$0xff] %v465
      %485 = vst [vmem:[#allocation2 + $0xf0] sm:$0xff] %v467
      %486 = vst [vmem:[#allocation2 + $0xf8] sm:$0xff] %v469
      %487 = vst [vmem:[#allocation2 + $0x100] sm:$0xff] %v471
      %488 = vst [vmem:[#allocation2 + $0x108] sm:$0xff] %v473
      %489 = vst [vmem:[#allocation2 + $0x110] sm:$0xff] %v475
      %490 = vrot.lane.b32.xlu0 %v253, 115
      %v491 = vpop.permute.xlu0 %490
      %492 = vrot.lane.b32.xlu0 %v254, 115
      %v493 = vpop.permute.xlu0 %492
      %494 = vrot.lane.b32.xlu0 %v255, 115
      %v495 = vpop.permute.xlu0 %494
      %496 = vrot.lane.b32.xlu0 %v256, 115
      %v497 = vpop.permute.xlu0 %496
      %498 = vrot.lane.b32.xlu0 %v257, 115
      %v499 = vpop.permute.xlu0 %498
      %500 = vrot.lane.b32.xlu0 %v258, 115
      %v501 = vpop.permute.xlu0 %500
      %502 = vrot.lane.b32.xlu0 %v259, 115
      %v503 = vpop.permute.xlu0 %502
      %504 = vrot.lane.b32.xlu0 %v260, 115
      %v505 = vpop.permute.xlu0 %504
      %v506 = vrot.slane %v491, 4
      %v507 = vrot.slane %v493, 4
      %v508 = vrot.slane %v495, 4
      %v509 = vrot.slane %v497, 4
      %v510 = vrot.slane %v499, 4
      %v511 = vrot.slane %v501, 4
      %v512 = vrot.slane %v503, 4
      %v513 = vrot.slane %v505, 4
      %v514 = vsel %vm301, %v506, %v507
      %vm515 = vcmask 941056
      %v516 = vsel %vm515, %v491, %v514
      %v517 = vsel %vm301, %v507, %v508
      %v518 = vsel %vm515, %v493, %v517
      %v519 = vsel %vm301, %v508, %v509
      %v520 = vsel %vm515, %v495, %v519
      %v521 = vsel %vm301, %v509, %v510
      %v522 = vsel %vm515, %v497, %v521
      %v523 = vsel %vm301, %v510, %v511
      %v524 = vsel %vm515, %v499, %v523
      %v525 = vsel %vm301, %v511, %v512
      %v526 = vsel %vm515, %v501, %v525
      %v527 = vsel %vm301, %v512, %v513
      %v528 = vsel %vm515, %v503, %v527
      %536 = vst [vmem:[#allocation2 + $0x118] sm:$0xff] %v516
      %537 = vst [vmem:[#allocation2 + $0x120] sm:$0xff] %v518
      %538 = vst [vmem:[#allocation2 + $0x128] sm:$0xff] %v520
      %539 = vst [vmem:[#allocation2 + $0x130] sm:$0xff] %v522
      %540 = vst [vmem:[#allocation2 + $0x138] sm:$0xff] %v524
      %541 = vst [vmem:[#allocation2 + $0x140] sm:$0xff] %v526
      %542 = vst [vmem:[#allocation2 + $0x148] sm:$0xff] %v528
      %543 = vrot.lane.b32.xlu0 %v253, 106
      %v544 = vpop.permute.xlu0 %543
      %545 = vrot.lane.b32.xlu0 %v254, 106
      %v546 = vpop.permute.xlu0 %545
      %547 = vrot.lane.b32.xlu0 %v255, 106
      %v548 = vpop.permute.xlu0 %547
      %549 = vrot.lane.b32.xlu0 %v256, 106
      %v550 = vpop.permute.xlu0 %549
      %551 = vrot.lane.b32.xlu0 %v257, 106
      %v552 = vpop.permute.xlu0 %551
      %553 = vrot.lane.b32.xlu0 %v258, 106
      %v554 = vpop.permute.xlu0 %553
      %555 = vrot.lane.b32.xlu0 %v259, 106
      %v556 = vpop.permute.xlu0 %555
      %557 = vrot.lane.b32.xlu0 %v260, 106
      %v558 = vpop.permute.xlu0 %557
      %v559 = vrot.slane %v544, 4
      %v560 = vrot.slane %v546, 4
      %v561 = vrot.slane %v548, 4
      %v562 = vrot.slane %v550, 4
      %v563 = vrot.slane %v552, 4
      %v564 = vrot.slane %v554, 4
      %v565 = vrot.slane %v556, 4
      %v566 = vrot.slane %v558, 4
      %v567 = vsel %vm301, %v559, %v560
      %vm568 = vcmask 867328
      %v569 = vsel %vm568, %v544, %v567
      %v570 = vsel %vm301, %v560, %v561
      %v571 = vsel %vm568, %v546, %v570
      %v572 = vsel %vm301, %v561, %v562
      %v573 = vsel %vm568, %v548, %v572
      %v574 = vsel %vm301, %v562, %v563
      %v575 = vsel %vm568, %v550, %v574
      %v576 = vsel %vm301, %v563, %v564
      %v577 = vsel %vm568, %v552, %v576
      %v578 = vsel %vm301, %v564, %v565
      %v579 = vsel %vm568, %v554, %v578
      %v580 = vsel %vm301, %v565, %v566
      %v581 = vsel %vm568, %v556, %v580
      %589 = vst [vmem:[#allocation2 + $0x150] sm:$0xff] %v569
      %590 = vst [vmem:[#allocation2 + $0x158] sm:$0xff] %v571
      %591 = vst [vmem:[#allocation2 + $0x160] sm:$0xff] %v573
      %592 = vst [vmem:[#allocation2 + $0x168] sm:$0xff] %v575
      %593 = vst [vmem:[#allocation2 + $0x170] sm:$0xff] %v577
      %594 = vst [vmem:[#allocation2 + $0x178] sm:$0xff] %v579
      %595 = vst [vmem:[#allocation2 + $0x180] sm:$0xff] %v581
      %596 = vrot.lane.b32.xlu0 %v253, 105
      %v597 = vpop.permute.xlu0 %596
      %598 = vrot.lane.b32.xlu0 %v254, 105
      %v599 = vpop.permute.xlu0 %598
      %600 = vrot.lane.b32.xlu0 %v255, 105
      %v601 = vpop.permute.xlu0 %600
      %602 = vrot.lane.b32.xlu0 %v256, 105
      %v603 = vpop.permute.xlu0 %602
      %604 = vrot.lane.b32.xlu0 %v257, 105
      %v605 = vpop.permute.xlu0 %604
      %606 = vrot.lane.b32.xlu0 %v258, 105
      %v607 = vpop.permute.xlu0 %606
      %608 = vrot.lane.b32.xlu0 %v259, 105
      %v609 = vpop.permute.xlu0 %608
      %610 = vrot.lane.b32.xlu0 %v260, 105
      %v611 = vpop.permute.xlu0 %610
      %v612 = vrot.slane %v597, 4
      %v613 = vrot.slane %v599, 4
      %v614 = vrot.slane %v601, 4
      %v615 = vrot.slane %v603, 4
      %v616 = vrot.slane %v605, 4
      %v617 = vrot.slane %v607, 4
      %v618 = vrot.slane %v609, 4
      %v619 = vrot.slane %v611, 4
      %v620 = vsel %vm301, %v612, %v613
      %vm621 = vcmask 859136
      %v622 = vsel %vm621, %v597, %v620
      %v623 = vsel %vm301, %v613, %v614
      %v624 = vsel %vm621, %v599, %v623
      %v625 = vsel %vm301, %v614, %v615
      %v626 = vsel %vm621, %v601, %v625
      %v627 = vsel %vm301, %v615, %v616
      %v628 = vsel %vm621, %v603, %v627
      %v629 = vsel %vm301, %v616, %v617
      %v630 = vsel %vm621, %v605, %v629
      %v631 = vsel %vm301, %v617, %v618
      %v632 = vsel %vm621, %v607, %v631
      %v633 = vsel %vm301, %v618, %v619
      %v634 = vsel %vm621, %v609, %v633
      %642 = vst [vmem:[#allocation2 + $0x188] sm:$0xff] %v622
      %643 = vst [vmem:[#allocation2 + $0x190] sm:$0xff] %v624
      %644 = vst [vmem:[#allocation2 + $0x198] sm:$0xff] %v626
      %645 = vst [vmem:[#allocation2 + $0x1a0] sm:$0xff] %v628
      %646 = vst [vmem:[#allocation2 + $0x1a8] sm:$0xff] %v630
      %647 = vst [vmem:[#allocation2 + $0x1b0] sm:$0xff] %v632
      %648 = vst [vmem:[#allocation2 + $0x1b8] sm:$0xff] %v634
      %649 = vrot.lane.b32.xlu0 %v253, 104
      %v650 = vpop.permute.xlu0 %649
      %651 = vrot.lane.b32.xlu0 %v254, 104
      %v652 = vpop.permute.xlu0 %651
      %653 = vrot.lane.b32.xlu0 %v255, 104
      %v654 = vpop.permute.xlu0 %653
      %655 = vrot.lane.b32.xlu0 %v256, 104
      %v656 = vpop.permute.xlu0 %655
      %657 = vrot.lane.b32.xlu0 %v257, 104
      %v658 = vpop.permute.xlu0 %657
      %659 = vrot.lane.b32.xlu0 %v258, 104
      %v660 = vpop.permute.xlu0 %659
      %661 = vrot.lane.b32.xlu0 %v259, 104
      %v662 = vpop.permute.xlu0 %661
      %663 = vrot.lane.b32.xlu0 %v260, 104
      %v664 = vpop.permute.xlu0 %663
      %v665 = vrot.slane %v650, 4
      %v666 = vrot.slane %v652, 4
      %v667 = vrot.slane %v654, 4
      %v668 = vrot.slane %v656, 4
      %v669 = vrot.slane %v658, 4
      %v670 = vrot.slane %v660, 4
      %v671 = vrot.slane %v662, 4
      %v672 = vrot.slane %v664, 4
      %v673 = vsel %vm301, %v665, %v666
      %vm674 = vcmask 850944
      %v675 = vsel %vm674, %v650, %v673
      %v676 = vsel %vm301, %v666, %v667
      %v677 = vsel %vm674, %v652, %v676
      %v678 = vsel %vm301, %v667, %v668
      %v679 = vsel %vm674, %v654, %v678
      %v680 = vsel %vm301, %v668, %v669
      %v681 = vsel %vm674, %v656, %v680
      %v682 = vsel %vm301, %v669, %v670
      %v683 = vsel %vm674, %v658, %v682
      %v684 = vsel %vm301, %v670, %v671
      %v685 = vsel %vm674, %v660, %v684
      %v686 = vsel %vm301, %v671, %v672
      %v687 = vsel %vm674, %v662, %v686
      %695 = vst [vmem:[#allocation2 + $0x1c0] sm:$0xff] %v675
      %696 = vst [vmem:[#allocation2 + $0x1c8] sm:$0xff] %v677
      %697 = vst [vmem:[#allocation2 + $0x1d0] sm:$0xff] %v679
      %698 = vst [vmem:[#allocation2 + $0x1d8] sm:$0xff] %v681
      %699 = vst [vmem:[#allocation2 + $0x1e0] sm:$0xff] %v683
      %700 = vst [vmem:[#allocation2 + $0x1e8] sm:$0xff] %v685
      %701 = vst [vmem:[#allocation2 + $0x1f0] sm:$0xff] %v687
      %702 = vrot.lane.b32.xlu0 %v253, 7
      %v703 = vpop.permute.xlu0 %702
      %704 = vrot.lane.b32.xlu0 %v254, 7
      %v705 = vpop.permute.xlu0 %704
      %706 = vrot.lane.b32.xlu0 %v255, 7
      %v707 = vpop.permute.xlu0 %706
      %708 = vrot.lane.b32.xlu0 %v256, 7
      %v709 = vpop.permute.xlu0 %708
      %710 = vrot.lane.b32.xlu0 %v257, 7
      %v711 = vpop.permute.xlu0 %710
      %712 = vrot.lane.b32.xlu0 %v258, 7
      %v713 = vpop.permute.xlu0 %712
      %714 = vrot.lane.b32.xlu0 %v259, 7
      %v715 = vpop.permute.xlu0 %714
      %716 = vrot.lane.b32.xlu0 %v260, 7
      %v717 = vpop.permute.xlu0 %716
      %v718 = vrot.slane %v703, 4
      %v719 = vrot.slane %v705, 4
      %v720 = vrot.slane %v707, 4
      %v721 = vrot.slane %v709, 4
      %v722 = vrot.slane %v711, 4
      %v723 = vrot.slane %v713, 4
      %v724 = vrot.slane %v715, 4
      %v725 = vrot.slane %v717, 4
      %v726 = vsel %vm301, %v718, %v719
      %vm727 = vcmask 56320
      %v728 = vsel %vm727, %v703, %v726
      %v729 = vsel %vm301, %v719, %v720
      %v730 = vsel %vm727, %v705, %v729
      %v731 = vsel %vm301, %v720, %v721
      %v732 = vsel %vm727, %v707, %v731
      %v733 = vsel %vm301, %v721, %v722
      %v734 = vsel %vm727, %v709, %v733
      %v735 = vsel %vm301, %v722, %v723
      %v736 = vsel %vm727, %v711, %v735
      %v737 = vsel %vm301, %v723, %v724
      %v738 = vsel %vm727, %v713, %v737
      %v739 = vsel %vm301, %v724, %v725
      %v740 = vsel %vm727, %v715, %v739
      %748 = vst [vmem:[#allocation2 + $0x1f8] sm:$0xff] %v728
      %749 = vst [vmem:[#allocation2 + $0x200] sm:$0xff] %v730
      %750 = vst [vmem:[#allocation2 + $0x208] sm:$0xff] %v732
      %751 = vst [vmem:[#allocation2 + $0x210] sm:$0xff] %v734
      %752 = vst [vmem:[#allocation2 + $0x218] sm:$0xff] %v736
      %753 = vst [vmem:[#allocation2 + $0x220] sm:$0xff] %v738
      %754 = vst [vmem:[#allocation2 + $0x228] sm:$0xff] %v740
      %755 = vrot.lane.b32.xlu0 %v253, 6
      %v756 = vpop.permute.xlu0 %755
      %757 = vrot.lane.b32.xlu0 %v254, 6
      %v758 = vpop.permute.xlu0 %757
      %759 = vrot.lane.b32.xlu0 %v255, 6
      %v760 = vpop.permute.xlu0 %759
      %761 = vrot.lane.b32.xlu0 %v256, 6
      %v762 = vpop.permute.xlu0 %761
      %763 = vrot.lane.b32.xlu0 %v257, 6
      %v764 = vpop.permute.xlu0 %763
      %765 = vrot.lane.b32.xlu0 %v258, 6
      %v766 = vpop.permute.xlu0 %765
      %767 = vrot.lane.b32.xlu0 %v259, 6
      %v768 = vpop.permute.xlu0 %767
      %769 = vrot.lane.b32.xlu0 %v260, 6
      %v770 = vpop.permute.xlu0 %769
      %v771 = vrot.slane %v756, 4
      %v772 = vrot.slane %v758, 4
      %v773 = vrot.slane %v760, 4
      %v774 = vrot.slane %v762, 4
      %v775 = vrot.slane %v764, 4
      %v776 = vrot.slane %v766, 4
      %v777 = vrot.slane %v768, 4
      %v778 = vrot.slane %v770, 4
      %v779 = vsel %vm301, %v771, %v772
      %vm780 = vcmask 48128
      %v781 = vsel %vm780, %v756, %v779
      %v782 = vsel %vm301, %v772, %v773
      %v783 = vsel %vm780, %v758, %v782
      %v784 = vsel %vm301, %v773, %v774
      %v785 = vsel %vm780, %v760, %v784
      %v786 = vsel %vm301, %v774, %v775
      %v787 = vsel %vm780, %v762, %v786
      %v788 = vsel %vm301, %v775, %v776
      %v789 = vsel %vm780, %v764, %v788
      %v790 = vsel %vm301, %v776, %v777
      %v791 = vsel %vm780, %v766, %v790
      %v792 = vsel %vm301, %v777, %v778
      %v793 = vsel %vm780, %v768, %v792
      %801 = vst [vmem:[#allocation2 + $0x230] sm:$0xff] %v781
      %802 = vst [vmem:[#allocation2 + $0x238] sm:$0xff] %v783
      %803 = vst [vmem:[#allocation2 + $0x240] sm:$0xff] %v785
      %804 = vst [vmem:[#allocation2 + $0x248] sm:$0xff] %v787
      %805 = vst [vmem:[#allocation2 + $0x250] sm:$0xff] %v789
      %806 = vst [vmem:[#allocation2 + $0x258] sm:$0xff] %v791
      %807 = vst [vmem:[#allocation2 + $0x260] sm:$0xff] %v793
      %808 = vrot.lane.b32.xlu0 %v253, 5
      %v809 = vpop.permute.xlu0 %808
      %810 = vrot.lane.b32.xlu0 %v254, 5
      %v811 = vpop.permute.xlu0 %810
      %812 = vrot.lane.b32.xlu0 %v255, 5
      %v813 = vpop.permute.xlu0 %812
      %814 = vrot.lane.b32.xlu0 %v256, 5
      %v815 = vpop.permute.xlu0 %814
      %816 = vrot.lane.b32.xlu0 %v257, 5
      %v817 = vpop.permute.xlu0 %816
      %818 = vrot.lane.b32.xlu0 %v258, 5
      %v819 = vpop.permute.xlu0 %818
      %820 = vrot.lane.b32.xlu0 %v259, 5
      %v821 = vpop.permute.xlu0 %820
      %822 = vrot.lane.b32.xlu0 %v260, 5
      %v823 = vpop.permute.xlu0 %822
      %v824 = vrot.slane %v809, 4
      %v825 = vrot.slane %v811, 4
      %v826 = vrot.slane %v813, 4
      %v827 = vrot.slane %v815, 4
      %v828 = vrot.slane %v817, 4
      %v829 = vrot.slane %v819, 4
      %v830 = vrot.slane %v821, 4
      %v831 = vrot.slane %v823, 4
      %v832 = vsel %vm301, %v824, %v825
      %vm833 = vcmask 39936
      %v834 = vsel %vm833, %v809, %v832
      %v835 = vsel %vm301, %v825, %v826
      %v836 = vsel %vm833, %v811, %v835
      %v837 = vsel %vm301, %v826, %v827
      %v838 = vsel %vm833, %v813, %v837
      %v839 = vsel %vm301, %v827, %v828
      %v840 = vsel %vm833, %v815, %v839
      %v841 = vsel %vm301, %v828, %v829
      %v842 = vsel %vm833, %v817, %v841
      %v843 = vsel %vm301, %v829, %v830
      %v844 = vsel %vm833, %v819, %v843
      %v845 = vsel %vm301, %v830, %v831
      %v846 = vsel %vm833, %v821, %v845
      %854 = vst [vmem:[#allocation2 + $0x268] sm:$0xff] %v834
      %855 = vst [vmem:[#allocation2 + $0x270] sm:$0xff] %v836
      %856 = vst [vmem:[#allocation2 + $0x278] sm:$0xff] %v838
      %857 = vst [vmem:[#allocation2 + $0x280] sm:$0xff] %v840
      %858 = vst [vmem:[#allocation2 + $0x288] sm:$0xff] %v842
      %859 = vst [vmem:[#allocation2 + $0x290] sm:$0xff] %v844
      %860 = vst [vmem:[#allocation2 + $0x298] sm:$0xff] %v846
      %861 = vrot.lane.b32.xlu0 %v253, 124
      %v862 = vpop.permute.xlu0 %861
      %863 = vrot.lane.b32.xlu0 %v254, 124
      %v864 = vpop.permute.xlu0 %863
      %865 = vrot.lane.b32.xlu0 %v255, 124
      %v866 = vpop.permute.xlu0 %865
      %867 = vrot.lane.b32.xlu0 %v256, 124
      %v868 = vpop.permute.xlu0 %867
      %869 = vrot.lane.b32.xlu0 %v257, 124
      %v870 = vpop.permute.xlu0 %869
      %871 = vrot.lane.b32.xlu0 %v258, 124
      %v872 = vpop.permute.xlu0 %871
      %873 = vrot.lane.b32.xlu0 %v259, 124
      %v874 = vpop.permute.xlu0 %873
      %875 = vrot.lane.b32.xlu0 %v260, 124
      %v876 = vpop.permute.xlu0 %875
      %v877 = vrot.slane %v862, 4
      %v878 = vrot.slane %v864, 4
      %v879 = vrot.slane %v866, 4
      %v880 = vrot.slane %v868, 4
      %v881 = vrot.slane %v870, 4
      %v882 = vrot.slane %v872, 4
      %v883 = vrot.slane %v874, 4
      %v884 = vrot.slane %v876, 4
      %v885 = vsel %vm301, %v877, %v878
      %vm886 = vcmask 1014784
      %v887 = vsel %vm886, %v885, %v864
      %v888 = vsel %vm301, %v878, %v879
      %v889 = vsel %vm886, %v888, %v866
      %v890 = vsel %vm301, %v879, %v880
      %v891 = vsel %vm886, %v890, %v868
      %v892 = vsel %vm301, %v880, %v881
      %v893 = vsel %vm886, %v892, %v870
      %v894 = vsel %vm301, %v881, %v882
      %v895 = vsel %vm886, %v894, %v872
      %v896 = vsel %vm301, %v882, %v883
      %v897 = vsel %vm886, %v896, %v874
      %v898 = vsel %vm301, %v883, %v884
      %v899 = vsel %vm886, %v898, %v876
      %907 = vst [vmem:[#allocation2 + $0x2a0] sm:$0xff] %v887
      %908 = vst [vmem:[#allocation2 + $0x2a8] sm:$0xff] %v889
      %909 = vst [vmem:[#allocation2 + $0x2b0] sm:$0xff] %v891
      %910 = vst [vmem:[#allocation2 + $0x2b8] sm:$0xff] %v893
      %911 = vst [vmem:[#allocation2 + $0x2c0] sm:$0xff] %v895
      %912 = vst [vmem:[#allocation2 + $0x2c8] sm:$0xff] %v897
      %913 = vst [vmem:[#allocation2 + $0x2d0] sm:$0xff] %v899
      %914 = vrot.lane.b32.xlu0 %v253, 123
      %v915 = vpop.permute.xlu0 %914
      %916 = vrot.lane.b32.xlu0 %v254, 123
      %v917 = vpop.permute.xlu0 %916
      %918 = vrot.lane.b32.xlu0 %v255, 123
      %v919 = vpop.permute.xlu0 %918
      %920 = vrot.lane.b32.xlu0 %v256, 123
      %v921 = vpop.permute.xlu0 %920
      %922 = vrot.lane.b32.xlu0 %v257, 123
      %v923 = vpop.permute.xlu0 %922
      %924 = vrot.lane.b32.xlu0 %v258, 123
      %v925 = vpop.permute.xlu0 %924
      %926 = vrot.lane.b32.xlu0 %v259, 123
      %v927 = vpop.permute.xlu0 %926
      %928 = vrot.lane.b32.xlu0 %v260, 123
      %v929 = vpop.permute.xlu0 %928
      %v930 = vrot.slane %v915, 4
      %v931 = vrot.slane %v917, 4
      %v932 = vrot.slane %v919, 4
      %v933 = vrot.slane %v921, 4
      %v934 = vrot.slane %v923, 4
      %v935 = vrot.slane %v925, 4
      %v936 = vrot.slane %v927, 4
      %v937 = vrot.slane %v929, 4
      %v938 = vsel %vm301, %v930, %v931
      %vm939 = vcmask 1006592
      %v940 = vsel %vm939, %v938, %v917
      %v941 = vsel %vm301, %v931, %v932
      %v942 = vsel %vm939, %v941, %v919
      %v943 = vsel %vm301, %v932, %v933
      %v944 = vsel %vm939, %v943, %v921
      %v945 = vsel %vm301, %v933, %v934
      %v946 = vsel %vm939, %v945, %v923
      %v947 = vsel %vm301, %v934, %v935
      %v948 = vsel %vm939, %v947, %v925
      %v949 = vsel %vm301, %v935, %v936
      %v950 = vsel %vm939, %v949, %v927
      %v951 = vsel %vm301, %v936, %v937
      %v952 = vsel %vm939, %v951, %v929
      %960 = vst [vmem:[#allocation2 + $0x2d8] sm:$0xff] %v940
      %961 = vst [vmem:[#allocation2 + $0x2e0] sm:$0xff] %v942
      %962 = vst [vmem:[#allocation2 + $0x2e8] sm:$0xff] %v944
      %963 = vst [vmem:[#allocation2 + $0x2f0] sm:$0xff] %v946
      %964 = vst [vmem:[#allocation2 + $0x2f8] sm:$0xff] %v948
      %965 = vst [vmem:[#allocation2 + $0x300] sm:$0xff] %v950
      %966 = vst [vmem:[#allocation2 + $0x308] sm:$0xff] %v952
      %967 = vrot.lane.b32.xlu0 %v253, 122
      %v968 = vpop.permute.xlu0 %967
      %969 = vrot.lane.b32.xlu0 %v254, 122
      %v970 = vpop.permute.xlu0 %969
      %971 = vrot.lane.b32.xlu0 %v255, 122
      %v972 = vpop.permute.xlu0 %971
      %973 = vrot.lane.b32.xlu0 %v256, 122
      %v974 = vpop.permute.xlu0 %973
      %975 = vrot.lane.b32.xlu0 %v257, 122
      %v976 = vpop.permute.xlu0 %975
      %977 = vrot.lane.b32.xlu0 %v258, 122
      %v978 = vpop.permute.xlu0 %977
      %979 = vrot.lane.b32.xlu0 %v259, 122
      %v980 = vpop.permute.xlu0 %979
      %981 = vrot.lane.b32.xlu0 %v260, 122
      %v982 = vpop.permute.xlu0 %981
      %v983 = vrot.slane %v968, 4
      %v984 = vrot.slane %v970, 4
      %v985 = vrot.slane %v972, 4
      %v986 = vrot.slane %v974, 4
      %v987 = vrot.slane %v976, 4
      %v988 = vrot.slane %v978, 4
      %v989 = vrot.slane %v980, 4
      %v990 = vrot.slane %v982, 4
      %v991 = vsel %vm301, %v983, %v984
      %vm992 = vcmask 998400
      %v993 = vsel %vm992, %v991, %v970
      %v994 = vsel %vm301, %v984, %v985
      %v995 = vsel %vm992, %v994, %v972
      %v996 = vsel %vm301, %v985, %v986
      %v997 = vsel %vm992, %v996, %v974
      %v998 = vsel %vm301, %v986, %v987
      %v999 = vsel %vm992, %v998, %v976
      %v1000 = vsel %vm301, %v987, %v988
      %v1001 = vsel %vm992, %v1000, %v978
      %v1002 = vsel %vm301, %v988, %v989
      %v1003 = vsel %vm992, %v1002, %v980
      %v1004 = vsel %vm301, %v989, %v990
      %v1005 = vsel %vm992, %v1004, %v982
      %1013 = vst [vmem:[#allocation2 + $0x310] sm:$0xff] %v993
      %1014 = vst [vmem:[#allocation2 + $0x318] sm:$0xff] %v995
      %1015 = vst [vmem:[#allocation2 + $0x320] sm:$0xff] %v997
      %1016 = vst [vmem:[#allocation2 + $0x328] sm:$0xff] %v999
      %1017 = vst [vmem:[#allocation2 + $0x330] sm:$0xff] %v1001
      %1018 = vst [vmem:[#allocation2 + $0x338] sm:$0xff] %v1003
      %1019 = vst [vmem:[#allocation2 + $0x340] sm:$0xff] %v1005
      %1020 = vrot.lane.b32.xlu0 %v253, 113
      %v1021 = vpop.permute.xlu0 %1020
      %1022 = vrot.lane.b32.xlu0 %v254, 113
      %v1023 = vpop.permute.xlu0 %1022
      %1024 = vrot.lane.b32.xlu0 %v255, 113
      %v1025 = vpop.permute.xlu0 %1024
      %1026 = vrot.lane.b32.xlu0 %v256, 113
      %v1027 = vpop.permute.xlu0 %1026
      %1028 = vrot.lane.b32.xlu0 %v257, 113
      %v1029 = vpop.permute.xlu0 %1028
      %1030 = vrot.lane.b32.xlu0 %v258, 113
      %v1031 = vpop.permute.xlu0 %1030
      %1032 = vrot.lane.b32.xlu0 %v259, 113
      %v1033 = vpop.permute.xlu0 %1032
      %1034 = vrot.lane.b32.xlu0 %v260, 113
      %v1035 = vpop.permute.xlu0 %1034
      %v1036 = vrot.slane %v1021, 4
      %v1037 = vrot.slane %v1023, 4
      %v1038 = vrot.slane %v1025, 4
      %v1039 = vrot.slane %v1027, 4
      %v1040 = vrot.slane %v1029, 4
      %v1041 = vrot.slane %v1031, 4
      %v1042 = vrot.slane %v1033, 4
      %v1043 = vrot.slane %v1035, 4
      %v1044 = vsel %vm301, %v1036, %v1037
      %vm1045 = vcmask 924672
      %v1046 = vsel %vm1045, %v1044, %v1023
      %v1047 = vsel %vm301, %v1037, %v1038
      %v1048 = vsel %vm1045, %v1047, %v1025
      %v1049 = vsel %vm301, %v1038, %v1039
      %v1050 = vsel %vm1045, %v1049, %v1027
      %v1051 = vsel %vm301, %v1039, %v1040
      %v1052 = vsel %vm1045, %v1051, %v1029
      %v1053 = vsel %vm301, %v1040, %v1041
      %v1054 = vsel %vm1045, %v1053, %v1031
      %v1055 = vsel %vm301, %v1041, %v1042
      %v1056 = vsel %vm1045, %v1055, %v1033
      %v1057 = vsel %vm301, %v1042, %v1043
      %v1058 = vsel %vm1045, %v1057, %v1035
      %1066 = vst [vmem:[#allocation2 + $0x348] sm:$0xff] %v1046
      %1067 = vst [vmem:[#allocation2 + $0x350] sm:$0xff] %v1048
      %1068 = vst [vmem:[#allocation2 + $0x358] sm:$0xff] %v1050
      %1069 = vst [vmem:[#allocation2 + $0x360] sm:$0xff] %v1052
      %1070 = vst [vmem:[#allocation2 + $0x368] sm:$0xff] %v1054
      %1071 = vst [vmem:[#allocation2 + $0x370] sm:$0xff] %v1056
      %1072 = vst [vmem:[#allocation2 + $0x378] sm:$0xff] %v1058
      %1073 = vrot.lane.b32.xlu0 %v253, 112
      %v1074 = vpop.permute.xlu0 %1073
      %1075 = vrot.lane.b32.xlu0 %v254, 112
      %v1076 = vpop.permute.xlu0 %1075
      %1077 = vrot.lane.b32.xlu0 %v255, 112
      %v1078 = vpop.permute.xlu0 %1077
      %1079 = vrot.lane.b32.xlu0 %v256, 112
      %v1080 = vpop.permute.xlu0 %1079
      %1081 = vrot.lane.b32.xlu0 %v257, 112
      %v1082 = vpop.permute.xlu0 %1081
      %1083 = vrot.lane.b32.xlu0 %v258, 112
      %v1084 = vpop.permute.xlu0 %1083
      %1085 = vrot.lane.b32.xlu0 %v259, 112
      %v1086 = vpop.permute.xlu0 %1085
      %1087 = vrot.lane.b32.xlu0 %v260, 112
      %v1088 = vpop.permute.xlu0 %1087
      %v1089 = vrot.slane %v1074, 4
      %v1090 = vrot.slane %v1076, 4
      %v1091 = vrot.slane %v1078, 4
      %v1092 = vrot.slane %v1080, 4
      %v1093 = vrot.slane %v1082, 4
      %v1094 = vrot.slane %v1084, 4
      %v1095 = vrot.slane %v1086, 4
      %v1096 = vrot.slane %v1088, 4
      %v1097 = vsel %vm301, %v1089, %v1090
      %vm1098 = vcmask 916480
      %v1099 = vsel %vm1098, %v1097, %v1076
      %v1100 = vsel %vm301, %v1090, %v1091
      %v1101 = vsel %vm1098, %v1100, %v1078
      %v1102 = vsel %vm301, %v1091, %v1092
      %v1103 = vsel %vm1098, %v1102, %v1080
      %v1104 = vsel %vm301, %v1092, %v1093
      %v1105 = vsel %vm1098, %v1104, %v1082
      %v1106 = vsel %vm301, %v1093, %v1094
      %v1107 = vsel %vm1098, %v1106, %v1084
      %v1108 = vsel %vm301, %v1094, %v1095
      %v1109 = vsel %vm1098, %v1108, %v1086
      %v1110 = vsel %vm301, %v1095, %v1096
      %v1111 = vsel %vm1098, %v1110, %v1088
      %1119 = vst [vmem:[#allocation2 + $0x380] sm:$0xff] %v1099
      %1120 = vst [vmem:[#allocation2 + $0x388] sm:$0xff] %v1101
      %1121 = vst [vmem:[#allocation2 + $0x390] sm:$0xff] %v1103
      %1122 = vst [vmem:[#allocation2 + $0x398] sm:$0xff] %v1105
      %1123 = vst [vmem:[#allocation2 + $0x3a0] sm:$0xff] %v1107
      %1124 = vst [vmem:[#allocation2 + $0x3a8] sm:$0xff] %v1109
      %1125 = vst [vmem:[#allocation2 + $0x3b0] sm:$0xff] %v1111
      %1126 = vrot.lane.b32.xlu0 %v253, 111
      %v1127 = vpop.permute.xlu0 %1126
      %1128 = vrot.lane.b32.xlu0 %v254, 111
      %v1129 = vpop.permute.xlu0 %1128
      %1130 = vrot.lane.b32.xlu0 %v255, 111
      %v1131 = vpop.permute.xlu0 %1130
      %1132 = vrot.lane.b32.xlu0 %v256, 111
      %v1133 = vpop.permute.xlu0 %1132
      %1134 = vrot.lane.b32.xlu0 %v257, 111
      %v1135 = vpop.permute.xlu0 %1134
      %1136 = vrot.lane.b32.xlu0 %v258, 111
      %v1137 = vpop.permute.xlu0 %1136
      %1138 = vrot.lane.b32.xlu0 %v259, 111
      %v1139 = vpop.permute.xlu0 %1138
      %1140 = vrot.lane.b32.xlu0 %v260, 111
      %v1141 = vpop.permute.xlu0 %1140
      %v1142 = vrot.slane %v1127, 4
      %v1143 = vrot.slane %v1129, 4
      %v1144 = vrot.slane %v1131, 4
      %v1145 = vrot.slane %v1133, 4
      %v1146 = vrot.slane %v1135, 4
      %v1147 = vrot.slane %v1137, 4
      %v1148 = vrot.slane %v1139, 4
      %v1149 = vrot.slane %v1141, 4
      %v1150 = vsel %vm301, %v1142, %v1143
      %vm1151 = vcmask 908288
      %v1152 = vsel %vm1151, %v1150, %v1129
      %v1153 = vsel %vm301, %v1143, %v1144
      %v1154 = vsel %vm1151, %v1153, %v1131
      %v1155 = vsel %vm301, %v1144, %v1145
      %v1156 = vsel %vm1151, %v1155, %v1133
      %v1157 = vsel %vm301, %v1145, %v1146
      %v1158 = vsel %vm1151, %v1157, %v1135
      %v1159 = vsel %vm301, %v1146, %v1147
      %v1160 = vsel %vm1151, %v1159, %v1137
      %v1161 = vsel %vm301, %v1147, %v1148
      %v1162 = vsel %vm1151, %v1161, %v1139
      %v1163 = vsel %vm301, %v1148, %v1149
      %v1164 = vsel %vm1151, %v1163, %v1141
      %1172 = vst [vmem:[#allocation2 + $0x3b8] sm:$0xff] %v1152
      %1173 = vst [vmem:[#allocation2 + $0x3c0] sm:$0xff] %v1154
      %1174 = vst [vmem:[#allocation2 + $0x3c8] sm:$0xff] %v1156
      %1175 = vst [vmem:[#allocation2 + $0x3d0] sm:$0xff] %v1158
      %1176 = vst [vmem:[#allocation2 + $0x3d8] sm:$0xff] %v1160
      %1177 = vst [vmem:[#allocation2 + $0x3e0] sm:$0xff] %v1162
      %1178 = vst [vmem:[#allocation2 + $0x3e8] sm:$0xff] %v1164
      %1179 = vrot.lane.b32.xlu0 %v253, 14
      %v1180 = vpop.permute.xlu0 %1179
      %1181 = vrot.lane.b32.xlu0 %v254, 14
      %v1182 = vpop.permute.xlu0 %1181
      %1183 = vrot.lane.b32.xlu0 %v255, 14
      %v1184 = vpop.permute.xlu0 %1183
      %1185 = vrot.lane.b32.xlu0 %v256, 14
      %v1186 = vpop.permute.xlu0 %1185
      %1187 = vrot.lane.b32.xlu0 %v257, 14
      %v1188 = vpop.permute.xlu0 %1187
      %1189 = vrot.lane.b32.xlu0 %v258, 14
      %v1190 = vpop.permute.xlu0 %1189
      %1191 = vrot.lane.b32.xlu0 %v259, 14
      %v1192 = vpop.permute.xlu0 %1191
      %1193 = vrot.lane.b32.xlu0 %v260, 14
      %v1194 = vpop.permute.xlu0 %1193
      %v1195 = vrot.slane %v1180, 4
      %v1196 = vrot.slane %v1182, 4
      %v1197 = vrot.slane %v1184, 4
      %v1198 = vrot.slane %v1186, 4
      %v1199 = vrot.slane %v1188, 4
      %v1200 = vrot.slane %v1190, 4
      %v1201 = vrot.slane %v1192, 4
      %v1202 = vrot.slane %v1194, 4
      %v1203 = vsel %vm301, %v1195, %v1196
      %vm1204 = vcmask 113664
      %v1205 = vsel %vm1204, %v1203, %v1182
      %v1206 = vsel %vm301, %v1196, %v1197
      %v1207 = vsel %vm1204, %v1206, %v1184
      %v1208 = vsel %vm301, %v1197, %v1198
      %v1209 = vsel %vm1204, %v1208, %v1186
      %v1210 = vsel %vm301, %v1198, %v1199
      %v1211 = vsel %vm1204, %v1210, %v1188
      %v1212 = vsel %vm301, %v1199, %v1200
      %v1213 = vsel %vm1204, %v1212, %v1190
      %v1214 = vsel %vm301, %v1200, %v1201
      %v1215 = vsel %vm1204, %v1214, %v1192
      %v1216 = vsel %vm301, %v1201, %v1202
      %v1217 = vsel %vm1204, %v1216, %v1194
      %1225 = vst [vmem:[#allocation2 + $0x3f0] sm:$0xff] %v1205
      %1226 = vst [vmem:[#allocation2 + $0x3f8] sm:$0xff] %v1207
      %1227 = vst [vmem:[#allocation2 + $0x400] sm:$0xff] %v1209
      %1228 = vst [vmem:[#allocation2 + $0x408] sm:$0xff] %v1211
      %1229 = vst [vmem:[#allocation2 + $0x410] sm:$0xff] %v1213
      %1230 = vst [vmem:[#allocation2 + $0x418] sm:$0xff] %v1215
      %1231 = vst [vmem:[#allocation2 + $0x420] sm:$0xff] %v1217
      %1232 = vrot.lane.b32.xlu0 %v253, 13
      %v1233 = vpop.permute.xlu0 %1232
      %1234 = vrot.lane.b32.xlu0 %v254, 13
      %v1235 = vpop.permute.xlu0 %1234
      %1236 = vrot.lane.b32.xlu0 %v255, 13
      %v1237 = vpop.permute.xlu0 %1236
      %1238 = vrot.lane.b32.xlu0 %v256, 13
      %v1239 = vpop.permute.xlu0 %1238
      %1240 = vrot.lane.b32.xlu0 %v257, 13
      %v1241 = vpop.permute.xlu0 %1240
      %1242 = vrot.lane.b32.xlu0 %v258, 13
      %v1243 = vpop.permute.xlu0 %1242
      %1244 = vrot.lane.b32.xlu0 %v259, 13
      %v1245 = vpop.permute.xlu0 %1244
      %1246 = vrot.lane.b32.xlu0 %v260, 13
      %v1247 = vpop.permute.xlu0 %1246
      %v1248 = vrot.slane %v1233, 4
      %v1249 = vrot.slane %v1235, 4
      %v1250 = vrot.slane %v1237, 4
      %v1251 = vrot.slane %v1239, 4
      %v1252 = vrot.slane %v1241, 4
      %v1253 = vrot.slane %v1243, 4
      %v1254 = vrot.slane %v1245, 4
      %v1255 = vrot.slane %v1247, 4
      %v1256 = vsel %vm301, %v1248, %v1249
      %vm1257 = vcmask 105472
      %v1258 = vsel %vm1257, %v1256, %v1235
      %v1259 = vsel %vm301, %v1249, %v1250
      %v1260 = vsel %vm1257, %v1259, %v1237
      %v1261 = vsel %vm301, %v1250, %v1251
      %v1262 = vsel %vm1257, %v1261, %v1239
      %v1263 = vsel %vm301, %v1251, %v1252
      %v1264 = vsel %vm1257, %v1263, %v1241
      %v1265 = vsel %vm301, %v1252, %v1253
      %v1266 = vsel %vm1257, %v1265, %v1243
      %v1267 = vsel %vm301, %v1253, %v1254
      %v1268 = vsel %vm1257, %v1267, %v1245
      %v1269 = vsel %vm301, %v1254, %v1255
      %v1270 = vsel %vm1257, %v1269, %v1247
      %1278 = vst [vmem:[#allocation2 + $0x428] sm:$0xff] %v1258
      %1279 = vst [vmem:[#allocation2 + $0x430] sm:$0xff] %v1260
      %1280 = vst [vmem:[#allocation2 + $0x438] sm:$0xff] %v1262
      %1281 = vst [vmem:[#allocation2 + $0x440] sm:$0xff] %v1264
      %1282 = vst [vmem:[#allocation2 + $0x448] sm:$0xff] %v1266
      %1283 = vst [vmem:[#allocation2 + $0x450] sm:$0xff] %v1268
      %1284 = vst [vmem:[#allocation2 + $0x458] sm:$0xff] %v1270
      %1285 = vrot.lane.b32.xlu0 %v253, 12
      %v1286 = vpop.permute.xlu0 %1285
      %1287 = vrot.lane.b32.xlu0 %v254, 12
      %v1288 = vpop.permute.xlu0 %1287
      %1289 = vrot.lane.b32.xlu0 %v255, 12
      %v1290 = vpop.permute.xlu0 %1289
      %1291 = vrot.lane.b32.xlu0 %v256, 12
      %v1292 = vpop.permute.xlu0 %1291
      %1293 = vrot.lane.b32.xlu0 %v257, 12
      %v1294 = vpop.permute.xlu0 %1293
      %1295 = vrot.lane.b32.xlu0 %v258, 12
      %v1296 = vpop.permute.xlu0 %1295
      %1297 = vrot.lane.b32.xlu0 %v259, 12
      %v1298 = vpop.permute.xlu0 %1297
      %1299 = vrot.lane.b32.xlu0 %v260, 12
      %v1300 = vpop.permute.xlu0 %1299
      %v1301 = vrot.slane %v1286, 4
      %v1302 = vrot.slane %v1288, 4
      %v1303 = vrot.slane %v1290, 4
      %v1304 = vrot.slane %v1292, 4
      %v1305 = vrot.slane %v1294, 4
      %v1306 = vrot.slane %v1296, 4
      %v1307 = vrot.slane %v1298, 4
      %v1308 = vrot.slane %v1300, 4
      %v1309 = vsel %vm301, %v1301, %v1302
      %vm1310 = vcmask 97280
      %v1311 = vsel %vm1310, %v1309, %v1288
      %v1312 = vsel %vm301, %v1302, %v1303
      %v1313 = vsel %vm1310, %v1312, %v1290
      %v1314 = vsel %vm301, %v1303, %v1304
      %v1315 = vsel %vm1310, %v1314, %v1292
      %v1316 = vsel %vm301, %v1304, %v1305
      %v1317 = vsel %vm1310, %v1316, %v1294
      %v1318 = vsel %vm301, %v1305, %v1306
      %v1319 = vsel %vm1310, %v1318, %v1296
      %v1320 = vsel %vm301, %v1306, %v1307
      %v1321 = vsel %vm1310, %v1320, %v1298
      %v1322 = vsel %vm301, %v1307, %v1308
      %v1323 = vsel %vm1310, %v1322, %v1300
      %1331 = vst [vmem:[#allocation2 + $0x460] sm:$0xff] %v1311
      %1332 = vst [vmem:[#allocation2 + $0x468] sm:$0xff] %v1313
      %1333 = vst [vmem:[#allocation2 + $0x470] sm:$0xff] %v1315
      %1334 = vst [vmem:[#allocation2 + $0x478] sm:$0xff] %v1317
      %1335 = vst [vmem:[#allocation2 + $0x480] sm:$0xff] %v1319
      %1336 = vst [vmem:[#allocation2 + $0x488] sm:$0xff] %v1321
      %1337 = vst [vmem:[#allocation2 + $0x490] sm:$0xff] %v1323
      %1338 = vrot.lane.b32.xlu0 %v253, 3
      %v1339 = vpop.permute.xlu0 %1338
      %1340 = vrot.lane.b32.xlu0 %v254, 3
      %v1341 = vpop.permute.xlu0 %1340
      %1342 = vrot.lane.b32.xlu0 %v255, 3
      %v1343 = vpop.permute.xlu0 %1342
      %1344 = vrot.lane.b32.xlu0 %v256, 3
      %v1345 = vpop.permute.xlu0 %1344
      %1346 = vrot.lane.b32.xlu0 %v257, 3
      %v1347 = vpop.permute.xlu0 %1346
      %1348 = vrot.lane.b32.xlu0 %v258, 3
      %v1349 = vpop.permute.xlu0 %1348
      %1350 = vrot.lane.b32.xlu0 %v259, 3
      %v1351 = vpop.permute.xlu0 %1350
      %1352 = vrot.lane.b32.xlu0 %v260, 3
      %v1353 = vpop.permute.xlu0 %1352
      %v1354 = vrot.slane %v1339, 4
      %v1355 = vrot.slane %v1341, 4
      %v1356 = vrot.slane %v1343, 4
      %v1357 = vrot.slane %v1345, 4
      %v1358 = vrot.slane %v1347, 4
      %v1359 = vrot.slane %v1349, 4
      %v1360 = vrot.slane %v1351, 4
      %v1361 = vrot.slane %v1353, 4
      %v1362 = vsel %vm301, %v1354, %v1355
      %vm1363 = vcmask 23552
      %v1364 = vsel %vm1363, %v1362, %v1341
      %v1365 = vsel %vm301, %v1355, %v1356
      %v1366 = vsel %vm1363, %v1365, %v1343
      %v1367 = vsel %vm301, %v1356, %v1357
      %v1368 = vsel %vm1363, %v1367, %v1345
      %v1369 = vsel %vm301, %v1357, %v1358
      %v1370 = vsel %vm1363, %v1369, %v1347
      %v1371 = vsel %vm301, %v1358, %v1359
      %v1372 = vsel %vm1363, %v1371, %v1349
      %v1373 = vsel %vm301, %v1359, %v1360
      %v1374 = vsel %vm1363, %v1373, %v1351
      %v1375 = vsel %vm301, %v1360, %v1361
      %v1376 = vsel %vm1363, %v1375, %v1353
      %1384 = vst [vmem:[#allocation2 + $0x498] sm:$0xff] %v1364
      %1385 = vst [vmem:[#allocation2 + $0x4a0] sm:$0xff] %v1366
      %1386 = vst [vmem:[#allocation2 + $0x4a8] sm:$0xff] %v1368
      %1387 = vst [vmem:[#allocation2 + $0x4b0] sm:$0xff] %v1370
      %1388 = vst [vmem:[#allocation2 + $0x4b8] sm:$0xff] %v1372
      %1389 = vst [vmem:[#allocation2 + $0x4c0] sm:$0xff] %v1374
      %1390 = vst [vmem:[#allocation2 + $0x4c8] sm:$0xff] %v1376
      %1391 = vrot.lane.b32.xlu0 %v253, 2
      %v1392 = vpop.permute.xlu0 %1391
      %1393 = vrot.lane.b32.xlu0 %v254, 2
      %v1394 = vpop.permute.xlu0 %1393
      %1395 = vrot.lane.b32.xlu0 %v255, 2
      %v1396 = vpop.permute.xlu0 %1395
      %1397 = vrot.lane.b32.xlu0 %v256, 2
      %v1398 = vpop.permute.xlu0 %1397
      %1399 = vrot.lane.b32.xlu0 %v257, 2
      %v1400 = vpop.permute.xlu0 %1399
      %1401 = vrot.lane.b32.xlu0 %v258, 2
      %v1402 = vpop.permute.xlu0 %1401
      %1403 = vrot.lane.b32.xlu0 %v259, 2
      %v1404 = vpop.permute.xlu0 %1403
      %1405 = vrot.lane.b32.xlu0 %v260, 2
      %v1406 = vpop.permute.xlu0 %1405
      %v1407 = vrot.slane %v1392, 4
      %v1408 = vrot.slane %v1394, 4
      %v1409 = vrot.slane %v1396, 4
      %v1410 = vrot.slane %v1398, 4
      %v1411 = vrot.slane %v1400, 4
      %v1412 = vrot.slane %v1402, 4
      %v1413 = vrot.slane %v1404, 4
      %v1414 = vrot.slane %v1406, 4
      %v1415 = vsel %vm301, %v1407, %v1408
      %vm1416 = vcmask 15360
      %v1417 = vsel %vm1416, %v1415, %v1394
      %v1418 = vsel %vm301, %v1408, %v1409
      %v1419 = vsel %vm1416, %v1418, %v1396
      %v1420 = vsel %vm301, %v1409, %v1410
      %v1421 = vsel %vm1416, %v1420, %v1398
      %v1422 = vsel %vm301, %v1410, %v1411
      %v1423 = vsel %vm1416, %v1422, %v1400
      %v1424 = vsel %vm301, %v1411, %v1412
      %v1425 = vsel %vm1416, %v1424, %v1402
      %v1426 = vsel %vm301, %v1412, %v1413
      %v1427 = vsel %vm1416, %v1426, %v1404
      %v1428 = vsel %vm301, %v1413, %v1414
      %v1429 = vsel %vm1416, %v1428, %v1406
      %1437 = vst [vmem:[#allocation2 + $0x4d0] sm:$0xff] %v1417
      %1438 = vst [vmem:[#allocation2 + $0x4d8] sm:$0xff] %v1419
      %1439 = vst [vmem:[#allocation2 + $0x4e0] sm:$0xff] %v1421
      %1440 = vst [vmem:[#allocation2 + $0x4e8] sm:$0xff] %v1423
      %1441 = vst [vmem:[#allocation2 + $0x4f0] sm:$0xff] %v1425
      %1442 = vst [vmem:[#allocation2 + $0x4f8] sm:$0xff] %v1427
      %1443 = vst [vmem:[#allocation2 + $0x500] sm:$0xff] %v1429
      %1444 = vrot.lane.b32.xlu0 %v253, 1
      %v1445 = vpop.permute.xlu0 %1444
      %1446 = vrot.lane.b32.xlu0 %v254, 1
      %v1447 = vpop.permute.xlu0 %1446
      %1448 = vrot.lane.b32.xlu0 %v255, 1
      %v1449 = vpop.permute.xlu0 %1448
      %1450 = vrot.lane.b32.xlu0 %v256, 1
      %v1451 = vpop.permute.xlu0 %1450
      %1452 = vrot.lane.b32.xlu0 %v257, 1
      %v1453 = vpop.permute.xlu0 %1452
      %1454 = vrot.lane.b32.xlu0 %v258, 1
      %v1455 = vpop.permute.xlu0 %1454
      %1456 = vrot.lane.b32.xlu0 %v259, 1
      %v1457 = vpop.permute.xlu0 %1456
      %1458 = vrot.lane.b32.xlu0 %v260, 1
      %v1459 = vpop.permute.xlu0 %1458
      %v1460 = vrot.slane %v1445, 4
      %v1461 = vrot.slane %v1447, 4
      %v1462 = vrot.slane %v1449, 4
      %v1463 = vrot.slane %v1451, 4
      %v1464 = vrot.slane %v1453, 4
      %v1465 = vrot.slane %v1455, 4
      %v1466 = vrot.slane %v1457, 4
      %v1467 = vrot.slane %v1459, 4
      %v1468 = vsel %vm301, %v1460, %v1461
      %vm1469 = vcmask 7168
      %v1470 = vsel %vm1469, %v1468, %v1447
      %v1471 = vsel %vm301, %v1461, %v1462
      %v1472 = vsel %vm1469, %v1471, %v1449
      %v1473 = vsel %vm301, %v1462, %v1463
      %v1474 = vsel %vm1469, %v1473, %v1451
      %v1475 = vsel %vm301, %v1463, %v1464
      %v1476 = vsel %vm1469, %v1475, %v1453
      %v1477 = vsel %vm301, %v1464, %v1465
      %v1478 = vsel %vm1469, %v1477, %v1455
      %v1479 = vsel %vm301, %v1465, %v1466
      %v1480 = vsel %vm1469, %v1479, %v1457
      %v1481 = vsel %vm301, %v1466, %v1467
      %v1482 = vsel %vm1469, %v1481, %v1459
      %1490 = vst [vmem:[#allocation2 + $0x508] sm:$0xff] %v1470
      %1491 = vst [vmem:[#allocation2 + $0x510] sm:$0xff] %v1472
      %1492 = vst [vmem:[#allocation2 + $0x518] sm:$0xff] %v1474
      %1493 = vst [vmem:[#allocation2 + $0x520] sm:$0xff] %v1476
      %1494 = vst [vmem:[#allocation2 + $0x528] sm:$0xff] %v1478
      %1495 = vst [vmem:[#allocation2 + $0x530] sm:$0xff] %v1480
      %1496 = vst [vmem:[#allocation2 + $0x538] sm:$0xff] %v1482
      %1498 = vrot.lane.b32.xlu0 %v254, 120
      %v1499 = vpop.permute.xlu0 %1498
      %1500 = vrot.lane.b32.xlu0 %v255, 120
      %v1501 = vpop.permute.xlu0 %1500
      %1502 = vrot.lane.b32.xlu0 %v256, 120
      %v1503 = vpop.permute.xlu0 %1502
      %1504 = vrot.lane.b32.xlu0 %v257, 120
      %v1505 = vpop.permute.xlu0 %1504
      %1506 = vrot.lane.b32.xlu0 %v258, 120
      %v1507 = vpop.permute.xlu0 %1506
      %1508 = vrot.lane.b32.xlu0 %v259, 120
      %v1509 = vpop.permute.xlu0 %1508
      %1510 = vrot.lane.b32.xlu0 %v260, 120
      %v1511 = vpop.permute.xlu0 %1510
      %1512 = vrot.lane.b32.xlu0 %v261, 120
      %v1513 = vpop.permute.xlu0 %1512
      %v1514 = vrot.slane %v1499, 4
      %v1515 = vrot.slane %v1501, 4
      %v1516 = vrot.slane %v1503, 4
      %v1517 = vrot.slane %v1505, 4
      %v1518 = vrot.slane %v1507, 4
      %v1519 = vrot.slane %v1509, 4
      %v1520 = vrot.slane %v1511, 4
      %v1521 = vrot.slane %v1513, 4
      %v1522 = vsel %vm301, %v1514, %v1515
      %vm1523 = vcmask 982016
      %v1524 = vsel %vm1523, %v1499, %v1522
      %v1525 = vsel %vm301, %v1515, %v1516
      %v1526 = vsel %vm1523, %v1501, %v1525
      %v1527 = vsel %vm301, %v1516, %v1517
      %v1528 = vsel %vm1523, %v1503, %v1527
      %v1529 = vsel %vm301, %v1517, %v1518
      %v1530 = vsel %vm1523, %v1505, %v1529
      %v1531 = vsel %vm301, %v1518, %v1519
      %v1532 = vsel %vm1523, %v1507, %v1531
      %v1533 = vsel %vm301, %v1519, %v1520
      %v1534 = vsel %vm1523, %v1509, %v1533
      %v1535 = vsel %vm301, %v1520, %v1521
      %v1536 = vsel %vm1523, %v1511, %v1535
      %1544 = vst [vmem:[#allocation2 + $0x540] sm:$0xff] %v1524
      %1545 = vst [vmem:[#allocation2 + $0x548] sm:$0xff] %v1526
      %1546 = vst [vmem:[#allocation2 + $0x550] sm:$0xff] %v1528
      %1547 = vst [vmem:[#allocation2 + $0x558] sm:$0xff] %v1530
      %1548 = vst [vmem:[#allocation2 + $0x560] sm:$0xff] %v1532
      %1549 = vst [vmem:[#allocation2 + $0x568] sm:$0xff] %v1534
      %1550 = vst [vmem:[#allocation2 + $0x570] sm:$0xff] %v1536
      %1551 = vrot.lane.b32.xlu0 %v254, 119
      %v1552 = vpop.permute.xlu0 %1551
      %1553 = vrot.lane.b32.xlu0 %v255, 119
      %v1554 = vpop.permute.xlu0 %1553
      %1555 = vrot.lane.b32.xlu0 %v256, 119
      %v1556 = vpop.permute.xlu0 %1555
      %1557 = vrot.lane.b32.xlu0 %v257, 119
      %v1558 = vpop.permute.xlu0 %1557
      %1559 = vrot.lane.b32.xlu0 %v258, 119
      %v1560 = vpop.permute.xlu0 %1559
      %1561 = vrot.lane.b32.xlu0 %v259, 119
      %v1562 = vpop.permute.xlu0 %1561
      %1563 = vrot.lane.b32.xlu0 %v260, 119
      %v1564 = vpop.permute.xlu0 %1563
      %1565 = vrot.lane.b32.xlu0 %v261, 119
      %v1566 = vpop.permute.xlu0 %1565
      %v1567 = vrot.slane %v1552, 4
      %v1568 = vrot.slane %v1554, 4
      %v1569 = vrot.slane %v1556, 4
      %v1570 = vrot.slane %v1558, 4
      %v1571 = vrot.slane %v1560, 4
      %v1572 = vrot.slane %v1562, 4
      %v1573 = vrot.slane %v1564, 4
      %v1574 = vrot.slane %v1566, 4
      %v1575 = vsel %vm301, %v1567, %v1568
      %vm1576 = vcmask 973824
      %v1577 = vsel %vm1576, %v1552, %v1575
      %v1578 = vsel %vm301, %v1568, %v1569
      %v1579 = vsel %vm1576, %v1554, %v1578
      %v1580 = vsel %vm301, %v1569, %v1570
      %v1581 = vsel %vm1576, %v1556, %v1580
      %v1582 = vsel %vm301, %v1570, %v1571
      %v1583 = vsel %vm1576, %v1558, %v1582
      %v1584 = vsel %vm301, %v1571, %v1572
      %v1585 = vsel %vm1576, %v1560, %v1584
      %v1586 = vsel %vm301, %v1572, %v1573
      %v1587 = vsel %vm1576, %v1562, %v1586
      %v1588 = vsel %vm301, %v1573, %v1574
      %v1589 = vsel %vm1576, %v1564, %v1588
      %1597 = vst [vmem:[#allocation2 + $0x578] sm:$0xff] %v1577
      %1598 = vst [vmem:[#allocation2 + $0x580] sm:$0xff] %v1579
      %1599 = vst [vmem:[#allocation2 + $0x588] sm:$0xff] %v1581
      %1600 = vst [vmem:[#allocation2 + $0x590] sm:$0xff] %v1583
      %1601 = vst [vmem:[#allocation2 + $0x598] sm:$0xff] %v1585
      %1602 = vst [vmem:[#allocation2 + $0x5a0] sm:$0xff] %v1587
      %1603 = vst [vmem:[#allocation2 + $0x5a8] sm:$0xff] %v1589
      %1604 = vrot.lane.b32.xlu0 %v254, 118
      %v1605 = vpop.permute.xlu0 %1604
      %1606 = vrot.lane.b32.xlu0 %v255, 118
      %v1607 = vpop.permute.xlu0 %1606
      %1608 = vrot.lane.b32.xlu0 %v256, 118
      %v1609 = vpop.permute.xlu0 %1608
      %1610 = vrot.lane.b32.xlu0 %v257, 118
      %v1611 = vpop.permute.xlu0 %1610
      %1612 = vrot.lane.b32.xlu0 %v258, 118
      %v1613 = vpop.permute.xlu0 %1612
      %1614 = vrot.lane.b32.xlu0 %v259, 118
      %v1615 = vpop.permute.xlu0 %1614
      %1616 = vrot.lane.b32.xlu0 %v260, 118
      %v1617 = vpop.permute.xlu0 %1616
      %1618 = vrot.lane.b32.xlu0 %v261, 118
      %v1619 = vpop.permute.xlu0 %1618
      %v1620 = vrot.slane %v1605, 4
      %v1621 = vrot.slane %v1607, 4
      %v1622 = vrot.slane %v1609, 4
      %v1623 = vrot.slane %v1611, 4
      %v1624 = vrot.slane %v1613, 4
      %v1625 = vrot.slane %v1615, 4
      %v1626 = vrot.slane %v1617, 4
      %v1627 = vrot.slane %v1619, 4
      %v1628 = vsel %vm301, %v1620, %v1621
      %vm1629 = vcmask 965632
      %v1630 = vsel %vm1629, %v1605, %v1628
      %v1631 = vsel %vm301, %v1621, %v1622
      %v1632 = vsel %vm1629, %v1607, %v1631
      %v1633 = vsel %vm301, %v1622, %v1623
      %v1634 = vsel %vm1629, %v1609, %v1633
      %v1635 = vsel %vm301, %v1623, %v1624
      %v1636 = vsel %vm1629, %v1611, %v1635
      %v1637 = vsel %vm301, %v1624, %v1625
      %v1638 = vsel %vm1629, %v1613, %v1637
      %v1639 = vsel %vm301, %v1625, %v1626
      %v1640 = vsel %vm1629, %v1615, %v1639
      %v1641 = vsel %vm301, %v1626, %v1627
      %v1642 = vsel %vm1629, %v1617, %v1641
      %1650 = vst [vmem:[#allocation2 + $0x5b0] sm:$0xff] %v1630
      %1651 = vst [vmem:[#allocation2 + $0x5b8] sm:$0xff] %v1632
      %1652 = vst [vmem:[#allocation2 + $0x5c0] sm:$0xff] %v1634
      %1653 = vst [vmem:[#allocation2 + $0x5c8] sm:$0xff] %v1636
      %1654 = vst [vmem:[#allocation2 + $0x5d0] sm:$0xff] %v1638
      %1655 = vst [vmem:[#allocation2 + $0x5d8] sm:$0xff] %v1640
      %1656 = vst [vmem:[#allocation2 + $0x5e0] sm:$0xff] %v1642
      %v1657 = vld [vmem:[%s1] sm:$0xff]
      %v1658 = vld [vmem:[#allocation2] sm:$0xff]
      %v1659 = vld [vmem:[#allocation2 + $0x8] sm:$0xff]
      %v1660 = vld [vmem:[#allocation2 + $0x10] sm:$0xff]
      %v1661 = vld [vmem:[#allocation2 + $0x18] sm:$0xff]
      %v1662 = vld [vmem:[#allocation2 + $0x20] sm:$0xff]
      %v1663 = vld [vmem:[#allocation2 + $0x28] sm:$0xff]
      %v1664 = vld [vmem:[#allocation2 + $0x30] sm:$0xff]
      %v1665 = vld [vmem:[#allocation2 + $0x38] sm:$0xff]
      %v1666 = vld [vmem:[#allocation2 + $0x40] sm:$0xff]
      %v1667 = vld [vmem:[#allocation2 + $0x48] sm:$0xff]
      %v1668 = vld [vmem:[#allocation2 + $0x50] sm:$0xff]
      %v1669 = vld [vmem:[#allocation2 + $0x58] sm:$0xff]
      %v1670 = vld [vmem:[#allocation2 + $0x60] sm:$0xff]
      %v1671 = vld [vmem:[#allocation2 + $0x68] sm:$0xff]
      %v1672 = vld [vmem:[#allocation2 + $0x70] sm:$0xff]
      %v1673 = vld [vmem:[#allocation2 + $0x78] sm:$0xff]
      %v1674 = vld [vmem:[#allocation2 + $0x80] sm:$0xff]
      %v1675 = vld [vmem:[#allocation2 + $0x88] sm:$0xff]
      %v1676 = vld [vmem:[#allocation2 + $0x90] sm:$0xff]
      %v1677 = vld [vmem:[#allocation2 + $0x98] sm:$0xff]
      %v1678 = vld [vmem:[#allocation2 + $0xa0] sm:$0xff]
      %v1679 = vld [vmem:[#allocation2 + $0xa8] sm:$0xff]
      %v1680 = vld [vmem:[#allocation2 + $0xb0] sm:$0xff]
      %v1681 = vld [vmem:[#allocation2 + $0xb8] sm:$0xff]
      %v1682 = vld [vmem:[#allocation2 + $0xc0] sm:$0xff]
      %v1683 = vld [vmem:[#allocation2 + $0xc8] sm:$0xff]
      %v1684 = vld [vmem:[#allocation2 + $0xd0] sm:$0xff]
      %v1685 = vld [vmem:[#allocation2 + $0xd8] sm:$0xff]
      %v1686 = vld [vmem:[#allocation2 + $0xe0] sm:$0xff]
      %v1687 = vld [vmem:[#allocation2 + $0xe8] sm:$0xff]
      %v1688 = vld [vmem:[#allocation2 + $0xf0] sm:$0xff]
      %v1689 = vld [vmem:[#allocation2 + $0xf8] sm:$0xff]
      %v1690 = vld [vmem:[#allocation2 + $0x100] sm:$0xff]
      %v1691 = vld [vmem:[#allocation2 + $0x108] sm:$0xff]
      %v1692 = vld [vmem:[#allocation2 + $0x110] sm:$0xff]
      %v1693 = vld [vmem:[#allocation2 + $0x118] sm:$0xff]
      %v1694 = vld [vmem:[#allocation2 + $0x120] sm:$0xff]
      %v1695 = vld [vmem:[#allocation2 + $0x128] sm:$0xff]
      %v1696 = vld [vmem:[#allocation2 + $0x130] sm:$0xff]
      %v1697 = vld [vmem:[#allocation2 + $0x138] sm:$0xff]
      %v1698 = vld [vmem:[#allocation2 + $0x140] sm:$0xff]
      %v1699 = vld [vmem:[#allocation2 + $0x148] sm:$0xff]
      %v1700 = vld [vmem:[#allocation2 + $0x150] sm:$0xff]
      %v1701 = vld [vmem:[#allocation2 + $0x158] sm:$0xff]
      %v1702 = vld [vmem:[#allocation2 + $0x160] sm:$0xff]
      %v1703 = vld [vmem:[#allocation2 + $0x168] sm:$0xff]
      %v1704 = vld [vmem:[#allocation2 + $0x170] sm:$0xff]
      %v1705 = vld [vmem:[#allocation2 + $0x178] sm:$0xff]
      %v1706 = vld [vmem:[#allocation2 + $0x180] sm:$0xff]
      %v1707 = vld [vmem:[#allocation2 + $0x188] sm:$0xff]
      %v1708 = vld [vmem:[#allocation2 + $0x190] sm:$0xff]
      %v1709 = vld [vmem:[#allocation2 + $0x198] sm:$0xff]
      %v1710 = vld [vmem:[#allocation2 + $0x1a0] sm:$0xff]
      %v1711 = vld [vmem:[#allocation2 + $0x1a8] sm:$0xff]
      %v1712 = vld [vmem:[#allocation2 + $0x1b0] sm:$0xff]
      %v1713 = vld [vmem:[#allocation2 + $0x1b8] sm:$0xff]
      %v1714 = vld [vmem:[#allocation2 + $0x1c0] sm:$0xff]
      %v1715 = vld [vmem:[#allocation2 + $0x1c8] sm:$0xff]
      %v1716 = vld [vmem:[#allocation2 + $0x1d0] sm:$0xff]
      %v1717 = vld [vmem:[#allocation2 + $0x1d8] sm:$0xff]
      %v1718 = vld [vmem:[#allocation2 + $0x1e0] sm:$0xff]
      %v1719 = vld [vmem:[#allocation2 + $0x1e8] sm:$0xff]
      %v1720 = vld [vmem:[#allocation2 + $0x1f0] sm:$0xff]
      %v1721 = vld [vmem:[#allocation2 + $0x1f8] sm:$0xff]
      %v1722 = vld [vmem:[#allocation2 + $0x200] sm:$0xff]
      %v1723 = vld [vmem:[#allocation2 + $0x208] sm:$0xff]
      %v1724 = vld [vmem:[#allocation2 + $0x210] sm:$0xff]
      %v1725 = vld [vmem:[#allocation2 + $0x218] sm:$0xff]
      %v1726 = vld [vmem:[#allocation2 + $0x220] sm:$0xff]
      %v1727 = vld [vmem:[#allocation2 + $0x228] sm:$0xff]
      %v1728 = vld [vmem:[#allocation2 + $0x230] sm:$0xff]
      %v1729 = vld [vmem:[#allocation2 + $0x238] sm:$0xff]
      %v1730 = vld [vmem:[#allocation2 + $0x240] sm:$0xff]
      %v1731 = vld [vmem:[#allocation2 + $0x248] sm:$0xff]
      %v1732 = vld [vmem:[#allocation2 + $0x250] sm:$0xff]
      %v1733 = vld [vmem:[#allocation2 + $0x258] sm:$0xff]
      %v1734 = vld [vmem:[#allocation2 + $0x260] sm:$0xff]
      %v1735 = vld [vmem:[#allocation2 + $0x268] sm:$0xff]
      %v1736 = vld [vmem:[#allocation2 + $0x270] sm:$0xff]
      %v1737 = vld [vmem:[#allocation2 + $0x278] sm:$0xff]
      %v1738 = vld [vmem:[#allocation2 + $0x280] sm:$0xff]
      %v1739 = vld [vmem:[#allocation2 + $0x288] sm:$0xff]
      %v1740 = vld [vmem:[#allocation2 + $0x290] sm:$0xff]
      %v1741 = vld [vmem:[#allocation2 + $0x298] sm:$0xff]
      %v1742 = vld [vmem:[#allocation2 + $0x2a0] sm:$0xff]
      %v1743 = vld [vmem:[#allocation2 + $0x2a8] sm:$0xff]
      %v1744 = vld [vmem:[#allocation2 + $0x2b0] sm:$0xff]
      %v1745 = vld [vmem:[#allocation2 + $0x2b8] sm:$0xff]
      %v1746 = vld [vmem:[#allocation2 + $0x2c0] sm:$0xff]
      %v1747 = vld [vmem:[#allocation2 + $0x2c8] sm:$0xff]
      %v1748 = vld [vmem:[#allocation2 + $0x2d0] sm:$0xff]
      %v1749 = vld [vmem:[#allocation2 + $0x2d8] sm:$0xff]
      %v1750 = vld [vmem:[#allocation2 + $0x2e0] sm:$0xff]
      %v1751 = vld [vmem:[#allocation2 + $0x2e8] sm:$0xff]
      %v1752 = vld [vmem:[#allocation2 + $0x2f0] sm:$0xff]
      %v1753 = vld [vmem:[#allocation2 + $0x2f8] sm:$0xff]
      %v1754 = vld [vmem:[#allocation2 + $0x300] sm:$0xff]
      %v1755 = vld [vmem:[#allocation2 + $0x308] sm:$0xff]
      %v1756 = vld [vmem:[#allocation2 + $0x310] sm:$0xff]
      %v1757 = vld [vmem:[#allocation2 + $0x318] sm:$0xff]
      %v1758 = vld [vmem:[#allocation2 + $0x320] sm:$0xff]
      %v1759 = vld [vmem:[#allocation2 + $0x328] sm:$0xff]
      %v1760 = vld [vmem:[#allocation2 + $0x330] sm:$0xff]
      %v1761 = vld [vmem:[#allocation2 + $0x338] sm:$0xff]
      %v1762 = vld [vmem:[#allocation2 + $0x340] sm:$0xff]
      %v1763 = vld [vmem:[#allocation2 + $0x348] sm:$0xff]
      %v1764 = vld [vmem:[#allocation2 + $0x350] sm:$0xff]
      %v1765 = vld [vmem:[#allocation2 + $0x358] sm:$0xff]
      %v1766 = vld [vmem:[#allocation2 + $0x360] sm:$0xff]
      %v1767 = vld [vmem:[#allocation2 + $0x368] sm:$0xff]
      %v1768 = vld [vmem:[#allocation2 + $0x370] sm:$0xff]
      %v1769 = vld [vmem:[#allocation2 + $0x378] sm:$0xff]
      %v1770 = vld [vmem:[#allocation2 + $0x380] sm:$0xff]
      %v1771 = vld [vmem:[#allocation2 + $0x388] sm:$0xff]
      %v1772 = vld [vmem:[#allocation2 + $0x390] sm:$0xff]
      %v1773 = vld [vmem:[#allocation2 + $0x398] sm:$0xff]
      %v1774 = vld [vmem:[#allocation2 + $0x3a0] sm:$0xff]
      %v1775 = vld [vmem:[#allocation2 + $0x3a8] sm:$0xff]
      %v1776 = vld [vmem:[#allocation2 + $0x3b0] sm:$0xff]
      %v1777 = vld [vmem:[#allocation2 + $0x3b8] sm:$0xff]
      %v1778 = vld [vmem:[#allocation2 + $0x3c0] sm:$0xff]
      %v1779 = vld [vmem:[#allocation2 + $0x3c8] sm:$0xff]
      %v1780 = vld [vmem:[#allocation2 + $0x3d0] sm:$0xff]
      %v1781 = vld [vmem:[#allocation2 + $0x3d8] sm:$0xff]
      %v1782 = vld [vmem:[#allocation2 + $0x3e0] sm:$0xff]
      %v1783 = vld [vmem:[#allocation2 + $0x3e8] sm:$0xff]
      %v1784 = vld [vmem:[#allocation2 + $0x3f0] sm:$0xff]
      %v1785 = vld [vmem:[#allocation2 + $0x3f8] sm:$0xff]
      %v1786 = vld [vmem:[#allocation2 + $0x400] sm:$0xff]
      %v1787 = vld [vmem:[#allocation2 + $0x408] sm:$0xff]
      %v1788 = vld [vmem:[#allocation2 + $0x410] sm:$0xff]
      %v1789 = vld [vmem:[#allocation2 + $0x418] sm:$0xff]
      %v1790 = vld [vmem:[#allocation2 + $0x420] sm:$0xff]
      %v1791 = vld [vmem:[#allocation2 + $0x428] sm:$0xff]
      %v1792 = vld [vmem:[#allocation2 + $0x430] sm:$0xff]
      %v1793 = vld [vmem:[#allocation2 + $0x438] sm:$0xff]
      %v1794 = vld [vmem:[#allocation2 + $0x440] sm:$0xff]
      %v1795 = vld [vmem:[#allocation2 + $0x448] sm:$0xff]
      %v1796 = vld [vmem:[#allocation2 + $0x450] sm:$0xff]
      %v1797 = vld [vmem:[#allocation2 + $0x458] sm:$0xff]
      %v1798 = vld [vmem:[#allocation2 + $0x460] sm:$0xff]
      %v1799 = vld [vmem:[#allocation2 + $0x468] sm:$0xff]
      %v1800 = vld [vmem:[#allocation2 + $0x470] sm:$0xff]
      %v1801 = vld [vmem:[#allocation2 + $0x478] sm:$0xff]
      %v1802 = vld [vmem:[#allocation2 + $0x480] sm:$0xff]
      %v1803 = vld [vmem:[#allocation2 + $0x488] sm:$0xff]
      %v1804 = vld [vmem:[#allocation2 + $0x490] sm:$0xff]
      %v1805 = vld [vmem:[#allocation2 + $0x498] sm:$0xff]
      %v1806 = vld [vmem:[#allocation2 + $0x4a0] sm:$0xff]
      %v1807 = vld [vmem:[#allocation2 + $0x4a8] sm:$0xff]
      %v1808 = vld [vmem:[#allocation2 + $0x4b0] sm:$0xff]
      %v1809 = vld [vmem:[#allocation2 + $0x4b8] sm:$0xff]
      %v1810 = vld [vmem:[#allocation2 + $0x4c0] sm:$0xff]
      %v1811 = vld [vmem:[#allocation2 + $0x4c8] sm:$0xff]
      %v1812 = vld [vmem:[#allocation2 + $0x4d0] sm:$0xff]
      %v1813 = vld [vmem:[#allocation2 + $0x4d8] sm:$0xff]
      %v1814 = vld [vmem:[#allocation2 + $0x4e0] sm:$0xff]
      %v1815 = vld [vmem:[#allocation2 + $0x4e8] sm:$0xff]
      %v1816 = vld [vmem:[#allocation2 + $0x4f0] sm:$0xff]
      %v1817 = vld [vmem:[#allocation2 + $0x4f8] sm:$0xff]
      %v1818 = vld [vmem:[#allocation2 + $0x500] sm:$0xff]
      %v1819 = vld [vmem:[#allocation2 + $0x508] sm:$0xff]
      %v1820 = vld [vmem:[#allocation2 + $0x510] sm:$0xff]
      %v1821 = vld [vmem:[#allocation2 + $0x518] sm:$0xff]
      %v1822 = vld [vmem:[#allocation2 + $0x520] sm:$0xff]
      %v1823 = vld [vmem:[#allocation2 + $0x528] sm:$0xff]
      %v1824 = vld [vmem:[#allocation2 + $0x530] sm:$0xff]
      %v1825 = vld [vmem:[#allocation2 + $0x538] sm:$0xff]
      %v1826 = vld [vmem:[#allocation2 + $0x540] sm:$0xff]
      %v1827 = vld [vmem:[#allocation2 + $0x548] sm:$0xff]
      %v1828 = vld [vmem:[#allocation2 + $0x550] sm:$0xff]
      %v1829 = vld [vmem:[#allocation2 + $0x558] sm:$0xff]
      %v1830 = vld [vmem:[#allocation2 + $0x560] sm:$0xff]
      %v1831 = vld [vmem:[#allocation2 + $0x568] sm:$0xff]
      %v1832 = vld [vmem:[#allocation2 + $0x570] sm:$0xff]
      %v1833 = vld [vmem:[#allocation2 + $0x578] sm:$0xff]
      %v1834 = vld [vmem:[#allocation2 + $0x580] sm:$0xff]
      %v1835 = vld [vmem:[#allocation2 + $0x588] sm:$0xff]
      %v1836 = vld [vmem:[#allocation2 + $0x590] sm:$0xff]
      %v1837 = vld [vmem:[#allocation2 + $0x598] sm:$0xff]
      %v1838 = vld [vmem:[#allocation2 + $0x5a0] sm:$0xff]
      %v1839 = vld [vmem:[#allocation2 + $0x5a8] sm:$0xff]
      %v1840 = vld [vmem:[#allocation2 + $0x5b0] sm:$0xff]
      %v1841 = vld [vmem:[#allocation2 + $0x5b8] sm:$0xff]
      %v1842 = vld [vmem:[#allocation2 + $0x5c0] sm:$0xff]
      %v1843 = vld [vmem:[#allocation2 + $0x5c8] sm:$0xff]
      %v1844 = vld [vmem:[#allocation2 + $0x5d0] sm:$0xff]
      %v1845 = vld [vmem:[#allocation2 + $0x5d8] sm:$0xff]
      %v1846 = vld [vmem:[#allocation2 + $0x5e0] sm:$0xff]
      %v1847 = vld [vmem:[%s2] sm:$0xff]
      %1849 = vset.pattern.permute.xlu0 0
      %1850 = vperm.xlu0 %1849, %v1847
      %v1851 = vpop.permute.xlu0 %1850
      %v1854 = vunpack.c.l.b16 %v1657
      %v1855 = vunpack.c.h.b16 %v1657
      %v1856 = vpack.c.b16 %v1854, %v1854
      %v1857 = vpack.c.b16 %v1855, %v1855
      %v2048 = vunpack.c.l.b16 %v1658
      %v2049 = vunpack.c.h.b16 %v1658
      %v2050 = vunpack.c.l.b16 %v1659
      %v2051 = vunpack.c.h.b16 %v1659
      %v2052 = vunpack.c.l.b16 %v1660
      %v2053 = vunpack.c.h.b16 %v1660
      %v2054 = vunpack.c.l.b16 %v1661
      %v2055 = vunpack.c.h.b16 %v1661
      %v2056 = vunpack.c.l.b16 %v1662
      %v2057 = vunpack.c.h.b16 %v1662
      %v2058 = vunpack.c.l.b16 %v1663
      %v2059 = vunpack.c.h.b16 %v1663
      %v2060 = vunpack.c.l.b16 %v1664
      %v2061 = vunpack.c.h.b16 %v1664
      %v2062 = vunpack.c.l.b16 %v1665
      %v2063 = vunpack.c.h.b16 %v1665
      %v2064 = vunpack.c.l.b16 %v1666
      %v2065 = vunpack.c.h.b16 %v1666
      %v2066 = vunpack.c.l.b16 %v1667
      %v2067 = vunpack.c.h.b16 %v1667
      %v2068 = vunpack.c.l.b16 %v1668
      %v2069 = vunpack.c.h.b16 %v1668
      %v2070 = vunpack.c.l.b16 %v1669
      %v2071 = vunpack.c.h.b16 %v1669
      %v2072 = vunpack.c.l.b16 %v1670
      %v2073 = vunpack.c.h.b16 %v1670
      %v2074 = vunpack.c.l.b16 %v1671
      %v2075 = vunpack.c.h.b16 %v1671
      %v2076 = vunpack.c.l.b16 %v1672
      %v2077 = vunpack.c.h.b16 %v1672
      %v2078 = vunpack.c.l.b16 %v1673
      %v2079 = vunpack.c.h.b16 %v1673
      %v2080 = vunpack.c.l.b16 %v1674
      %v2081 = vunpack.c.h.b16 %v1674
      %v2082 = vunpack.c.l.b16 %v1675
      %v2083 = vunpack.c.h.b16 %v1675
      %v2084 = vunpack.c.l.b16 %v1676
      %v2085 = vunpack.c.h.b16 %v1676
      %v2086 = vunpack.c.l.b16 %v1677
      %v2087 = vunpack.c.h.b16 %v1677
      %v2088 = vunpack.c.l.b16 %v1678
      %v2089 = vunpack.c.h.b16 %v1678
      %v2090 = vunpack.c.l.b16 %v1679
      %v2091 = vunpack.c.h.b16 %v1679
      %v2092 = vunpack.c.l.b16 %v1680
      %v2093 = vunpack.c.h.b16 %v1680
      %v2094 = vunpack.c.l.b16 %v1681
      %v2095 = vunpack.c.h.b16 %v1681
      %v2096 = vunpack.c.l.b16 %v1682
      %v2097 = vunpack.c.h.b16 %v1682
      %v2098 = vunpack.c.l.b16 %v1683
      %v2099 = vunpack.c.h.b16 %v1683
      %v2100 = vunpack.c.l.b16 %v1684
      %v2101 = vunpack.c.h.b16 %v1684
      %v2102 = vunpack.c.l.b16 %v1685
      %v2103 = vunpack.c.h.b16 %v1685
      %v2104 = vunpack.c.l.b16 %v1686
      %v2105 = vunpack.c.h.b16 %v1686
      %v2106 = vunpack.c.l.b16 %v1687
      %v2107 = vunpack.c.h.b16 %v1687
      %v2108 = vunpack.c.l.b16 %v1688
      %v2109 = vunpack.c.h.b16 %v1688
      %v2110 = vunpack.c.l.b16 %v1689
      %v2111 = vunpack.c.h.b16 %v1689
      %v2112 = vunpack.c.l.b16 %v1690
      %v2113 = vunpack.c.h.b16 %v1690
      %v2114 = vunpack.c.l.b16 %v1691
      %v2115 = vunpack.c.h.b16 %v1691
      %v2116 = vunpack.c.l.b16 %v1692
      %v2117 = vunpack.c.h.b16 %v1692
      %v2118 = vunpack.c.l.b16 %v1693
      %v2119 = vunpack.c.h.b16 %v1693
      %v2120 = vunpack.c.l.b16 %v1694
      %v2121 = vunpack.c.h.b16 %v1694
      %v2122 = vunpack.c.l.b16 %v1695
      %v2123 = vunpack.c.h.b16 %v1695
      %v2124 = vunpack.c.l.b16 %v1696
      %v2125 = vunpack.c.h.b16 %v1696
      %v2126 = vunpack.c.l.b16 %v1697
      %v2127 = vunpack.c.h.b16 %v1697
      %v2128 = vunpack.c.l.b16 %v1698
      %v2129 = vunpack.c.h.b16 %v1698
      %v2130 = vunpack.c.l.b16 %v1699
      %v2131 = vunpack.c.h.b16 %v1699
      %v2132 = vunpack.c.l.b16 %v1700
      %v2133 = vunpack.c.h.b16 %v1700
      %v2134 = vunpack.c.l.b16 %v1701
      %v2135 = vunpack.c.h.b16 %v1701
      %v2136 = vunpack.c.l.b16 %v1702
      %v2137 = vunpack.c.h.b16 %v1702
      %v2138 = vunpack.c.l.b16 %v1703
      %v2139 = vunpack.c.h.b16 %v1703
      %v2140 = vunpack.c.l.b16 %v1704
      %v2141 = vunpack.c.h.b16 %v1704
      %v2142 = vunpack.c.l.b16 %v1705
      %v2143 = vunpack.c.h.b16 %v1705
      %v2144 = vunpack.c.l.b16 %v1706
      %v2145 = vunpack.c.h.b16 %v1706
      %v2146 = vunpack.c.l.b16 %v1707
      %v2147 = vunpack.c.h.b16 %v1707
      %v2148 = vunpack.c.l.b16 %v1708
      %v2149 = vunpack.c.h.b16 %v1708
      %v2150 = vunpack.c.l.b16 %v1709
      %v2151 = vunpack.c.h.b16 %v1709
      %v2152 = vunpack.c.l.b16 %v1710
      %v2153 = vunpack.c.h.b16 %v1710
      %v2154 = vunpack.c.l.b16 %v1711
      %v2155 = vunpack.c.h.b16 %v1711
      %v2156 = vunpack.c.l.b16 %v1712
      %v2157 = vunpack.c.h.b16 %v1712
      %v2158 = vunpack.c.l.b16 %v1713
      %v2159 = vunpack.c.h.b16 %v1713
      %v2160 = vunpack.c.l.b16 %v1714
      %v2161 = vunpack.c.h.b16 %v1714
      %v2162 = vunpack.c.l.b16 %v1715
      %v2163 = vunpack.c.h.b16 %v1715
      %v2164 = vunpack.c.l.b16 %v1716
      %v2165 = vunpack.c.h.b16 %v1716
      %v2166 = vunpack.c.l.b16 %v1717
      %v2167 = vunpack.c.h.b16 %v1717
      %v2168 = vunpack.c.l.b16 %v1718
      %v2169 = vunpack.c.h.b16 %v1718
      %v2170 = vunpack.c.l.b16 %v1719
      %v2171 = vunpack.c.h.b16 %v1719
      %v2172 = vunpack.c.l.b16 %v1720
      %v2173 = vunpack.c.h.b16 %v1720
      %v2174 = vunpack.c.l.b16 %v1721
      %v2175 = vunpack.c.h.b16 %v1721
      %v2176 = vunpack.c.l.b16 %v1722
      %v2177 = vunpack.c.h.b16 %v1722
      %v2178 = vunpack.c.l.b16 %v1723
      %v2179 = vunpack.c.h.b16 %v1723
      %v2180 = vunpack.c.l.b16 %v1724
      %v2181 = vunpack.c.h.b16 %v1724
      %v2182 = vunpack.c.l.b16 %v1725
      %v2183 = vunpack.c.h.b16 %v1725
      %v2184 = vunpack.c.l.b16 %v1726
      %v2185 = vunpack.c.h.b16 %v1726
      %v2186 = vunpack.c.l.b16 %v1727
      %v2187 = vunpack.c.h.b16 %v1727
      %v2188 = vunpack.c.l.b16 %v1728
      %v2189 = vunpack.c.h.b16 %v1728
      %v2190 = vunpack.c.l.b16 %v1729
      %v2191 = vunpack.c.h.b16 %v1729
      %v2192 = vunpack.c.l.b16 %v1730
      %v2193 = vunpack.c.h.b16 %v1730
      %v2194 = vunpack.c.l.b16 %v1731
      %v2195 = vunpack.c.h.b16 %v1731
      %v2196 = vunpack.c.l.b16 %v1732
      %v2197 = vunpack.c.h.b16 %v1732
      %v2198 = vunpack.c.l.b16 %v1733
      %v2199 = vunpack.c.h.b16 %v1733
      %v2200 = vunpack.c.l.b16 %v1734
      %v2201 = vunpack.c.h.b16 %v1734
      %v2202 = vunpack.c.l.b16 %v1735
      %v2203 = vunpack.c.h.b16 %v1735
      %v2204 = vunpack.c.l.b16 %v1736
      %v2205 = vunpack.c.h.b16 %v1736
      %v2206 = vunpack.c.l.b16 %v1737
      %v2207 = vunpack.c.h.b16 %v1737
      %v2208 = vunpack.c.l.b16 %v1738
      %v2209 = vunpack.c.h.b16 %v1738
      %v2210 = vunpack.c.l.b16 %v1739
      %v2211 = vunpack.c.h.b16 %v1739
      %v2212 = vunpack.c.l.b16 %v1740
      %v2213 = vunpack.c.h.b16 %v1740
      %v2214 = vunpack.c.l.b16 %v1741
      %v2215 = vunpack.c.h.b16 %v1741
      %v2216 = vunpack.c.l.b16 %v1742
      %v2217 = vunpack.c.h.b16 %v1742
      %v2218 = vunpack.c.l.b16 %v1743
      %v2219 = vunpack.c.h.b16 %v1743
      %v2220 = vunpack.c.l.b16 %v1744
      %v2221 = vunpack.c.h.b16 %v1744
      %v2222 = vunpack.c.l.b16 %v1745
      %v2223 = vunpack.c.h.b16 %v1745
      %v2224 = vunpack.c.l.b16 %v1746
      %v2225 = vunpack.c.h.b16 %v1746
      %v2226 = vunpack.c.l.b16 %v1747
      %v2227 = vunpack.c.h.b16 %v1747
      %v2228 = vunpack.c.l.b16 %v1748
      %v2229 = vunpack.c.h.b16 %v1748
      %v2230 = vunpack.c.l.b16 %v1749
      %v2231 = vunpack.c.h.b16 %v1749
      %v2232 = vunpack.c.l.b16 %v1750
      %v2233 = vunpack.c.h.b16 %v1750
      %v2234 = vunpack.c.l.b16 %v1751
      %v2235 = vunpack.c.h.b16 %v1751
      %v2236 = vunpack.c.l.b16 %v1752
      %v2237 = vunpack.c.h.b16 %v1752
      %v2238 = vunpack.c.l.b16 %v1753
      %v2239 = vunpack.c.h.b16 %v1753
      %v2240 = vunpack.c.l.b16 %v1754
      %v2241 = vunpack.c.h.b16 %v1754
      %v2242 = vunpack.c.l.b16 %v1755
      %v2243 = vunpack.c.h.b16 %v1755
      %v2244 = vunpack.c.l.b16 %v1756
      %v2245 = vunpack.c.h.b16 %v1756
      %v2246 = vunpack.c.l.b16 %v1757
      %v2247 = vunpack.c.h.b16 %v1757
      %v2248 = vunpack.c.l.b16 %v1758
      %v2249 = vunpack.c.h.b16 %v1758
      %v2250 = vunpack.c.l.b16 %v1759
      %v2251 = vunpack.c.h.b16 %v1759
      %v2252 = vunpack.c.l.b16 %v1760
      %v2253 = vunpack.c.h.b16 %v1760
      %v2254 = vunpack.c.l.b16 %v1761
      %v2255 = vunpack.c.h.b16 %v1761
      %v2256 = vunpack.c.l.b16 %v1762
      %v2257 = vunpack.c.h.b16 %v1762
      %v2258 = vunpack.c.l.b16 %v1763
      %v2259 = vunpack.c.h.b16 %v1763
      %v2260 = vunpack.c.l.b16 %v1764
      %v2261 = vunpack.c.h.b16 %v1764
      %v2262 = vunpack.c.l.b16 %v1765
      %v2263 = vunpack.c.h.b16 %v1765
      %v2264 = vunpack.c.l.b16 %v1766
      %v2265 = vunpack.c.h.b16 %v1766
      %v2266 = vunpack.c.l.b16 %v1767
      %v2267 = vunpack.c.h.b16 %v1767
      %v2268 = vunpack.c.l.b16 %v1768
      %v2269 = vunpack.c.h.b16 %v1768
      %v2270 = vunpack.c.l.b16 %v1769
      %v2271 = vunpack.c.h.b16 %v1769
      %v2272 = vunpack.c.l.b16 %v1770
      %v2273 = vunpack.c.h.b16 %v1770
      %v2274 = vunpack.c.l.b16 %v1771
      %v2275 = vunpack.c.h.b16 %v1771
      %v2276 = vunpack.c.l.b16 %v1772
      %v2277 = vunpack.c.h.b16 %v1772
      %v2278 = vunpack.c.l.b16 %v1773
      %v2279 = vunpack.c.h.b16 %v1773
      %v2280 = vunpack.c.l.b16 %v1774
      %v2281 = vunpack.c.h.b16 %v1774
      %v2282 = vunpack.c.l.b16 %v1775
      %v2283 = vunpack.c.h.b16 %v1775
      %v2284 = vunpack.c.l.b16 %v1776
      %v2285 = vunpack.c.h.b16 %v1776
      %v2286 = vunpack.c.l.b16 %v1777
      %v2287 = vunpack.c.h.b16 %v1777
      %v2288 = vunpack.c.l.b16 %v1778
      %v2289 = vunpack.c.h.b16 %v1778
      %v2290 = vunpack.c.l.b16 %v1779
      %v2291 = vunpack.c.h.b16 %v1779
      %v2292 = vunpack.c.l.b16 %v1780
      %v2293 = vunpack.c.h.b16 %v1780
      %v2294 = vunpack.c.l.b16 %v1781
      %v2295 = vunpack.c.h.b16 %v1781
      %v2296 = vunpack.c.l.b16 %v1782
      %v2297 = vunpack.c.h.b16 %v1782
      %v2298 = vunpack.c.l.b16 %v1783
      %v2299 = vunpack.c.h.b16 %v1783
      %v2300 = vunpack.c.l.b16 %v1784
      %v2301 = vunpack.c.h.b16 %v1784
      %v2302 = vunpack.c.l.b16 %v1785
      %v2303 = vunpack.c.h.b16 %v1785
      %v2304 = vunpack.c.l.b16 %v1786
      %v2305 = vunpack.c.h.b16 %v1786
      %v2306 = vunpack.c.l.b16 %v1787
      %v2307 = vunpack.c.h.b16 %v1787
      %v2308 = vunpack.c.l.b16 %v1788
      %v2309 = vunpack.c.h.b16 %v1788
      %v2310 = vunpack.c.l.b16 %v1789
      %v2311 = vunpack.c.h.b16 %v1789
      %v2312 = vunpack.c.l.b16 %v1790
      %v2313 = vunpack.c.h.b16 %v1790
      %v2314 = vunpack.c.l.b16 %v1791
      %v2315 = vunpack.c.h.b16 %v1791
      %v2316 = vunpack.c.l.b16 %v1792
      %v2317 = vunpack.c.h.b16 %v1792
      %v2318 = vunpack.c.l.b16 %v1793
      %v2319 = vunpack.c.h.b16 %v1793
      %v2320 = vunpack.c.l.b16 %v1794
      %v2321 = vunpack.c.h.b16 %v1794
      %v2322 = vunpack.c.l.b16 %v1795
      %v2323 = vunpack.c.h.b16 %v1795
      %v2324 = vunpack.c.l.b16 %v1796
      %v2325 = vunpack.c.h.b16 %v1796
      %v2326 = vunpack.c.l.b16 %v1797
      %v2327 = vunpack.c.h.b16 %v1797
      %v2328 = vunpack.c.l.b16 %v1798
      %v2329 = vunpack.c.h.b16 %v1798
      %v2330 = vunpack.c.l.b16 %v1799
      %v2331 = vunpack.c.h.b16 %v1799
      %v2332 = vunpack.c.l.b16 %v1800
      %v2333 = vunpack.c.h.b16 %v1800
      %v2334 = vunpack.c.l.b16 %v1801
      %v2335 = vunpack.c.h.b16 %v1801
      %v2336 = vunpack.c.l.b16 %v1802
      %v2337 = vunpack.c.h.b16 %v1802
      %v2338 = vunpack.c.l.b16 %v1803
      %v2339 = vunpack.c.h.b16 %v1803
      %v2340 = vunpack.c.l.b16 %v1804
      %v2341 = vunpack.c.h.b16 %v1804
      %v2342 = vunpack.c.l.b16 %v1805
      %v2343 = vunpack.c.h.b16 %v1805
      %v2344 = vunpack.c.l.b16 %v1806
      %v2345 = vunpack.c.h.b16 %v1806
      %v2346 = vunpack.c.l.b16 %v1807
      %v2347 = vunpack.c.h.b16 %v1807
      %v2348 = vunpack.c.l.b16 %v1808
      %v2349 = vunpack.c.h.b16 %v1808
      %v2350 = vunpack.c.l.b16 %v1809
      %v2351 = vunpack.c.h.b16 %v1809
      %v2352 = vunpack.c.l.b16 %v1810
      %v2353 = vunpack.c.h.b16 %v1810
      %v2354 = vunpack.c.l.b16 %v1811
      %v2355 = vunpack.c.h.b16 %v1811
      %v2356 = vunpack.c.l.b16 %v1812
      %v2357 = vunpack.c.h.b16 %v1812
      %v2358 = vunpack.c.l.b16 %v1813
      %v2359 = vunpack.c.h.b16 %v1813
      %v2360 = vunpack.c.l.b16 %v1814
      %v2361 = vunpack.c.h.b16 %v1814
      %v2362 = vunpack.c.l.b16 %v1815
      %v2363 = vunpack.c.h.b16 %v1815
      %v2364 = vunpack.c.l.b16 %v1816
      %v2365 = vunpack.c.h.b16 %v1816
      %v2366 = vunpack.c.l.b16 %v1817
      %v2367 = vunpack.c.h.b16 %v1817
      %v2368 = vunpack.c.l.b16 %v1818
      %v2369 = vunpack.c.h.b16 %v1818
      %v2370 = vunpack.c.l.b16 %v1819
      %v2371 = vunpack.c.h.b16 %v1819
      %v2372 = vunpack.c.l.b16 %v1820
      %v2373 = vunpack.c.h.b16 %v1820
      %v2374 = vunpack.c.l.b16 %v1821
      %v2375 = vunpack.c.h.b16 %v1821
      %v2376 = vunpack.c.l.b16 %v1822
      %v2377 = vunpack.c.h.b16 %v1822
      %v2378 = vunpack.c.l.b16 %v1823
      %v2379 = vunpack.c.h.b16 %v1823
      %v2380 = vunpack.c.l.b16 %v1824
      %v2381 = vunpack.c.h.b16 %v1824
      %v2382 = vunpack.c.l.b16 %v1825
      %v2383 = vunpack.c.h.b16 %v1825
      %v2384 = vunpack.c.l.b16 %v1826
      %v2385 = vunpack.c.h.b16 %v1826
      %v2386 = vunpack.c.l.b16 %v1827
      %v2387 = vunpack.c.h.b16 %v1827
      %v2388 = vunpack.c.l.b16 %v1828
      %v2389 = vunpack.c.h.b16 %v1828
      %v2390 = vunpack.c.l.b16 %v1829
      %v2391 = vunpack.c.h.b16 %v1829
      %v2392 = vunpack.c.l.b16 %v1830
      %v2393 = vunpack.c.h.b16 %v1830
      %v2394 = vunpack.c.l.b16 %v1831
      %v2395 = vunpack.c.h.b16 %v1831
      %v2396 = vunpack.c.l.b16 %v1832
      %v2397 = vunpack.c.h.b16 %v1832
      %v2398 = vunpack.c.l.b16 %v1833
      %v2399 = vunpack.c.h.b16 %v1833
      %v2400 = vunpack.c.l.b16 %v1834
      %v2401 = vunpack.c.h.b16 %v1834
      %v2402 = vunpack.c.l.b16 %v1835
      %v2403 = vunpack.c.h.b16 %v1835
      %v2404 = vunpack.c.l.b16 %v1836
      %v2405 = vunpack.c.h.b16 %v1836
      %v2406 = vunpack.c.l.b16 %v1837
      %v2407 = vunpack.c.h.b16 %v1837
      %v2408 = vunpack.c.l.b16 %v1838
      %v2409 = vunpack.c.h.b16 %v1838
      %v2410 = vunpack.c.l.b16 %v1839
      %v2411 = vunpack.c.h.b16 %v1839
      %v2412 = vunpack.c.l.b16 %v1840
      %v2413 = vunpack.c.h.b16 %v1840
      %v2414 = vunpack.c.l.b16 %v1841
      %v2415 = vunpack.c.h.b16 %v1841
      %v2416 = vunpack.c.l.b16 %v1842
      %v2417 = vunpack.c.h.b16 %v1842
      %v2418 = vunpack.c.l.b16 %v1843
      %v2419 = vunpack.c.h.b16 %v1843
      %v2420 = vunpack.c.l.b16 %v1844
      %v2421 = vunpack.c.h.b16 %v1844
      %v2422 = vunpack.c.l.b16 %v1845
      %v2423 = vunpack.c.h.b16 %v1845
      %v2424 = vunpack.c.l.b16 %v1846
      %v2425 = vunpack.c.h.b16 %v1846
      %v2426 = vpack.c.b16 %v2062, %v2048
      %v2427 = vpack.c.b16 %v2063, %v2049
      %v2428 = vpack.c.b16 %v2064, %v2050
      %v2429 = vpack.c.b16 %v2065, %v2051
      %v2430 = vpack.c.b16 %v2066, %v2052
      %v2431 = vpack.c.b16 %v2067, %v2053
      %v2432 = vpack.c.b16 %v2068, %v2054
      %v2433 = vpack.c.b16 %v2069, %v2055
      %v2434 = vpack.c.b16 %v2070, %v2056
      %v2435 = vpack.c.b16 %v2071, %v2057
      %v2436 = vpack.c.b16 %v2072, %v2058
      %v2437 = vpack.c.b16 %v2073, %v2059
      %v2438 = vpack.c.b16 %v2074, %v2060
      %v2439 = vpack.c.b16 %v2075, %v2061
      %v2440 = vpack.c.b16 %v2090, %v2076
      %v2441 = vpack.c.b16 %v2091, %v2077
      %v2442 = vpack.c.b16 %v2092, %v2078
      %v2443 = vpack.c.b16 %v2093, %v2079
      %v2444 = vpack.c.b16 %v2094, %v2080
      %v2445 = vpack.c.b16 %v2095, %v2081
      %v2446 = vpack.c.b16 %v2096, %v2082
      %v2447 = vpack.c.b16 %v2097, %v2083
      %v2448 = vpack.c.b16 %v2098, %v2084
      %v2449 = vpack.c.b16 %v2099, %v2085
      %v2450 = vpack.c.b16 %v2100, %v2086
      %v2451 = vpack.c.b16 %v2101, %v2087
      %v2452 = vpack.c.b16 %v2102, %v2088
      %v2453 = vpack.c.b16 %v2103, %v2089
      %v2454 = vpack.c.b16 %v2118, %v2104
      %v2455 = vpack.c.b16 %v2119, %v2105
      %v2456 = vpack.c.b16 %v2120, %v2106
      %v2457 = vpack.c.b16 %v2121, %v2107
      %v2458 = vpack.c.b16 %v2122, %v2108
      %v2459 = vpack.c.b16 %v2123, %v2109
      %v2460 = vpack.c.b16 %v2124, %v2110
      %v2461 = vpack.c.b16 %v2125, %v2111
      %v2462 = vpack.c.b16 %v2126, %v2112
      %v2463 = vpack.c.b16 %v2127, %v2113
      %v2464 = vpack.c.b16 %v2128, %v2114
      %v2465 = vpack.c.b16 %v2129, %v2115
      %v2466 = vpack.c.b16 %v2130, %v2116
      %v2467 = vpack.c.b16 %v2131, %v2117
      %v2468 = vpack.c.b16 %v2146, %v2132
      %v2469 = vpack.c.b16 %v2147, %v2133
      %v2470 = vpack.c.b16 %v2148, %v2134
      %v2471 = vpack.c.b16 %v2149, %v2135
      %v2472 = vpack.c.b16 %v2150, %v2136
      %v2473 = vpack.c.b16 %v2151, %v2137
      %v2474 = vpack.c.b16 %v2152, %v2138
      %v2475 = vpack.c.b16 %v2153, %v2139
      %v2476 = vpack.c.b16 %v2154, %v2140
      %v2477 = vpack.c.b16 %v2155, %v2141
      %v2478 = vpack.c.b16 %v2156, %v2142
      %v2479 = vpack.c.b16 %v2157, %v2143
      %v2480 = vpack.c.b16 %v2158, %v2144
      %v2481 = vpack.c.b16 %v2159, %v2145
      %v2482 = vpack.c.b16 %v2174, %v2160
      %v2483 = vpack.c.b16 %v2175, %v2161
      %v2484 = vpack.c.b16 %v2176, %v2162
      %v2485 = vpack.c.b16 %v2177, %v2163
      %v2486 = vpack.c.b16 %v2178, %v2164
      %v2487 = vpack.c.b16 %v2179, %v2165
      %v2488 = vpack.c.b16 %v2180, %v2166
      %v2489 = vpack.c.b16 %v2181, %v2167
      %v2490 = vpack.c.b16 %v2182, %v2168
      %v2491 = vpack.c.b16 %v2183, %v2169
      %v2492 = vpack.c.b16 %v2184, %v2170
      %v2493 = vpack.c.b16 %v2185, %v2171
      %v2494 = vpack.c.b16 %v2186, %v2172
      %v2495 = vpack.c.b16 %v2187, %v2173
      %v2496 = vpack.c.b16 %v2202, %v2188
      %v2497 = vpack.c.b16 %v2203, %v2189
      %v2498 = vpack.c.b16 %v2204, %v2190
      %v2499 = vpack.c.b16 %v2205, %v2191
      %v2500 = vpack.c.b16 %v2206, %v2192
      %v2501 = vpack.c.b16 %v2207, %v2193
      %v2502 = vpack.c.b16 %v2208, %v2194
      %v2503 = vpack.c.b16 %v2209, %v2195
      %v2504 = vpack.c.b16 %v2210, %v2196
      %v2505 = vpack.c.b16 %v2211, %v2197
      %v2506 = vpack.c.b16 %v2212, %v2198
      %v2507 = vpack.c.b16 %v2213, %v2199
      %v2508 = vpack.c.b16 %v2214, %v2200
      %v2509 = vpack.c.b16 %v2215, %v2201
      %v2510 = vpack.c.b16 %v2230, %v2216
      %v2511 = vpack.c.b16 %v2231, %v2217
      %v2512 = vpack.c.b16 %v2232, %v2218
      %v2513 = vpack.c.b16 %v2233, %v2219
      %v2514 = vpack.c.b16 %v2234, %v2220
      %v2515 = vpack.c.b16 %v2235, %v2221
      %v2516 = vpack.c.b16 %v2236, %v2222
      %v2517 = vpack.c.b16 %v2237, %v2223
      %v2518 = vpack.c.b16 %v2238, %v2224
      %v2519 = vpack.c.b16 %v2239, %v2225
      %v2520 = vpack.c.b16 %v2240, %v2226
      %v2521 = vpack.c.b16 %v2241, %v2227
      %v2522 = vpack.c.b16 %v2242, %v2228
      %v2523 = vpack.c.b16 %v2243, %v2229
      %v2524 = vpack.c.b16 %v2258, %v2244
      %v2525 = vpack.c.b16 %v2259, %v2245
      %v2526 = vpack.c.b16 %v2260, %v2246
      %v2527 = vpack.c.b16 %v2261, %v2247
      %v2528 = vpack.c.b16 %v2262, %v2248
      %v2529 = vpack.c.b16 %v2263, %v2249
      %v2530 = vpack.c.b16 %v2264, %v2250
      %v2531 = vpack.c.b16 %v2265, %v2251
      %v2532 = vpack.c.b16 %v2266, %v2252
      %v2533 = vpack.c.b16 %v2267, %v2253
      %v2534 = vpack.c.b16 %v2268, %v2254
      %v2535 = vpack.c.b16 %v2269, %v2255
      %v2536 = vpack.c.b16 %v2270, %v2256
      %v2537 = vpack.c.b16 %v2271, %v2257
      %v2538 = vpack.c.b16 %v2286, %v2272
      %v2539 = vpack.c.b16 %v2287, %v2273
      %v2540 = vpack.c.b16 %v2288, %v2274
      %v2541 = vpack.c.b16 %v2289, %v2275
      %v2542 = vpack.c.b16 %v2290, %v2276
      %v2543 = vpack.c.b16 %v2291, %v2277
      %v2544 = vpack.c.b16 %v2292, %v2278
      %v2545 = vpack.c.b16 %v2293, %v2279
      %v2546 = vpack.c.b16 %v2294, %v2280
      %v2547 = vpack.c.b16 %v2295, %v2281
      %v2548 = vpack.c.b16 %v2296, %v2282
      %v2549 = vpack.c.b16 %v2297, %v2283
      %v2550 = vpack.c.b16 %v2298, %v2284
      %v2551 = vpack.c.b16 %v2299, %v2285
      %v2552 = vpack.c.b16 %v2314, %v2300
      %v2553 = vpack.c.b16 %v2315, %v2301
      %v2554 = vpack.c.b16 %v2316, %v2302
      %v2555 = vpack.c.b16 %v2317, %v2303
      %v2556 = vpack.c.b16 %v2318, %v2304
      %v2557 = vpack.c.b16 %v2319, %v2305
      %v2558 = vpack.c.b16 %v2320, %v2306
      %v2559 = vpack.c.b16 %v2321, %v2307
      %v2560 = vpack.c.b16 %v2322, %v2308
      %v2561 = vpack.c.b16 %v2323, %v2309
      %v2562 = vpack.c.b16 %v2324, %v2310
      %v2563 = vpack.c.b16 %v2325, %v2311
      %v2564 = vpack.c.b16 %v2326, %v2312
      %v2565 = vpack.c.b16 %v2327, %v2313
      %v2566 = vpack.c.b16 %v2342, %v2328
      %v2567 = vpack.c.b16 %v2343, %v2329
      %v2568 = vpack.c.b16 %v2344, %v2330
      %v2569 = vpack.c.b16 %v2345, %v2331
      %v2570 = vpack.c.b16 %v2346, %v2332
      %v2571 = vpack.c.b16 %v2347, %v2333
      %v2572 = vpack.c.b16 %v2348, %v2334
      %v2573 = vpack.c.b16 %v2349, %v2335
      %v2574 = vpack.c.b16 %v2350, %v2336
      %v2575 = vpack.c.b16 %v2351, %v2337
      %v2576 = vpack.c.b16 %v2352, %v2338
      %v2577 = vpack.c.b16 %v2353, %v2339
      %v2578 = vpack.c.b16 %v2354, %v2340
      %v2579 = vpack.c.b16 %v2355, %v2341
      %v2580 = vpack.c.b16 %v2370, %v2356
      %v2581 = vpack.c.b16 %v2371, %v2357
      %v2582 = vpack.c.b16 %v2372, %v2358
      %v2583 = vpack.c.b16 %v2373, %v2359
      %v2584 = vpack.c.b16 %v2374, %v2360
      %v2585 = vpack.c.b16 %v2375, %v2361
      %v2586 = vpack.c.b16 %v2376, %v2362
      %v2587 = vpack.c.b16 %v2377, %v2363
      %v2588 = vpack.c.b16 %v2378, %v2364
      %v2589 = vpack.c.b16 %v2379, %v2365
      %v2590 = vpack.c.b16 %v2380, %v2366
      %v2591 = vpack.c.b16 %v2381, %v2367
      %v2592 = vpack.c.b16 %v2382, %v2368
      %v2593 = vpack.c.b16 %v2383, %v2369
      %v2594 = vpack.c.b16 %v2398, %v2384
      %v2595 = vpack.c.b16 %v2399, %v2385
      %v2596 = vpack.c.b16 %v2400, %v2386
      %v2597 = vpack.c.b16 %v2401, %v2387
      %v2598 = vpack.c.b16 %v2402, %v2388
      %v2599 = vpack.c.b16 %v2403, %v2389
      %v2600 = vpack.c.b16 %v2404, %v2390
      %v2601 = vpack.c.b16 %v2405, %v2391
      %v2602 = vpack.c.b16 %v2406, %v2392
      %v2603 = vpack.c.b16 %v2407, %v2393
      %v2604 = vpack.c.b16 %v2408, %v2394
      %v2605 = vpack.c.b16 %v2409, %v2395
      %v2606 = vpack.c.b16 %v2410, %v2396
      %v2607 = vpack.c.b16 %v2411, %v2397
      %v2608 = vpack.c.b16 %v2412, %v2412
      %v2609 = vpack.c.b16 %v2413, %v2413
      %v2610 = vpack.c.b16 %v2414, %v2414
      %v2611 = vpack.c.b16 %v2415, %v2415
      %v2612 = vpack.c.b16 %v2416, %v2416
      %v2613 = vpack.c.b16 %v2417, %v2417
      %v2614 = vpack.c.b16 %v2418, %v2418
      %v2615 = vpack.c.b16 %v2419, %v2419
      %v2616 = vpack.c.b16 %v2420, %v2420
      %v2617 = vpack.c.b16 %v2421, %v2421
      %v2618 = vpack.c.b16 %v2422, %v2422
      %v2619 = vpack.c.b16 %v2423, %v2423
      %v2620 = vpack.c.b16 %v2424, %v2424
      %v2621 = vpack.c.b16 %v2425, %v2425
      %vm2804 = vcmask 719872
      %v2806 = vsel %vm2804, %v1857, 0
      %vm2808 = vcmask 1043456
      %v2810 = vsel %vm2808, %v2608, 0
      %v2813 = vsel %vm2808, %v2609, 0
      %v2816 = vsel %vm2808, %v2610, 0
      %v2819 = vsel %vm2808, %v2611, 0
      %v2822 = vsel %vm2808, %v2612, 0
      %v2825 = vsel %vm2808, %v2613, 0
      %v2828 = vsel %vm2808, %v2614, 0
      %v2831 = vsel %vm2808, %v2615, 0
      %v2834 = vsel %vm2808, %v2616, 0
      %v2837 = vsel %vm2808, %v2617, 0
      %v2840 = vsel %vm2808, %v2618, 0
      %v2843 = vsel %vm2808, %v2619, 0
      %v2846 = vsel %vm2808, %v2620, 0
      %v2849 = vsel %vm2808, %v2621, 0
      %2851 = vmatprep.subr.bf16.mxu0 %v2525
      %2852 = vmatpush1.bf16.msra.mxu0 %v2524
      %2853 = vmatprep.subr.bf16.mxu0 %v2511
      %2854 = vmatpush1.bf16.msra.mxu0 %v2510
      %2855 = vmatprep.subr.bf16.mxu0 %v2497
      %2856 = vmatpush1.bf16.msra.mxu0 %v2496
      %2857 = vmatprep.subr.bf16.mxu0 %v2483
      %2858 = vmatpush1.bf16.msra.mxu0 %v2482
      %2859 = vmatprep.subr.bf16.mxu0 %v2469
      %2860 = vmatpush1.bf16.msra.mxu0 %v2468
      %2861 = vmatprep.subr.bf16.mxu0 %v2455
      %2862 = vmatpush1.bf16.msra.mxu0 %v2454
      %2863 = vmatprep.subr.bf16.mxu0 %v2441
      %2864 = vmatpush1.bf16.msra.mxu0 %v2440
      %2865 = vmatprep.subr.bf16.mxu0 %v2427
      %2866 = vmatpush1.bf16.msra.mxu0 %v2426
      %2867 = vmatprep.subr.bf16.mxu0 0
      %2868 = vmatpush2.bf16.msra.mxu0 0
      %2869 = vmatprep.subr.bf16.mxu0 0
      %2870 = vmatpush2.bf16.msra.mxu0 0
      %2871 = vmatprep.subr.bf16.mxu0 %v2813
      %2872 = vmatpush2.bf16.msra.mxu0 %v2810
      %2873 = vmatprep.subr.bf16.mxu0 %v2595
      %2874 = vmatpush2.bf16.msra.mxu0 %v2594
      %2875 = vmatprep.subr.bf16.mxu0 %v2581
      %2876 = vmatpush2.bf16.msra.mxu0 %v2580
      %2877 = vmatprep.subr.bf16.mxu0 %v2567
      %2878 = vmatpush2.bf16.msra.mxu0 %v2566
      %2879 = vmatprep.subr.bf16.mxu0 %v2553
      %2880 = vmatpush2.bf16.msra.mxu0 %v2552
      %2881 = vmatprep.subr.bf16.mxu0 %v2539
      %2882 = vmatpush2.bf16.msra.mxu0 %v2538
      %2883 = vmatprep.mubr.bf16.mxu0 %v2806
      %2884 = vmatmul.mubr.bf16.gmra.mxu0 %v1856
      %v2885 = vpop.f32.mrf.mxu0
      %v2886 = vadd.f32 %v1851, %v2885
      %v2887 = vpop.f32.mrf.mxu0
      %v2888 = vadd.f32 %v1851, %v2887
      %v2889 = vpop.f32.mrf.mxu0
      %v2890 = vpop.f32.mrf.mxu0
      %2891 = vdwg.mxu0
      %2892 = vmatprep.subr.bf16.mxu0 %v2527
      %2893 = vmatpush1.bf16.msra.mxu0 %v2526
      %2894 = vmatprep.subr.bf16.mxu0 %v2513
      %2895 = vmatpush1.bf16.msra.mxu0 %v2512
      %2896 = vmatprep.subr.bf16.mxu0 %v2499
      %2897 = vmatpush1.bf16.msra.mxu0 %v2498
      %2898 = vmatprep.subr.bf16.mxu0 %v2485
      %2899 = vmatpush1.bf16.msra.mxu0 %v2484
      %2900 = vmatprep.subr.bf16.mxu0 %v2471
      %2901 = vmatpush1.bf16.msra.mxu0 %v2470
      %2902 = vmatprep.subr.bf16.mxu0 %v2457
      %2903 = vmatpush1.bf16.msra.mxu0 %v2456
      %2904 = vmatprep.subr.bf16.mxu0 %v2443
      %2905 = vmatpush1.bf16.msra.mxu0 %v2442
      %2906 = vmatprep.subr.bf16.mxu0 %v2429
      %2907 = vmatpush1.bf16.msra.mxu0 %v2428
      %2908 = vmatprep.subr.bf16.mxu0 0
      %2909 = vmatpush2.bf16.msra.mxu0 0
      %2910 = vmatprep.subr.bf16.mxu0 0
      %2911 = vmatpush2.bf16.msra.mxu0 0
      %2912 = vmatprep.subr.bf16.mxu0 %v2819
      %2913 = vmatpush2.bf16.msra.mxu0 %v2816
      %2914 = vmatprep.subr.bf16.mxu0 %v2597
      %2915 = vmatpush2.bf16.msra.mxu0 %v2596
      %2916 = vmatprep.subr.bf16.mxu0 %v2583
      %2917 = vmatpush2.bf16.msra.mxu0 %v2582
      %2918 = vmatprep.subr.bf16.mxu0 %v2569
      %2919 = vmatpush2.bf16.msra.mxu0 %v2568
      %2920 = vmatprep.subr.bf16.mxu0 %v2555
      %2921 = vmatpush2.bf16.msra.mxu0 %v2554
      %2922 = vmatprep.subr.bf16.mxu0 %v2541
      %2923 = vmatpush2.bf16.msra.mxu0 %v2540
      %2924 = vmatprep.mubr.bf16.mxu0 %v2806
      %2925 = vmatmul.mubr.bf16.gmra.mxu0 %v1856
      %v2926 = vpop.f32.mrf.mxu0
      %v2927 = vadd.f32 %v1851, %v2926
      %v2928 = vpop.f32.mrf.mxu0
      %v2929 = vadd.f32 %v1851, %v2928
      %v2930 = vpop.f32.mrf.mxu0
      %v2931 = vpop.f32.mrf.mxu0
      %2932 = vdwg.mxu0
      %2933 = vmatprep.subr.bf16.mxu0 %v2529
      %2934 = vmatpush1.bf16.msra.mxu0 %v2528
      %2935 = vmatprep.subr.bf16.mxu0 %v2515
      %2936 = vmatpush1.bf16.msra.mxu0 %v2514
      %2937 = vmatprep.subr.bf16.mxu0 %v2501
      %2938 = vmatpush1.bf16.msra.mxu0 %v2500
      %2939 = vmatprep.subr.bf16.mxu0 %v2487
      %2940 = vmatpush1.bf16.msra.mxu0 %v2486
      %2941 = vmatprep.subr.bf16.mxu0 %v2473
      %2942 = vmatpush1.bf16.msra.mxu0 %v2472
      %2943 = vmatprep.subr.bf16.mxu0 %v2459
      %2944 = vmatpush1.bf16.msra.mxu0 %v2458
      %2945 = vmatprep.subr.bf16.mxu0 %v2445
      %2946 = vmatpush1.bf16.msra.mxu0 %v2444
      %2947 = vmatprep.subr.bf16.mxu0 %v2431
      %2948 = vmatpush1.bf16.msra.mxu0 %v2430
      %2949 = vmatprep.subr.bf16.mxu0 0
      %2950 = vmatpush2.bf16.msra.mxu0 0
      %2951 = vmatprep.subr.bf16.mxu0 0
      %2952 = vmatpush2.bf16.msra.mxu0 0
      %2953 = vmatprep.subr.bf16.mxu0 %v2825
      %2954 = vmatpush2.bf16.msra.mxu0 %v2822
      %2955 = vmatprep.subr.bf16.mxu0 %v2599
      %2956 = vmatpush2.bf16.msra.mxu0 %v2598
      %2957 = vmatprep.subr.bf16.mxu0 %v2585
      %2958 = vmatpush2.bf16.msra.mxu0 %v2584
      %2959 = vmatprep.subr.bf16.mxu0 %v2571
      %2960 = vmatpush2.bf16.msra.mxu0 %v2570
      %2961 = vmatprep.subr.bf16.mxu0 %v2557
      %2962 = vmatpush2.bf16.msra.mxu0 %v2556
      %2963 = vmatprep.subr.bf16.mxu0 %v2543
      %2964 = vmatpush2.bf16.msra.mxu0 %v2542
      %2965 = vmatprep.mubr.bf16.mxu0 %v2806
      %2966 = vmatmul.mubr.bf16.gmra.mxu0 %v1856
      %v2967 = vpop.f32.mrf.mxu0
      %v2968 = vadd.f32 %v1851, %v2967
      %v2969 = vpop.f32.mrf.mxu0
      %v2970 = vadd.f32 %v1851, %v2969
      %v2971 = vpop.f32.mrf.mxu0
      %v2972 = vpop.f32.mrf.mxu0
      %2973 = vdwg.mxu0
      %2974 = vmatprep.subr.bf16.mxu0 %v2531
      %2975 = vmatpush1.bf16.msra.mxu0 %v2530
      %2976 = vmatprep.subr.bf16.mxu0 %v2517
      %2977 = vmatpush1.bf16.msra.mxu0 %v2516
      %2978 = vmatprep.subr.bf16.mxu0 %v2503
      %2979 = vmatpush1.bf16.msra.mxu0 %v2502
      %2980 = vmatprep.subr.bf16.mxu0 %v2489
      %2981 = vmatpush1.bf16.msra.mxu0 %v2488
      %2982 = vmatprep.subr.bf16.mxu0 %v2475
      %2983 = vmatpush1.bf16.msra.mxu0 %v2474
      %2984 = vmatprep.subr.bf16.mxu0 %v2461
      %2985 = vmatpush1.bf16.msra.mxu0 %v2460
      %2986 = vmatprep.subr.bf16.mxu0 %v2447
      %2987 = vmatpush1.bf16.msra.mxu0 %v2446
      %2988 = vmatprep.subr.bf16.mxu0 %v2433
      %2989 = vmatpush1.bf16.msra.mxu0 %v2432
      %2990 = vmatprep.subr.bf16.mxu0 0
      %2991 = vmatpush2.bf16.msra.mxu0 0
      %2992 = vmatprep.subr.bf16.mxu0 0
      %2993 = vmatpush2.bf16.msra.mxu0 0
      %2994 = vmatprep.subr.bf16.mxu0 %v2831
      %2995 = vmatpush2.bf16.msra.mxu0 %v2828
      %2996 = vmatprep.subr.bf16.mxu0 %v2601
      %2997 = vmatpush2.bf16.msra.mxu0 %v2600
      %2998 = vmatprep.subr.bf16.mxu0 %v2587
      %2999 = vmatpush2.bf16.msra.mxu0 %v2586
      %3000 = vmatprep.subr.bf16.mxu0 %v2573
      %3001 = vmatpush2.bf16.msra.mxu0 %v2572
      %3002 = vmatprep.subr.bf16.mxu0 %v2559
      %3003 = vmatpush2.bf16.msra.mxu0 %v2558
      %3004 = vmatprep.subr.bf16.mxu0 %v2545
      %3005 = vmatpush2.bf16.msra.mxu0 %v2544
      %3006 = vmatprep.mubr.bf16.mxu0 %v2806
      %3007 = vmatmul.mubr.bf16.gmra.mxu0 %v1856
      %v3008 = vpop.f32.mrf.mxu0
      %v3009 = vadd.f32 %v1851, %v3008
      %v3010 = vpop.f32.mrf.mxu0
      %v3011 = vadd.f32 %v1851, %v3010
      %v3012 = vpop.f32.mrf.mxu0
      %v3013 = vpop.f32.mrf.mxu0
      %3014 = vdwg.mxu0
      %3015 = vmatprep.subr.bf16.mxu0 %v2533
      %3016 = vmatpush1.bf16.msra.mxu0 %v2532
      %3017 = vmatprep.subr.bf16.mxu0 %v2519
      %3018 = vmatpush1.bf16.msra.mxu0 %v2518
      %3019 = vmatprep.subr.bf16.mxu0 %v2505
      %3020 = vmatpush1.bf16.msra.mxu0 %v2504
      %3021 = vmatprep.subr.bf16.mxu0 %v2491
      %3022 = vmatpush1.bf16.msra.mxu0 %v2490
      %3023 = vmatprep.subr.bf16.mxu0 %v2477
      %3024 = vmatpush1.bf16.msra.mxu0 %v2476
      %3025 = vmatprep.subr.bf16.mxu0 %v2463
      %3026 = vmatpush1.bf16.msra.mxu0 %v2462
      %3027 = vmatprep.subr.bf16.mxu0 %v2449
      %3028 = vmatpush1.bf16.msra.mxu0 %v2448
      %3029 = vmatprep.subr.bf16.mxu0 %v2435
      %3030 = vmatpush1.bf16.msra.mxu0 %v2434
      %3031 = vmatprep.subr.bf16.mxu0 0
      %3032 = vmatpush2.bf16.msra.mxu0 0
      %3033 = vmatprep.subr.bf16.mxu0 0
      %3034 = vmatpush2.bf16.msra.mxu0 0
      %3035 = vmatprep.subr.bf16.mxu0 %v2837
      %3036 = vmatpush2.bf16.msra.mxu0 %v2834
      %3037 = vmatprep.subr.bf16.mxu0 %v2603
      %3038 = vmatpush2.bf16.msra.mxu0 %v2602
      %3039 = vmatprep.subr.bf16.mxu0 %v2589
      %3040 = vmatpush2.bf16.msra.mxu0 %v2588
      %3041 = vmatprep.subr.bf16.mxu0 %v2575
      %3042 = vmatpush2.bf16.msra.mxu0 %v2574
      %3043 = vmatprep.subr.bf16.mxu0 %v2561
      %3044 = vmatpush2.bf16.msra.mxu0 %v2560
      %3045 = vmatprep.subr.bf16.mxu0 %v2547
      %3046 = vmatpush2.bf16.msra.mxu0 %v2546
      %3047 = vmatprep.mubr.bf16.mxu0 %v2806
      %3048 = vmatmul.mubr.bf16.gmra.mxu0 %v1856
      %v3049 = vpop.f32.mrf.mxu0
      %v3050 = vadd.f32 %v1851, %v3049
      %v3051 = vpop.f32.mrf.mxu0
      %v3052 = vadd.f32 %v1851, %v3051
      %v3053 = vpop.f32.mrf.mxu0
      %v3054 = vpop.f32.mrf.mxu0
      %3055 = vdwg.mxu0
      %3056 = vmatprep.subr.bf16.mxu0 %v2535
      %3057 = vmatpush1.bf16.msra.mxu0 %v2534
      %3058 = vmatprep.subr.bf16.mxu0 %v2521
      %3059 = vmatpush1.bf16.msra.mxu0 %v2520
      %3060 = vmatprep.subr.bf16.mxu0 %v2507
      %3061 = vmatpush1.bf16.msra.mxu0 %v2506
      %3062 = vmatprep.subr.bf16.mxu0 %v2493
      %3063 = vmatpush1.bf16.msra.mxu0 %v2492
      %3064 = vmatprep.subr.bf16.mxu0 %v2479
      %3065 = vmatpush1.bf16.msra.mxu0 %v2478
      %3066 = vmatprep.subr.bf16.mxu0 %v2465
      %3067 = vmatpush1.bf16.msra.mxu0 %v2464
      %3068 = vmatprep.subr.bf16.mxu0 %v2451
      %3069 = vmatpush1.bf16.msra.mxu0 %v2450
      %3070 = vmatprep.subr.bf16.mxu0 %v2437
      %3071 = vmatpush1.bf16.msra.mxu0 %v2436
      %3072 = vmatprep.subr.bf16.mxu0 0
      %3073 = vmatpush2.bf16.msra.mxu0 0
      %3074 = vmatprep.subr.bf16.mxu0 0
      %3075 = vmatpush2.bf16.msra.mxu0 0
      %3076 = vmatprep.subr.bf16.mxu0 %v2843
      %3077 = vmatpush2.bf16.msra.mxu0 %v2840
      %3078 = vmatprep.subr.bf16.mxu0 %v2605
      %3079 = vmatpush2.bf16.msra.mxu0 %v2604
      %3080 = vmatprep.subr.bf16.mxu0 %v2591
      %3081 = vmatpush2.bf16.msra.mxu0 %v2590
      %3082 = vmatprep.subr.bf16.mxu0 %v2577
      %3083 = vmatpush2.bf16.msra.mxu0 %v2576
      %3084 = vmatprep.subr.bf16.mxu0 %v2563
      %3085 = vmatpush2.bf16.msra.mxu0 %v2562
      %3086 = vmatprep.subr.bf16.mxu0 %v2549
      %3087 = vmatpush2.bf16.msra.mxu0 %v2548
      %3088 = vmatprep.mubr.bf16.mxu0 %v2806
      %3089 = vmatmul.mubr.bf16.gmra.mxu0 %v1856
      %v3090 = vpop.f32.mrf.mxu0
      %v3091 = vadd.f32 %v1851, %v3090
      %v3092 = vpop.f32.mrf.mxu0
      %v3093 = vadd.f32 %v1851, %v3092
      %v3094 = vpop.f32.mrf.mxu0
      %v3095 = vpop.f32.mrf.mxu0
      %3096 = vdwg.mxu0
      %3097 = vmatprep.subr.bf16.mxu0 %v2537
      %3098 = vmatpush1.bf16.msra.mxu0 %v2536
      %3099 = vmatprep.subr.bf16.mxu0 %v2523
      %3100 = vmatpush1.bf16.msra.mxu0 %v2522
      %3101 = vmatprep.subr.bf16.mxu0 %v2509
      %3102 = vmatpush1.bf16.msra.mxu0 %v2508
      %3103 = vmatprep.subr.bf16.mxu0 %v2495
      %3104 = vmatpush1.bf16.msra.mxu0 %v2494
      %3105 = vmatprep.subr.bf16.mxu0 %v2481
      %3106 = vmatpush1.bf16.msra.mxu0 %v2480
      %3107 = vmatprep.subr.bf16.mxu0 %v2467
      %3108 = vmatpush1.bf16.msra.mxu0 %v2466
      %3109 = vmatprep.subr.bf16.mxu0 %v2453
      %3110 = vmatpush1.bf16.msra.mxu0 %v2452
      %3111 = vmatprep.subr.bf16.mxu0 %v2439
      %3112 = vmatpush1.bf16.msra.mxu0 %v2438
      %3113 = vmatprep.subr.bf16.mxu0 0
      %3114 = vmatpush2.bf16.msra.mxu0 0
      %3115 = vmatprep.subr.bf16.mxu0 0
      %3116 = vmatpush2.bf16.msra.mxu0 0
      %3117 = vmatprep.subr.bf16.mxu0 %v2849
      %3118 = vmatpush2.bf16.msra.mxu0 %v2846
      %3119 = vmatprep.subr.bf16.mxu0 %v2607
      %3120 = vmatpush2.bf16.msra.mxu0 %v2606
      %3121 = vmatprep.subr.bf16.mxu0 %v2593
      %3122 = vmatpush2.bf16.msra.mxu0 %v2592
      %3123 = vmatprep.subr.bf16.mxu0 %v2579
      %3124 = vmatpush2.bf16.msra.mxu0 %v2578
      %3125 = vmatprep.subr.bf16.mxu0 %v2565
      %3126 = vmatpush2.bf16.msra.mxu0 %v2564
      %3127 = vmatprep.subr.bf16.mxu0 %v2551
      %3128 = vmatpush2.bf16.msra.mxu0 %v2550
      %3129 = vmatprep.mubr.bf16.mxu0 %v2806
      %3130 = vmatmul.mubr.bf16.gmra.mxu0 %v1856
      %v3131 = vpop.f32.mrf.mxu0
      %v3132 = vadd.f32 %v1851, %v3131
      %v3133 = vpop.f32.mrf.mxu0
      %v3134 = vadd.f32 %v1851, %v3133
      %v3135 = vpop.f32.mrf.mxu0
      %v3136 = vpop.f32.mrf.mxu0
      %3137 = vdwg.mxu0
      %v3138 = vmax.f32 %v2886, 0.0
      %v3139 = vmax.f32 %v2888, 0.0
      %v3140 = vmax.f32 %v2927, 0.0
      %v3141 = vmax.f32 %v2929, 0.0
      %v3142 = vmax.f32 %v2968, 0.0
      %v3143 = vmax.f32 %v2970, 0.0
      %v3144 = vmax.f32 %v3009, 0.0
      %v3145 = vmax.f32 %v3011, 0.0
      %v3146 = vmax.f32 %v3050, 0.0
      %v3147 = vmax.f32 %v3052, 0.0
      %v3148 = vmax.f32 %v3091, 0.0
      %v3149 = vmax.f32 %v3093, 0.0
      %v3150 = vmax.f32 %v3132, 0.0
      %v3151 = vmax.f32 %v3134, 0.0
      %v3152 = vld [vmem:[%s5] sm:$0xff]
      %v3153 = vld [vmem:[%s5 + $0x8] sm:$0x3f]
      %v3156 = vlaneseq
      %v3157 = vshrl.u32 %v3156, 7
      %v3158 = vsub.s32 0, %v3157
      %v3159 = vrot.slane %v3152, %v3158
      %v3160 = vlaneseq
      %v3161 = vshrl.u32 %v3160, 7
      %v3162 = vsub.s32 1, %v3161
      %v3163 = vrot.slane %v3152, %v3162
      %v3164 = vlaneseq
      %v3165 = vshrl.u32 %v3164, 7
      %v3166 = vsub.s32 2, %v3165
      %v3167 = vrot.slane %v3152, %v3166
      %v3168 = vlaneseq
      %v3169 = vshrl.u32 %v3168, 7
      %v3170 = vsub.s32 3, %v3169
      %v3171 = vrot.slane %v3152, %v3170
      %v3172 = vlaneseq
      %v3173 = vshrl.u32 %v3172, 7
      %v3174 = vsub.s32 4, %v3173
      %v3175 = vrot.slane %v3152, %v3174
      %v3176 = vlaneseq
      %v3177 = vshrl.u32 %v3176, 7
      %v3178 = vsub.s32 5, %v3177
      %v3179 = vrot.slane %v3152, %v3178
      %v3180 = vlaneseq
      %v3181 = vshrl.u32 %v3180, 7
      %v3182 = vsub.s32 6, %v3181
      %v3183 = vrot.slane %v3152, %v3182
      %v3184 = vlaneseq
      %v3185 = vshrl.u32 %v3184, 7
      %v3186 = vsub.s32 7, %v3185
      %v3187 = vrot.slane %v3152, %v3186
      %v3188 = vlaneseq
      %v3189 = vshrl.u32 %v3188, 7
      %v3190 = vsub.s32 0, %v3189
      %v3191 = vrot.slane %v3153, %v3190
      %v3192 = vlaneseq
      %v3193 = vshrl.u32 %v3192, 7
      %v3194 = vsub.s32 1, %v3193
      %v3195 = vrot.slane %v3153, %v3194
      %v3196 = vlaneseq
      %v3197 = vshrl.u32 %v3196, 7
      %v3198 = vsub.s32 2, %v3197
      %v3199 = vrot.slane %v3153, %v3198
      %v3200 = vlaneseq
      %v3201 = vshrl.u32 %v3200, 7
      %v3202 = vsub.s32 3, %v3201
      %v3203 = vrot.slane %v3153, %v3202
      %v3204 = vlaneseq
      %v3205 = vshrl.u32 %v3204, 7
      %v3206 = vsub.s32 4, %v3205
      %v3207 = vrot.slane %v3153, %v3206
      %v3208 = vlaneseq
      %v3209 = vshrl.u32 %v3208, 7
      %v3210 = vsub.s32 5, %v3209
      %v3211 = vrot.slane %v3153, %v3210
      %v3226 = vmul.f32 %v3138, %v3159
      %v3227 = vmul.f32 %v3139, %v3163
      %v3228 = vmul.f32 %v3140, %v3167
      %v3229 = vmul.f32 %v3141, %v3171
      %v3230 = vmul.f32 %v3142, %v3175
      %v3231 = vmul.f32 %v3143, %v3179
      %v3232 = vmul.f32 %v3144, %v3183
      %v3233 = vmul.f32 %v3145, %v3187
      %v3234 = vmul.f32 %v3146, %v3191
      %v3235 = vmul.f32 %v3147, %v3195
      %v3236 = vmul.f32 %v3148, %v3199
      %v3237 = vmul.f32 %v3149, %v3203
      %v3238 = vmul.f32 %v3150, %v3207
      %v3239 = vmul.f32 %v3151, %v3211
      %v3240 = vpack.c.bf16 %v3226, %v3226
      %v3241 = vpack.c.bf16 %v3227, %v3227
      %v3242 = vpack.c.bf16 %v3228, %v3228
      %v3243 = vpack.c.bf16 %v3229, %v3229
      %v3244 = vpack.c.bf16 %v3230, %v3230
      %v3245 = vpack.c.bf16 %v3231, %v3231
      %v3246 = vpack.c.bf16 %v3232, %v3232
      %v3247 = vpack.c.bf16 %v3233, %v3233
      %v3248 = vpack.c.bf16 %v3234, %v3234
      %v3249 = vpack.c.bf16 %v3235, %v3235
      %v3250 = vpack.c.bf16 %v3236, %v3236
      %v3251 = vpack.c.bf16 %v3237, %v3237
      %v3252 = vpack.c.bf16 %v3238, %v3238
      %v3253 = vpack.c.bf16 %v3239, %v3239
      %v3265 = vunpack.c.l.b16 %v3240
      %v3266 = vunpack.c.l.b16 %v3241
      %v3267 = vunpack.c.l.b16 %v3242
      %v3268 = vunpack.c.l.b16 %v3243
      %v3269 = vunpack.c.l.b16 %v3244
      %v3270 = vunpack.c.l.b16 %v3245
      %v3271 = vunpack.c.l.b16 %v3246
      %v3272 = vunpack.c.l.b16 %v3247
      %v3273 = vunpack.c.l.b16 %v3248
      %v3274 = vunpack.c.l.b16 %v3249
      %v3275 = vunpack.c.l.b16 %v3250
      %v3276 = vpack.c.b16 %v3266, %v3265
      %v3277 = vpack.c.b16 %v3268, %v3267
      %v3278 = vpack.c.b16 %v3270, %v3269
      %v3279 = vpack.c.b16 %v3272, %v3271
      %v3280 = vpack.c.b16 %v3274, %v3273
      %v3281 = vpack.c.b16 %v3275, %v3275
      %3288 = vst [vmem:[#allocation2] sm:$0xff] %v3276
      %3289 = vst [vmem:[#allocation2 + $0x8] sm:$0xff] %v3277
      %3290 = vst [vmem:[#allocation2 + $0x10] sm:$0xff] %v3278
      %3291 = vst [vmem:[#allocation2 + $0x18] sm:$0xff] %v3279
      %3292 = vst [vmem:[#allocation2 + $0x20] sm:$0xff] %v3280
      %3293 = vst [vmem:[#allocation2 + $0x28] sm:$0xf] %v3281
      %v3295 = vunpack.c.l.b16 %v3251
      %v3296 = vpack.c.b16 %v3295, %v3275
      %3297 = vrot.lane.b32.xlu0 %v3276, 127
      %v3298 = vpop.permute.xlu0 %3297
      %3299 = vrot.lane.b32.xlu0 %v3277, 127
      %v3300 = vpop.permute.xlu0 %3299
      %3301 = vrot.lane.b32.xlu0 %v3278, 127
      %v3302 = vpop.permute.xlu0 %3301
      %3303 = vrot.lane.b32.xlu0 %v3279, 127
      %v3304 = vpop.permute.xlu0 %3303
      %3305 = vrot.lane.b32.xlu0 %v3280, 127
      %v3306 = vpop.permute.xlu0 %3305
      %3307 = vrot.lane.b32.xlu0 %v3296, 127
      %v3308 = vpop.permute.xlu0 %3307
      %v3309 = vrot.slane %v3298, 4
      %v3310 = vrot.slane %v3300, 4
      %v3311 = vrot.slane %v3302, 4
      %v3312 = vrot.slane %v3304, 4
      %v3313 = vrot.slane %v3306, 4
      %v3314 = vrot.slane %v3308, 4
      %v3315 = vsel %vm301, %v3309, %v3310
      %v3316 = vsel %vm303, %v3298, %v3315
      %v3317 = vsel %vm301, %v3310, %v3311
      %v3318 = vsel %vm303, %v3300, %v3317
      %v3319 = vsel %vm301, %v3311, %v3312
      %v3320 = vsel %vm303, %v3302, %v3319
      %v3321 = vsel %vm301, %v3312, %v3313
      %v3322 = vsel %vm303, %v3304, %v3321
      %v3323 = vsel %vm301, %v3313, %v3314
      %v3324 = vsel %vm303, %v3306, %v3323
      %v3325 = vsel %vm303, %v3308, %v3314
      %3332 = vst [vmem:[#allocation2 + $0x38] sm:$0xff] %v3316
      %3333 = vst [vmem:[#allocation2 + $0x40] sm:$0xff] %v3318
      %3334 = vst [vmem:[#allocation2 + $0x48] sm:$0xff] %v3320
      %3335 = vst [vmem:[#allocation2 + $0x50] sm:$0xff] %v3322
      %3336 = vst [vmem:[#allocation2 + $0x58] sm:$0xff] %v3324
      %3337 = vst [vmem:[#allocation2 + $0x60] sm:$0xf] %v3325
      %3338 = vrot.lane.b32.xlu0 %v3276, 126
      %v3339 = vpop.permute.xlu0 %3338
      %3340 = vrot.lane.b32.xlu0 %v3277, 126
      %v3341 = vpop.permute.xlu0 %3340
      %3342 = vrot.lane.b32.xlu0 %v3278, 126
      %v3343 = vpop.permute.xlu0 %3342
      %3344 = vrot.lane.b32.xlu0 %v3279, 126
      %v3345 = vpop.permute.xlu0 %3344
      %3346 = vrot.lane.b32.xlu0 %v3280, 126
      %v3347 = vpop.permute.xlu0 %3346
      %3348 = vrot.lane.b32.xlu0 %v3296, 126
      %v3349 = vpop.permute.xlu0 %3348
      %v3350 = vrot.slane %v3339, 4
      %v3351 = vrot.slane %v3341, 4
      %v3352 = vrot.slane %v3343, 4
      %v3353 = vrot.slane %v3345, 4
      %v3354 = vrot.slane %v3347, 4
      %v3355 = vrot.slane %v3349, 4
      %v3356 = vsel %vm301, %v3350, %v3351
      %v3357 = vsel %vm356, %v3339, %v3356
      %v3358 = vsel %vm301, %v3351, %v3352
      %v3359 = vsel %vm356, %v3341, %v3358
      %v3360 = vsel %vm301, %v3352, %v3353
      %v3361 = vsel %vm356, %v3343, %v3360
      %v3362 = vsel %vm301, %v3353, %v3354
      %v3363 = vsel %vm356, %v3345, %v3362
      %v3364 = vsel %vm301, %v3354, %v3355
      %v3365 = vsel %vm356, %v3347, %v3364
      %v3366 = vsel %vm356, %v3349, %v3355
      %3373 = vst [vmem:[#allocation2 + $0x70] sm:$0xff] %v3357
      %3374 = vst [vmem:[#allocation2 + $0x78] sm:$0xff] %v3359
      %3375 = vst [vmem:[#allocation2 + $0x80] sm:$0xff] %v3361
      %3376 = vst [vmem:[#allocation2 + $0x88] sm:$0xff] %v3363
      %3377 = vst [vmem:[#allocation2 + $0x90] sm:$0xff] %v3365
      %3378 = vst [vmem:[#allocation2 + $0x98] sm:$0xf] %v3366
      %3379 = vrot.lane.b32.xlu0 %v3276, 117
      %v3380 = vpop.permute.xlu0 %3379
      %3381 = vrot.lane.b32.xlu0 %v3277, 117
      %v3382 = vpop.permute.xlu0 %3381
      %3383 = vrot.lane.b32.xlu0 %v3278, 117
      %v3384 = vpop.permute.xlu0 %3383
      %3385 = vrot.lane.b32.xlu0 %v3279, 117
      %v3386 = vpop.permute.xlu0 %3385
      %3387 = vrot.lane.b32.xlu0 %v3280, 117
      %v3388 = vpop.permute.xlu0 %3387
      %3389 = vrot.lane.b32.xlu0 %v3296, 117
      %v3390 = vpop.permute.xlu0 %3389
      %v3391 = vrot.slane %v3380, 4
      %v3392 = vrot.slane %v3382, 4
      %v3393 = vrot.slane %v3384, 4
      %v3394 = vrot.slane %v3386, 4
      %v3395 = vrot.slane %v3388, 4
      %v3396 = vrot.slane %v3390, 4
      %v3397 = vsel %vm301, %v3391, %v3392
      %v3398 = vsel %vm409, %v3380, %v3397
      %v3399 = vsel %vm301, %v3392, %v3393
      %v3400 = vsel %vm409, %v3382, %v3399
      %v3401 = vsel %vm301, %v3393, %v3394
      %v3402 = vsel %vm409, %v3384, %v3401
      %v3403 = vsel %vm301, %v3394, %v3395
      %v3404 = vsel %vm409, %v3386, %v3403
      %v3405 = vsel %vm301, %v3395, %v3396
      %v3406 = vsel %vm409, %v3388, %v3405
      %v3407 = vsel %vm409, %v3390, %v3396
      %3414 = vst [vmem:[#allocation2 + $0xa8] sm:$0xff] %v3398
      %3415 = vst [vmem:[#allocation2 + $0xb0] sm:$0xff] %v3400
      %3416 = vst [vmem:[#allocation2 + $0xb8] sm:$0xff] %v3402
      %3417 = vst [vmem:[#allocation2 + $0xc0] sm:$0xff] %v3404
      %3418 = vst [vmem:[#allocation2 + $0xc8] sm:$0xff] %v3406
      %3419 = vst [vmem:[#allocation2 + $0xd0] sm:$0xf] %v3407
      %3420 = vrot.lane.b32.xlu0 %v3276, 116
      %v3421 = vpop.permute.xlu0 %3420
      %3422 = vrot.lane.b32.xlu0 %v3277, 116
      %v3423 = vpop.permute.xlu0 %3422
      %3424 = vrot.lane.b32.xlu0 %v3278, 116
      %v3425 = vpop.permute.xlu0 %3424
      %3426 = vrot.lane.b32.xlu0 %v3279, 116
      %v3427 = vpop.permute.xlu0 %3426
      %3428 = vrot.lane.b32.xlu0 %v3280, 116
      %v3429 = vpop.permute.xlu0 %3428
      %3430 = vrot.lane.b32.xlu0 %v3296, 116
      %v3431 = vpop.permute.xlu0 %3430
      %v3432 = vrot.slane %v3421, 4
      %v3433 = vrot.slane %v3423, 4
      %v3434 = vrot.slane %v3425, 4
      %v3435 = vrot.slane %v3427, 4
      %v3436 = vrot.slane %v3429, 4
      %v3437 = vrot.slane %v3431, 4
      %v3438 = vsel %vm301, %v3432, %v3433
      %v3439 = vsel %vm462, %v3421, %v3438
      %v3440 = vsel %vm301, %v3433, %v3434
      %v3441 = vsel %vm462, %v3423, %v3440
      %v3442 = vsel %vm301, %v3434, %v3435
      %v3443 = vsel %vm462, %v3425, %v3442
      %v3444 = vsel %vm301, %v3435, %v3436
      %v3445 = vsel %vm462, %v3427, %v3444
      %v3446 = vsel %vm301, %v3436, %v3437
      %v3447 = vsel %vm462, %v3429, %v3446
      %v3448 = vsel %vm462, %v3431, %v3437
      %3455 = vst [vmem:[#allocation2 + $0xe0] sm:$0xff] %v3439
      %3456 = vst [vmem:[#allocation2 + $0xe8] sm:$0xff] %v3441
      %3457 = vst [vmem:[#allocation2 + $0xf0] sm:$0xff] %v3443
      %3458 = vst [vmem:[#allocation2 + $0xf8] sm:$0xff] %v3445
      %3459 = vst [vmem:[#allocation2 + $0x100] sm:$0xff] %v3447
      %3460 = vst [vmem:[#allocation2 + $0x108] sm:$0xf] %v3448
      %3461 = vrot.lane.b32.xlu0 %v3276, 115
      %v3462 = vpop.permute.xlu0 %3461
      %3463 = vrot.lane.b32.xlu0 %v3277, 115
      %v3464 = vpop.permute.xlu0 %3463
      %3465 = vrot.lane.b32.xlu0 %v3278, 115
      %v3466 = vpop.permute.xlu0 %3465
      %3467 = vrot.lane.b32.xlu0 %v3279, 115
      %v3468 = vpop.permute.xlu0 %3467
      %3469 = vrot.lane.b32.xlu0 %v3280, 115
      %v3470 = vpop.permute.xlu0 %3469
      %3471 = vrot.lane.b32.xlu0 %v3296, 115
      %v3472 = vpop.permute.xlu0 %3471
      %v3473 = vrot.slane %v3462, 4
      %v3474 = vrot.slane %v3464, 4
      %v3475 = vrot.slane %v3466, 4
      %v3476 = vrot.slane %v3468, 4
      %v3477 = vrot.slane %v3470, 4
      %v3478 = vrot.slane %v3472, 4
      %v3479 = vsel %vm301, %v3473, %v3474
      %v3480 = vsel %vm515, %v3462, %v3479
      %v3481 = vsel %vm301, %v3474, %v3475
      %v3482 = vsel %vm515, %v3464, %v3481
      %v3483 = vsel %vm301, %v3475, %v3476
      %v3484 = vsel %vm515, %v3466, %v3483
      %v3485 = vsel %vm301, %v3476, %v3477
      %v3486 = vsel %vm515, %v3468, %v3485
      %v3487 = vsel %vm301, %v3477, %v3478
      %v3488 = vsel %vm515, %v3470, %v3487
      %v3489 = vsel %vm515, %v3472, %v3478
      %3496 = vst [vmem:[#allocation2 + $0x118] sm:$0xff] %v3480
      %3497 = vst [vmem:[#allocation2 + $0x120] sm:$0xff] %v3482
      %3498 = vst [vmem:[#allocation2 + $0x128] sm:$0xff] %v3484
      %3499 = vst [vmem:[#allocation2 + $0x130] sm:$0xff] %v3486
      %3500 = vst [vmem:[#allocation2 + $0x138] sm:$0xff] %v3488
      %3501 = vst [vmem:[#allocation2 + $0x140] sm:$0xf] %v3489
      %3502 = vrot.lane.b32.xlu0 %v3276, 106
      %v3503 = vpop.permute.xlu0 %3502
      %3504 = vrot.lane.b32.xlu0 %v3277, 106
      %v3505 = vpop.permute.xlu0 %3504
      %3506 = vrot.lane.b32.xlu0 %v3278, 106
      %v3507 = vpop.permute.xlu0 %3506
      %3508 = vrot.lane.b32.xlu0 %v3279, 106
      %v3509 = vpop.permute.xlu0 %3508
      %3510 = vrot.lane.b32.xlu0 %v3280, 106
      %v3511 = vpop.permute.xlu0 %3510
      %3512 = vrot.lane.b32.xlu0 %v3296, 106
      %v3513 = vpop.permute.xlu0 %3512
      %v3514 = vrot.slane %v3503, 4
      %v3515 = vrot.slane %v3505, 4
      %v3516 = vrot.slane %v3507, 4
      %v3517 = vrot.slane %v3509, 4
      %v3518 = vrot.slane %v3511, 4
      %v3519 = vrot.slane %v3513, 4
      %v3520 = vsel %vm301, %v3514, %v3515
      %v3521 = vsel %vm568, %v3503, %v3520
      %v3522 = vsel %vm301, %v3515, %v3516
      %v3523 = vsel %vm568, %v3505, %v3522
      %v3524 = vsel %vm301, %v3516, %v3517
      %v3525 = vsel %vm568, %v3507, %v3524
      %v3526 = vsel %vm301, %v3517, %v3518
      %v3527 = vsel %vm568, %v3509, %v3526
      %v3528 = vsel %vm301, %v3518, %v3519
      %v3529 = vsel %vm568, %v3511, %v3528
      %v3530 = vsel %vm568, %v3513, %v3519
      %3537 = vst [vmem:[#allocation2 + $0x150] sm:$0xff] %v3521
      %3538 = vst [vmem:[#allocation2 + $0x158] sm:$0xff] %v3523
      %3539 = vst [vmem:[#allocation2 + $0x160] sm:$0xff] %v3525
      %3540 = vst [vmem:[#allocation2 + $0x168] sm:$0xff] %v3527
      %3541 = vst [vmem:[#allocation2 + $0x170] sm:$0xff] %v3529
      %3542 = vst [vmem:[#allocation2 + $0x178] sm:$0xf] %v3530
      %3543 = vrot.lane.b32.xlu0 %v3276, 105
      %v3544 = vpop.permute.xlu0 %3543
      %3545 = vrot.lane.b32.xlu0 %v3277, 105
      %v3546 = vpop.permute.xlu0 %3545
      %3547 = vrot.lane.b32.xlu0 %v3278, 105
      %v3548 = vpop.permute.xlu0 %3547
      %3549 = vrot.lane.b32.xlu0 %v3279, 105
      %v3550 = vpop.permute.xlu0 %3549
      %3551 = vrot.lane.b32.xlu0 %v3280, 105
      %v3552 = vpop.permute.xlu0 %3551
      %3553 = vrot.lane.b32.xlu0 %v3296, 105
      %v3554 = vpop.permute.xlu0 %3553
      %v3555 = vrot.slane %v3544, 4
      %v3556 = vrot.slane %v3546, 4
      %v3557 = vrot.slane %v3548, 4
      %v3558 = vrot.slane %v3550, 4
      %v3559 = vrot.slane %v3552, 4
      %v3560 = vrot.slane %v3554, 4
      %v3561 = vsel %vm301, %v3555, %v3556
      %v3562 = vsel %vm621, %v3544, %v3561
      %v3563 = vsel %vm301, %v3556, %v3557
      %v3564 = vsel %vm621, %v3546, %v3563
      %v3565 = vsel %vm301, %v3557, %v3558
      %v3566 = vsel %vm621, %v3548, %v3565
      %v3567 = vsel %vm301, %v3558, %v3559
      %v3568 = vsel %vm621, %v3550, %v3567
      %v3569 = vsel %vm301, %v3559, %v3560
      %v3570 = vsel %vm621, %v3552, %v3569
      %v3571 = vsel %vm621, %v3554, %v3560
      %3578 = vst [vmem:[#allocation2 + $0x188] sm:$0xff] %v3562
      %3579 = vst [vmem:[#allocation2 + $0x190] sm:$0xff] %v3564
      %3580 = vst [vmem:[#allocation2 + $0x198] sm:$0xff] %v3566
      %3581 = vst [vmem:[#allocation2 + $0x1a0] sm:$0xff] %v3568
      %3582 = vst [vmem:[#allocation2 + $0x1a8] sm:$0xff] %v3570
      %3583 = vst [vmem:[#allocation2 + $0x1b0] sm:$0xf] %v3571
      %3584 = vrot.lane.b32.xlu0 %v3276, 104
      %v3585 = vpop.permute.xlu0 %3584
      %3586 = vrot.lane.b32.xlu0 %v3277, 104
      %v3587 = vpop.permute.xlu0 %3586
      %3588 = vrot.lane.b32.xlu0 %v3278, 104
      %v3589 = vpop.permute.xlu0 %3588
      %3590 = vrot.lane.b32.xlu0 %v3279, 104
      %v3591 = vpop.permute.xlu0 %3590
      %3592 = vrot.lane.b32.xlu0 %v3280, 104
      %v3593 = vpop.permute.xlu0 %3592
      %3594 = vrot.lane.b32.xlu0 %v3296, 104
      %v3595 = vpop.permute.xlu0 %3594
      %v3596 = vrot.slane %v3585, 4
      %v3597 = vrot.slane %v3587, 4
      %v3598 = vrot.slane %v3589, 4
      %v3599 = vrot.slane %v3591, 4
      %v3600 = vrot.slane %v3593, 4
      %v3601 = vrot.slane %v3595, 4
      %v3602 = vsel %vm301, %v3596, %v3597
      %v3603 = vsel %vm674, %v3585, %v3602
      %v3604 = vsel %vm301, %v3597, %v3598
      %v3605 = vsel %vm674, %v3587, %v3604
      %v3606 = vsel %vm301, %v3598, %v3599
      %v3607 = vsel %vm674, %v3589, %v3606
      %v3608 = vsel %vm301, %v3599, %v3600
      %v3609 = vsel %vm674, %v3591, %v3608
      %v3610 = vsel %vm301, %v3600, %v3601
      %v3611 = vsel %vm674, %v3593, %v3610
      %v3612 = vsel %vm674, %v3595, %v3601
      %3619 = vst [vmem:[#allocation2 + $0x1c0] sm:$0xff] %v3603
      %3620 = vst [vmem:[#allocation2 + $0x1c8] sm:$0xff] %v3605
      %3621 = vst [vmem:[#allocation2 + $0x1d0] sm:$0xff] %v3607
      %3622 = vst [vmem:[#allocation2 + $0x1d8] sm:$0xff] %v3609
      %3623 = vst [vmem:[#allocation2 + $0x1e0] sm:$0xff] %v3611
      %3624 = vst [vmem:[#allocation2 + $0x1e8] sm:$0xf] %v3612
      %3625 = vrot.lane.b32.xlu0 %v3276, 7
      %v3626 = vpop.permute.xlu0 %3625
      %3627 = vrot.lane.b32.xlu0 %v3277, 7
      %v3628 = vpop.permute.xlu0 %3627
      %3629 = vrot.lane.b32.xlu0 %v3278, 7
      %v3630 = vpop.permute.xlu0 %3629
      %3631 = vrot.lane.b32.xlu0 %v3279, 7
      %v3632 = vpop.permute.xlu0 %3631
      %3633 = vrot.lane.b32.xlu0 %v3280, 7
      %v3634 = vpop.permute.xlu0 %3633
      %3635 = vrot.lane.b32.xlu0 %v3296, 7
      %v3636 = vpop.permute.xlu0 %3635
      %v3637 = vrot.slane %v3626, 4
      %v3638 = vrot.slane %v3628, 4
      %v3639 = vrot.slane %v3630, 4
      %v3640 = vrot.slane %v3632, 4
      %v3641 = vrot.slane %v3634, 4
      %v3642 = vrot.slane %v3636, 4
      %v3643 = vsel %vm301, %v3637, %v3638
      %v3644 = vsel %vm727, %v3626, %v3643
      %v3645 = vsel %vm301, %v3638, %v3639
      %v3646 = vsel %vm727, %v3628, %v3645
      %v3647 = vsel %vm301, %v3639, %v3640
      %v3648 = vsel %vm727, %v3630, %v3647
      %v3649 = vsel %vm301, %v3640, %v3641
      %v3650 = vsel %vm727, %v3632, %v3649
      %v3651 = vsel %vm301, %v3641, %v3642
      %v3652 = vsel %vm727, %v3634, %v3651
      %v3653 = vsel %vm727, %v3636, %v3642
      %3660 = vst [vmem:[#allocation2 + $0x1f8] sm:$0xff] %v3644
      %3661 = vst [vmem:[#allocation2 + $0x200] sm:$0xff] %v3646
      %3662 = vst [vmem:[#allocation2 + $0x208] sm:$0xff] %v3648
      %3663 = vst [vmem:[#allocation2 + $0x210] sm:$0xff] %v3650
      %3664 = vst [vmem:[#allocation2 + $0x218] sm:$0xff] %v3652
      %3665 = vst [vmem:[#allocation2 + $0x220] sm:$0xf] %v3653
      %3666 = vrot.lane.b32.xlu0 %v3276, 6
      %v3667 = vpop.permute.xlu0 %3666
      %3668 = vrot.lane.b32.xlu0 %v3277, 6
      %v3669 = vpop.permute.xlu0 %3668
      %3670 = vrot.lane.b32.xlu0 %v3278, 6
      %v3671 = vpop.permute.xlu0 %3670
      %3672 = vrot.lane.b32.xlu0 %v3279, 6
      %v3673 = vpop.permute.xlu0 %3672
      %3674 = vrot.lane.b32.xlu0 %v3280, 6
      %v3675 = vpop.permute.xlu0 %3674
      %3676 = vrot.lane.b32.xlu0 %v3296, 6
      %v3677 = vpop.permute.xlu0 %3676
      %v3678 = vrot.slane %v3667, 4
      %v3679 = vrot.slane %v3669, 4
      %v3680 = vrot.slane %v3671, 4
      %v3681 = vrot.slane %v3673, 4
      %v3682 = vrot.slane %v3675, 4
      %v3683 = vrot.slane %v3677, 4
      %v3684 = vsel %vm301, %v3678, %v3679
      %v3685 = vsel %vm780, %v3667, %v3684
      %v3686 = vsel %vm301, %v3679, %v3680
      %v3687 = vsel %vm780, %v3669, %v3686
      %v3688 = vsel %vm301, %v3680, %v3681
      %v3689 = vsel %vm780, %v3671, %v3688
      %v3690 = vsel %vm301, %v3681, %v3682
      %v3691 = vsel %vm780, %v3673, %v3690
      %v3692 = vsel %vm301, %v3682, %v3683
      %v3693 = vsel %vm780, %v3675, %v3692
      %v3694 = vsel %vm780, %v3677, %v3683
      %3701 = vst [vmem:[#allocation2 + $0x230] sm:$0xff] %v3685
      %3702 = vst [vmem:[#allocation2 + $0x238] sm:$0xff] %v3687
      %3703 = vst [vmem:[#allocation2 + $0x240] sm:$0xff] %v3689
      %3704 = vst [vmem:[#allocation2 + $0x248] sm:$0xff] %v3691
      %3705 = vst [vmem:[#allocation2 + $0x250] sm:$0xff] %v3693
      %3706 = vst [vmem:[#allocation2 + $0x258] sm:$0xf] %v3694
      %3707 = vrot.lane.b32.xlu0 %v3276, 5
      %v3708 = vpop.permute.xlu0 %3707
      %3709 = vrot.lane.b32.xlu0 %v3277, 5
      %v3710 = vpop.permute.xlu0 %3709
      %3711 = vrot.lane.b32.xlu0 %v3278, 5
      %v3712 = vpop.permute.xlu0 %3711
      %3713 = vrot.lane.b32.xlu0 %v3279, 5
      %v3714 = vpop.permute.xlu0 %3713
      %3715 = vrot.lane.b32.xlu0 %v3280, 5
      %v3716 = vpop.permute.xlu0 %3715
      %3717 = vrot.lane.b32.xlu0 %v3296, 5
      %v3718 = vpop.permute.xlu0 %3717
      %v3719 = vrot.slane %v3708, 4
      %v3720 = vrot.slane %v3710, 4
      %v3721 = vrot.slane %v3712, 4
      %v3722 = vrot.slane %v3714, 4
      %v3723 = vrot.slane %v3716, 4
      %v3724 = vrot.slane %v3718, 4
      %v3725 = vsel %vm301, %v3719, %v3720
      %v3726 = vsel %vm833, %v3708, %v3725
      %v3727 = vsel %vm301, %v3720, %v3721
      %v3728 = vsel %vm833, %v3710, %v3727
      %v3729 = vsel %vm301, %v3721, %v3722
      %v3730 = vsel %vm833, %v3712, %v3729
      %v3731 = vsel %vm301, %v3722, %v3723
      %v3732 = vsel %vm833, %v3714, %v3731
      %v3733 = vsel %vm301, %v3723, %v3724
      %v3734 = vsel %vm833, %v3716, %v3733
      %v3735 = vsel %vm833, %v3718, %v3724
      %3742 = vst [vmem:[#allocation2 + $0x268] sm:$0xff] %v3726
      %3743 = vst [vmem:[#allocation2 + $0x270] sm:$0xff] %v3728
      %3744 = vst [vmem:[#allocation2 + $0x278] sm:$0xff] %v3730
      %3745 = vst [vmem:[#allocation2 + $0x280] sm:$0xff] %v3732
      %3746 = vst [vmem:[#allocation2 + $0x288] sm:$0xff] %v3734
      %3747 = vst [vmem:[#allocation2 + $0x290] sm:$0xf] %v3735
      %v3749 = vunpack.c.l.b16 %v3252
      %v3750 = vpack.c.b16 %v3267, %v3266
      %v3751 = vpack.c.b16 %v3269, %v3268
      %v3752 = vpack.c.b16 %v3271, %v3270
      %v3753 = vpack.c.b16 %v3273, %v3272
      %v3754 = vpack.c.b16 %v3275, %v3274
      %v3755 = vpack.c.b16 %v3749, %v3295
      %3756 = vrot.lane.b32.xlu0 %v3750, 124
      %v3757 = vpop.permute.xlu0 %3756
      %3758 = vrot.lane.b32.xlu0 %v3751, 124
      %v3759 = vpop.permute.xlu0 %3758
      %3760 = vrot.lane.b32.xlu0 %v3752, 124
      %v3761 = vpop.permute.xlu0 %3760
      %3762 = vrot.lane.b32.xlu0 %v3753, 124
      %v3763 = vpop.permute.xlu0 %3762
      %3764 = vrot.lane.b32.xlu0 %v3754, 124
      %v3765 = vpop.permute.xlu0 %3764
      %3766 = vrot.lane.b32.xlu0 %v3755, 124
      %v3767 = vpop.permute.xlu0 %3766
      %v3768 = vrot.slane %v3757, 4
      %v3769 = vrot.slane %v3759, 4
      %v3770 = vrot.slane %v3761, 4
      %v3771 = vrot.slane %v3763, 4
      %v3772 = vrot.slane %v3765, 4
      %v3773 = vrot.slane %v3767, 4
      %v3774 = vsel %vm301, %v3768, %v3769
      %v3775 = vsel %vm886, %v3757, %v3774
      %v3776 = vsel %vm301, %v3769, %v3770
      %v3777 = vsel %vm886, %v3759, %v3776
      %v3778 = vsel %vm301, %v3770, %v3771
      %v3779 = vsel %vm886, %v3761, %v3778
      %v3780 = vsel %vm301, %v3771, %v3772
      %v3781 = vsel %vm886, %v3763, %v3780
      %v3782 = vsel %vm301, %v3772, %v3773
      %v3783 = vsel %vm886, %v3765, %v3782
      %v3784 = vsel %vm886, %v3767, %v3773
      %3791 = vst [vmem:[#allocation2 + $0x2a0] sm:$0xff] %v3775
      %3792 = vst [vmem:[#allocation2 + $0x2a8] sm:$0xff] %v3777
      %3793 = vst [vmem:[#allocation2 + $0x2b0] sm:$0xff] %v3779
      %3794 = vst [vmem:[#allocation2 + $0x2b8] sm:$0xff] %v3781
      %3795 = vst [vmem:[#allocation2 + $0x2c0] sm:$0xff] %v3783
      %3796 = vst [vmem:[#allocation2 + $0x2c8] sm:$0xf] %v3784
      %3797 = vrot.lane.b32.xlu0 %v3750, 123
      %v3798 = vpop.permute.xlu0 %3797
      %3799 = vrot.lane.b32.xlu0 %v3751, 123
      %v3800 = vpop.permute.xlu0 %3799
      %3801 = vrot.lane.b32.xlu0 %v3752, 123
      %v3802 = vpop.permute.xlu0 %3801
      %3803 = vrot.lane.b32.xlu0 %v3753, 123
      %v3804 = vpop.permute.xlu0 %3803
      %3805 = vrot.lane.b32.xlu0 %v3754, 123
      %v3806 = vpop.permute.xlu0 %3805
      %3807 = vrot.lane.b32.xlu0 %v3755, 123
      %v3808 = vpop.permute.xlu0 %3807
      %v3809 = vrot.slane %v3798, 4
      %v3810 = vrot.slane %v3800, 4
      %v3811 = vrot.slane %v3802, 4
      %v3812 = vrot.slane %v3804, 4
      %v3813 = vrot.slane %v3806, 4
      %v3814 = vrot.slane %v3808, 4
      %v3815 = vsel %vm301, %v3809, %v3810
      %v3816 = vsel %vm939, %v3798, %v3815
      %v3817 = vsel %vm301, %v3810, %v3811
      %v3818 = vsel %vm939, %v3800, %v3817
      %v3819 = vsel %vm301, %v3811, %v3812
      %v3820 = vsel %vm939, %v3802, %v3819
      %v3821 = vsel %vm301, %v3812, %v3813
      %v3822 = vsel %vm939, %v3804, %v3821
      %v3823 = vsel %vm301, %v3813, %v3814
      %v3824 = vsel %vm939, %v3806, %v3823
      %v3825 = vsel %vm939, %v3808, %v3814
      %3832 = vst [vmem:[#allocation2 + $0x2d8] sm:$0xff] %v3816
      %3833 = vst [vmem:[#allocation2 + $0x2e0] sm:$0xff] %v3818
      %3834 = vst [vmem:[#allocation2 + $0x2e8] sm:$0xff] %v3820
      %3835 = vst [vmem:[#allocation2 + $0x2f0] sm:$0xff] %v3822
      %3836 = vst [vmem:[#allocation2 + $0x2f8] sm:$0xff] %v3824
      %3837 = vst [vmem:[#allocation2 + $0x300] sm:$0xf] %v3825
      %3838 = vrot.lane.b32.xlu0 %v3750, 122
      %v3839 = vpop.permute.xlu0 %3838
      %3840 = vrot.lane.b32.xlu0 %v3751, 122
      %v3841 = vpop.permute.xlu0 %3840
      %3842 = vrot.lane.b32.xlu0 %v3752, 122
      %v3843 = vpop.permute.xlu0 %3842
      %3844 = vrot.lane.b32.xlu0 %v3753, 122
      %v3845 = vpop.permute.xlu0 %3844
      %3846 = vrot.lane.b32.xlu0 %v3754, 122
      %v3847 = vpop.permute.xlu0 %3846
      %3848 = vrot.lane.b32.xlu0 %v3755, 122
      %v3849 = vpop.permute.xlu0 %3848
      %v3850 = vrot.slane %v3839, 4
      %v3851 = vrot.slane %v3841, 4
      %v3852 = vrot.slane %v3843, 4
      %v3853 = vrot.slane %v3845, 4
      %v3854 = vrot.slane %v3847, 4
      %v3855 = vrot.slane %v3849, 4
      %v3856 = vsel %vm301, %v3850, %v3851
      %v3857 = vsel %vm992, %v3839, %v3856
      %v3858 = vsel %vm301, %v3851, %v3852
      %v3859 = vsel %vm992, %v3841, %v3858
      %v3860 = vsel %vm301, %v3852, %v3853
      %v3861 = vsel %vm992, %v3843, %v3860
      %v3862 = vsel %vm301, %v3853, %v3854
      %v3863 = vsel %vm992, %v3845, %v3862
      %v3864 = vsel %vm301, %v3854, %v3855
      %v3865 = vsel %vm992, %v3847, %v3864
      %v3866 = vsel %vm992, %v3849, %v3855
      %3873 = vst [vmem:[#allocation2 + $0x310] sm:$0xff] %v3857
      %3874 = vst [vmem:[#allocation2 + $0x318] sm:$0xff] %v3859
      %3875 = vst [vmem:[#allocation2 + $0x320] sm:$0xff] %v3861
      %3876 = vst [vmem:[#allocation2 + $0x328] sm:$0xff] %v3863
      %3877 = vst [vmem:[#allocation2 + $0x330] sm:$0xff] %v3865
      %3878 = vst [vmem:[#allocation2 + $0x338] sm:$0xf] %v3866
      %3879 = vrot.lane.b32.xlu0 %v3750, 113
      %v3880 = vpop.permute.xlu0 %3879
      %3881 = vrot.lane.b32.xlu0 %v3751, 113
      %v3882 = vpop.permute.xlu0 %3881
      %3883 = vrot.lane.b32.xlu0 %v3752, 113
      %v3884 = vpop.permute.xlu0 %3883
      %3885 = vrot.lane.b32.xlu0 %v3753, 113
      %v3886 = vpop.permute.xlu0 %3885
      %3887 = vrot.lane.b32.xlu0 %v3754, 113
      %v3888 = vpop.permute.xlu0 %3887
      %3889 = vrot.lane.b32.xlu0 %v3755, 113
      %v3890 = vpop.permute.xlu0 %3889
      %v3891 = vrot.slane %v3880, 4
      %v3892 = vrot.slane %v3882, 4
      %v3893 = vrot.slane %v3884, 4
      %v3894 = vrot.slane %v3886, 4
      %v3895 = vrot.slane %v3888, 4
      %v3896 = vrot.slane %v3890, 4
      %v3897 = vsel %vm301, %v3891, %v3892
      %v3898 = vsel %vm1045, %v3880, %v3897
      %v3899 = vsel %vm301, %v3892, %v3893
      %v3900 = vsel %vm1045, %v3882, %v3899
      %v3901 = vsel %vm301, %v3893, %v3894
      %v3902 = vsel %vm1045, %v3884, %v3901
      %v3903 = vsel %vm301, %v3894, %v3895
      %v3904 = vsel %vm1045, %v3886, %v3903
      %v3905 = vsel %vm301, %v3895, %v3896
      %v3906 = vsel %vm1045, %v3888, %v3905
      %v3907 = vsel %vm1045, %v3890, %v3896
      %3914 = vst [vmem:[#allocation2 + $0x348] sm:$0xff] %v3898
      %3915 = vst [vmem:[#allocation2 + $0x350] sm:$0xff] %v3900
      %3916 = vst [vmem:[#allocation2 + $0x358] sm:$0xff] %v3902
      %3917 = vst [vmem:[#allocation2 + $0x360] sm:$0xff] %v3904
      %3918 = vst [vmem:[#allocation2 + $0x368] sm:$0xff] %v3906
      %3919 = vst [vmem:[#allocation2 + $0x370] sm:$0xf] %v3907
      %3920 = vrot.lane.b32.xlu0 %v3750, 112
      %v3921 = vpop.permute.xlu0 %3920
      %3922 = vrot.lane.b32.xlu0 %v3751, 112
      %v3923 = vpop.permute.xlu0 %3922
      %3924 = vrot.lane.b32.xlu0 %v3752, 112
      %v3925 = vpop.permute.xlu0 %3924
      %3926 = vrot.lane.b32.xlu0 %v3753, 112
      %v3927 = vpop.permute.xlu0 %3926
      %3928 = vrot.lane.b32.xlu0 %v3754, 112
      %v3929 = vpop.permute.xlu0 %3928
      %3930 = vrot.lane.b32.xlu0 %v3755, 112
      %v3931 = vpop.permute.xlu0 %3930
      %v3932 = vrot.slane %v3921, 4
      %v3933 = vrot.slane %v3923, 4
      %v3934 = vrot.slane %v3925, 4
      %v3935 = vrot.slane %v3927, 4
      %v3936 = vrot.slane %v3929, 4
      %v3937 = vrot.slane %v3931, 4
      %v3938 = vsel %vm301, %v3932, %v3933
      %v3939 = vsel %vm1098, %v3921, %v3938
      %v3940 = vsel %vm301, %v3933, %v3934
      %v3941 = vsel %vm1098, %v3923, %v3940
      %v3942 = vsel %vm301, %v3934, %v3935
      %v3943 = vsel %vm1098, %v3925, %v3942
      %v3944 = vsel %vm301, %v3935, %v3936
      %v3945 = vsel %vm1098, %v3927, %v3944
      %v3946 = vsel %vm301, %v3936, %v3937
      %v3947 = vsel %vm1098, %v3929, %v3946
      %v3948 = vsel %vm1098, %v3931, %v3937
      %3955 = vst [vmem:[#allocation2 + $0x380] sm:$0xff] %v3939
      %3956 = vst [vmem:[#allocation2 + $0x388] sm:$0xff] %v3941
      %3957 = vst [vmem:[#allocation2 + $0x390] sm:$0xff] %v3943
      %3958 = vst [vmem:[#allocation2 + $0x398] sm:$0xff] %v3945
      %3959 = vst [vmem:[#allocation2 + $0x3a0] sm:$0xff] %v3947
      %3960 = vst [vmem:[#allocation2 + $0x3a8] sm:$0xf] %v3948
      %3961 = vrot.lane.b32.xlu0 %v3750, 111
      %v3962 = vpop.permute.xlu0 %3961
      %3963 = vrot.lane.b32.xlu0 %v3751, 111
      %v3964 = vpop.permute.xlu0 %3963
      %3965 = vrot.lane.b32.xlu0 %v3752, 111
      %v3966 = vpop.permute.xlu0 %3965
      %3967 = vrot.lane.b32.xlu0 %v3753, 111
      %v3968 = vpop.permute.xlu0 %3967
      %3969 = vrot.lane.b32.xlu0 %v3754, 111
      %v3970 = vpop.permute.xlu0 %3969
      %3971 = vrot.lane.b32.xlu0 %v3755, 111
      %v3972 = vpop.permute.xlu0 %3971
      %v3973 = vrot.slane %v3962, 4
      %v3974 = vrot.slane %v3964, 4
      %v3975 = vrot.slane %v3966, 4
      %v3976 = vrot.slane %v3968, 4
      %v3977 = vrot.slane %v3970, 4
      %v3978 = vrot.slane %v3972, 4
      %v3979 = vsel %vm301, %v3973, %v3974
      %v3980 = vsel %vm1151, %v3962, %v3979
      %v3981 = vsel %vm301, %v3974, %v3975
      %v3982 = vsel %vm1151, %v3964, %v3981
      %v3983 = vsel %vm301, %v3975, %v3976
      %v3984 = vsel %vm1151, %v3966, %v3983
      %v3985 = vsel %vm301, %v3976, %v3977
      %v3986 = vsel %vm1151, %v3968, %v3985
      %v3987 = vsel %vm301, %v3977, %v3978
      %v3988 = vsel %vm1151, %v3970, %v3987
      %v3989 = vsel %vm1151, %v3972, %v3978
      %3996 = vst [vmem:[#allocation2 + $0x3b8] sm:$0xff] %v3980
      %3997 = vst [vmem:[#allocation2 + $0x3c0] sm:$0xff] %v3982
      %3998 = vst [vmem:[#allocation2 + $0x3c8] sm:$0xff] %v3984
      %3999 = vst [vmem:[#allocation2 + $0x3d0] sm:$0xff] %v3986
      %4000 = vst [vmem:[#allocation2 + $0x3d8] sm:$0xff] %v3988
      %4001 = vst [vmem:[#allocation2 + $0x3e0] sm:$0xf] %v3989
      %4002 = vrot.lane.b32.xlu0 %v3750, 14
      %v4003 = vpop.permute.xlu0 %4002
      %4004 = vrot.lane.b32.xlu0 %v3751, 14
      %v4005 = vpop.permute.xlu0 %4004
      %4006 = vrot.lane.b32.xlu0 %v3752, 14
      %v4007 = vpop.permute.xlu0 %4006
      %4008 = vrot.lane.b32.xlu0 %v3753, 14
      %v4009 = vpop.permute.xlu0 %4008
      %4010 = vrot.lane.b32.xlu0 %v3754, 14
      %v4011 = vpop.permute.xlu0 %4010
      %4012 = vrot.lane.b32.xlu0 %v3755, 14
      %v4013 = vpop.permute.xlu0 %4012
      %v4014 = vrot.slane %v4003, 4
      %v4015 = vrot.slane %v4005, 4
      %v4016 = vrot.slane %v4007, 4
      %v4017 = vrot.slane %v4009, 4
      %v4018 = vrot.slane %v4011, 4
      %v4019 = vrot.slane %v4013, 4
      %v4020 = vsel %vm301, %v4014, %v4015
      %v4021 = vsel %vm1204, %v4003, %v4020
      %v4022 = vsel %vm301, %v4015, %v4016
      %v4023 = vsel %vm1204, %v4005, %v4022
      %v4024 = vsel %vm301, %v4016, %v4017
      %v4025 = vsel %vm1204, %v4007, %v4024
      %v4026 = vsel %vm301, %v4017, %v4018
      %v4027 = vsel %vm1204, %v4009, %v4026
      %v4028 = vsel %vm301, %v4018, %v4019
      %v4029 = vsel %vm1204, %v4011, %v4028
      %v4030 = vsel %vm1204, %v4013, %v4019
      %4037 = vst [vmem:[#allocation2 + $0x3f0] sm:$0xff] %v4021
      %4038 = vst [vmem:[#allocation2 + $0x3f8] sm:$0xff] %v4023
      %4039 = vst [vmem:[#allocation2 + $0x400] sm:$0xff] %v4025
      %4040 = vst [vmem:[#allocation2 + $0x408] sm:$0xff] %v4027
      %4041 = vst [vmem:[#allocation2 + $0x410] sm:$0xff] %v4029
      %4042 = vst [vmem:[#allocation2 + $0x418] sm:$0xf] %v4030
      %4043 = vrot.lane.b32.xlu0 %v3750, 13
      %v4044 = vpop.permute.xlu0 %4043
      %4045 = vrot.lane.b32.xlu0 %v3751, 13
      %v4046 = vpop.permute.xlu0 %4045
      %4047 = vrot.lane.b32.xlu0 %v3752, 13
      %v4048 = vpop.permute.xlu0 %4047
      %4049 = vrot.lane.b32.xlu0 %v3753, 13
      %v4050 = vpop.permute.xlu0 %4049
      %4051 = vrot.lane.b32.xlu0 %v3754, 13
      %v4052 = vpop.permute.xlu0 %4051
      %4053 = vrot.lane.b32.xlu0 %v3755, 13
      %v4054 = vpop.permute.xlu0 %4053
      %v4055 = vrot.slane %v4044, 4
      %v4056 = vrot.slane %v4046, 4
      %v4057 = vrot.slane %v4048, 4
      %v4058 = vrot.slane %v4050, 4
      %v4059 = vrot.slane %v4052, 4
      %v4060 = vrot.slane %v4054, 4
      %v4061 = vsel %vm301, %v4055, %v4056
      %v4062 = vsel %vm1257, %v4044, %v4061
      %v4063 = vsel %vm301, %v4056, %v4057
      %v4064 = vsel %vm1257, %v4046, %v4063
      %v4065 = vsel %vm301, %v4057, %v4058
      %v4066 = vsel %vm1257, %v4048, %v4065
      %v4067 = vsel %vm301, %v4058, %v4059
      %v4068 = vsel %vm1257, %v4050, %v4067
      %v4069 = vsel %vm301, %v4059, %v4060
      %v4070 = vsel %vm1257, %v4052, %v4069
      %v4071 = vsel %vm1257, %v4054, %v4060
      %4078 = vst [vmem:[#allocation2 + $0x428] sm:$0xff] %v4062
      %4079 = vst [vmem:[#allocation2 + $0x430] sm:$0xff] %v4064
      %4080 = vst [vmem:[#allocation2 + $0x438] sm:$0xff] %v4066
      %4081 = vst [vmem:[#allocation2 + $0x440] sm:$0xff] %v4068
      %4082 = vst [vmem:[#allocation2 + $0x448] sm:$0xff] %v4070
      %4083 = vst [vmem:[#allocation2 + $0x450] sm:$0xf] %v4071
      %4084 = vrot.lane.b32.xlu0 %v3750, 12
      %v4085 = vpop.permute.xlu0 %4084
      %4086 = vrot.lane.b32.xlu0 %v3751, 12
      %v4087 = vpop.permute.xlu0 %4086
      %4088 = vrot.lane.b32.xlu0 %v3752, 12
      %v4089 = vpop.permute.xlu0 %4088
      %4090 = vrot.lane.b32.xlu0 %v3753, 12
      %v4091 = vpop.permute.xlu0 %4090
      %4092 = vrot.lane.b32.xlu0 %v3754, 12
      %v4093 = vpop.permute.xlu0 %4092
      %4094 = vrot.lane.b32.xlu0 %v3755, 12
      %v4095 = vpop.permute.xlu0 %4094
      %v4096 = vrot.slane %v4085, 4
      %v4097 = vrot.slane %v4087, 4
      %v4098 = vrot.slane %v4089, 4
      %v4099 = vrot.slane %v4091, 4
      %v4100 = vrot.slane %v4093, 4
      %v4101 = vrot.slane %v4095, 4
      %v4102 = vsel %vm301, %v4096, %v4097
      %v4103 = vsel %vm1310, %v4085, %v4102
      %v4104 = vsel %vm301, %v4097, %v4098
      %v4105 = vsel %vm1310, %v4087, %v4104
      %v4106 = vsel %vm301, %v4098, %v4099
      %v4107 = vsel %vm1310, %v4089, %v4106
      %v4108 = vsel %vm301, %v4099, %v4100
      %v4109 = vsel %vm1310, %v4091, %v4108
      %v4110 = vsel %vm301, %v4100, %v4101
      %v4111 = vsel %vm1310, %v4093, %v4110
      %v4112 = vsel %vm1310, %v4095, %v4101
      %4119 = vst [vmem:[#allocation2 + $0x460] sm:$0xff] %v4103
      %4120 = vst [vmem:[#allocation2 + $0x468] sm:$0xff] %v4105
      %4121 = vst [vmem:[#allocation2 + $0x470] sm:$0xff] %v4107
      %4122 = vst [vmem:[#allocation2 + $0x478] sm:$0xff] %v4109
      %4123 = vst [vmem:[#allocation2 + $0x480] sm:$0xff] %v4111
      %4124 = vst [vmem:[#allocation2 + $0x488] sm:$0xf] %v4112
      %4125 = vrot.lane.b32.xlu0 %v3750, 3
      %v4126 = vpop.permute.xlu0 %4125
      %4127 = vrot.lane.b32.xlu0 %v3751, 3
      %v4128 = vpop.permute.xlu0 %4127
      %4129 = vrot.lane.b32.xlu0 %v3752, 3
      %v4130 = vpop.permute.xlu0 %4129
      %4131 = vrot.lane.b32.xlu0 %v3753, 3
      %v4132 = vpop.permute.xlu0 %4131
      %4133 = vrot.lane.b32.xlu0 %v3754, 3
      %v4134 = vpop.permute.xlu0 %4133
      %4135 = vrot.lane.b32.xlu0 %v3755, 3
      %v4136 = vpop.permute.xlu0 %4135
      %v4137 = vrot.slane %v4126, 4
      %v4138 = vrot.slane %v4128, 4
      %v4139 = vrot.slane %v4130, 4
      %v4140 = vrot.slane %v4132, 4
      %v4141 = vrot.slane %v4134, 4
      %v4142 = vrot.slane %v4136, 4
      %v4143 = vsel %vm301, %v4137, %v4138
      %v4144 = vsel %vm1363, %v4126, %v4143
      %v4145 = vsel %vm301, %v4138, %v4139
      %v4146 = vsel %vm1363, %v4128, %v4145
      %v4147 = vsel %vm301, %v4139, %v4140
      %v4148 = vsel %vm1363, %v4130, %v4147
      %v4149 = vsel %vm301, %v4140, %v4141
      %v4150 = vsel %vm1363, %v4132, %v4149
      %v4151 = vsel %vm301, %v4141, %v4142
      %v4152 = vsel %vm1363, %v4134, %v4151
      %v4153 = vsel %vm1363, %v4136, %v4142
      %4160 = vst [vmem:[#allocation2 + $0x498] sm:$0xff] %v4144
      %4161 = vst [vmem:[#allocation2 + $0x4a0] sm:$0xff] %v4146
      %4162 = vst [vmem:[#allocation2 + $0x4a8] sm:$0xff] %v4148
      %4163 = vst [vmem:[#allocation2 + $0x4b0] sm:$0xff] %v4150
      %4164 = vst [vmem:[#allocation2 + $0x4b8] sm:$0xff] %v4152
      %4165 = vst [vmem:[#allocation2 + $0x4c0] sm:$0xf] %v4153
      %4166 = vrot.lane.b32.xlu0 %v3750, 2
      %v4167 = vpop.permute.xlu0 %4166
      %4168 = vrot.lane.b32.xlu0 %v3751, 2
      %v4169 = vpop.permute.xlu0 %4168
      %4170 = vrot.lane.b32.xlu0 %v3752, 2
      %v4171 = vpop.permute.xlu0 %4170
      %4172 = vrot.lane.b32.xlu0 %v3753, 2
      %v4173 = vpop.permute.xlu0 %4172
      %4174 = vrot.lane.b32.xlu0 %v3754, 2
      %v4175 = vpop.permute.xlu0 %4174
      %4176 = vrot.lane.b32.xlu0 %v3755, 2
      %v4177 = vpop.permute.xlu0 %4176
      %v4178 = vrot.slane %v4167, 4
      %v4179 = vrot.slane %v4169, 4
      %v4180 = vrot.slane %v4171, 4
      %v4181 = vrot.slane %v4173, 4
      %v4182 = vrot.slane %v4175, 4
      %v4183 = vrot.slane %v4177, 4
      %v4184 = vsel %vm301, %v4178, %v4179
      %v4185 = vsel %vm1416, %v4167, %v4184
      %v4186 = vsel %vm301, %v4179, %v4180
      %v4187 = vsel %vm1416, %v4169, %v4186
      %v4188 = vsel %vm301, %v4180, %v4181
      %v4189 = vsel %vm1416, %v4171, %v4188
      %v4190 = vsel %vm301, %v4181, %v4182
      %v4191 = vsel %vm1416, %v4173, %v4190
      %v4192 = vsel %vm301, %v4182, %v4183
      %v4193 = vsel %vm1416, %v4175, %v4192
      %v4194 = vsel %vm1416, %v4177, %v4183
      %4201 = vst [vmem:[#allocation2 + $0x4d0] sm:$0xff] %v4185
      %4202 = vst [vmem:[#allocation2 + $0x4d8] sm:$0xff] %v4187
      %4203 = vst [vmem:[#allocation2 + $0x4e0] sm:$0xff] %v4189
      %4204 = vst [vmem:[#allocation2 + $0x4e8] sm:$0xff] %v4191
      %4205 = vst [vmem:[#allocation2 + $0x4f0] sm:$0xff] %v4193
      %4206 = vst [vmem:[#allocation2 + $0x4f8] sm:$0xf] %v4194
      %4207 = vrot.lane.b32.xlu0 %v3750, 1
      %v4208 = vpop.permute.xlu0 %4207
      %4209 = vrot.lane.b32.xlu0 %v3751, 1
      %v4210 = vpop.permute.xlu0 %4209
      %4211 = vrot.lane.b32.xlu0 %v3752, 1
      %v4212 = vpop.permute.xlu0 %4211
      %4213 = vrot.lane.b32.xlu0 %v3753, 1
      %v4214 = vpop.permute.xlu0 %4213
      %4215 = vrot.lane.b32.xlu0 %v3754, 1
      %v4216 = vpop.permute.xlu0 %4215
      %4217 = vrot.lane.b32.xlu0 %v3755, 1
      %v4218 = vpop.permute.xlu0 %4217
      %v4219 = vrot.slane %v4208, 4
      %v4220 = vrot.slane %v4210, 4
      %v4221 = vrot.slane %v4212, 4
      %v4222 = vrot.slane %v4214, 4
      %v4223 = vrot.slane %v4216, 4
      %v4224 = vrot.slane %v4218, 4
      %v4225 = vsel %vm301, %v4219, %v4220
      %v4226 = vsel %vm1469, %v4208, %v4225
      %v4227 = vsel %vm301, %v4220, %v4221
      %v4228 = vsel %vm1469, %v4210, %v4227
      %v4229 = vsel %vm301, %v4221, %v4222
      %v4230 = vsel %vm1469, %v4212, %v4229
      %v4231 = vsel %vm301, %v4222, %v4223
      %v4232 = vsel %vm1469, %v4214, %v4231
      %v4233 = vsel %vm301, %v4223, %v4224
      %v4234 = vsel %vm1469, %v4216, %v4233
      %v4235 = vsel %vm1469, %v4218, %v4224
      %4242 = vst [vmem:[#allocation2 + $0x508] sm:$0xff] %v4226
      %4243 = vst [vmem:[#allocation2 + $0x510] sm:$0xff] %v4228
      %4244 = vst [vmem:[#allocation2 + $0x518] sm:$0xff] %v4230
      %4245 = vst [vmem:[#allocation2 + $0x520] sm:$0xff] %v4232
      %4246 = vst [vmem:[#allocation2 + $0x528] sm:$0xff] %v4234
      %4247 = vst [vmem:[#allocation2 + $0x530] sm:$0xf] %v4235
      %v4249 = vunpack.c.l.b16 %v3253
      %v4250 = vpack.c.b16 %v4249, %v3749
      %4251 = vrot.lane.b32.xlu0 %v3277, 120
      %v4252 = vpop.permute.xlu0 %4251
      %4253 = vrot.lane.b32.xlu0 %v3278, 120
      %v4254 = vpop.permute.xlu0 %4253
      %4255 = vrot.lane.b32.xlu0 %v3279, 120
      %v4256 = vpop.permute.xlu0 %4255
      %4257 = vrot.lane.b32.xlu0 %v3280, 120
      %v4258 = vpop.permute.xlu0 %4257
      %4259 = vrot.lane.b32.xlu0 %v3296, 120
      %v4260 = vpop.permute.xlu0 %4259
      %4261 = vrot.lane.b32.xlu0 %v4250, 120
      %v4262 = vpop.permute.xlu0 %4261
      %v4263 = vrot.slane %v4252, 4
      %v4264 = vrot.slane %v4254, 4
      %v4265 = vrot.slane %v4256, 4
      %v4266 = vrot.slane %v4258, 4
      %v4267 = vrot.slane %v4260, 4
      %v4268 = vrot.slane %v4262, 4
      %v4269 = vsel %vm301, %v4263, %v4264
      %v4270 = vsel %vm1523, %v4252, %v4269
      %v4271 = vsel %vm301, %v4264, %v4265
      %v4272 = vsel %vm1523, %v4254, %v4271
      %v4273 = vsel %vm301, %v4265, %v4266
      %v4274 = vsel %vm1523, %v4256, %v4273
      %v4275 = vsel %vm301, %v4266, %v4267
      %v4276 = vsel %vm1523, %v4258, %v4275
      %v4277 = vsel %vm301, %v4267, %v4268
      %v4278 = vsel %vm1523, %v4260, %v4277
      %v4279 = vsel %vm1523, %v4262, %v4268
      %4286 = vst [vmem:[#allocation2 + $0x540] sm:$0xff] %v4270
      %4287 = vst [vmem:[#allocation2 + $0x548] sm:$0xff] %v4272
      %4288 = vst [vmem:[#allocation2 + $0x550] sm:$0xff] %v4274
      %4289 = vst [vmem:[#allocation2 + $0x558] sm:$0xff] %v4276
      %4290 = vst [vmem:[#allocation2 + $0x560] sm:$0xff] %v4278
      %4291 = vst [vmem:[#allocation2 + $0x568] sm:$0xf] %v4279
      %4292 = vrot.lane.b32.xlu0 %v3277, 119
      %v4293 = vpop.permute.xlu0 %4292
      %4294 = vrot.lane.b32.xlu0 %v3278, 119
      %v4295 = vpop.permute.xlu0 %4294
      %4296 = vrot.lane.b32.xlu0 %v3279, 119
      %v4297 = vpop.permute.xlu0 %4296
      %4298 = vrot.lane.b32.xlu0 %v3280, 119
      %v4299 = vpop.permute.xlu0 %4298
      %4300 = vrot.lane.b32.xlu0 %v3296, 119
      %v4301 = vpop.permute.xlu0 %4300
      %4302 = vrot.lane.b32.xlu0 %v4250, 119
      %v4303 = vpop.permute.xlu0 %4302
      %v4304 = vrot.slane %v4293, 4
      %v4305 = vrot.slane %v4295, 4
      %v4306 = vrot.slane %v4297, 4
      %v4307 = vrot.slane %v4299, 4
      %v4308 = vrot.slane %v4301, 4
      %v4309 = vrot.slane %v4303, 4
      %v4310 = vsel %vm301, %v4304, %v4305
      %v4311 = vsel %vm1576, %v4293, %v4310
      %v4312 = vsel %vm301, %v4305, %v4306
      %v4313 = vsel %vm1576, %v4295, %v4312
      %v4314 = vsel %vm301, %v4306, %v4307
      %v4315 = vsel %vm1576, %v4297, %v4314
      %v4316 = vsel %vm301, %v4307, %v4308
      %v4317 = vsel %vm1576, %v4299, %v4316
      %v4318 = vsel %vm301, %v4308, %v4309
      %v4319 = vsel %vm1576, %v4301, %v4318
      %v4320 = vsel %vm1576, %v4303, %v4309
      %4327 = vst [vmem:[#allocation2 + $0x578] sm:$0xff] %v4311
      %4328 = vst [vmem:[#allocation2 + $0x580] sm:$0xff] %v4313
      %4329 = vst [vmem:[#allocation2 + $0x588] sm:$0xff] %v4315
      %4330 = vst [vmem:[#allocation2 + $0x590] sm:$0xff] %v4317
      %4331 = vst [vmem:[#allocation2 + $0x598] sm:$0xff] %v4319
      %4332 = vst [vmem:[#allocation2 + $0x5a0] sm:$0xf] %v4320
      %4333 = vrot.lane.b32.xlu0 %v3277, 118
      %v4334 = vpop.permute.xlu0 %4333
      %4335 = vrot.lane.b32.xlu0 %v3278, 118
      %v4336 = vpop.permute.xlu0 %4335
      %4337 = vrot.lane.b32.xlu0 %v3279, 118
      %v4338 = vpop.permute.xlu0 %4337
      %4339 = vrot.lane.b32.xlu0 %v3280, 118
      %v4340 = vpop.permute.xlu0 %4339
      %4341 = vrot.lane.b32.xlu0 %v3296, 118
      %v4342 = vpop.permute.xlu0 %4341
      %4343 = vrot.lane.b32.xlu0 %v4250, 118
      %v4344 = vpop.permute.xlu0 %4343
      %v4345 = vrot.slane %v4334, 4
      %v4346 = vrot.slane %v4336, 4
      %v4347 = vrot.slane %v4338, 4
      %v4348 = vrot.slane %v4340, 4
      %v4349 = vrot.slane %v4342, 4
      %v4350 = vrot.slane %v4344, 4
      %v4351 = vsel %vm301, %v4345, %v4346
      %v4352 = vsel %vm1629, %v4334, %v4351
      %v4353 = vsel %vm301, %v4346, %v4347
      %v4354 = vsel %vm1629, %v4336, %v4353
      %v4355 = vsel %vm301, %v4347, %v4348
      %v4356 = vsel %vm1629, %v4338, %v4355
      %v4357 = vsel %vm301, %v4348, %v4349
      %v4358 = vsel %vm1629, %v4340, %v4357
      %v4359 = vsel %vm301, %v4349, %v4350
      %v4360 = vsel %vm1629, %v4342, %v4359
      %v4361 = vsel %vm1629, %v4344, %v4350
      %4368 = vst [vmem:[#allocation2 + $0x5b0] sm:$0xff] %v4352
      %4369 = vst [vmem:[#allocation2 + $0x5b8] sm:$0xff] %v4354
      %4370 = vst [vmem:[#allocation2 + $0x5c0] sm:$0xff] %v4356
      %4371 = vst [vmem:[#allocation2 + $0x5c8] sm:$0xff] %v4358
      %4372 = vst [vmem:[#allocation2 + $0x5d0] sm:$0xff] %v4360
      %4373 = vst [vmem:[#allocation2 + $0x5d8] sm:$0xf] %v4361
      %v4374 = vld [vmem:[%s3] sm:$0xff]
      %v4375 = vld [vmem:[#allocation2] sm:$0xff]
      %v4376 = vld [vmem:[#allocation2 + $0x8] sm:$0xff]
      %v4377 = vld [vmem:[#allocation2 + $0x10] sm:$0xff]
      %v4378 = vld [vmem:[#allocation2 + $0x18] sm:$0xff]
      %v4379 = vld [vmem:[#allocation2 + $0x20] sm:$0xff]
      %v4380 = vld [vmem:[#allocation2 + $0x28] sm:$0xf]
      %v4381 = vld [vmem:[#allocation2 + $0x38] sm:$0xff]
      %v4382 = vld [vmem:[#allocation2 + $0x40] sm:$0xff]
      %v4383 = vld [vmem:[#allocation2 + $0x48] sm:$0xff]
      %v4384 = vld [vmem:[#allocation2 + $0x50] sm:$0xff]
      %v4385 = vld [vmem:[#allocation2 + $0x58] sm:$0xff]
      %v4386 = vld [vmem:[#allocation2 + $0x60] sm:$0xf]
      %v4387 = vld [vmem:[#allocation2 + $0x70] sm:$0xff]
      %v4388 = vld [vmem:[#allocation2 + $0x78] sm:$0xff]
      %v4389 = vld [vmem:[#allocation2 + $0x80] sm:$0xff]
      %v4390 = vld [vmem:[#allocation2 + $0x88] sm:$0xff]
      %v4391 = vld [vmem:[#allocation2 + $0x90] sm:$0xff]
      %v4392 = vld [vmem:[#allocation2 + $0x98] sm:$0xf]
      %v4393 = vld [vmem:[#allocation2 + $0xa8] sm:$0xff]
      %v4394 = vld [vmem:[#allocation2 + $0xb0] sm:$0xff]
      %v4395 = vld [vmem:[#allocation2 + $0xb8] sm:$0xff]
      %v4396 = vld [vmem:[#allocation2 + $0xc0] sm:$0xff]
      %v4397 = vld [vmem:[#allocation2 + $0xc8] sm:$0xff]
      %v4398 = vld [vmem:[#allocation2 + $0xd0] sm:$0xf]
      %v4399 = vld [vmem:[#allocation2 + $0xe0] sm:$0xff]
      %v4400 = vld [vmem:[#allocation2 + $0xe8] sm:$0xff]
      %v4401 = vld [vmem:[#allocation2 + $0xf0] sm:$0xff]
      %v4402 = vld [vmem:[#allocation2 + $0xf8] sm:$0xff]
      %v4403 = vld [vmem:[#allocation2 + $0x100] sm:$0xff]
      %v4404 = vld [vmem:[#allocation2 + $0x108] sm:$0xf]
      %v4405 = vld [vmem:[#allocation2 + $0x118] sm:$0xff]
      %v4406 = vld [vmem:[#allocation2 + $0x120] sm:$0xff]
      %v4407 = vld [vmem:[#allocation2 + $0x128] sm:$0xff]
      %v4408 = vld [vmem:[#allocation2 + $0x130] sm:$0xff]
      %v4409 = vld [vmem:[#allocation2 + $0x138] sm:$0xff]
      %v4410 = vld [vmem:[#allocation2 + $0x140] sm:$0xf]
      %v4411 = vld [vmem:[#allocation2 + $0x150] sm:$0xff]
      %v4412 = vld [vmem:[#allocation2 + $0x158] sm:$0xff]
      %v4413 = vld [vmem:[#allocation2 + $0x160] sm:$0xff]
      %v4414 = vld [vmem:[#allocation2 + $0x168] sm:$0xff]
      %v4415 = vld [vmem:[#allocation2 + $0x170] sm:$0xff]
      %v4416 = vld [vmem:[#allocation2 + $0x178] sm:$0xf]
      %v4417 = vld [vmem:[#allocation2 + $0x188] sm:$0xff]
      %v4418 = vld [vmem:[#allocation2 + $0x190] sm:$0xff]
      %v4419 = vld [vmem:[#allocation2 + $0x198] sm:$0xff]
      %v4420 = vld [vmem:[#allocation2 + $0x1a0] sm:$0xff]
      %v4421 = vld [vmem:[#allocation2 + $0x1a8] sm:$0xff]
      %v4422 = vld [vmem:[#allocation2 + $0x1b0] sm:$0xf]
      %v4423 = vld [vmem:[#allocation2 + $0x1c0] sm:$0xff]
      %v4424 = vld [vmem:[#allocation2 + $0x1c8] sm:$0xff]
      %v4425 = vld [vmem:[#allocation2 + $0x1d0] sm:$0xff]
      %v4426 = vld [vmem:[#allocation2 + $0x1d8] sm:$0xff]
      %v4427 = vld [vmem:[#allocation2 + $0x1e0] sm:$0xff]
      %v4428 = vld [vmem:[#allocation2 + $0x1e8] sm:$0xf]
      %v4429 = vld [vmem:[#allocation2 + $0x1f8] sm:$0xff]
      %v4430 = vld [vmem:[#allocation2 + $0x200] sm:$0xff]
      %v4431 = vld [vmem:[#allocation2 + $0x208] sm:$0xff]
      %v4432 = vld [vmem:[#allocation2 + $0x210] sm:$0xff]
      %v4433 = vld [vmem:[#allocation2 + $0x218] sm:$0xff]
      %v4434 = vld [vmem:[#allocation2 + $0x220] sm:$0xf]
      %v4435 = vld [vmem:[#allocation2 + $0x230] sm:$0xff]
      %v4436 = vld [vmem:[#allocation2 + $0x238] sm:$0xff]
      %v4437 = vld [vmem:[#allocation2 + $0x240] sm:$0xff]
      %v4438 = vld [vmem:[#allocation2 + $0x248] sm:$0xff]
      %v4439 = vld [vmem:[#allocation2 + $0x250] sm:$0xff]
      %v4440 = vld [vmem:[#allocation2 + $0x258] sm:$0xf]
      %v4441 = vld [vmem:[#allocation2 + $0x268] sm:$0xff]
      %v4442 = vld [vmem:[#allocation2 + $0x270] sm:$0xff]
      %v4443 = vld [vmem:[#allocation2 + $0x278] sm:$0xff]
      %v4444 = vld [vmem:[#allocation2 + $0x280] sm:$0xff]
      %v4445 = vld [vmem:[#allocation2 + $0x288] sm:$0xff]
      %v4446 = vld [vmem:[#allocation2 + $0x290] sm:$0xf]
      %v4447 = vld [vmem:[#allocation2 + $0x2a0] sm:$0xff]
      %v4448 = vld [vmem:[#allocation2 + $0x2a8] sm:$0xff]
      %v4449 = vld [vmem:[#allocation2 + $0x2b0] sm:$0xff]
      %v4450 = vld [vmem:[#allocation2 + $0x2b8] sm:$0xff]
      %v4451 = vld [vmem:[#allocation2 + $0x2c0] sm:$0xff]
      %v4452 = vld [vmem:[#allocation2 + $0x2c8] sm:$0xf]
      %v4453 = vld [vmem:[#allocation2 + $0x2d8] sm:$0xff]
      %v4454 = vld [vmem:[#allocation2 + $0x2e0] sm:$0xff]
      %v4455 = vld [vmem:[#allocation2 + $0x2e8] sm:$0xff]
      %v4456 = vld [vmem:[#allocation2 + $0x2f0] sm:$0xff]
      %v4457 = vld [vmem:[#allocation2 + $0x2f8] sm:$0xff]
      %v4458 = vld [vmem:[#allocation2 + $0x300] sm:$0xf]
      %v4459 = vld [vmem:[#allocation2 + $0x310] sm:$0xff]
      %v4460 = vld [vmem:[#allocation2 + $0x318] sm:$0xff]
      %v4461 = vld [vmem:[#allocation2 + $0x320] sm:$0xff]
      %v4462 = vld [vmem:[#allocation2 + $0x328] sm:$0xff]
      %v4463 = vld [vmem:[#allocation2 + $0x330] sm:$0xff]
      %v4464 = vld [vmem:[#allocation2 + $0x338] sm:$0xf]
      %v4465 = vld [vmem:[#allocation2 + $0x348] sm:$0xff]
      %v4466 = vld [vmem:[#allocation2 + $0x350] sm:$0xff]
      %v4467 = vld [vmem:[#allocation2 + $0x358] sm:$0xff]
      %v4468 = vld [vmem:[#allocation2 + $0x360] sm:$0xff]
      %v4469 = vld [vmem:[#allocation2 + $0x368] sm:$0xff]
      %v4470 = vld [vmem:[#allocation2 + $0x370] sm:$0xf]
      %v4471 = vld [vmem:[#allocation2 + $0x380] sm:$0xff]
      %v4472 = vld [vmem:[#allocation2 + $0x388] sm:$0xff]
      %v4473 = vld [vmem:[#allocation2 + $0x390] sm:$0xff]
      %v4474 = vld [vmem:[#allocation2 + $0x398] sm:$0xff]
      %v4475 = vld [vmem:[#allocation2 + $0x3a0] sm:$0xff]
      %v4476 = vld [vmem:[#allocation2 + $0x3a8] sm:$0xf]
      %v4477 = vld [vmem:[#allocation2 + $0x3b8] sm:$0xff]
      %v4478 = vld [vmem:[#allocation2 + $0x3c0] sm:$0xff]
      %v4479 = vld [vmem:[#allocation2 + $0x3c8] sm:$0xff]
      %v4480 = vld [vmem:[#allocation2 + $0x3d0] sm:$0xff]
      %v4481 = vld [vmem:[#allocation2 + $0x3d8] sm:$0xff]
      %v4482 = vld [vmem:[#allocation2 + $0x3e0] sm:$0xf]
      %v4483 = vld [vmem:[#allocation2 + $0x3f0] sm:$0xff]
      %v4484 = vld [vmem:[#allocation2 + $0x3f8] sm:$0xff]
      %v4485 = vld [vmem:[#allocation2 + $0x400] sm:$0xff]
      %v4486 = vld [vmem:[#allocation2 + $0x408] sm:$0xff]
      %v4487 = vld [vmem:[#allocation2 + $0x410] sm:$0xff]
      %v4488 = vld [vmem:[#allocation2 + $0x418] sm:$0xf]
      %v4489 = vld [vmem:[#allocation2 + $0x428] sm:$0xff]
      %v4490 = vld [vmem:[#allocation2 + $0x430] sm:$0xff]
      %v4491 = vld [vmem:[#allocation2 + $0x438] sm:$0xff]
      %v4492 = vld [vmem:[#allocation2 + $0x440] sm:$0xff]
      %v4493 = vld [vmem:[#allocation2 + $0x448] sm:$0xff]
      %v4494 = vld [vmem:[#allocation2 + $0x450] sm:$0xf]
      %v4495 = vld [vmem:[#allocation2 + $0x460] sm:$0xff]
      %v4496 = vld [vmem:[#allocation2 + $0x468] sm:$0xff]
      %v4497 = vld [vmem:[#allocation2 + $0x470] sm:$0xff]
      %v4498 = vld [vmem:[#allocation2 + $0x478] sm:$0xff]
      %v4499 = vld [vmem:[#allocation2 + $0x480] sm:$0xff]
      %v4500 = vld [vmem:[#allocation2 + $0x488] sm:$0xf]
      %v4501 = vld [vmem:[#allocation2 + $0x498] sm:$0xff]
      %v4502 = vld [vmem:[#allocation2 + $0x4a0] sm:$0xff]
      %v4503 = vld [vmem:[#allocation2 + $0x4a8] sm:$0xff]
      %v4504 = vld [vmem:[#allocation2 + $0x4b0] sm:$0xff]
      %v4505 = vld [vmem:[#allocation2 + $0x4b8] sm:$0xff]
      %v4506 = vld [vmem:[#allocation2 + $0x4c0] sm:$0xf]
      %v4507 = vld [vmem:[#allocation2 + $0x4d0] sm:$0xff]
      %v4508 = vld [vmem:[#allocation2 + $0x4d8] sm:$0xff]
      %v4509 = vld [vmem:[#allocation2 + $0x4e0] sm:$0xff]
      %v4510 = vld [vmem:[#allocation2 + $0x4e8] sm:$0xff]
      %v4511 = vld [vmem:[#allocation2 + $0x4f0] sm:$0xff]
      %v4512 = vld [vmem:[#allocation2 + $0x4f8] sm:$0xf]
      %v4513 = vld [vmem:[#allocation2 + $0x508] sm:$0xff]
      %v4514 = vld [vmem:[#allocation2 + $0x510] sm:$0xff]
      %v4515 = vld [vmem:[#allocation2 + $0x518] sm:$0xff]
      %v4516 = vld [vmem:[#allocation2 + $0x520] sm:$0xff]
      %v4517 = vld [vmem:[#allocation2 + $0x528] sm:$0xff]
      %v4518 = vld [vmem:[#allocation2 + $0x530] sm:$0xf]
      %v4519 = vld [vmem:[#allocation2 + $0x540] sm:$0xff]
      %v4520 = vld [vmem:[#allocation2 + $0x548] sm:$0xff]
      %v4521 = vld [vmem:[#allocation2 + $0x550] sm:$0xff]
      %v4522 = vld [vmem:[#allocation2 + $0x558] sm:$0xff]
      %v4523 = vld [vmem:[#allocation2 + $0x560] sm:$0xff]
      %v4524 = vld [vmem:[#allocation2 + $0x568] sm:$0xf]
      %v4525 = vld [vmem:[#allocation2 + $0x578] sm:$0xff]
      %v4526 = vld [vmem:[#allocation2 + $0x580] sm:$0xff]
      %v4527 = vld [vmem:[#allocation2 + $0x588] sm:$0xff]
      %v4528 = vld [vmem:[#allocation2 + $0x590] sm:$0xff]
      %v4529 = vld [vmem:[#allocation2 + $0x598] sm:$0xff]
      %v4530 = vld [vmem:[#allocation2 + $0x5a0] sm:$0xf]
      %v4531 = vld [vmem:[#allocation2 + $0x5b0] sm:$0xff]
      %v4532 = vld [vmem:[#allocation2 + $0x5b8] sm:$0xff]
      %v4533 = vld [vmem:[#allocation2 + $0x5c0] sm:$0xff]
      %v4534 = vld [vmem:[#allocation2 + $0x5c8] sm:$0xff]
      %v4535 = vld [vmem:[#allocation2 + $0x5d0] sm:$0xff]
      %v4536 = vld [vmem:[#allocation2 + $0x5d8] sm:$0xf]
      %v4537 = vld [vmem:[%s4] sm:$0xff]
      %4539 = vset.pattern.permute.xlu0 0
      %4540 = vperm.xlu0 %4539, %v4537
      %v4541 = vpop.permute.xlu0 %4540
      %v4544 = vunpack.c.l.b16 %v4374
      %v4545 = vunpack.c.h.b16 %v4374
      %v4546 = vpack.c.b16 %v4544, %v4544
      %v4547 = vpack.c.b16 %v4545, %v4545
      %v4711 = vunpack.c.l.b16 %v4375
      %v4712 = vunpack.c.h.b16 %v4375
      %v4713 = vunpack.c.l.b16 %v4376
      %v4714 = vunpack.c.h.b16 %v4376
      %v4715 = vunpack.c.l.b16 %v4377
      %v4716 = vunpack.c.h.b16 %v4377
      %v4717 = vunpack.c.l.b16 %v4378
      %v4718 = vunpack.c.h.b16 %v4378
      %v4719 = vunpack.c.l.b16 %v4379
      %v4720 = vunpack.c.h.b16 %v4379
      %v4721 = vunpack.c.l.b16 %v4380
      %v4722 = vunpack.c.l.b16 %v4381
      %v4723 = vunpack.c.h.b16 %v4381
      %v4724 = vunpack.c.l.b16 %v4382
      %v4725 = vunpack.c.h.b16 %v4382
      %v4726 = vunpack.c.l.b16 %v4383
      %v4727 = vunpack.c.h.b16 %v4383
      %v4728 = vunpack.c.l.b16 %v4384
      %v4729 = vunpack.c.h.b16 %v4384
      %v4730 = vunpack.c.l.b16 %v4385
      %v4731 = vunpack.c.h.b16 %v4385
      %v4732 = vunpack.c.l.b16 %v4386
      %v4733 = vunpack.c.l.b16 %v4387
      %v4734 = vunpack.c.h.b16 %v4387
      %v4735 = vunpack.c.l.b16 %v4388
      %v4736 = vunpack.c.h.b16 %v4388
      %v4737 = vunpack.c.l.b16 %v4389
      %v4738 = vunpack.c.h.b16 %v4389
      %v4739 = vunpack.c.l.b16 %v4390
      %v4740 = vunpack.c.h.b16 %v4390
      %v4741 = vunpack.c.l.b16 %v4391
      %v4742 = vunpack.c.h.b16 %v4391
      %v4743 = vunpack.c.l.b16 %v4392
      %v4744 = vunpack.c.l.b16 %v4393
      %v4745 = vunpack.c.h.b16 %v4393
      %v4746 = vunpack.c.l.b16 %v4394
      %v4747 = vunpack.c.h.b16 %v4394
      %v4748 = vunpack.c.l.b16 %v4395
      %v4749 = vunpack.c.h.b16 %v4395
      %v4750 = vunpack.c.l.b16 %v4396
      %v4751 = vunpack.c.h.b16 %v4396
      %v4752 = vunpack.c.l.b16 %v4397
      %v4753 = vunpack.c.h.b16 %v4397
      %v4754 = vunpack.c.l.b16 %v4398
      %v4755 = vunpack.c.l.b16 %v4399
      %v4756 = vunpack.c.h.b16 %v4399
      %v4757 = vunpack.c.l.b16 %v4400
      %v4758 = vunpack.c.h.b16 %v4400
      %v4759 = vunpack.c.l.b16 %v4401
      %v4760 = vunpack.c.h.b16 %v4401
      %v4761 = vunpack.c.l.b16 %v4402
      %v4762 = vunpack.c.h.b16 %v4402
      %v4763 = vunpack.c.l.b16 %v4403
      %v4764 = vunpack.c.h.b16 %v4403
      %v4765 = vunpack.c.l.b16 %v4404
      %v4766 = vunpack.c.l.b16 %v4405
      %v4767 = vunpack.c.h.b16 %v4405
      %v4768 = vunpack.c.l.b16 %v4406
      %v4769 = vunpack.c.h.b16 %v4406
      %v4770 = vunpack.c.l.b16 %v4407
      %v4771 = vunpack.c.h.b16 %v4407
      %v4772 = vunpack.c.l.b16 %v4408
      %v4773 = vunpack.c.h.b16 %v4408
      %v4774 = vunpack.c.l.b16 %v4409
      %v4775 = vunpack.c.h.b16 %v4409
      %v4776 = vunpack.c.l.b16 %v4410
      %v4777 = vunpack.c.l.b16 %v4411
      %v4778 = vunpack.c.h.b16 %v4411
      %v4779 = vunpack.c.l.b16 %v4412
      %v4780 = vunpack.c.h.b16 %v4412
      %v4781 = vunpack.c.l.b16 %v4413
      %v4782 = vunpack.c.h.b16 %v4413
      %v4783 = vunpack.c.l.b16 %v4414
      %v4784 = vunpack.c.h.b16 %v4414
      %v4785 = vunpack.c.l.b16 %v4415
      %v4786 = vunpack.c.h.b16 %v4415
      %v4787 = vunpack.c.l.b16 %v4416
      %v4788 = vunpack.c.l.b16 %v4417
      %v4789 = vunpack.c.h.b16 %v4417
      %v4790 = vunpack.c.l.b16 %v4418
      %v4791 = vunpack.c.h.b16 %v4418
      %v4792 = vunpack.c.l.b16 %v4419
      %v4793 = vunpack.c.h.b16 %v4419
      %v4794 = vunpack.c.l.b16 %v4420
      %v4795 = vunpack.c.h.b16 %v4420
      %v4796 = vunpack.c.l.b16 %v4421
      %v4797 = vunpack.c.h.b16 %v4421
      %v4798 = vunpack.c.l.b16 %v4422
      %v4799 = vunpack.c.l.b16 %v4423
      %v4800 = vunpack.c.h.b16 %v4423
      %v4801 = vunpack.c.l.b16 %v4424
      %v4802 = vunpack.c.h.b16 %v4424
      %v4803 = vunpack.c.l.b16 %v4425
      %v4804 = vunpack.c.h.b16 %v4425
      %v4805 = vunpack.c.l.b16 %v4426
      %v4806 = vunpack.c.h.b16 %v4426
      %v4807 = vunpack.c.l.b16 %v4427
      %v4808 = vunpack.c.h.b16 %v4427
      %v4809 = vunpack.c.l.b16 %v4428
      %v4810 = vunpack.c.l.b16 %v4429
      %v4811 = vunpack.c.h.b16 %v4429
      %v4812 = vunpack.c.l.b16 %v4430
      %v4813 = vunpack.c.h.b16 %v4430
      %v4814 = vunpack.c.l.b16 %v4431
      %v4815 = vunpack.c.h.b16 %v4431
      %v4816 = vunpack.c.l.b16 %v4432
      %v4817 = vunpack.c.h.b16 %v4432
      %v4818 = vunpack.c.l.b16 %v4433
      %v4819 = vunpack.c.h.b16 %v4433
      %v4820 = vunpack.c.l.b16 %v4434
      %v4821 = vunpack.c.l.b16 %v4435
      %v4822 = vunpack.c.h.b16 %v4435
      %v4823 = vunpack.c.l.b16 %v4436
      %v4824 = vunpack.c.h.b16 %v4436
      %v4825 = vunpack.c.l.b16 %v4437
      %v4826 = vunpack.c.h.b16 %v4437
      %v4827 = vunpack.c.l.b16 %v4438
      %v4828 = vunpack.c.h.b16 %v4438
      %v4829 = vunpack.c.l.b16 %v4439
      %v4830 = vunpack.c.h.b16 %v4439
      %v4831 = vunpack.c.l.b16 %v4440
      %v4832 = vunpack.c.l.b16 %v4441
      %v4833 = vunpack.c.h.b16 %v4441
      %v4834 = vunpack.c.l.b16 %v4442
      %v4835 = vunpack.c.h.b16 %v4442
      %v4836 = vunpack.c.l.b16 %v4443
      %v4837 = vunpack.c.h.b16 %v4443
      %v4838 = vunpack.c.l.b16 %v4444
      %v4839 = vunpack.c.h.b16 %v4444
      %v4840 = vunpack.c.l.b16 %v4445
      %v4841 = vunpack.c.h.b16 %v4445
      %v4842 = vunpack.c.l.b16 %v4446
      %v4843 = vunpack.c.l.b16 %v4447
      %v4844 = vunpack.c.h.b16 %v4447
      %v4845 = vunpack.c.l.b16 %v4448
      %v4846 = vunpack.c.h.b16 %v4448
      %v4847 = vunpack.c.l.b16 %v4449
      %v4848 = vunpack.c.h.b16 %v4449
      %v4849 = vunpack.c.l.b16 %v4450
      %v4850 = vunpack.c.h.b16 %v4450
      %v4851 = vunpack.c.l.b16 %v4451
      %v4852 = vunpack.c.h.b16 %v4451
      %v4853 = vunpack.c.l.b16 %v4452
      %v4854 = vunpack.c.l.b16 %v4453
      %v4855 = vunpack.c.h.b16 %v4453
      %v4856 = vunpack.c.l.b16 %v4454
      %v4857 = vunpack.c.h.b16 %v4454
      %v4858 = vunpack.c.l.b16 %v4455
      %v4859 = vunpack.c.h.b16 %v4455
      %v4860 = vunpack.c.l.b16 %v4456
      %v4861 = vunpack.c.h.b16 %v4456
      %v4862 = vunpack.c.l.b16 %v4457
      %v4863 = vunpack.c.h.b16 %v4457
      %v4864 = vunpack.c.l.b16 %v4458
      %v4865 = vunpack.c.l.b16 %v4459
      %v4866 = vunpack.c.h.b16 %v4459
      %v4867 = vunpack.c.l.b16 %v4460
      %v4868 = vunpack.c.h.b16 %v4460
      %v4869 = vunpack.c.l.b16 %v4461
      %v4870 = vunpack.c.h.b16 %v4461
      %v4871 = vunpack.c.l.b16 %v4462
      %v4872 = vunpack.c.h.b16 %v4462
      %v4873 = vunpack.c.l.b16 %v4463
      %v4874 = vunpack.c.h.b16 %v4463
      %v4875 = vunpack.c.l.b16 %v4464
      %v4876 = vunpack.c.l.b16 %v4465
      %v4877 = vunpack.c.h.b16 %v4465
      %v4878 = vunpack.c.l.b16 %v4466
      %v4879 = vunpack.c.h.b16 %v4466
      %v4880 = vunpack.c.l.b16 %v4467
      %v4881 = vunpack.c.h.b16 %v4467
      %v4882 = vunpack.c.l.b16 %v4468
      %v4883 = vunpack.c.h.b16 %v4468
      %v4884 = vunpack.c.l.b16 %v4469
      %v4885 = vunpack.c.h.b16 %v4469
      %v4886 = vunpack.c.l.b16 %v4470
      %v4887 = vunpack.c.l.b16 %v4471
      %v4888 = vunpack.c.h.b16 %v4471
      %v4889 = vunpack.c.l.b16 %v4472
      %v4890 = vunpack.c.h.b16 %v4472
      %v4891 = vunpack.c.l.b16 %v4473
      %v4892 = vunpack.c.h.b16 %v4473
      %v4893 = vunpack.c.l.b16 %v4474
      %v4894 = vunpack.c.h.b16 %v4474
      %v4895 = vunpack.c.l.b16 %v4475
      %v4896 = vunpack.c.h.b16 %v4475
      %v4897 = vunpack.c.l.b16 %v4476
      %v4898 = vunpack.c.l.b16 %v4477
      %v4899 = vunpack.c.h.b16 %v4477
      %v4900 = vunpack.c.l.b16 %v4478
      %v4901 = vunpack.c.h.b16 %v4478
      %v4902 = vunpack.c.l.b16 %v4479
      %v4903 = vunpack.c.h.b16 %v4479
      %v4904 = vunpack.c.l.b16 %v4480
      %v4905 = vunpack.c.h.b16 %v4480
      %v4906 = vunpack.c.l.b16 %v4481
      %v4907 = vunpack.c.h.b16 %v4481
      %v4908 = vunpack.c.l.b16 %v4482
      %v4909 = vunpack.c.l.b16 %v4483
      %v4910 = vunpack.c.h.b16 %v4483
      %v4911 = vunpack.c.l.b16 %v4484
      %v4912 = vunpack.c.h.b16 %v4484
      %v4913 = vunpack.c.l.b16 %v4485
      %v4914 = vunpack.c.h.b16 %v4485
      %v4915 = vunpack.c.l.b16 %v4486
      %v4916 = vunpack.c.h.b16 %v4486
      %v4917 = vunpack.c.l.b16 %v4487
      %v4918 = vunpack.c.h.b16 %v4487
      %v4919 = vunpack.c.l.b16 %v4488
      %v4920 = vunpack.c.l.b16 %v4489
      %v4921 = vunpack.c.h.b16 %v4489
      %v4922 = vunpack.c.l.b16 %v4490
      %v4923 = vunpack.c.h.b16 %v4490
      %v4924 = vunpack.c.l.b16 %v4491
      %v4925 = vunpack.c.h.b16 %v4491
      %v4926 = vunpack.c.l.b16 %v4492
      %v4927 = vunpack.c.h.b16 %v4492
      %v4928 = vunpack.c.l.b16 %v4493
      %v4929 = vunpack.c.h.b16 %v4493
      %v4930 = vunpack.c.l.b16 %v4494
      %v4931 = vunpack.c.l.b16 %v4495
      %v4932 = vunpack.c.h.b16 %v4495
      %v4933 = vunpack.c.l.b16 %v4496
      %v4934 = vunpack.c.h.b16 %v4496
      %v4935 = vunpack.c.l.b16 %v4497
      %v4936 = vunpack.c.h.b16 %v4497
      %v4937 = vunpack.c.l.b16 %v4498
      %v4938 = vunpack.c.h.b16 %v4498
      %v4939 = vunpack.c.l.b16 %v4499
      %v4940 = vunpack.c.h.b16 %v4499
      %v4941 = vunpack.c.l.b16 %v4500
      %v4942 = vunpack.c.l.b16 %v4501
      %v4943 = vunpack.c.h.b16 %v4501
      %v4944 = vunpack.c.l.b16 %v4502
      %v4945 = vunpack.c.h.b16 %v4502
      %v4946 = vunpack.c.l.b16 %v4503
      %v4947 = vunpack.c.h.b16 %v4503
      %v4948 = vunpack.c.l.b16 %v4504
      %v4949 = vunpack.c.h.b16 %v4504
      %v4950 = vunpack.c.l.b16 %v4505
      %v4951 = vunpack.c.h.b16 %v4505
      %v4952 = vunpack.c.l.b16 %v4506
      %v4953 = vunpack.c.l.b16 %v4507
      %v4954 = vunpack.c.h.b16 %v4507
      %v4955 = vunpack.c.l.b16 %v4508
      %v4956 = vunpack.c.h.b16 %v4508
      %v4957 = vunpack.c.l.b16 %v4509
      %v4958 = vunpack.c.h.b16 %v4509
      %v4959 = vunpack.c.l.b16 %v4510
      %v4960 = vunpack.c.h.b16 %v4510
      %v4961 = vunpack.c.l.b16 %v4511
      %v4962 = vunpack.c.h.b16 %v4511
      %v4963 = vunpack.c.l.b16 %v4512
      %v4964 = vunpack.c.l.b16 %v4513
      %v4965 = vunpack.c.h.b16 %v4513
      %v4966 = vunpack.c.l.b16 %v4514
      %v4967 = vunpack.c.h.b16 %v4514
      %v4968 = vunpack.c.l.b16 %v4515
      %v4969 = vunpack.c.h.b16 %v4515
      %v4970 = vunpack.c.l.b16 %v4516
      %v4971 = vunpack.c.h.b16 %v4516
      %v4972 = vunpack.c.l.b16 %v4517
      %v4973 = vunpack.c.h.b16 %v4517
      %v4974 = vunpack.c.l.b16 %v4518
      %v4975 = vunpack.c.l.b16 %v4519
      %v4976 = vunpack.c.h.b16 %v4519
      %v4977 = vunpack.c.l.b16 %v4520
      %v4978 = vunpack.c.h.b16 %v4520
      %v4979 = vunpack.c.l.b16 %v4521
      %v4980 = vunpack.c.h.b16 %v4521
      %v4981 = vunpack.c.l.b16 %v4522
      %v4982 = vunpack.c.h.b16 %v4522
      %v4983 = vunpack.c.l.b16 %v4523
      %v4984 = vunpack.c.h.b16 %v4523
      %v4985 = vunpack.c.l.b16 %v4524
      %v4986 = vunpack.c.l.b16 %v4525
      %v4987 = vunpack.c.h.b16 %v4525
      %v4988 = vunpack.c.l.b16 %v4526
      %v4989 = vunpack.c.h.b16 %v4526
      %v4990 = vunpack.c.l.b16 %v4527
      %v4991 = vunpack.c.h.b16 %v4527
      %v4992 = vunpack.c.l.b16 %v4528
      %v4993 = vunpack.c.h.b16 %v4528
      %v4994 = vunpack.c.l.b16 %v4529
      %v4995 = vunpack.c.h.b16 %v4529
      %v4996 = vunpack.c.l.b16 %v4530
      %v4997 = vunpack.c.l.b16 %v4531
      %v4998 = vunpack.c.h.b16 %v4531
      %v4999 = vunpack.c.l.b16 %v4532
      %v5000 = vunpack.c.h.b16 %v4532
      %v5001 = vunpack.c.l.b16 %v4533
      %v5002 = vunpack.c.h.b16 %v4533
      %v5003 = vunpack.c.l.b16 %v4534
      %v5004 = vunpack.c.h.b16 %v4534
      %v5005 = vunpack.c.l.b16 %v4535
      %v5006 = vunpack.c.h.b16 %v4535
      %v5007 = vunpack.c.l.b16 %v4536
      %v5008 = vpack.c.b16 %v4722, %v4711
      %v5009 = vpack.c.b16 %v4723, %v4712
      %v5010 = vpack.c.b16 %v4724, %v4713
      %v5011 = vpack.c.b16 %v4725, %v4714
      %v5012 = vpack.c.b16 %v4726, %v4715
      %v5013 = vpack.c.b16 %v4727, %v4716
      %v5014 = vpack.c.b16 %v4728, %v4717
      %v5015 = vpack.c.b16 %v4729, %v4718
      %v5016 = vpack.c.b16 %v4730, %v4719
      %v5017 = vpack.c.b16 %v4731, %v4720
      %v5018 = vpack.c.b16 %v4732, %v4721
      %v5019 = vpack.c.b16 %v4744, %v4733
      %v5020 = vpack.c.b16 %v4745, %v4734
      %v5021 = vpack.c.b16 %v4746, %v4735
      %v5022 = vpack.c.b16 %v4747, %v4736
      %v5023 = vpack.c.b16 %v4748, %v4737
      %v5024 = vpack.c.b16 %v4749, %v4738
      %v5025 = vpack.c.b16 %v4750, %v4739
      %v5026 = vpack.c.b16 %v4751, %v4740
      %v5027 = vpack.c.b16 %v4752, %v4741
      %v5028 = vpack.c.b16 %v4753, %v4742
      %v5029 = vpack.c.b16 %v4754, %v4743
      %v5030 = vpack.c.b16 %v4766, %v4755
      %v5031 = vpack.c.b16 %v4767, %v4756
      %v5032 = vpack.c.b16 %v4768, %v4757
      %v5033 = vpack.c.b16 %v4769, %v4758
      %v5034 = vpack.c.b16 %v4770, %v4759
      %v5035 = vpack.c.b16 %v4771, %v4760
      %v5036 = vpack.c.b16 %v4772, %v4761
      %v5037 = vpack.c.b16 %v4773, %v4762
      %v5038 = vpack.c.b16 %v4774, %v4763
      %v5039 = vpack.c.b16 %v4775, %v4764
      %v5040 = vpack.c.b16 %v4776, %v4765
      %v5041 = vpack.c.b16 %v4788, %v4777
      %v5042 = vpack.c.b16 %v4789, %v4778
      %v5043 = vpack.c.b16 %v4790, %v4779
      %v5044 = vpack.c.b16 %v4791, %v4780
      %v5045 = vpack.c.b16 %v4792, %v4781
      %v5046 = vpack.c.b16 %v4793, %v4782
      %v5047 = vpack.c.b16 %v4794, %v4783
      %v5048 = vpack.c.b16 %v4795, %v4784
      %v5049 = vpack.c.b16 %v4796, %v4785
      %v5050 = vpack.c.b16 %v4797, %v4786
      %v5051 = vpack.c.b16 %v4798, %v4787
      %v5052 = vpack.c.b16 %v4810, %v4799
      %v5053 = vpack.c.b16 %v4811, %v4800
      %v5054 = vpack.c.b16 %v4812, %v4801
      %v5055 = vpack.c.b16 %v4813, %v4802
      %v5056 = vpack.c.b16 %v4814, %v4803
      %v5057 = vpack.c.b16 %v4815, %v4804
      %v5058 = vpack.c.b16 %v4816, %v4805
      %v5059 = vpack.c.b16 %v4817, %v4806
      %v5060 = vpack.c.b16 %v4818, %v4807
      %v5061 = vpack.c.b16 %v4819, %v4808
      %v5062 = vpack.c.b16 %v4820, %v4809
      %v5063 = vpack.c.b16 %v4832, %v4821
      %v5064 = vpack.c.b16 %v4833, %v4822
      %v5065 = vpack.c.b16 %v4834, %v4823
      %v5066 = vpack.c.b16 %v4835, %v4824
      %v5067 = vpack.c.b16 %v4836, %v4825
      %v5068 = vpack.c.b16 %v4837, %v4826
      %v5069 = vpack.c.b16 %v4838, %v4827
      %v5070 = vpack.c.b16 %v4839, %v4828
      %v5071 = vpack.c.b16 %v4840, %v4829
      %v5072 = vpack.c.b16 %v4841, %v4830
      %v5073 = vpack.c.b16 %v4842, %v4831
      %v5074 = vpack.c.b16 %v4854, %v4843
      %v5075 = vpack.c.b16 %v4855, %v4844
      %v5076 = vpack.c.b16 %v4856, %v4845
      %v5077 = vpack.c.b16 %v4857, %v4846
      %v5078 = vpack.c.b16 %v4858, %v4847
      %v5079 = vpack.c.b16 %v4859, %v4848
      %v5080 = vpack.c.b16 %v4860, %v4849
      %v5081 = vpack.c.b16 %v4861, %v4850
      %v5082 = vpack.c.b16 %v4862, %v4851
      %v5083 = vpack.c.b16 %v4863, %v4852
      %v5084 = vpack.c.b16 %v4864, %v4853
      %v5085 = vpack.c.b16 %v4876, %v4865
      %v5086 = vpack.c.b16 %v4877, %v4866
      %v5087 = vpack.c.b16 %v4878, %v4867
      %v5088 = vpack.c.b16 %v4879, %v4868
      %v5089 = vpack.c.b16 %v4880, %v4869
      %v5090 = vpack.c.b16 %v4881, %v4870
      %v5091 = vpack.c.b16 %v4882, %v4871
      %v5092 = vpack.c.b16 %v4883, %v4872
      %v5093 = vpack.c.b16 %v4884, %v4873
      %v5094 = vpack.c.b16 %v4885, %v4874
      %v5095 = vpack.c.b16 %v4886, %v4875
      %v5096 = vpack.c.b16 %v4898, %v4887
      %v5097 = vpack.c.b16 %v4899, %v4888
      %v5098 = vpack.c.b16 %v4900, %v4889
      %v5099 = vpack.c.b16 %v4901, %v4890
      %v5100 = vpack.c.b16 %v4902, %v4891
      %v5101 = vpack.c.b16 %v4903, %v4892
      %v5102 = vpack.c.b16 %v4904, %v4893
      %v5103 = vpack.c.b16 %v4905, %v4894
      %v5104 = vpack.c.b16 %v4906, %v4895
      %v5105 = vpack.c.b16 %v4907, %v4896
      %v5106 = vpack.c.b16 %v4908, %v4897
      %v5107 = vpack.c.b16 %v4920, %v4909
      %v5108 = vpack.c.b16 %v4921, %v4910
      %v5109 = vpack.c.b16 %v4922, %v4911
      %v5110 = vpack.c.b16 %v4923, %v4912
      %v5111 = vpack.c.b16 %v4924, %v4913
      %v5112 = vpack.c.b16 %v4925, %v4914
      %v5113 = vpack.c.b16 %v4926, %v4915
      %v5114 = vpack.c.b16 %v4927, %v4916
      %v5115 = vpack.c.b16 %v4928, %v4917
      %v5116 = vpack.c.b16 %v4929, %v4918
      %v5117 = vpack.c.b16 %v4930, %v4919
      %v5118 = vpack.c.b16 %v4942, %v4931
      %v5119 = vpack.c.b16 %v4943, %v4932
      %v5120 = vpack.c.b16 %v4944, %v4933
      %v5121 = vpack.c.b16 %v4945, %v4934
      %v5122 = vpack.c.b16 %v4946, %v4935
      %v5123 = vpack.c.b16 %v4947, %v4936
      %v5124 = vpack.c.b16 %v4948, %v4937
      %v5125 = vpack.c.b16 %v4949, %v4938
      %v5126 = vpack.c.b16 %v4950, %v4939
      %v5127 = vpack.c.b16 %v4951, %v4940
      %v5128 = vpack.c.b16 %v4952, %v4941
      %v5129 = vpack.c.b16 %v4964, %v4953
      %v5130 = vpack.c.b16 %v4965, %v4954
      %v5131 = vpack.c.b16 %v4966, %v4955
      %v5132 = vpack.c.b16 %v4967, %v4956
      %v5133 = vpack.c.b16 %v4968, %v4957
      %v5134 = vpack.c.b16 %v4969, %v4958
      %v5135 = vpack.c.b16 %v4970, %v4959
      %v5136 = vpack.c.b16 %v4971, %v4960
      %v5137 = vpack.c.b16 %v4972, %v4961
      %v5138 = vpack.c.b16 %v4973, %v4962
      %v5139 = vpack.c.b16 %v4974, %v4963
      %v5140 = vpack.c.b16 %v4986, %v4975
      %v5141 = vpack.c.b16 %v4987, %v4976
      %v5142 = vpack.c.b16 %v4988, %v4977
      %v5143 = vpack.c.b16 %v4989, %v4978
      %v5144 = vpack.c.b16 %v4990, %v4979
      %v5145 = vpack.c.b16 %v4991, %v4980
      %v5146 = vpack.c.b16 %v4992, %v4981
      %v5147 = vpack.c.b16 %v4993, %v4982
      %v5148 = vpack.c.b16 %v4994, %v4983
      %v5149 = vpack.c.b16 %v4995, %v4984
      %v5150 = vpack.c.b16 %v4996, %v4985
      %v5151 = vpack.c.b16 %v4997, %v4997
      %v5152 = vpack.c.b16 %v4998, %v4998
      %v5153 = vpack.c.b16 %v4999, %v4999
      %v5154 = vpack.c.b16 %v5000, %v5000
      %v5155 = vpack.c.b16 %v5001, %v5001
      %v5156 = vpack.c.b16 %v5002, %v5002
      %v5157 = vpack.c.b16 %v5003, %v5003
      %v5158 = vpack.c.b16 %v5004, %v5004
      %v5159 = vpack.c.b16 %v5005, %v5005
      %v5160 = vpack.c.b16 %v5006, %v5006
      %v5161 = vpack.c.b16 %v5007, %v5007
      %v5306 = vsel %vm2804, %v4547, 0
      %v5309 = vsel %vm2808, %v5151, 0
      %v5312 = vsel %vm2808, %v5152, 0
      %v5315 = vsel %vm2808, %v5153, 0
      %v5318 = vsel %vm2808, %v5154, 0
      %v5321 = vsel %vm2808, %v5155, 0
      %v5324 = vsel %vm2808, %v5156, 0
      %v5327 = vsel %vm2808, %v5157, 0
      %v5330 = vsel %vm2808, %v5158, 0
      %v5333 = vsel %vm2808, %v5159, 0
      %v5336 = vsel %vm2808, %v5160, 0
      %v5339 = vsel %vm2808, %v5161, 0
      %5341 = vmatprep.subr.bf16.mxu0 %v5086
      %5342 = vmatpush1.bf16.msra.mxu0 %v5085
      %5343 = vmatprep.subr.bf16.mxu0 %v5075
      %5344 = vmatpush1.bf16.msra.mxu0 %v5074
      %5345 = vmatprep.subr.bf16.mxu0 %v5064
      %5346 = vmatpush1.bf16.msra.mxu0 %v5063
      %5347 = vmatprep.subr.bf16.mxu0 %v5053
      %5348 = vmatpush1.bf16.msra.mxu0 %v5052
      %5349 = vmatprep.subr.bf16.mxu0 %v5042
      %5350 = vmatpush1.bf16.msra.mxu0 %v5041
      %5351 = vmatprep.subr.bf16.mxu0 %v5031
      %5352 = vmatpush1.bf16.msra.mxu0 %v5030
      %5353 = vmatprep.subr.bf16.mxu0 %v5020
      %5354 = vmatpush1.bf16.msra.mxu0 %v5019
      %5355 = vmatprep.subr.bf16.mxu0 %v5009
      %5356 = vmatpush1.bf16.msra.mxu0 %v5008
      %5357 = vmatprep.subr.bf16.mxu0 0
      %5358 = vmatpush2.bf16.msra.mxu0 0
      %5359 = vmatprep.subr.bf16.mxu0 0
      %5360 = vmatpush2.bf16.msra.mxu0 0
      %5361 = vmatprep.subr.bf16.mxu0 %v5312
      %5362 = vmatpush2.bf16.msra.mxu0 %v5309
      %5363 = vmatprep.subr.bf16.mxu0 %v5141
      %5364 = vmatpush2.bf16.msra.mxu0 %v5140
      %5365 = vmatprep.subr.bf16.mxu0 %v5130
      %5366 = vmatpush2.bf16.msra.mxu0 %v5129
      %5367 = vmatprep.subr.bf16.mxu0 %v5119
      %5368 = vmatpush2.bf16.msra.mxu0 %v5118
      %5369 = vmatprep.subr.bf16.mxu0 %v5108
      %5370 = vmatpush2.bf16.msra.mxu0 %v5107
      %5371 = vmatprep.subr.bf16.mxu0 %v5097
      %5372 = vmatpush2.bf16.msra.mxu0 %v5096
      %5373 = vmatprep.mubr.bf16.mxu0 %v5306
      %5374 = vmatmul.mubr.bf16.gmra.mxu0 %v4546
      %v5375 = vpop.f32.mrf.mxu0
      %v5376 = vadd.f32 %v4541, %v5375
      %v5377 = vpop.f32.mrf.mxu0
      %v5378 = vadd.f32 %v4541, %v5377
      %v5379 = vpop.f32.mrf.mxu0
      %v5380 = vpop.f32.mrf.mxu0
      %5381 = vdwg.mxu0
      %5382 = vmatprep.subr.bf16.mxu0 %v5088
      %5383 = vmatpush1.bf16.msra.mxu0 %v5087
      %5384 = vmatprep.subr.bf16.mxu0 %v5077
      %5385 = vmatpush1.bf16.msra.mxu0 %v5076
      %5386 = vmatprep.subr.bf16.mxu0 %v5066
      %5387 = vmatpush1.bf16.msra.mxu0 %v5065
      %5388 = vmatprep.subr.bf16.mxu0 %v5055
      %5389 = vmatpush1.bf16.msra.mxu0 %v5054
      %5390 = vmatprep.subr.bf16.mxu0 %v5044
      %5391 = vmatpush1.bf16.msra.mxu0 %v5043
      %5392 = vmatprep.subr.bf16.mxu0 %v5033
      %5393 = vmatpush1.bf16.msra.mxu0 %v5032
      %5394 = vmatprep.subr.bf16.mxu0 %v5022
      %5395 = vmatpush1.bf16.msra.mxu0 %v5021
      %5396 = vmatprep.subr.bf16.mxu0 %v5011
      %5397 = vmatpush1.bf16.msra.mxu0 %v5010
      %5398 = vmatprep.subr.bf16.mxu0 0
      %5399 = vmatpush2.bf16.msra.mxu0 0
      %5400 = vmatprep.subr.bf16.mxu0 0
      %5401 = vmatpush2.bf16.msra.mxu0 0
      %5402 = vmatprep.subr.bf16.mxu0 %v5318
      %5403 = vmatpush2.bf16.msra.mxu0 %v5315
      %5404 = vmatprep.subr.bf16.mxu0 %v5143
      %5405 = vmatpush2.bf16.msra.mxu0 %v5142
      %5406 = vmatprep.subr.bf16.mxu0 %v5132
      %5407 = vmatpush2.bf16.msra.mxu0 %v5131
      %5408 = vmatprep.subr.bf16.mxu0 %v5121
      %5409 = vmatpush2.bf16.msra.mxu0 %v5120
      %5410 = vmatprep.subr.bf16.mxu0 %v5110
      %5411 = vmatpush2.bf16.msra.mxu0 %v5109
      %5412 = vmatprep.subr.bf16.mxu0 %v5099
      %5413 = vmatpush2.bf16.msra.mxu0 %v5098
      %5414 = vmatprep.mubr.bf16.mxu0 %v5306
      %5415 = vmatmul.mubr.bf16.gmra.mxu0 %v4546
      %v5416 = vpop.f32.mrf.mxu0
      %v5417 = vadd.f32 %v4541, %v5416
      %v5418 = vpop.f32.mrf.mxu0
      %v5419 = vadd.f32 %v4541, %v5418
      %v5420 = vpop.f32.mrf.mxu0
      %v5421 = vpop.f32.mrf.mxu0
      %5422 = vdwg.mxu0
      %5423 = vmatprep.subr.bf16.mxu0 %v5090
      %5424 = vmatpush1.bf16.msra.mxu0 %v5089
      %5425 = vmatprep.subr.bf16.mxu0 %v5079
      %5426 = vmatpush1.bf16.msra.mxu0 %v5078
      %5427 = vmatprep.subr.bf16.mxu0 %v5068
      %5428 = vmatpush1.bf16.msra.mxu0 %v5067
      %5429 = vmatprep.subr.bf16.mxu0 %v5057
      %5430 = vmatpush1.bf16.msra.mxu0 %v5056
      %5431 = vmatprep.subr.bf16.mxu0 %v5046
      %5432 = vmatpush1.bf16.msra.mxu0 %v5045
      %5433 = vmatprep.subr.bf16.mxu0 %v5035
      %5434 = vmatpush1.bf16.msra.mxu0 %v5034
      %5435 = vmatprep.subr.bf16.mxu0 %v5024
      %5436 = vmatpush1.bf16.msra.mxu0 %v5023
      %5437 = vmatprep.subr.bf16.mxu0 %v5013
      %5438 = vmatpush1.bf16.msra.mxu0 %v5012
      %5439 = vmatprep.subr.bf16.mxu0 0
      %5440 = vmatpush2.bf16.msra.mxu0 0
      %5441 = vmatprep.subr.bf16.mxu0 0
      %5442 = vmatpush2.bf16.msra.mxu0 0
      %5443 = vmatprep.subr.bf16.mxu0 %v5324
      %5444 = vmatpush2.bf16.msra.mxu0 %v5321
      %5445 = vmatprep.subr.bf16.mxu0 %v5145
      %5446 = vmatpush2.bf16.msra.mxu0 %v5144
      %5447 = vmatprep.subr.bf16.mxu0 %v5134
      %5448 = vmatpush2.bf16.msra.mxu0 %v5133
      %5449 = vmatprep.subr.bf16.mxu0 %v5123
      %5450 = vmatpush2.bf16.msra.mxu0 %v5122
      %5451 = vmatprep.subr.bf16.mxu0 %v5112
      %5452 = vmatpush2.bf16.msra.mxu0 %v5111
      %5453 = vmatprep.subr.bf16.mxu0 %v5101
      %5454 = vmatpush2.bf16.msra.mxu0 %v5100
      %5455 = vmatprep.mubr.bf16.mxu0 %v5306
      %5456 = vmatmul.mubr.bf16.gmra.mxu0 %v4546
      %v5457 = vpop.f32.mrf.mxu0
      %v5458 = vadd.f32 %v4541, %v5457
      %v5459 = vpop.f32.mrf.mxu0
      %v5460 = vadd.f32 %v4541, %v5459
      %v5461 = vpop.f32.mrf.mxu0
      %v5462 = vpop.f32.mrf.mxu0
      %5463 = vdwg.mxu0
      %5464 = vmatprep.subr.bf16.mxu0 %v5092
      %5465 = vmatpush1.bf16.msra.mxu0 %v5091
      %5466 = vmatprep.subr.bf16.mxu0 %v5081
      %5467 = vmatpush1.bf16.msra.mxu0 %v5080
      %5468 = vmatprep.subr.bf16.mxu0 %v5070
      %5469 = vmatpush1.bf16.msra.mxu0 %v5069
      %5470 = vmatprep.subr.bf16.mxu0 %v5059
      %5471 = vmatpush1.bf16.msra.mxu0 %v5058
      %5472 = vmatprep.subr.bf16.mxu0 %v5048
      %5473 = vmatpush1.bf16.msra.mxu0 %v5047
      %5474 = vmatprep.subr.bf16.mxu0 %v5037
      %5475 = vmatpush1.bf16.msra.mxu0 %v5036
      %5476 = vmatprep.subr.bf16.mxu0 %v5026
      %5477 = vmatpush1.bf16.msra.mxu0 %v5025
      %5478 = vmatprep.subr.bf16.mxu0 %v5015
      %5479 = vmatpush1.bf16.msra.mxu0 %v5014
      %5480 = vmatprep.subr.bf16.mxu0 0
      %5481 = vmatpush2.bf16.msra.mxu0 0
      %5482 = vmatprep.subr.bf16.mxu0 0
      %5483 = vmatpush2.bf16.msra.mxu0 0
      %5484 = vmatprep.subr.bf16.mxu0 %v5330
      %5485 = vmatpush2.bf16.msra.mxu0 %v5327
      %5486 = vmatprep.subr.bf16.mxu0 %v5147
      %5487 = vmatpush2.bf16.msra.mxu0 %v5146
      %5488 = vmatprep.subr.bf16.mxu0 %v5136
      %5489 = vmatpush2.bf16.msra.mxu0 %v5135
      %5490 = vmatprep.subr.bf16.mxu0 %v5125
      %5491 = vmatpush2.bf16.msra.mxu0 %v5124
      %5492 = vmatprep.subr.bf16.mxu0 %v5114
      %5493 = vmatpush2.bf16.msra.mxu0 %v5113
      %5494 = vmatprep.subr.bf16.mxu0 %v5103
      %5495 = vmatpush2.bf16.msra.mxu0 %v5102
      %5496 = vmatprep.mubr.bf16.mxu0 %v5306
      %5497 = vmatmul.mubr.bf16.gmra.mxu0 %v4546
      %v5498 = vpop.f32.mrf.mxu0
      %v5499 = vadd.f32 %v4541, %v5498
      %v5500 = vpop.f32.mrf.mxu0
      %v5501 = vadd.f32 %v4541, %v5500
      %v5502 = vpop.f32.mrf.mxu0
      %v5503 = vpop.f32.mrf.mxu0
      %5504 = vdwg.mxu0
      %5505 = vmatprep.subr.bf16.mxu0 %v5094
      %5506 = vmatpush1.bf16.msra.mxu0 %v5093
      %5507 = vmatprep.subr.bf16.mxu0 %v5083
      %5508 = vmatpush1.bf16.msra.mxu0 %v5082
      %5509 = vmatprep.subr.bf16.mxu0 %v5072
      %5510 = vmatpush1.bf16.msra.mxu0 %v5071
      %5511 = vmatprep.subr.bf16.mxu0 %v5061
      %5512 = vmatpush1.bf16.msra.mxu0 %v5060
      %5513 = vmatprep.subr.bf16.mxu0 %v5050
      %5514 = vmatpush1.bf16.msra.mxu0 %v5049
      %5515 = vmatprep.subr.bf16.mxu0 %v5039
      %5516 = vmatpush1.bf16.msra.mxu0 %v5038
      %5517 = vmatprep.subr.bf16.mxu0 %v5028
      %5518 = vmatpush1.bf16.msra.mxu0 %v5027
      %5519 = vmatprep.subr.bf16.mxu0 %v5017
      %5520 = vmatpush1.bf16.msra.mxu0 %v5016
      %5521 = vmatprep.subr.bf16.mxu0 0
      %5522 = vmatpush2.bf16.msra.mxu0 0
      %5523 = vmatprep.subr.bf16.mxu0 0
      %5524 = vmatpush2.bf16.msra.mxu0 0
      %5525 = vmatprep.subr.bf16.mxu0 %v5336
      %5526 = vmatpush2.bf16.msra.mxu0 %v5333
      %5527 = vmatprep.subr.bf16.mxu0 %v5149
      %5528 = vmatpush2.bf16.msra.mxu0 %v5148
      %5529 = vmatprep.subr.bf16.mxu0 %v5138
      %5530 = vmatpush2.bf16.msra.mxu0 %v5137
      %5531 = vmatprep.subr.bf16.mxu0 %v5127
      %5532 = vmatpush2.bf16.msra.mxu0 %v5126
      %5533 = vmatprep.subr.bf16.mxu0 %v5116
      %5534 = vmatpush2.bf16.msra.mxu0 %v5115
      %5535 = vmatprep.subr.bf16.mxu0 %v5105
      %5536 = vmatpush2.bf16.msra.mxu0 %v5104
      %5537 = vmatprep.mubr.bf16.mxu0 %v5306
      %5538 = vmatmul.mubr.bf16.gmra.mxu0 %v4546
      %v5539 = vpop.f32.mrf.mxu0
      %v5540 = vadd.f32 %v4541, %v5539
      %v5541 = vpop.f32.mrf.mxu0
      %v5542 = vadd.f32 %v4541, %v5541
      %v5543 = vpop.f32.mrf.mxu0
      %v5544 = vpop.f32.mrf.mxu0
      %5545 = vdwg.mxu0
      %5546 = vmatprep.subr.bf16.mxu0 0
      %5547 = vmatpush1.bf16.msra.mxu0 %v5095
      %5548 = vmatprep.subr.bf16.mxu0 0
      %5549 = vmatpush1.bf16.msra.mxu0 %v5084
      %5550 = vmatprep.subr.bf16.mxu0 0
      %5551 = vmatpush1.bf16.msra.mxu0 %v5073
      %5552 = vmatprep.subr.bf16.mxu0 0
      %5553 = vmatpush1.bf16.msra.mxu0 %v5062
      %5554 = vmatprep.subr.bf16.mxu0 0
      %5555 = vmatpush1.bf16.msra.mxu0 %v5051
      %5556 = vmatprep.subr.bf16.mxu0 0
      %5557 = vmatpush1.bf16.msra.mxu0 %v5040
      %5558 = vmatprep.subr.bf16.mxu0 0
      %5559 = vmatpush1.bf16.msra.mxu0 %v5029
      %5560 = vmatprep.subr.bf16.mxu0 0
      %5561 = vmatpush1.bf16.msra.mxu0 %v5018
      %5562 = vmatprep.subr.bf16.mxu0 0
      %5563 = vmatpush2.bf16.msra.mxu0 0
      %5564 = vmatprep.subr.bf16.mxu0 0
      %5565 = vmatpush2.bf16.msra.mxu0 0
      %5566 = vmatprep.subr.bf16.mxu0 0
      %5567 = vmatpush2.bf16.msra.mxu0 %v5339
      %5568 = vmatprep.subr.bf16.mxu0 0
      %5569 = vmatpush2.bf16.msra.mxu0 %v5150
      %5570 = vmatprep.subr.bf16.mxu0 0
      %5571 = vmatpush2.bf16.msra.mxu0 %v5139
      %5572 = vmatprep.subr.bf16.mxu0 0
      %5573 = vmatpush2.bf16.msra.mxu0 %v5128
      %5574 = vmatprep.subr.bf16.mxu0 0
      %5575 = vmatpush2.bf16.msra.mxu0 %v5117
      %5576 = vmatprep.subr.bf16.mxu0 0
      %5577 = vmatpush2.bf16.msra.mxu0 %v5106
      %5578 = vmatprep.mubr.bf16.mxu0 %v5306
      %5579 = vmatmul.mubr.bf16.gmra.mxu0 %v4546
      %v5580 = vpop.f32.mrf.mxu0
      %v5581 = vadd.f32 %v4541, %v5580
      %v5582 = vpop.f32.mrf.mxu0
      %v5583 = vpop.f32.mrf.mxu0
      %v5584 = vpop.f32.mrf.mxu0
      %5585 = vdwg.mxu0
      %v5586 = vunpack.c.l.bf16 %v254
      %v5587 = vunpack.c.h.bf16 %v254
      %v5588 = vunpack.c.l.bf16 %v255
      %v5589 = vunpack.c.h.bf16 %v255
      %v5590 = vunpack.c.l.bf16 %v256
      %v5591 = vunpack.c.h.bf16 %v256
      %v5592 = vunpack.c.l.bf16 %v257
      %v5593 = vunpack.c.h.bf16 %v257
      %v5594 = vunpack.c.l.bf16 %v258
      %v5595 = vunpack.c.h.bf16 %v258
      %v5596 = vunpack.c.l.bf16 %v259
      %v5597 = vunpack.c.h.bf16 %v259
      %5610 = vrot.lane.b32.xlu0 %v5586, 118
      %v5611 = vpop.permute.xlu0 %5610
      %5612 = vrot.lane.b32.xlu0 %v5587, 118
      %v5613 = vpop.permute.xlu0 %5612
      %5614 = vrot.lane.b32.xlu0 %v5588, 118
      %v5615 = vpop.permute.xlu0 %5614
      %5616 = vrot.lane.b32.xlu0 %v5589, 118
      %v5617 = vpop.permute.xlu0 %5616
      %5618 = vrot.lane.b32.xlu0 %v5590, 118
      %v5619 = vpop.permute.xlu0 %5618
      %5620 = vrot.lane.b32.xlu0 %v5591, 118
      %v5621 = vpop.permute.xlu0 %5620
      %5622 = vrot.lane.b32.xlu0 %v5592, 118
      %v5623 = vpop.permute.xlu0 %5622
      %5624 = vrot.lane.b32.xlu0 %v5593, 118
      %v5625 = vpop.permute.xlu0 %5624
      %5626 = vrot.lane.b32.xlu0 %v5594, 118
      %v5627 = vpop.permute.xlu0 %5626
      %5628 = vrot.lane.b32.xlu0 %v5595, 118
      %v5629 = vpop.permute.xlu0 %5628
      %5630 = vrot.lane.b32.xlu0 %v5596, 118
      %v5631 = vpop.permute.xlu0 %5630
      %5632 = vrot.lane.b32.xlu0 %v5597, 118
      %v5633 = vpop.permute.xlu0 %5632
      %vm5634 = vcmask 965632
      %v5635 = vsel %vm5634, %v5611, %v5613
      %v5636 = vsel %vm5634, %v5613, %v5615
      %v5637 = vsel %vm5634, %v5615, %v5617
      %v5638 = vsel %vm5634, %v5617, %v5619
      %v5639 = vsel %vm5634, %v5619, %v5621
      %v5640 = vsel %vm5634, %v5621, %v5623
      %v5641 = vsel %vm5634, %v5623, %v5625
      %v5642 = vsel %vm5634, %v5625, %v5627
      %v5643 = vsel %vm5634, %v5627, %v5629
      %v5644 = vsel %vm5634, %v5629, %v5631
      %v5645 = vsel %vm5634, %v5631, %v5633
      %v5657 = vadd.f32 %v5376, %v5635
      %v5658 = vadd.f32 %v5378, %v5636
      %v5659 = vadd.f32 %v5417, %v5637
      %v5660 = vadd.f32 %v5419, %v5638
      %v5661 = vadd.f32 %v5458, %v5639
      %v5662 = vadd.f32 %v5460, %v5640
      %v5663 = vadd.f32 %v5499, %v5641
      %v5664 = vadd.f32 %v5501, %v5642
      %v5665 = vadd.f32 %v5540, %v5643
      %v5666 = vadd.f32 %v5542, %v5644
      %v5667 = vadd.f32 %v5581, %v5645
      %v5668 = vmax.f32 %v5657, 0.0
      %v5669 = vmax.f32 %v5658, 0.0
      %v5670 = vmax.f32 %v5659, 0.0
      %v5671 = vmax.f32 %v5660, 0.0
      %v5672 = vmax.f32 %v5661, 0.0
      %v5673 = vmax.f32 %v5662, 0.0
      %v5674 = vmax.f32 %v5663, 0.0
      %v5675 = vmax.f32 %v5664, 0.0
      %v5676 = vmax.f32 %v5665, 0.0
      %v5677 = vmax.f32 %v5666, 0.0
      %v5678 = vmax.f32 %v5667, 0.0
      %5679 = vst [vmem:[%s251] sm:$0xff] %v5668
      %5680 = vst [vmem:[%s251 + $0x8] sm:$0xff] %v5669
      %5681 = vst [vmem:[%s251 + $0x10] sm:$0xff] %v5670
      %5682 = vst [vmem:[%s251 + $0x18] sm:$0xff] %v5671
      %5683 = vst [vmem:[%s251 + $0x20] sm:$0xff] %v5672
      %5684 = vst [vmem:[%s251 + $0x28] sm:$0xff] %v5673
      %5685 = vst [vmem:[%s251 + $0x30] sm:$0xff] %v5674
      %5686 = vst [vmem:[%s251 + $0x38] sm:$0xff] %v5675
      %5687 = vst [vmem:[%s251 + $0x40] sm:$0xff] %v5676
      %5688 = vst [vmem:[%s251 + $0x48] sm:$0xff] %v5677
      %5689 = vst [vmem:[%s251 + $0x50] sm:$0xff] %v5678
      %p5690 = scmp.lt.s32.totalorder %s17, 1
      %s5691 = scalar_select %p5690, %s17, 1
      %s5692 = smul.addr %s5691, 11
      %s5693 = smul.addr %s5692, 8
      %s5694 = scalar_lea.vmem %s6, %s5693
      // Predicated region
      $region45: #{model_forward.2} parent=43 // pred_check
        %p5695 = pneg %p166
      $region46: #{model_forward.2} parent=43 // pred_check_branch
        %5697 = sbr.rel (%p5695) target = $region48
      $region47: #{model_forward.2} parent=43 // pred_region
        _
      $region48: #{model_forward.2} parent=43 // pred_fallthru
        _
    $region44: #{model_forward.2} parent=5 // pred_fallthru
      _
    %p5698 = scmp.le.s32.totalorder 2, %s12
    // Predicated region
    $region49: #{model_forward.2} parent=5 // pred_check
      %p5699 = pneg %p5698
    $region50: #{model_forward.2} parent=5 // pred_check_branch
      %5701 = sbr.rel (%p5699) target = $region52
    $region51: #{model_forward.2} parent=5 // pred_region
      %s5702 = ssub.s32 %s12, 2
      // Predicated region
      $region53: #{model_forward.2} parent=51 // pred_check
        %p5703 = pneg %p172
      $region54: #{model_forward.2} parent=51 // pred_check_branch
        %5705 = sbr.rel (%p5703) target = $region56
      $region55: #{model_forward.2} parent=51 // pred_region
        %p5706 = scmp.lt.s32.totalorder %s18, 1
        %s5707 = scalar_select %p5706, %s18, 1
        %s5708 = smul.addr %s5707, 11
        %s5709 = smul.addr %s5708, 8
        %s5710 = scalar_lea.vmem %s6, %s5709
      $region56: #{model_forward.2} parent=51 // pred_fallthru
        _
    $region52: #{model_forward.2} parent=5 // pred_fallthru
      _
  $region6: #{model_forward.2} parent=0 // loop_footer
    %s16 = sadd.s32 1, %s12
  $region7: #{model_forward.2} parent=0 // loop_footer_branch
    %11 = sbr.rel target = $region3
  $region8: #{model_forward.2} parent=0 // loop_exit
    _

// kernel: model_forward.3
$region0: #{model_forward.3}
  #allocation0 [shape = 'u32[]', space=smem, size = 0x4, offset = 0x4, fixed_abs, tag = 'smem constant byte address 0x4 - core index']
  #allocation1 [shape = 'u32[144,128]{1,0:T(1,128)}', space=vmem, size = 0x12000, scoped, tag = 'internal scratch']
  #allocation2 [shape = 'bf16[432,512]{1,0:T(8,128)(2,1)}', space=vmem, size = 0x6c000, scoped, tag = 'scratch operand']
  %s0 = inlined_call_operand.vmem [shape: bf16[2,8,5120], index: 0, kind: input, shape index: {}]
  %s1 = inlined_call_operand.vmem [shape: bf16[16,216], index: 1, kind: input, shape index: {}]
  %s2 = inlined_call_operand.vmem [shape: f32[16,1], index: 2, kind: input, shape index: {}]
  %s3 = inlined_call_operand.vmem [shape: bf16[16,432], index: 3, kind: input, shape index: {}]
  %s4 = inlined_call_operand.vmem [shape: f32[16,1], index: 4, kind: input, shape index: {}]
  %s5 = inlined_call_operand.vmem [shape: f32[1,512], index: 5, kind: input, shape index: {}]
  %s6 = inlined_call_operand.vmem [shape: bf16[16,8], index: 6, kind: input, shape index: {}]
  %s7 = inlined_call_operand.vmem [shape: f32[16,1], index: 7, kind: input, shape index: {}]
  %s8 = inlined_call_operand.vmem [shape: f32[2,16,384], index: 8, kind: output, shape index: {}]
  %s9 = sld [smem:[#allocation0]]
  $region65: #{model_forward.3} parent=0
    _
  %s11 = ssub.s32 1, %s9
  %s12 = scalar_select 0, %s11, %s9
  loop: start=0, step=1, limit=4
  $region2: #{model_forward.3} parent=0 // loop_pre_header
    _
  $region3: #{model_forward.3} parent=0 // loop_header
    %s14 = sphi 0, %s18
    %p15 = scmp.ge.s32.totalorder %s14, 4
    %s24 = sphi 0, %s26
    %s27 = sphi 0, %s24
    %s28 = sphi 0, %s27
    %s44 = sphi 0, %s28
    %s48 = sphi 0, %s48
    %s50 = sphi 0, %s48
    %s51 = sphi 0, %s50
    %s65 = sphi 0, %s51
    %s69 = sphi 0, %s69
    %s71 = sphi 0, %s69
    %s72 = sphi 0, %s71
    %s86 = sphi 0, %s72
    %s90 = sphi 0, %s90
    %s92 = sphi 0, %s90
    %s93 = sphi 0, %s92
    %s107 = sphi 0, %s93
    %s111 = sphi 0, %s111
    %s113 = sphi 0, %s111
    %s114 = sphi 0, %s113
    %s128 = sphi 0, %s114
    %s132 = sphi 0, %s132
    %s134 = sphi 0, %s132
    %s135 = sphi 0, %s134
    %s149 = sphi 0, %s135
    %s153 = sphi 0, %s153
    %s155 = sphi 0, %s153
    %s156 = sphi 0, %s155
    %s170 = sphi 0, %s156
    %s174 = sphi 0, %s174
    %s176 = sphi 0, %s174
    %s177 = sphi 0, %s176
    %s191 = sphi 0, %s177
    %s197 = sphi 0, %s199
    %s200 = sphi 0, %s197
    %s201 = sphi 0, %s200
    %s217 = sphi 0, %s201
  $region4: #{model_forward.3} parent=0 // loop_header_branch
    %17 = sbr.rel (%p15) target = $region8
  $region5: #{model_forward.3} parent=0 // loop_body
    %s19 = ssub.s32 %s14, 1
    %s20 = ssub.s32 %s14, 2
    %s21 = sadd.s32 %s14, 1
    %s22 = ssub.s32 %s14, %s21
    %p23 = scmp.eq.s32.totalorder %s22, 0
    %s25 = sadd.s32 %s24, 1
    %s26 = scalar_select %p23, %s24, %s25
    %p29 = pneg %p23
    %p30 = scmp.eq.s32.totalorder %s14, 1
    %p31 = por %p29, %p30
    %p32 = scmp.ne.s32.totalorder %s24, %s27
    %p33 = scmp.eq.s32.totalorder %s14, 0
    %p34 = por %p32, %p33
    %p35 = scmp.ne.s32.totalorder %s24, %s27
    %p36 = scmp.eq.s32.totalorder %s19, 1
    %p37 = por %p35, %p36
    %p38 = scmp.ne.s32.totalorder %s27, %s28
    %p39 = scmp.eq.s32.totalorder %s19, 0
    %p40 = por %p38, %p39
    %p41 = scmp.ne.s32.totalorder %s27, %s28
    %p42 = scmp.eq.s32.totalorder %s20, 1
    %p43 = por %p41, %p42
    %p45 = scmp.ne.s32.totalorder %s28, %s44
    %p46 = scmp.eq.s32.totalorder %s20, 0
    %p47 = por %p45, %p46
    %s49 = sadd.s32 %s48, 1
    %p52 = scmp.eq.s32.totalorder %s14, 1
    %p53 = scmp.ne.s32.totalorder %s48, %s50
    %p54 = scmp.eq.s32.totalorder %s14, 0
    %p55 = por %p53, %p54
    %p56 = scmp.ne.s32.totalorder %s48, %s50
    %p57 = scmp.eq.s32.totalorder %s19, 1
    %p58 = por %p56, %p57
    %p59 = scmp.ne.s32.totalorder %s50, %s51
    %p60 = scmp.eq.s32.totalorder %s19, 0
    %p61 = por %p59, %p60
    %p62 = scmp.ne.s32.totalorder %s50, %s51
    %p63 = scmp.eq.s32.totalorder %s20, 1
    %p64 = por %p62, %p63
    %p66 = scmp.ne.s32.totalorder %s51, %s65
    %p67 = scmp.eq.s32.totalorder %s20, 0
    %p68 = por %p66, %p67
    %s70 = sadd.s32 %s69, 1
    %p73 = scmp.eq.s32.totalorder %s14, 1
    %p74 = scmp.ne.s32.totalorder %s69, %s71
    %p75 = scmp.eq.s32.totalorder %s14, 0
    %p76 = por %p74, %p75
    %p77 = scmp.ne.s32.totalorder %s69, %s71
    %p78 = scmp.eq.s32.totalorder %s19, 1
    %p79 = por %p77, %p78
    %p80 = scmp.ne.s32.totalorder %s71, %s72
    %p81 = scmp.eq.s32.totalorder %s19, 0
    %p82 = por %p80, %p81
    %p83 = scmp.ne.s32.totalorder %s71, %s72
    %p84 = scmp.eq.s32.totalorder %s20, 1
    %p85 = por %p83, %p84
    %p87 = scmp.ne.s32.totalorder %s72, %s86
    %p88 = scmp.eq.s32.totalorder %s20, 0
    %p89 = por %p87, %p88
    %s91 = sadd.s32 %s90, 1
    %p94 = scmp.eq.s32.totalorder %s14, 1
    %p95 = scmp.ne.s32.totalorder %s90, %s92
    %p96 = scmp.eq.s32.totalorder %s14, 0
    %p97 = por %p95, %p96
    %p98 = scmp.ne.s32.totalorder %s90, %s92
    %p99 = scmp.eq.s32.totalorder %s19, 1
    %p100 = por %p98, %p99
    %p101 = scmp.ne.s32.totalorder %s92, %s93
    %p102 = scmp.eq.s32.totalorder %s19, 0
    %p103 = por %p101, %p102
    %p104 = scmp.ne.s32.totalorder %s92, %s93
    %p105 = scmp.eq.s32.totalorder %s20, 1
    %p106 = por %p104, %p105
    %p108 = scmp.ne.s32.totalorder %s93, %s107
    %p109 = scmp.eq.s32.totalorder %s20, 0
    %p110 = por %p108, %p109
    %s112 = sadd.s32 %s111, 1
    %p115 = scmp.eq.s32.totalorder %s14, 1
    %p116 = scmp.ne.s32.totalorder %s111, %s113
    %p117 = scmp.eq.s32.totalorder %s14, 0
    %p118 = por %p116, %p117
    %p119 = scmp.ne.s32.totalorder %s111, %s113
    %p120 = scmp.eq.s32.totalorder %s19, 1
    %p121 = por %p119, %p120
    %p122 = scmp.ne.s32.totalorder %s113, %s114
    %p123 = scmp.eq.s32.totalorder %s19, 0
    %p124 = por %p122, %p123
    %p125 = scmp.ne.s32.totalorder %s113, %s114
    %p126 = scmp.eq.s32.totalorder %s20, 1
    %p127 = por %p125, %p126
    %p129 = scmp.ne.s32.totalorder %s114, %s128
    %p130 = scmp.eq.s32.totalorder %s20, 0
    %p131 = por %p129, %p130
    %s133 = sadd.s32 %s132, 1
    %p136 = scmp.eq.s32.totalorder %s14, 1
    %p137 = scmp.ne.s32.totalorder %s132, %s134
    %p138 = scmp.eq.s32.totalorder %s14, 0
    %p139 = por %p137, %p138
    %p140 = scmp.ne.s32.totalorder %s132, %s134
    %p141 = scmp.eq.s32.totalorder %s19, 1
    %p142 = por %p140, %p141
    %p143 = scmp.ne.s32.totalorder %s134, %s135
    %p144 = scmp.eq.s32.totalorder %s19, 0
    %p145 = por %p143, %p144
    %p146 = scmp.ne.s32.totalorder %s134, %s135
    %p147 = scmp.eq.s32.totalorder %s20, 1
    %p148 = por %p146, %p147
    %p150 = scmp.ne.s32.totalorder %s135, %s149
    %p151 = scmp.eq.s32.totalorder %s20, 0
    %p152 = por %p150, %p151
    %s154 = sadd.s32 %s153, 1
    %p157 = scmp.eq.s32.totalorder %s14, 1
    %p158 = scmp.ne.s32.totalorder %s153, %s155
    %p159 = scmp.eq.s32.totalorder %s14, 0
    %p160 = por %p158, %p159
    %p161 = scmp.ne.s32.totalorder %s153, %s155
    %p162 = scmp.eq.s32.totalorder %s19, 1
    %p163 = por %p161, %p162
    %p164 = scmp.ne.s32.totalorder %s155, %s156
    %p165 = scmp.eq.s32.totalorder %s19, 0
    %p166 = por %p164, %p165
    %p167 = scmp.ne.s32.totalorder %s155, %s156
    %p168 = scmp.eq.s32.totalorder %s20, 1
    %p169 = por %p167, %p168
    %p171 = scmp.ne.s32.totalorder %s156, %s170
    %p172 = scmp.eq.s32.totalorder %s20, 0
    %p173 = por %p171, %p172
    %s175 = sadd.s32 %s174, 1
    %p178 = scmp.eq.s32.totalorder %s14, 1
    %p179 = scmp.ne.s32.totalorder %s174, %s176
    %p180 = scmp.eq.s32.totalorder %s14, 0
    %p181 = por %p179, %p180
    %p182 = scmp.ne.s32.totalorder %s174, %s176
    %p183 = scmp.eq.s32.totalorder %s19, 1
    %p184 = por %p182, %p183
    %p185 = scmp.ne.s32.totalorder %s176, %s177
    %p186 = scmp.eq.s32.totalorder %s19, 0
    %p187 = por %p185, %p186
    %p188 = scmp.ne.s32.totalorder %s176, %s177
    %p189 = scmp.eq.s32.totalorder %s20, 1
    %p190 = por %p188, %p189
    %p192 = scmp.ne.s32.totalorder %s177, %s191
    %p193 = scmp.eq.s32.totalorder %s20, 0
    %p194 = por %p192, %p193
    %s195 = ssub.s32 %s14, %s21
    %p196 = scmp.eq.s32.totalorder %s195, 0
    %s198 = sadd.s32 %s197, 1
    %s199 = scalar_select %p196, %s197, %s198
    %p202 = pneg %p196
    %p203 = scmp.eq.s32.totalorder %s14, 1
    %p204 = por %p202, %p203
    %p205 = scmp.ne.s32.totalorder %s197, %s200
    %p206 = scmp.eq.s32.totalorder %s14, 0
    %p207 = por %p205, %p206
    %p208 = scmp.ne.s32.totalorder %s197, %s200
    %p209 = scmp.eq.s32.totalorder %s19, 1
    %p210 = por %p208, %p209
    %p211 = scmp.ne.s32.totalorder %s200, %s201
    %p212 = scmp.eq.s32.totalorder %s19, 0
    %p213 = por %p211, %p212
    %p214 = scmp.ne.s32.totalorder %s200, %s201
    %p215 = scmp.eq.s32.totalorder %s20, 1
    %p216 = por %p214, %p215
    %p218 = scmp.ne.s32.totalorder %s201, %s217
    %p219 = scmp.eq.s32.totalorder %s20, 0
    %p220 = por %p218, %p219
    %p221 = scmp.le.s32.totalorder 1, %s14
    %p222 = scmp.lt.s32.totalorder %s14, 3
    %p223 = pnand %p221, %p222
    %p224 = pneg %p223
    // Predicated region
    $region9: #{model_forward.3} parent=5 // pred_check
      _
    $region10: #{model_forward.3} parent=5 // pred_check_branch
      %226 = sbr.rel (%p223) target = $region12
    $region11: #{model_forward.3} parent=5 // pred_region
      %s227 = ssub.s32 %s14, 1
      // Predicated region
      $region13: #{model_forward.3} parent=11 // pred_check
        %p228 = pneg %p61
      $region14: #{model_forward.3} parent=11 // pred_check_branch
        %230 = sbr.rel (%p228) target = $region16
      $region15: #{model_forward.3} parent=11 // pred_region
        _
      $region16: #{model_forward.3} parent=11 // pred_fallthru
        _
      // Predicated region
      $region17: #{model_forward.3} parent=11 // pred_check
        %p231 = pneg %p82
      $region18: #{model_forward.3} parent=11 // pred_check_branch
        %233 = sbr.rel (%p231) target = $region20
      $region19: #{model_forward.3} parent=11 // pred_region
        _
      $region20: #{model_forward.3} parent=11 // pred_fallthru
        _
      // Predicated region
      $region21: #{model_forward.3} parent=11 // pred_check
        %p234 = pneg %p103
      $region22: #{model_forward.3} parent=11 // pred_check_branch
        %236 = sbr.rel (%p234) target = $region24
      $region23: #{model_forward.3} parent=11 // pred_region
        _
      $region24: #{model_forward.3} parent=11 // pred_fallthru
        _
      // Predicated region
      $region25: #{model_forward.3} parent=11 // pred_check
        %p237 = pneg %p124
      $region26: #{model_forward.3} parent=11 // pred_check_branch
        %239 = sbr.rel (%p237) target = $region28
      $region27: #{model_forward.3} parent=11 // pred_region
        _
      $region28: #{model_forward.3} parent=11 // pred_fallthru
        _
      // Predicated region
      $region29: #{model_forward.3} parent=11 // pred_check
        %p240 = pneg %p145
      $region30: #{model_forward.3} parent=11 // pred_check_branch
        %242 = sbr.rel (%p240) target = $region32
      $region31: #{model_forward.3} parent=11 // pred_region
        _
      $region32: #{model_forward.3} parent=11 // pred_fallthru
        _
      // Predicated region
      $region33: #{model_forward.3} parent=11 // pred_check
        %p243 = pneg %p166
      $region34: #{model_forward.3} parent=11 // pred_check_branch
        %245 = sbr.rel (%p243) target = $region36
      $region35: #{model_forward.3} parent=11 // pred_region
        _
      $region36: #{model_forward.3} parent=11 // pred_fallthru
        _
      // Predicated region
      $region37: #{model_forward.3} parent=11 // pred_check
        %p246 = pneg %p187
      $region38: #{model_forward.3} parent=11 // pred_check_branch
        %248 = sbr.rel (%p246) target = $region40
      $region39: #{model_forward.3} parent=11 // pred_region
        _
      $region40: #{model_forward.3} parent=11 // pred_fallthru
        _
    $region12: #{model_forward.3} parent=5 // pred_fallthru
      _
    %p249 = scmp.lt.s32.totalorder %s14, 2
    // Predicated region
    $region41: #{model_forward.3} parent=5 // pred_check
      %p250 = pneg %p249
    $region42: #{model_forward.3} parent=5 // pred_check_branch
      %252 = sbr.rel (%p250) target = $region44
    $region43: #{model_forward.3} parent=5 // pred_region
      // Predicated region
      $region45: #{model_forward.3} parent=43 // pred_check
        %p253 = pneg %p34
      $region46: #{model_forward.3} parent=43 // pred_check_branch
        %255 = sbr.rel (%p253) target = $region48
      $region47: #{model_forward.3} parent=43 // pred_region
        %p256 = scmp.lt.s32.totalorder %s14, 1
        %s257 = scalar_select %p256, %s14, 1
        %s258 = smul.addr %s257, 40
        %s259 = smul.addr %s258, 4
        %s260 = scalar_lea.vmem %s0, %s259
      $region48: #{model_forward.3} parent=43 // pred_fallthru
        _
    $region44: #{model_forward.3} parent=5 // pred_fallthru
      _
    %p261 = scmp.le.s32.totalorder 1, %s14
    %p262 = scmp.lt.s32.totalorder %s14, 3
    %p263 = pnand %p261, %p262
    %p264 = pneg %p263
    // Predicated region
    $region49: #{model_forward.3} parent=5 // pred_check
      _
    $region50: #{model_forward.3} parent=5 // pred_check_branch
      %266 = sbr.rel (%p263) target = $region52
    $region51: #{model_forward.3} parent=5 // pred_region
      %s267 = ssub.s32 %s14, 1
      %p268 = scmp.lt.s32.totalorder %s19, 1
      %s269 = scalar_select %p268, %s19, 1
      %s270 = smul.addr %s269, 40
      %s271 = smul.addr %s270, 4
      %s272 = scalar_lea.vmem %s0, %s271
      %p273 = pneg %p40
      %p274 = pneg %p37
      %p275 = pneg %p61
      %p276 = pneg %p58
      %p277 = pneg %p82
      %p278 = pneg %p79
      %p279 = pneg %p103
      %p280 = pneg %p100
      %p281 = pneg %p124
      %p282 = pneg %p121
      %p283 = pneg %p145
      %p284 = pneg %p142
      %p285 = pneg %p166
      %p286 = pneg %p163
      %p287 = pneg %p187
      %p288 = pneg %p184
      %p289 = pneg %p213
      %p290 = pneg %p210
      %p291 = scmp.lt.s32.totalorder %s19, 1
      %s292 = scalar_select %p291, %s19, 1
      %s293 = smul.addr %s292, 6
      %s294 = smul.addr %s293, 8
      %s295 = scalar_lea.vmem %s8, %s294
      %p296 = scmp.lt.s32.totalorder %s19, 1
      %s297 = scalar_select %p296, %s19, 1
      %s298 = smul.addr %s297, 40
      %s299 = smul.addr %s298, 4
      %s300 = scalar_lea.vmem %s0, %s299
      %p301 = scmp.lt.s32.totalorder %s19, 1
      %s302 = scalar_select %p301, %s19, 1
      %s303 = smul.addr %s302, 6
      %s304 = smul.addr %s303, 8
      %s305 = scalar_lea.vmem %s8, %s304
      %v307 = vld [vmem:[%s300] sm:$0xff]
      %v308 = vld [vmem:[%s300 + $0x8] sm:$0xff]
      %v309 = vld [vmem:[%s300 + $0x10] sm:$0xff]
      %v310 = vld [vmem:[%s300 + $0x18] sm:$0xff]
      %v311 = vld [vmem:[%s300 + $0x20] sm:$0xff]
      %v312 = vld [vmem:[%s300 + $0x28] sm:$0xff]
      %v313 = vld [vmem:[%s300 + $0x30] sm:$0xff]
      %v314 = vld [vmem:[%s300 + $0x38] sm:$0xff]
      %v315 = vld [vmem:[%s300 + $0x40] sm:$0xff]
      %v316 = vld [vmem:[%s300 + $0x48] sm:$0xff]
      %v317 = vld [vmem:[%s300 + $0x50] sm:$0xff]
      %v318 = vld [vmem:[%s300 + $0x58] sm:$0xff]
      %v319 = vld [vmem:[%s300 + $0x60] sm:$0xff]
      %v320 = vld [vmem:[%s300 + $0x68] sm:$0xff]
      %v321 = vld [vmem:[%s300 + $0x70] sm:$0xff]
      %v322 = vld [vmem:[%s300 + $0x78] sm:$0xff]
      %v323 = vld [vmem:[%s300 + $0x80] sm:$0xff]
      %v324 = vld [vmem:[%s300 + $0x88] sm:$0xff]
      %v325 = vld [vmem:[%s300 + $0x90] sm:$0xff]
      %v326 = vld [vmem:[%s300 + $0x98] sm:$0xff]
      %327 = vst [vmem:[#allocation2] sm:$0xff] %v307
      %328 = vst [vmem:[#allocation2 + $0x8] sm:$0xff] %v308
      %v332 = vrot.slane %v309, 4
      %v333 = vrot.slane %v310, 4
      %v334 = vrot.slane %v311, 4
      %vm335 = vcmask 1043456
      %v336 = vsel %vm335, %v332, %v333
      %v337 = vsel %vm335, %v333, %v334
      %340 = vst [vmem:[#allocation2 + $0x10] sm:$0xff] %v336
      %341 = vst [vmem:[#allocation2 + $0x18] sm:$0xff] %v337
      %344 = vrot.lane.b32.xlu0 %v307, 127
      %v345 = vpop.permute.xlu0 %344
      %346 = vrot.lane.b32.xlu0 %v308, 127
      %v347 = vpop.permute.xlu0 %346
      %348 = vrot.lane.b32.xlu0 %v309, 127
      %v349 = vpop.permute.xlu0 %348
      %v350 = vrot.slane %v345, 4
      %v351 = vrot.slane %v347, 4
      %v352 = vrot.slane %v349, 4
      %v353 = vsel %vm335, %v350, %v351
      %vm354 = vcmask 1039360
      %v355 = vsel %vm354, %v345, %v353
      %v356 = vsel %vm335, %v351, %v352
      %v357 = vsel %vm354, %v347, %v356
      %360 = vst [vmem:[#allocation2 + $0x20] sm:$0xff] %v355
      %361 = vst [vmem:[#allocation2 + $0x28] sm:$0xff] %v357
      %362 = vst [vmem:[#allocation2 + $0x30] sm:$0xff] %v312
      %363 = vst [vmem:[#allocation2 + $0x38] sm:$0xff] %v313
      %v367 = vrot.slane %v314, 4
      %v368 = vrot.slane %v315, 4
      %v369 = vrot.slane %v316, 4
      %v370 = vsel %vm335, %v367, %v368
      %v371 = vsel %vm335, %v368, %v369
      %374 = vst [vmem:[#allocation2 + $0x40] sm:$0xff] %v370
      %375 = vst [vmem:[#allocation2 + $0x48] sm:$0xff] %v371
      %378 = vrot.lane.b32.xlu0 %v312, 127
      %v379 = vpop.permute.xlu0 %378
      %380 = vrot.lane.b32.xlu0 %v313, 127
      %v381 = vpop.permute.xlu0 %380
      %382 = vrot.lane.b32.xlu0 %v314, 127
      %v383 = vpop.permute.xlu0 %382
      %v384 = vrot.slane %v379, 4
      %v385 = vrot.slane %v381, 4
      %v386 = vrot.slane %v383, 4
      %v387 = vsel %vm335, %v384, %v385
      %v388 = vsel %vm354, %v379, %v387
      %v389 = vsel %vm335, %v385, %v386
      %v390 = vsel %vm354, %v381, %v389
      %393 = vst [vmem:[#allocation2 + $0x50] sm:$0xff] %v388
      %394 = vst [vmem:[#allocation2 + $0x58] sm:$0xff] %v390
      %395 = vrot.lane.b32.xlu0 %v307, 121
      %v396 = vpop.permute.xlu0 %395
      %397 = vrot.lane.b32.xlu0 %v308, 121
      %v398 = vpop.permute.xlu0 %397
      %399 = vrot.lane.b32.xlu0 %v309, 121
      %v400 = vpop.permute.xlu0 %399
      %v401 = vrot.slane %v396, 4
      %v402 = vrot.slane %v398, 4
      %v403 = vrot.slane %v400, 4
      %v404 = vsel %vm335, %v401, %v402
      %vm405 = vcmask 990208
      %v406 = vsel %vm405, %v396, %v404
      %v407 = vsel %vm335, %v402, %v403
      %v408 = vsel %vm405, %v398, %v407
      %411 = vst [vmem:[#allocation2 + $0x60] sm:$0xff] %v406
      %412 = vst [vmem:[#allocation2 + $0x68] sm:$0xff] %v408
      %413 = vrot.lane.b32.xlu0 %v310, 121
      %v414 = vpop.permute.xlu0 %413
      %415 = vrot.lane.b32.xlu0 %v311, 121
      %v416 = vpop.permute.xlu0 %415
      %v417 = vrot.slane %v414, 4
      %v418 = vrot.slane %v416, 4
      %v419 = vsel %vm335, %v403, %v417
      %v420 = vsel %vm405, %v419, %v414
      %v421 = vsel %vm335, %v417, %v418
      %v422 = vsel %vm405, %v421, %v416
      %425 = vst [vmem:[#allocation2 + $0x70] sm:$0xff] %v420
      %426 = vst [vmem:[#allocation2 + $0x78] sm:$0xff] %v422
      %427 = vrot.lane.b32.xlu0 %v307, 120
      %v428 = vpop.permute.xlu0 %427
      %429 = vrot.lane.b32.xlu0 %v308, 120
      %v430 = vpop.permute.xlu0 %429
      %431 = vrot.lane.b32.xlu0 %v309, 120
      %v432 = vpop.permute.xlu0 %431
      %v433 = vrot.slane %v428, 4
      %v434 = vrot.slane %v430, 4
      %v435 = vrot.slane %v432, 4
      %v436 = vsel %vm335, %v433, %v434
      %vm437 = vcmask 982016
      %v438 = vsel %vm437, %v428, %v436
      %v439 = vsel %vm335, %v434, %v435
      %v440 = vsel %vm437, %v430, %v439
      %443 = vst [vmem:[#allocation2 + $0x80] sm:$0xff] %v438
      %444 = vst [vmem:[#allocation2 + $0x88] sm:$0xff] %v440
      %445 = vst [vmem:[#allocation2 + $0x90] sm:$0xff] %v317
      %446 = vst [vmem:[#allocation2 + $0x98] sm:$0xff] %v318
      %v450 = vrot.slane %v319, 4
      %v451 = vrot.slane %v320, 4
      %v452 = vrot.slane %v321, 4
      %v453 = vsel %vm335, %v450, %v451
      %v454 = vsel %vm335, %v451, %v452
      %457 = vst [vmem:[#allocation2 + $0xa0] sm:$0xff] %v453
      %458 = vst [vmem:[#allocation2 + $0xa8] sm:$0xff] %v454
      %461 = vrot.lane.b32.xlu0 %v317, 127
      %v462 = vpop.permute.xlu0 %461
      %463 = vrot.lane.b32.xlu0 %v318, 127
      %v464 = vpop.permute.xlu0 %463
      %465 = vrot.lane.b32.xlu0 %v319, 127
      %v466 = vpop.permute.xlu0 %465
      %v467 = vrot.slane %v462, 4
      %v468 = vrot.slane %v464, 4
      %v469 = vrot.slane %v466, 4
      %v470 = vsel %vm335, %v467, %v468
      %v471 = vsel %vm354, %v462, %v470
      %v472 = vsel %vm335, %v468, %v469
      %v473 = vsel %vm354, %v464, %v472
      %476 = vst [vmem:[#allocation2 + $0xb0] sm:$0xff] %v471
      %477 = vst [vmem:[#allocation2 + $0xb8] sm:$0xff] %v473
      %478 = vst [vmem:[#allocation2 + $0xc0] sm:$0xff] %v322
      %479 = vst [vmem:[#allocation2 + $0xc8] sm:$0xff] %v323
      %v483 = vrot.slane %v324, 4
      %v484 = vrot.slane %v325, 4
      %v485 = vrot.slane %v326, 4
      %v486 = vsel %vm335, %v483, %v484
      %v487 = vsel %vm335, %v484, %v485
      %490 = vst [vmem:[#allocation2 + $0xd0] sm:$0xff] %v486
      %491 = vst [vmem:[#allocation2 + $0xd8] sm:$0xff] %v487
      %494 = vrot.lane.b32.xlu0 %v322, 127
      %v495 = vpop.permute.xlu0 %494
      %496 = vrot.lane.b32.xlu0 %v323, 127
      %v497 = vpop.permute.xlu0 %496
      %498 = vrot.lane.b32.xlu0 %v324, 127
      %v499 = vpop.permute.xlu0 %498
      %v500 = vrot.slane %v495, 4
      %v501 = vrot.slane %v497, 4
      %v502 = vrot.slane %v499, 4
      %v503 = vsel %vm335, %v500, %v501
      %v504 = vsel %vm354, %v495, %v503
      %v505 = vsel %vm335, %v501, %v502
      %v506 = vsel %vm354, %v497, %v505
      %509 = vst [vmem:[#allocation2 + $0xe0] sm:$0xff] %v504
      %510 = vst [vmem:[#allocation2 + $0xe8] sm:$0xff] %v506
      %511 = vrot.lane.b32.xlu0 %v317, 121
      %v512 = vpop.permute.xlu0 %511
      %513 = vrot.lane.b32.xlu0 %v318, 121
      %v514 = vpop.permute.xlu0 %513
      %515 = vrot.lane.b32.xlu0 %v319, 121
      %v516 = vpop.permute.xlu0 %515
      %v517 = vrot.slane %v512, 4
      %v518 = vrot.slane %v514, 4
      %v519 = vrot.slane %v516, 4
      %v520 = vsel %vm335, %v517, %v518
      %v521 = vsel %vm405, %v512, %v520
      %v522 = vsel %vm335, %v518, %v519
      %v523 = vsel %vm405, %v514, %v522
      %526 = vst [vmem:[#allocation2 + $0xf0] sm:$0xff] %v521
      %527 = vst [vmem:[#allocation2 + $0xf8] sm:$0xff] %v523
      %528 = vrot.lane.b32.xlu0 %v320, 121
      %v529 = vpop.permute.xlu0 %528
      %530 = vrot.lane.b32.xlu0 %v321, 121
      %v531 = vpop.permute.xlu0 %530
      %v532 = vrot.slane %v529, 4
      %v533 = vrot.slane %v531, 4
      %v534 = vsel %vm335, %v519, %v532
      %v535 = vsel %vm405, %v534, %v529
      %v536 = vsel %vm335, %v532, %v533
      %v537 = vsel %vm405, %v536, %v531
      %540 = vst [vmem:[#allocation2 + $0x100] sm:$0xff] %v535
      %541 = vst [vmem:[#allocation2 + $0x108] sm:$0xff] %v537
      %542 = vrot.lane.b32.xlu0 %v317, 120
      %v543 = vpop.permute.xlu0 %542
      %544 = vrot.lane.b32.xlu0 %v318, 120
      %v545 = vpop.permute.xlu0 %544
      %546 = vrot.lane.b32.xlu0 %v319, 120
      %v547 = vpop.permute.xlu0 %546
      %v548 = vrot.slane %v543, 4
      %v549 = vrot.slane %v545, 4
      %v550 = vrot.slane %v547, 4
      %v551 = vsel %vm335, %v548, %v549
      %v552 = vsel %vm437, %v543, %v551
      %v553 = vsel %vm335, %v549, %v550
      %v554 = vsel %vm437, %v545, %v553
      %557 = vst [vmem:[#allocation2 + $0x110] sm:$0xff] %v552
      %558 = vst [vmem:[#allocation2 + $0x118] sm:$0xff] %v554
      %559 = vrot.lane.b32.xlu0 %v307, 79
      %v560 = vpop.permute.xlu0 %559
      %561 = vrot.lane.b32.xlu0 %v308, 79
      %v562 = vpop.permute.xlu0 %561
      %563 = vrot.lane.b32.xlu0 %v309, 79
      %v564 = vpop.permute.xlu0 %563
      %v565 = vrot.slane %v560, 4
      %v566 = vrot.slane %v562, 4
      %v567 = vrot.slane %v564, 4
      %v568 = vsel %vm335, %v565, %v566
      %vm569 = vcmask 646144
      %v570 = vsel %vm569, %v560, %v568
      %v571 = vsel %vm335, %v566, %v567
      %v572 = vsel %vm569, %v562, %v571
      %575 = vst [vmem:[#allocation2 + $0x120] sm:$0xff] %v570
      %576 = vst [vmem:[#allocation2 + $0x128] sm:$0xff] %v572
      %577 = vrot.lane.b32.xlu0 %v310, 79
      %v578 = vpop.permute.xlu0 %577
      %579 = vrot.lane.b32.xlu0 %v311, 79
      %v580 = vpop.permute.xlu0 %579
      %v581 = vrot.slane %v578, 4
      %v582 = vrot.slane %v580, 4
      %v583 = vsel %vm335, %v567, %v581
      %v584 = vsel %vm569, %v583, %v578
      %v585 = vsel %vm335, %v581, %v582
      %v586 = vsel %vm569, %v585, %v580
      %589 = vst [vmem:[#allocation2 + $0x130] sm:$0xff] %v584
      %590 = vst [vmem:[#allocation2 + $0x138] sm:$0xff] %v586
      %591 = vrot.lane.b32.xlu0 %v307, 78
      %v592 = vpop.permute.xlu0 %591
      %593 = vrot.lane.b32.xlu0 %v308, 78
      %v594 = vpop.permute.xlu0 %593
      %595 = vrot.lane.b32.xlu0 %v309, 78
      %v596 = vpop.permute.xlu0 %595
      %v597 = vrot.slane %v592, 4
      %v598 = vrot.slane %v594, 4
      %v599 = vrot.slane %v596, 4
      %v600 = vsel %vm335, %v597, %v598
      %vm601 = vcmask 637952
      %v602 = vsel %vm601, %v592, %v600
      %v603 = vsel %vm335, %v598, %v599
      %v604 = vsel %vm601, %v594, %v603
      %607 = vst [vmem:[#allocation2 + $0x140] sm:$0xff] %v602
      %608 = vst [vmem:[#allocation2 + $0x148] sm:$0xff] %v604
      %609 = vrot.lane.b32.xlu0 %v312, 79
      %v610 = vpop.permute.xlu0 %609
      %611 = vrot.lane.b32.xlu0 %v313, 79
      %v612 = vpop.permute.xlu0 %611
      %613 = vrot.lane.b32.xlu0 %v314, 79
      %v614 = vpop.permute.xlu0 %613
      %v615 = vrot.slane %v610, 4
      %v616 = vrot.slane %v612, 4
      %v617 = vrot.slane %v614, 4
      %v618 = vsel %vm335, %v615, %v616
      %v619 = vsel %vm569, %v610, %v618
      %v620 = vsel %vm335, %v616, %v617
      %v621 = vsel %vm569, %v612, %v620
      %624 = vst [vmem:[#allocation2 + $0x150] sm:$0xff] %v619
      %625 = vst [vmem:[#allocation2 + $0x158] sm:$0xff] %v621
      %626 = vrot.lane.b32.xlu0 %v315, 79
      %v627 = vpop.permute.xlu0 %626
      %628 = vrot.lane.b32.xlu0 %v316, 79
      %v629 = vpop.permute.xlu0 %628
      %v630 = vrot.slane %v627, 4
      %v631 = vrot.slane %v629, 4
      %v632 = vsel %vm335, %v617, %v630
      %v633 = vsel %vm569, %v632, %v627
      %v634 = vsel %vm335, %v630, %v631
      %v635 = vsel %vm569, %v634, %v629
      %638 = vst [vmem:[#allocation2 + $0x160] sm:$0xff] %v633
      %639 = vst [vmem:[#allocation2 + $0x168] sm:$0xff] %v635
      %640 = vrot.lane.b32.xlu0 %v312, 78
      %v641 = vpop.permute.xlu0 %640
      %642 = vrot.lane.b32.xlu0 %v313, 78
      %v643 = vpop.permute.xlu0 %642
      %644 = vrot.lane.b32.xlu0 %v314, 78
      %v645 = vpop.permute.xlu0 %644
      %v646 = vrot.slane %v641, 4
      %v647 = vrot.slane %v643, 4
      %v648 = vrot.slane %v645, 4
      %v649 = vsel %vm335, %v646, %v647
      %v650 = vsel %vm601, %v641, %v649
      %v651 = vsel %vm335, %v647, %v648
      %v652 = vsel %vm601, %v643, %v651
      %655 = vst [vmem:[#allocation2 + $0x170] sm:$0xff] %v650
      %656 = vst [vmem:[#allocation2 + $0x178] sm:$0xff] %v652
      %657 = vrot.lane.b32.xlu0 %v307, 72
      %v658 = vpop.permute.xlu0 %657
      %659 = vrot.lane.b32.xlu0 %v308, 72
      %v660 = vpop.permute.xlu0 %659
      %661 = vrot.lane.b32.xlu0 %v309, 72
      %v662 = vpop.permute.xlu0 %661
      %v663 = vrot.slane %v658, 4
      %v664 = vrot.slane %v660, 4
      %v665 = vrot.slane %v662, 4
      %v666 = vsel %vm335, %v663, %v664
      %vm667 = vcmask 588800
      %v668 = vsel %vm667, %v658, %v666
      %v669 = vsel %vm335, %v664, %v665
      %v670 = vsel %vm667, %v660, %v669
      %673 = vst [vmem:[#allocation2 + $0x180] sm:$0xff] %v668
      %674 = vst [vmem:[#allocation2 + $0x188] sm:$0xff] %v670
      %675 = vrot.lane.b32.xlu0 %v310, 72
      %v676 = vpop.permute.xlu0 %675
      %677 = vrot.lane.b32.xlu0 %v311, 72
      %v678 = vpop.permute.xlu0 %677
      %v679 = vrot.slane %v676, 4
      %v680 = vrot.slane %v678, 4
      %v681 = vsel %vm335, %v665, %v679
      %v682 = vsel %vm667, %v681, %v676
      %v683 = vsel %vm335, %v679, %v680
      %v684 = vsel %vm667, %v683, %v678
      %687 = vst [vmem:[#allocation2 + $0x190] sm:$0xff] %v682
      %688 = vst [vmem:[#allocation2 + $0x198] sm:$0xff] %v684
      %689 = vrot.lane.b32.xlu0 %v307, 71
      %v690 = vpop.permute.xlu0 %689
      %691 = vrot.lane.b32.xlu0 %v308, 71
      %v692 = vpop.permute.xlu0 %691
      %693 = vrot.lane.b32.xlu0 %v309, 71
      %v694 = vpop.permute.xlu0 %693
      %v695 = vrot.slane %v690, 4
      %v696 = vrot.slane %v692, 4
      %v697 = vrot.slane %v694, 4
      %v698 = vsel %vm335, %v695, %v696
      %vm699 = vcmask 580608
      %v700 = vsel %vm699, %v690, %v698
      %v701 = vsel %vm335, %v696, %v697
      %v702 = vsel %vm699, %v692, %v701
      %705 = vst [vmem:[#allocation2 + $0x1a0] sm:$0xff] %v700
      %706 = vst [vmem:[#allocation2 + $0x1a8] sm:$0xff] %v702
      %v707 = vld [vmem:[%s1] sm:$0xff]
      %v708 = vld [vmem:[%s1 + $0x8] sm:$0xff]
      %v709 = vld [vmem:[#allocation2] sm:$0xff]
      %v710 = vld [vmem:[#allocation2 + $0x8] sm:$0xff]
      %v711 = vld [vmem:[#allocation2 + $0x10] sm:$0xff]
      %v712 = vld [vmem:[#allocation2 + $0x18] sm:$0xff]
      %v713 = vld [vmem:[#allocation2 + $0x20] sm:$0xff]
      %v714 = vld [vmem:[#allocation2 + $0x28] sm:$0xff]
      %v715 = vld [vmem:[#allocation2 + $0x30] sm:$0xff]
      %v716 = vld [vmem:[#allocation2 + $0x38] sm:$0xff]
      %v717 = vld [vmem:[#allocation2 + $0x40] sm:$0xff]
      %v718 = vld [vmem:[#allocation2 + $0x48] sm:$0xff]
      %v719 = vld [vmem:[#allocation2 + $0x50] sm:$0xff]
      %v720 = vld [vmem:[#allocation2 + $0x58] sm:$0xff]
      %v721 = vld [vmem:[#allocation2 + $0x60] sm:$0xff]
      %v722 = vld [vmem:[#allocation2 + $0x68] sm:$0xff]
      %v723 = vld [vmem:[#allocation2 + $0x70] sm:$0xff]
      %v724 = vld [vmem:[#allocation2 + $0x78] sm:$0xff]
      %v725 = vld [vmem:[#allocation2 + $0x80] sm:$0xff]
      %v726 = vld [vmem:[#allocation2 + $0x88] sm:$0xff]
      %v727 = vld [vmem:[#allocation2 + $0x90] sm:$0xff]
      %v728 = vld [vmem:[#allocation2 + $0x98] sm:$0xff]
      %v729 = vld [vmem:[#allocation2 + $0xa0] sm:$0xff]
      %v730 = vld [vmem:[#allocation2 + $0xa8] sm:$0xff]
      %v731 = vld [vmem:[#allocation2 + $0xb0] sm:$0xff]
      %v732 = vld [vmem:[#allocation2 + $0xb8] sm:$0xff]
      %v733 = vld [vmem:[#allocation2 + $0xc0] sm:$0xff]
      %v734 = vld [vmem:[#allocation2 + $0xc8] sm:$0xff]
      %v735 = vld [vmem:[#allocation2 + $0xd0] sm:$0xff]
      %v736 = vld [vmem:[#allocation2 + $0xd8] sm:$0xff]
      %v737 = vld [vmem:[#allocation2 + $0xe0] sm:$0xff]
      %v738 = vld [vmem:[#allocation2 + $0xe8] sm:$0xff]
      %v739 = vld [vmem:[#allocation2 + $0xf0] sm:$0xff]
      %v740 = vld [vmem:[#allocation2 + $0xf8] sm:$0xff]
      %v741 = vld [vmem:[#allocation2 + $0x100] sm:$0xff]
      %v742 = vld [vmem:[#allocation2 + $0x108] sm:$0xff]
      %v743 = vld [vmem:[#allocation2 + $0x110] sm:$0xff]
      %v744 = vld [vmem:[#allocation2 + $0x118] sm:$0xff]
      %v745 = vld [vmem:[#allocation2 + $0x120] sm:$0xff]
      %v746 = vld [vmem:[#allocation2 + $0x128] sm:$0xff]
      %v747 = vld [vmem:[#allocation2 + $0x130] sm:$0xff]
      %v748 = vld [vmem:[#allocation2 + $0x138] sm:$0xff]
      %v749 = vld [vmem:[#allocation2 + $0x140] sm:$0xff]
      %v750 = vld [vmem:[#allocation2 + $0x148] sm:$0xff]
      %v751 = vld [vmem:[#allocation2 + $0x150] sm:$0xff]
      %v752 = vld [vmem:[#allocation2 + $0x158] sm:$0xff]
      %v753 = vld [vmem:[#allocation2 + $0x160] sm:$0xff]
      %v754 = vld [vmem:[#allocation2 + $0x168] sm:$0xff]
      %v755 = vld [vmem:[#allocation2 + $0x170] sm:$0xff]
      %v756 = vld [vmem:[#allocation2 + $0x178] sm:$0xff]
      %v757 = vld [vmem:[#allocation2 + $0x180] sm:$0xff]
      %v758 = vld [vmem:[#allocation2 + $0x188] sm:$0xff]
      %v759 = vld [vmem:[#allocation2 + $0x190] sm:$0xff]
      %v760 = vld [vmem:[#allocation2 + $0x198] sm:$0xff]
      %v761 = vld [vmem:[#allocation2 + $0x1a0] sm:$0xff]
      %v762 = vld [vmem:[#allocation2 + $0x1a8] sm:$0xff]
      %v763 = vld [vmem:[%s2] sm:$0xff]
      %v764 = vld [vmem:[%s2 + $0x8] sm:$0xff]
      %766 = vset.pattern.permute.xlu0 0
      %767 = vperm.xlu0 %766, %v763
      %v768 = vpop.permute.xlu0 %767
      %771 = vset.pattern.permute.xlu0 0
      %772 = vperm.xlu0 %771, %v764
      %v773 = vpop.permute.xlu0 %772
      %v777 = vunpack.c.l.b16 %v707
      %v778 = vunpack.c.h.b16 %v707
      %v779 = vunpack.c.l.b16 %v708
      %v780 = vunpack.c.h.b16 %v708
      %v781 = vpack.c.b16 %v779, %v777
      %v782 = vpack.c.b16 %v780, %v778
      %v838 = vunpack.c.l.b16 %v709
      %v839 = vunpack.c.h.b16 %v709
      %v840 = vunpack.c.l.b16 %v710
      %v841 = vunpack.c.h.b16 %v710
      %v842 = vunpack.c.l.b16 %v711
      %v843 = vunpack.c.h.b16 %v711
      %v844 = vunpack.c.l.b16 %v712
      %v845 = vunpack.c.h.b16 %v712
      %v846 = vunpack.c.l.b16 %v713
      %v847 = vunpack.c.h.b16 %v713
      %v848 = vunpack.c.l.b16 %v714
      %v849 = vunpack.c.h.b16 %v714
      %v850 = vunpack.c.l.b16 %v715
      %v851 = vunpack.c.h.b16 %v715
      %v852 = vunpack.c.l.b16 %v716
      %v853 = vunpack.c.h.b16 %v716
      %v854 = vunpack.c.l.b16 %v717
      %v855 = vunpack.c.h.b16 %v717
      %v856 = vunpack.c.l.b16 %v718
      %v857 = vunpack.c.h.b16 %v718
      %v858 = vunpack.c.l.b16 %v719
      %v859 = vunpack.c.h.b16 %v719
      %v860 = vunpack.c.l.b16 %v720
      %v861 = vunpack.c.h.b16 %v720
      %v862 = vunpack.c.l.b16 %v721
      %v863 = vunpack.c.h.b16 %v721
      %v864 = vunpack.c.l.b16 %v722
      %v865 = vunpack.c.h.b16 %v722
      %v866 = vunpack.c.l.b16 %v723
      %v867 = vunpack.c.h.b16 %v723
      %v868 = vunpack.c.l.b16 %v724
      %v869 = vunpack.c.h.b16 %v724
      %v870 = vunpack.c.l.b16 %v725
      %v871 = vunpack.c.h.b16 %v725
      %v872 = vunpack.c.l.b16 %v726
      %v873 = vunpack.c.h.b16 %v726
      %v874 = vunpack.c.l.b16 %v727
      %v875 = vunpack.c.h.b16 %v727
      %v876 = vunpack.c.l.b16 %v728
      %v877 = vunpack.c.h.b16 %v728
      %v878 = vunpack.c.l.b16 %v729
      %v879 = vunpack.c.h.b16 %v729
      %v880 = vunpack.c.l.b16 %v730
      %v881 = vunpack.c.h.b16 %v730
      %v882 = vunpack.c.l.b16 %v731
      %v883 = vunpack.c.h.b16 %v731
      %v884 = vunpack.c.l.b16 %v732
      %v885 = vunpack.c.h.b16 %v732
      %v886 = vunpack.c.l.b16 %v733
      %v887 = vunpack.c.h.b16 %v733
      %v888 = vunpack.c.l.b16 %v734
      %v889 = vunpack.c.h.b16 %v734
      %v890 = vunpack.c.l.b16 %v735
      %v891 = vunpack.c.h.b16 %v735
      %v892 = vunpack.c.l.b16 %v736
      %v893 = vunpack.c.h.b16 %v736
      %v894 = vunpack.c.l.b16 %v737
      %v895 = vunpack.c.h.b16 %v737
      %v896 = vunpack.c.l.b16 %v738
      %v897 = vunpack.c.h.b16 %v738
      %v898 = vunpack.c.l.b16 %v739
      %v899 = vunpack.c.h.b16 %v739
      %v900 = vunpack.c.l.b16 %v740
      %v901 = vunpack.c.h.b16 %v740
      %v902 = vunpack.c.l.b16 %v741
      %v903 = vunpack.c.h.b16 %v741
      %v904 = vunpack.c.l.b16 %v742
      %v905 = vunpack.c.h.b16 %v742
      %v906 = vunpack.c.l.b16 %v743
      %v907 = vunpack.c.h.b16 %v743
      %v908 = vunpack.c.l.b16 %v744
      %v909 = vunpack.c.h.b16 %v744
      %v910 = vunpack.c.l.b16 %v745
      %v911 = vunpack.c.h.b16 %v745
      %v912 = vunpack.c.l.b16 %v746
      %v913 = vunpack.c.h.b16 %v746
      %v914 = vunpack.c.l.b16 %v747
      %v915 = vunpack.c.h.b16 %v747
      %v916 = vunpack.c.l.b16 %v748
      %v917 = vunpack.c.h.b16 %v748
      %v918 = vunpack.c.l.b16 %v749
      %v919 = vunpack.c.h.b16 %v749
      %v920 = vunpack.c.l.b16 %v750
      %v921 = vunpack.c.h.b16 %v750
      %v922 = vunpack.c.l.b16 %v751
      %v923 = vunpack.c.h.b16 %v751
      %v924 = vunpack.c.l.b16 %v752
      %v925 = vunpack.c.h.b16 %v752
      %v926 = vunpack.c.l.b16 %v753
      %v927 = vunpack.c.h.b16 %v753
      %v928 = vunpack.c.l.b16 %v754
      %v929 = vunpack.c.h.b16 %v754
      %v930 = vunpack.c.l.b16 %v755
      %v931 = vunpack.c.h.b16 %v755
      %v932 = vunpack.c.l.b16 %v756
      %v933 = vunpack.c.h.b16 %v756
      %v934 = vunpack.c.l.b16 %v757
      %v935 = vunpack.c.h.b16 %v757
      %v936 = vunpack.c.l.b16 %v758
      %v937 = vunpack.c.h.b16 %v758
      %v938 = vunpack.c.l.b16 %v759
      %v939 = vunpack.c.h.b16 %v759
      %v940 = vunpack.c.l.b16 %v760
      %v941 = vunpack.c.h.b16 %v760
      %v942 = vunpack.c.l.b16 %v761
      %v943 = vunpack.c.h.b16 %v761
      %v944 = vunpack.c.l.b16 %v762
      %v945 = vunpack.c.h.b16 %v762
      %v946 = vpack.c.b16 %v842, %v838
      %v947 = vpack.c.b16 %v843, %v839
      %v948 = vpack.c.b16 %v844, %v840
      %v949 = vpack.c.b16 %v845, %v841
      %v950 = vpack.c.b16 %v850, %v846
      %v951 = vpack.c.b16 %v851, %v847
      %v952 = vpack.c.b16 %v852, %v848
      %v953 = vpack.c.b16 %v853, %v849
      %v954 = vpack.c.b16 %v858, %v854
      %v955 = vpack.c.b16 %v859, %v855
      %v956 = vpack.c.b16 %v860, %v856
      %v957 = vpack.c.b16 %v861, %v857
      %v958 = vpack.c.b16 %v866, %v862
      %v959 = vpack.c.b16 %v867, %v863
      %v960 = vpack.c.b16 %v868, %v864
      %v961 = vpack.c.b16 %v869, %v865
      %v962 = vpack.c.b16 %v874, %v870
      %v963 = vpack.c.b16 %v875, %v871
      %v964 = vpack.c.b16 %v876, %v872
      %v965 = vpack.c.b16 %v877, %v873
      %v966 = vpack.c.b16 %v882, %v878
      %v967 = vpack.c.b16 %v883, %v879
      %v968 = vpack.c.b16 %v884, %v880
      %v969 = vpack.c.b16 %v885, %v881
      %v970 = vpack.c.b16 %v890, %v886
      %v971 = vpack.c.b16 %v891, %v887
      %v972 = vpack.c.b16 %v892, %v888
      %v973 = vpack.c.b16 %v893, %v889
      %v974 = vpack.c.b16 %v898, %v894
      %v975 = vpack.c.b16 %v899, %v895
      %v976 = vpack.c.b16 %v900, %v896
      %v977 = vpack.c.b16 %v901, %v897
      %v978 = vpack.c.b16 %v906, %v902
      %v979 = vpack.c.b16 %v907, %v903
      %v980 = vpack.c.b16 %v908, %v904
      %v981 = vpack.c.b16 %v909, %v905
      %v982 = vpack.c.b16 %v914, %v910
      %v983 = vpack.c.b16 %v915, %v911
      %v984 = vpack.c.b16 %v916, %v912
      %v985 = vpack.c.b16 %v917, %v913
      %v986 = vpack.c.b16 %v922, %v918
      %v987 = vpack.c.b16 %v923, %v919
      %v988 = vpack.c.b16 %v924, %v920
      %v989 = vpack.c.b16 %v925, %v921
      %v990 = vpack.c.b16 %v930, %v926
      %v991 = vpack.c.b16 %v931, %v927
      %v992 = vpack.c.b16 %v932, %v928
      %v993 = vpack.c.b16 %v933, %v929
      %v994 = vpack.c.b16 %v938, %v934
      %v995 = vpack.c.b16 %v939, %v935
      %v996 = vpack.c.b16 %v940, %v936
      %v997 = vpack.c.b16 %v941, %v937
      %v998 = vpack.c.b16 %v942, %v942
      %v999 = vpack.c.b16 %v943, %v943
      %v1000 = vpack.c.b16 %v944, %v944
      %v1001 = vpack.c.b16 %v945, %v945
      %vm1054 = vcmask 719872
      %v1056 = vsel %vm1054, %v782, 0
      %vm1058 = vcmask 1043456
      %v1060 = vsel %vm1058, %v998, 0
      %v1063 = vsel %vm1058, %v999, 0
      %v1066 = vsel %vm1058, %v1000, 0
      %v1069 = vsel %vm1058, %v1001, 0
      %1071 = vmatprep.subr.bf16.mxu0 %v975
      %1072 = vmatpush1.bf16.msra.mxu0 %v974
      %1073 = vmatprep.subr.bf16.mxu0 %v971
      %1074 = vmatpush1.bf16.msra.mxu0 %v970
      %1075 = vmatprep.subr.bf16.mxu0 %v967
      %1076 = vmatpush1.bf16.msra.mxu0 %v966
      %1077 = vmatprep.subr.bf16.mxu0 %v963
      %1078 = vmatpush1.bf16.msra.mxu0 %v962
      %1079 = vmatprep.subr.bf16.mxu0 %v959
      %1080 = vmatpush1.bf16.msra.mxu0 %v958
      %1081 = vmatprep.subr.bf16.mxu0 %v955
      %1082 = vmatpush1.bf16.msra.mxu0 %v954
      %1083 = vmatprep.subr.bf16.mxu0 %v951
      %1084 = vmatpush1.bf16.msra.mxu0 %v950
      %1085 = vmatprep.subr.bf16.mxu0 %v947
      %1086 = vmatpush1.bf16.msra.mxu0 %v946
      %1087 = vmatprep.subr.bf16.mxu0 0
      %1088 = vmatpush2.bf16.msra.mxu0 0
      %1089 = vmatprep.subr.bf16.mxu0 0
      %1090 = vmatpush2.bf16.msra.mxu0 0
      %1091 = vmatprep.subr.bf16.mxu0 %v1063
      %1092 = vmatpush2.bf16.msra.mxu0 %v1060
      %1093 = vmatprep.subr.bf16.mxu0 %v995
      %1094 = vmatpush2.bf16.msra.mxu0 %v994
      %1095 = vmatprep.subr.bf16.mxu0 %v991
      %1096 = vmatpush2.bf16.msra.mxu0 %v990
      %1097 = vmatprep.subr.bf16.mxu0 %v987
      %1098 = vmatpush2.bf16.msra.mxu0 %v986
      %1099 = vmatprep.subr.bf16.mxu0 %v983
      %1100 = vmatpush2.bf16.msra.mxu0 %v982
      %1101 = vmatprep.subr.bf16.mxu0 %v979
      %1102 = vmatpush2.bf16.msra.mxu0 %v978
      %1103 = vmatprep.mubr.bf16.mxu0 %v1056
      %1104 = vmatmul.mubr.bf16.gmra.mxu0 %v781
      %v1105 = vpop.f32.mrf.mxu0
      %v1106 = vadd.f32 %v768, %v1105
      %v1107 = vpop.f32.mrf.mxu0
      %v1108 = vadd.f32 %v768, %v1107
      %v1109 = vpop.f32.mrf.mxu0
      %v1110 = vadd.f32 %v773, %v1109
      %v1111 = vpop.f32.mrf.mxu0
      %v1112 = vadd.f32 %v773, %v1111
      %1113 = vdwg.mxu0
      %1114 = vmatprep.subr.bf16.mxu0 %v977
      %1115 = vmatpush1.bf16.msra.mxu0 %v976
      %1116 = vmatprep.subr.bf16.mxu0 %v973
      %1117 = vmatpush1.bf16.msra.mxu0 %v972
      %1118 = vmatprep.subr.bf16.mxu0 %v969
      %1119 = vmatpush1.bf16.msra.mxu0 %v968
      %1120 = vmatprep.subr.bf16.mxu0 %v965
      %1121 = vmatpush1.bf16.msra.mxu0 %v964
      %1122 = vmatprep.subr.bf16.mxu0 %v961
      %1123 = vmatpush1.bf16.msra.mxu0 %v960
      %1124 = vmatprep.subr.bf16.mxu0 %v957
      %1125 = vmatpush1.bf16.msra.mxu0 %v956
      %1126 = vmatprep.subr.bf16.mxu0 %v953
      %1127 = vmatpush1.bf16.msra.mxu0 %v952
      %1128 = vmatprep.subr.bf16.mxu0 %v949
      %1129 = vmatpush1.bf16.msra.mxu0 %v948
      %1130 = vmatprep.subr.bf16.mxu0 0
      %1131 = vmatpush2.bf16.msra.mxu0 0
      %1132 = vmatprep.subr.bf16.mxu0 0
      %1133 = vmatpush2.bf16.msra.mxu0 0
      %1134 = vmatprep.subr.bf16.mxu0 %v1069
      %1135 = vmatpush2.bf16.msra.mxu0 %v1066
      %1136 = vmatprep.subr.bf16.mxu0 %v997
      %1137 = vmatpush2.bf16.msra.mxu0 %v996
      %1138 = vmatprep.subr.bf16.mxu0 %v993
      %1139 = vmatpush2.bf16.msra.mxu0 %v992
      %1140 = vmatprep.subr.bf16.mxu0 %v989
      %1141 = vmatpush2.bf16.msra.mxu0 %v988
      %1142 = vmatprep.subr.bf16.mxu0 %v985
      %1143 = vmatpush2.bf16.msra.mxu0 %v984
      %1144 = vmatprep.subr.bf16.mxu0 %v981
      %1145 = vmatpush2.bf16.msra.mxu0 %v980
      %1146 = vmatprep.mubr.bf16.mxu0 %v1056
      %1147 = vmatmul.mubr.bf16.gmra.mxu0 %v781
      %v1148 = vpop.f32.mrf.mxu0
      %v1149 = vadd.f32 %v768, %v1148
      %v1150 = vpop.f32.mrf.mxu0
      %v1151 = vadd.f32 %v768, %v1150
      %v1152 = vpop.f32.mrf.mxu0
      %v1153 = vadd.f32 %v773, %v1152
      %v1154 = vpop.f32.mrf.mxu0
      %v1155 = vadd.f32 %v773, %v1154
      %1156 = vdwg.mxu0
      %v1157 = vmax.f32 %v1106, 0.0
      %v1158 = vmax.f32 %v1108, 0.0
      %v1159 = vmax.f32 %v1149, 0.0
      %v1160 = vmax.f32 %v1151, 0.0
      %v1161 = vmax.f32 %v1110, 0.0
      %v1162 = vmax.f32 %v1112, 0.0
      %v1163 = vmax.f32 %v1153, 0.0
      %v1164 = vmax.f32 %v1155, 0.0
      %v1165 = vld [vmem:[%s5] sm:$0xf]
      %v1167 = vlaneseq
      %v1168 = vshrl.u32 %v1167, 7
      %v1169 = vsub.s32 0, %v1168
      %v1170 = vrot.slane %v1165, %v1169
      %v1171 = vlaneseq
      %v1172 = vshrl.u32 %v1171, 7
      %v1173 = vsub.s32 1, %v1172
      %v1174 = vrot.slane %v1165, %v1173
      %v1175 = vlaneseq
      %v1176 = vshrl.u32 %v1175, 7
      %v1177 = vsub.s32 2, %v1176
      %v1178 = vrot.slane %v1165, %v1177
      %v1179 = vlaneseq
      %v1180 = vshrl.u32 %v1179, 7
      %v1181 = vsub.s32 3, %v1180
      %v1182 = vrot.slane %v1165, %v1181
      %v1187 = vmul.f32 %v1157, %v1170
      %v1188 = vmul.f32 %v1158, %v1174
      %v1189 = vmul.f32 %v1159, %v1178
      %v1190 = vmul.f32 %v1160, %v1182
      %v1191 = vmul.f32 %v1161, %v1170
      %v1192 = vmul.f32 %v1162, %v1174
      %v1193 = vmul.f32 %v1163, %v1178
      %v1194 = vmul.f32 %v1164, %v1182
      %v1195 = vpack.c.bf16 %v1191, %v1187
      %v1196 = vpack.c.bf16 %v1192, %v1188
      %v1197 = vpack.c.bf16 %v1193, %v1189
      %v1198 = vpack.c.bf16 %v1194, %v1190
      %v1202 = vunpack.c.l.b16 %v1195
      %v1203 = vunpack.c.l.b16 %v1196
      %v1204 = vunpack.c.l.b16 %v1197
      %v1205 = vunpack.c.h.b16 %v1195
      %v1206 = vunpack.c.h.b16 %v1196
      %v1207 = vunpack.c.h.b16 %v1197
      %v1208 = vpack.c.b16 %v1203, %v1202
      %v1209 = vpack.c.b16 %v1204, %v1204
      %v1210 = vpack.c.b16 %v1206, %v1205
      %v1211 = vpack.c.b16 %v1207, %v1207
      %1216 = vst [vmem:[#allocation2] sm:$0xff] %v1208
      %1217 = vst [vmem:[#allocation2 + $0x8] sm:$0xf] %v1209
      %1218 = vst [vmem:[#allocation2 + $0x10] sm:$0xff] %v1210
      %1219 = vst [vmem:[#allocation2 + $0x18] sm:$0xf] %v1211
      %v1221 = vunpack.c.l.b16 %v1198
      %v1222 = vunpack.c.h.b16 %v1198
      %v1223 = vpack.c.b16 %v1221, %v1204
      %v1224 = vpack.c.b16 %v1222, %v1207
      %1225 = vrot.lane.b32.xlu0 %v1208, 127
      %v1226 = vpop.permute.xlu0 %1225
      %1227 = vrot.lane.b32.xlu0 %v1223, 127
      %v1228 = vpop.permute.xlu0 %1227
      %1229 = vrot.lane.b32.xlu0 %v1210, 127
      %v1230 = vpop.permute.xlu0 %1229
      %1231 = vrot.lane.b32.xlu0 %v1224, 127
      %v1232 = vpop.permute.xlu0 %1231
      %v1233 = vrot.slane %v1226, 4
      %v1234 = vrot.slane %v1228, 4
      %v1235 = vrot.slane %v1230, 4
      %v1236 = vrot.slane %v1232, 4
      %v1237 = vsel %vm335, %v1233, %v1234
      %v1238 = vsel %vm354, %v1226, %v1237
      %v1239 = vsel %vm354, %v1228, %v1234
      %v1240 = vsel %vm335, %v1235, %v1236
      %v1241 = vsel %vm354, %v1230, %v1240
      %v1242 = vsel %vm354, %v1232, %v1236
      %1247 = vst [vmem:[#allocation2 + $0x20] sm:$0xff] %v1238
      %1248 = vst [vmem:[#allocation2 + $0x28] sm:$0xf] %v1239
      %1249 = vst [vmem:[#allocation2 + $0x30] sm:$0xff] %v1241
      %1250 = vst [vmem:[#allocation2 + $0x38] sm:$0xf] %v1242
      %1251 = vrot.lane.b32.xlu0 %v1208, 126
      %v1252 = vpop.permute.xlu0 %1251
      %1253 = vrot.lane.b32.xlu0 %v1223, 126
      %v1254 = vpop.permute.xlu0 %1253
      %1255 = vrot.lane.b32.xlu0 %v1210, 126
      %v1256 = vpop.permute.xlu0 %1255
      %1257 = vrot.lane.b32.xlu0 %v1224, 126
      %v1258 = vpop.permute.xlu0 %1257
      %v1259 = vrot.slane %v1252, 4
      %v1260 = vrot.slane %v1254, 4
      %v1261 = vrot.slane %v1256, 4
      %v1262 = vrot.slane %v1258, 4
      %v1263 = vsel %vm335, %v1259, %v1260
      %vm1264 = vcmask 1031168
      %v1265 = vsel %vm1264, %v1252, %v1263
      %v1266 = vsel %vm1264, %v1254, %v1260
      %v1267 = vsel %vm335, %v1261, %v1262
      %v1268 = vsel %vm1264, %v1256, %v1267
      %v1269 = vsel %vm1264, %v1258, %v1262
      %1274 = vst [vmem:[#allocation2 + $0x40] sm:$0xff] %v1265
      %1275 = vst [vmem:[#allocation2 + $0x48] sm:$0xf] %v1266
      %1276 = vst [vmem:[#allocation2 + $0x50] sm:$0xff] %v1268
      %1277 = vst [vmem:[#allocation2 + $0x58] sm:$0xf] %v1269
      %1278 = vrot.lane.b32.xlu0 %v1208, 121
      %v1279 = vpop.permute.xlu0 %1278
      %1280 = vrot.lane.b32.xlu0 %v1223, 121
      %v1281 = vpop.permute.xlu0 %1280
      %1282 = vrot.lane.b32.xlu0 %v1210, 121
      %v1283 = vpop.permute.xlu0 %1282
      %1284 = vrot.lane.b32.xlu0 %v1224, 121
      %v1285 = vpop.permute.xlu0 %1284
      %v1286 = vrot.slane %v1279, 4
      %v1287 = vrot.slane %v1281, 4
      %v1288 = vrot.slane %v1283, 4
      %v1289 = vrot.slane %v1285, 4
      %v1290 = vsel %vm335, %v1286, %v1287
      %v1291 = vsel %vm405, %v1279, %v1290
      %v1292 = vsel %vm405, %v1281, %v1287
      %v1293 = vsel %vm335, %v1288, %v1289
      %v1294 = vsel %vm405, %v1283, %v1293
      %v1295 = vsel %vm405, %v1285, %v1289
      %1300 = vst [vmem:[#allocation2 + $0x60] sm:$0xff] %v1291
      %1301 = vst [vmem:[#allocation2 + $0x68] sm:$0xf] %v1292
      %1302 = vst [vmem:[#allocation2 + $0x70] sm:$0xff] %v1294
      %1303 = vst [vmem:[#allocation2 + $0x78] sm:$0xf] %v1295
      %1304 = vrot.lane.b32.xlu0 %v1208, 120
      %v1305 = vpop.permute.xlu0 %1304
      %1306 = vrot.lane.b32.xlu0 %v1223, 120
      %v1307 = vpop.permute.xlu0 %1306
      %1308 = vrot.lane.b32.xlu0 %v1210, 120
      %v1309 = vpop.permute.xlu0 %1308
      %1310 = vrot.lane.b32.xlu0 %v1224, 120
      %v1311 = vpop.permute.xlu0 %1310
      %v1312 = vrot.slane %v1305, 4
      %v1313 = vrot.slane %v1307, 4
      %v1314 = vrot.slane %v1309, 4
      %v1315 = vrot.slane %v1311, 4
      %v1316 = vsel %vm335, %v1312, %v1313
      %v1317 = vsel %vm437, %v1305, %v1316
      %v1318 = vsel %vm437, %v1307, %v1313
      %v1319 = vsel %vm335, %v1314, %v1315
      %v1320 = vsel %vm437, %v1309, %v1319
      %v1321 = vsel %vm437, %v1311, %v1315
      %1326 = vst [vmem:[#allocation2 + $0x80] sm:$0xff] %v1317
      %1327 = vst [vmem:[#allocation2 + $0x88] sm:$0xf] %v1318
      %1328 = vst [vmem:[#allocation2 + $0x90] sm:$0xff] %v1320
      %1329 = vst [vmem:[#allocation2 + $0x98] sm:$0xf] %v1321
      %1330 = vrot.lane.b32.xlu0 %v1208, 119
      %v1331 = vpop.permute.xlu0 %1330
      %1332 = vrot.lane.b32.xlu0 %v1223, 119
      %v1333 = vpop.permute.xlu0 %1332
      %1334 = vrot.lane.b32.xlu0 %v1210, 119
      %v1335 = vpop.permute.xlu0 %1334
      %1336 = vrot.lane.b32.xlu0 %v1224, 119
      %v1337 = vpop.permute.xlu0 %1336
      %v1338 = vrot.slane %v1331, 4
      %v1339 = vrot.slane %v1333, 4
      %v1340 = vrot.slane %v1335, 4
      %v1341 = vrot.slane %v1337, 4
      %v1342 = vsel %vm335, %v1338, %v1339
      %vm1343 = vcmask 973824
      %v1344 = vsel %vm1343, %v1331, %v1342
      %v1345 = vsel %vm1343, %v1333, %v1339
      %v1346 = vsel %vm335, %v1340, %v1341
      %v1347 = vsel %vm1343, %v1335, %v1346
      %v1348 = vsel %vm1343, %v1337, %v1341
      %1353 = vst [vmem:[#allocation2 + $0xa0] sm:$0xff] %v1344
      %1354 = vst [vmem:[#allocation2 + $0xa8] sm:$0xf] %v1345
      %1355 = vst [vmem:[#allocation2 + $0xb0] sm:$0xff] %v1347
      %1356 = vst [vmem:[#allocation2 + $0xb8] sm:$0xf] %v1348
      %1357 = vrot.lane.b32.xlu0 %v1208, 114
      %v1358 = vpop.permute.xlu0 %1357
      %1359 = vrot.lane.b32.xlu0 %v1223, 114
      %v1360 = vpop.permute.xlu0 %1359
      %1361 = vrot.lane.b32.xlu0 %v1210, 114
      %v1362 = vpop.permute.xlu0 %1361
      %1363 = vrot.lane.b32.xlu0 %v1224, 114
      %v1364 = vpop.permute.xlu0 %1363
      %v1365 = vrot.slane %v1358, 4
      %v1366 = vrot.slane %v1360, 4
      %v1367 = vrot.slane %v1362, 4
      %v1368 = vrot.slane %v1364, 4
      %v1369 = vsel %vm335, %v1365, %v1366
      %vm1370 = vcmask 932864
      %v1371 = vsel %vm1370, %v1358, %v1369
      %v1372 = vsel %vm1370, %v1360, %v1366
      %v1373 = vsel %vm335, %v1367, %v1368
      %v1374 = vsel %vm1370, %v1362, %v1373
      %v1375 = vsel %vm1370, %v1364, %v1368
      %1380 = vst [vmem:[#allocation2 + $0xc0] sm:$0xff] %v1371
      %1381 = vst [vmem:[#allocation2 + $0xc8] sm:$0xf] %v1372
      %1382 = vst [vmem:[#allocation2 + $0xd0] sm:$0xff] %v1374
      %1383 = vst [vmem:[#allocation2 + $0xd8] sm:$0xf] %v1375
      %1384 = vrot.lane.b32.xlu0 %v1208, 113
      %v1385 = vpop.permute.xlu0 %1384
      %1386 = vrot.lane.b32.xlu0 %v1223, 113
      %v1387 = vpop.permute.xlu0 %1386
      %1388 = vrot.lane.b32.xlu0 %v1210, 113
      %v1389 = vpop.permute.xlu0 %1388
      %1390 = vrot.lane.b32.xlu0 %v1224, 113
      %v1391 = vpop.permute.xlu0 %1390
      %v1392 = vrot.slane %v1385, 4
      %v1393 = vrot.slane %v1387, 4
      %v1394 = vrot.slane %v1389, 4
      %v1395 = vrot.slane %v1391, 4
      %v1396 = vsel %vm335, %v1392, %v1393
      %vm1397 = vcmask 924672
      %v1398 = vsel %vm1397, %v1385, %v1396
      %v1399 = vsel %vm1397, %v1387, %v1393
      %v1400 = vsel %vm335, %v1394, %v1395
      %v1401 = vsel %vm1397, %v1389, %v1400
      %v1402 = vsel %vm1397, %v1391, %v1395
      %1407 = vst [vmem:[#allocation2 + $0xe0] sm:$0xff] %v1398
      %1408 = vst [vmem:[#allocation2 + $0xe8] sm:$0xf] %v1399
      %1409 = vst [vmem:[#allocation2 + $0xf0] sm:$0xff] %v1401
      %1410 = vst [vmem:[#allocation2 + $0xf8] sm:$0xf] %v1402
      %1411 = vrot.lane.b32.xlu0 %v1208, 112
      %v1412 = vpop.permute.xlu0 %1411
      %1413 = vrot.lane.b32.xlu0 %v1223, 112
      %v1414 = vpop.permute.xlu0 %1413
      %1415 = vrot.lane.b32.xlu0 %v1210, 112
      %v1416 = vpop.permute.xlu0 %1415
      %1417 = vrot.lane.b32.xlu0 %v1224, 112
      %v1418 = vpop.permute.xlu0 %1417
      %v1419 = vrot.slane %v1412, 4
      %v1420 = vrot.slane %v1414, 4
      %v1421 = vrot.slane %v1416, 4
      %v1422 = vrot.slane %v1418, 4
      %v1423 = vsel %vm335, %v1419, %v1420
      %vm1424 = vcmask 916480
      %v1425 = vsel %vm1424, %v1412, %v1423
      %v1426 = vsel %vm1424, %v1414, %v1420
      %v1427 = vsel %vm335, %v1421, %v1422
      %v1428 = vsel %vm1424, %v1416, %v1427
      %v1429 = vsel %vm1424, %v1418, %v1422
      %1434 = vst [vmem:[#allocation2 + $0x100] sm:$0xff] %v1425
      %1435 = vst [vmem:[#allocation2 + $0x108] sm:$0xf] %v1426
      %1436 = vst [vmem:[#allocation2 + $0x110] sm:$0xff] %v1428
      %1437 = vst [vmem:[#allocation2 + $0x118] sm:$0xf] %v1429
      %1438 = vrot.lane.b32.xlu0 %v1208, 79
      %v1439 = vpop.permute.xlu0 %1438
      %1440 = vrot.lane.b32.xlu0 %v1223, 79
      %v1441 = vpop.permute.xlu0 %1440
      %1442 = vrot.lane.b32.xlu0 %v1210, 79
      %v1443 = vpop.permute.xlu0 %1442
      %1444 = vrot.lane.b32.xlu0 %v1224, 79
      %v1445 = vpop.permute.xlu0 %1444
      %v1446 = vrot.slane %v1439, 4
      %v1447 = vrot.slane %v1441, 4
      %v1448 = vrot.slane %v1443, 4
      %v1449 = vrot.slane %v1445, 4
      %v1450 = vsel %vm335, %v1446, %v1447
      %v1451 = vsel %vm569, %v1439, %v1450
      %v1452 = vsel %vm569, %v1441, %v1447
      %v1453 = vsel %vm335, %v1448, %v1449
      %v1454 = vsel %vm569, %v1443, %v1453
      %v1455 = vsel %vm569, %v1445, %v1449
      %1460 = vst [vmem:[#allocation2 + $0x120] sm:$0xff] %v1451
      %1461 = vst [vmem:[#allocation2 + $0x128] sm:$0xf] %v1452
      %1462 = vst [vmem:[#allocation2 + $0x130] sm:$0xff] %v1454
      %1463 = vst [vmem:[#allocation2 + $0x138] sm:$0xf] %v1455
      %1464 = vrot.lane.b32.xlu0 %v1208, 78
      %v1465 = vpop.permute.xlu0 %1464
      %1466 = vrot.lane.b32.xlu0 %v1223, 78
      %v1467 = vpop.permute.xlu0 %1466
      %1468 = vrot.lane.b32.xlu0 %v1210, 78
      %v1469 = vpop.permute.xlu0 %1468
      %1470 = vrot.lane.b32.xlu0 %v1224, 78
      %v1471 = vpop.permute.xlu0 %1470
      %v1472 = vrot.slane %v1465, 4
      %v1473 = vrot.slane %v1467, 4
      %v1474 = vrot.slane %v1469, 4
      %v1475 = vrot.slane %v1471, 4
      %v1476 = vsel %vm335, %v1472, %v1473
      %v1477 = vsel %vm601, %v1465, %v1476
      %v1478 = vsel %vm601, %v1467, %v1473
      %v1479 = vsel %vm335, %v1474, %v1475
      %v1480 = vsel %vm601, %v1469, %v1479
      %v1481 = vsel %vm601, %v1471, %v1475
      %1486 = vst [vmem:[#allocation2 + $0x140] sm:$0xff] %v1477
      %1487 = vst [vmem:[#allocation2 + $0x148] sm:$0xf] %v1478
      %1488 = vst [vmem:[#allocation2 + $0x150] sm:$0xff] %v1480
      %1489 = vst [vmem:[#allocation2 + $0x158] sm:$0xf] %v1481
      %1490 = vrot.lane.b32.xlu0 %v1208, 77
      %v1491 = vpop.permute.xlu0 %1490
      %1492 = vrot.lane.b32.xlu0 %v1223, 77
      %v1493 = vpop.permute.xlu0 %1492
      %1494 = vrot.lane.b32.xlu0 %v1210, 77
      %v1495 = vpop.permute.xlu0 %1494
      %1496 = vrot.lane.b32.xlu0 %v1224, 77
      %v1497 = vpop.permute.xlu0 %1496
      %v1498 = vrot.slane %v1491, 4
      %v1499 = vrot.slane %v1493, 4
      %v1500 = vrot.slane %v1495, 4
      %v1501 = vrot.slane %v1497, 4
      %v1502 = vsel %vm335, %v1498, %v1499
      %vm1503 = vcmask 629760
      %v1504 = vsel %vm1503, %v1491, %v1502
      %v1505 = vsel %vm1503, %v1493, %v1499
      %v1506 = vsel %vm335, %v1500, %v1501
      %v1507 = vsel %vm1503, %v1495, %v1506
      %v1508 = vsel %vm1503, %v1497, %v1501
      %1513 = vst [vmem:[#allocation2 + $0x160] sm:$0xff] %v1504
      %1514 = vst [vmem:[#allocation2 + $0x168] sm:$0xf] %v1505
      %1515 = vst [vmem:[#allocation2 + $0x170] sm:$0xff] %v1507
      %1516 = vst [vmem:[#allocation2 + $0x178] sm:$0xf] %v1508
      %1517 = vrot.lane.b32.xlu0 %v1208, 72
      %v1518 = vpop.permute.xlu0 %1517
      %1519 = vrot.lane.b32.xlu0 %v1223, 72
      %v1520 = vpop.permute.xlu0 %1519
      %1521 = vrot.lane.b32.xlu0 %v1210, 72
      %v1522 = vpop.permute.xlu0 %1521
      %1523 = vrot.lane.b32.xlu0 %v1224, 72
      %v1524 = vpop.permute.xlu0 %1523
      %v1525 = vrot.slane %v1518, 4
      %v1526 = vrot.slane %v1520, 4
      %v1527 = vrot.slane %v1522, 4
      %v1528 = vrot.slane %v1524, 4
      %v1529 = vsel %vm335, %v1525, %v1526
      %v1530 = vsel %vm667, %v1518, %v1529
      %v1531 = vsel %vm667, %v1520, %v1526
      %v1532 = vsel %vm335, %v1527, %v1528
      %v1533 = vsel %vm667, %v1522, %v1532
      %v1534 = vsel %vm667, %v1524, %v1528
      %1539 = vst [vmem:[#allocation2 + $0x180] sm:$0xff] %v1530
      %1540 = vst [vmem:[#allocation2 + $0x188] sm:$0xf] %v1531
      %1541 = vst [vmem:[#allocation2 + $0x190] sm:$0xff] %v1533
      %1542 = vst [vmem:[#allocation2 + $0x198] sm:$0xf] %v1534
      %1543 = vrot.lane.b32.xlu0 %v1208, 71
      %v1544 = vpop.permute.xlu0 %1543
      %1545 = vrot.lane.b32.xlu0 %v1223, 71
      %v1546 = vpop.permute.xlu0 %1545
      %1547 = vrot.lane.b32.xlu0 %v1210, 71
      %v1548 = vpop.permute.xlu0 %1547
      %1549 = vrot.lane.b32.xlu0 %v1224, 71
      %v1550 = vpop.permute.xlu0 %1549
      %v1551 = vrot.slane %v1544, 4
      %v1552 = vrot.slane %v1546, 4
      %v1553 = vrot.slane %v1548, 4
      %v1554 = vrot.slane %v1550, 4
      %v1555 = vsel %vm335, %v1551, %v1552
      %v1556 = vsel %vm699, %v1544, %v1555
      %v1557 = vsel %vm699, %v1546, %v1552
      %v1558 = vsel %vm335, %v1553, %v1554
      %v1559 = vsel %vm699, %v1548, %v1558
      %v1560 = vsel %vm699, %v1550, %v1554
      %1565 = vst [vmem:[#allocation2 + $0x1a0] sm:$0xff] %v1556
      %1566 = vst [vmem:[#allocation2 + $0x1a8] sm:$0xf] %v1557
      %1567 = vst [vmem:[#allocation2 + $0x1b0] sm:$0xff] %v1559
      %1568 = vst [vmem:[#allocation2 + $0x1b8] sm:$0xf] %v1560
      %1569 = vrot.lane.b32.xlu0 %v1208, 70
      %v1570 = vpop.permute.xlu0 %1569
      %1571 = vrot.lane.b32.xlu0 %v1223, 70
      %v1572 = vpop.permute.xlu0 %1571
      %1573 = vrot.lane.b32.xlu0 %v1210, 70
      %v1574 = vpop.permute.xlu0 %1573
      %1575 = vrot.lane.b32.xlu0 %v1224, 70
      %v1576 = vpop.permute.xlu0 %1575
      %v1577 = vrot.slane %v1570, 4
      %v1578 = vrot.slane %v1572, 4
      %v1579 = vrot.slane %v1574, 4
      %v1580 = vrot.slane %v1576, 4
      %v1581 = vsel %vm335, %v1577, %v1578
      %vm1582 = vcmask 572416
      %v1583 = vsel %vm1582, %v1570, %v1581
      %v1584 = vsel %vm1582, %v1572, %v1578
      %v1585 = vsel %vm335, %v1579, %v1580
      %v1586 = vsel %vm1582, %v1574, %v1585
      %v1587 = vsel %vm1582, %v1576, %v1580
      %1592 = vst [vmem:[#allocation2 + $0x1c0] sm:$0xff] %v1583
      %1593 = vst [vmem:[#allocation2 + $0x1c8] sm:$0xf] %v1584
      %1594 = vst [vmem:[#allocation2 + $0x1d0] sm:$0xff] %v1586
      %1595 = vst [vmem:[#allocation2 + $0x1d8] sm:$0xf] %v1587
      %1596 = vrot.lane.b32.xlu0 %v1208, 65
      %v1597 = vpop.permute.xlu0 %1596
      %1598 = vrot.lane.b32.xlu0 %v1223, 65
      %v1599 = vpop.permute.xlu0 %1598
      %1600 = vrot.lane.b32.xlu0 %v1210, 65
      %v1601 = vpop.permute.xlu0 %1600
      %1602 = vrot.lane.b32.xlu0 %v1224, 65
      %v1603 = vpop.permute.xlu0 %1602
      %v1604 = vrot.slane %v1597, 4
      %v1605 = vrot.slane %v1599, 4
      %v1606 = vrot.slane %v1601, 4
      %v1607 = vrot.slane %v1603, 4
      %v1608 = vsel %vm335, %v1604, %v1605
      %vm1609 = vcmask 531456
      %v1610 = vsel %vm1609, %v1597, %v1608
      %v1611 = vsel %vm1609, %v1599, %v1605
      %v1612 = vsel %vm335, %v1606, %v1607
      %v1613 = vsel %vm1609, %v1601, %v1612
      %v1614 = vsel %vm1609, %v1603, %v1607
      %1619 = vst [vmem:[#allocation2 + $0x1e0] sm:$0xff] %v1610
      %1620 = vst [vmem:[#allocation2 + $0x1e8] sm:$0xf] %v1611
      %1621 = vst [vmem:[#allocation2 + $0x1f0] sm:$0xff] %v1613
      %1622 = vst [vmem:[#allocation2 + $0x1f8] sm:$0xf] %v1614
      %1623 = vrot.lane.b32.xlu0 %v1208, 64
      %v1624 = vpop.permute.xlu0 %1623
      %1625 = vrot.lane.b32.xlu0 %v1223, 64
      %v1626 = vpop.permute.xlu0 %1625
      %1627 = vrot.lane.b32.xlu0 %v1210, 64
      %v1628 = vpop.permute.xlu0 %1627
      %1629 = vrot.lane.b32.xlu0 %v1224, 64
      %v1630 = vpop.permute.xlu0 %1629
      %v1631 = vrot.slane %v1624, 4
      %v1632 = vrot.slane %v1626, 4
      %v1633 = vrot.slane %v1628, 4
      %v1634 = vrot.slane %v1630, 4
      %v1635 = vsel %vm335, %v1631, %v1632
      %vm1636 = vcmask 523264
      %v1637 = vsel %vm1636, %v1624, %v1635
      %v1638 = vsel %vm1636, %v1626, %v1632
      %v1639 = vsel %vm335, %v1633, %v1634
      %v1640 = vsel %vm1636, %v1628, %v1639
      %v1641 = vsel %vm1636, %v1630, %v1634
      %1646 = vst [vmem:[#allocation2 + $0x200] sm:$0xff] %v1637
      %1647 = vst [vmem:[#allocation2 + $0x208] sm:$0xf] %v1638
      %1648 = vst [vmem:[#allocation2 + $0x210] sm:$0xff] %v1640
      %1649 = vst [vmem:[#allocation2 + $0x218] sm:$0xf] %v1641
      %1650 = vrot.lane.b32.xlu0 %v1208, 63
      %v1651 = vpop.permute.xlu0 %1650
      %1652 = vrot.lane.b32.xlu0 %v1223, 63
      %v1653 = vpop.permute.xlu0 %1652
      %1654 = vrot.lane.b32.xlu0 %v1210, 63
      %v1655 = vpop.permute.xlu0 %1654
      %1656 = vrot.lane.b32.xlu0 %v1224, 63
      %v1657 = vpop.permute.xlu0 %1656
      %v1658 = vrot.slane %v1651, 4
      %v1659 = vrot.slane %v1653, 4
      %v1660 = vrot.slane %v1655, 4
      %v1661 = vrot.slane %v1657, 4
      %v1662 = vsel %vm335, %v1658, %v1659
      %vm1663 = vcmask 515072
      %v1664 = vsel %vm1663, %v1651, %v1662
      %v1665 = vsel %vm1663, %v1653, %v1659
      %v1666 = vsel %vm335, %v1660, %v1661
      %v1667 = vsel %vm1663, %v1655, %v1666
      %v1668 = vsel %vm1663, %v1657, %v1661
      %1673 = vst [vmem:[#allocation2 + $0x220] sm:$0xff] %v1664
      %1674 = vst [vmem:[#allocation2 + $0x228] sm:$0xf] %v1665
      %1675 = vst [vmem:[#allocation2 + $0x230] sm:$0xff] %v1667
      %1676 = vst [vmem:[#allocation2 + $0x238] sm:$0xf] %v1668
      %1677 = vrot.lane.b32.xlu0 %v1208, 30
      %v1678 = vpop.permute.xlu0 %1677
      %1679 = vrot.lane.b32.xlu0 %v1223, 30
      %v1680 = vpop.permute.xlu0 %1679
      %1681 = vrot.lane.b32.xlu0 %v1210, 30
      %v1682 = vpop.permute.xlu0 %1681
      %1683 = vrot.lane.b32.xlu0 %v1224, 30
      %v1684 = vpop.permute.xlu0 %1683
      %v1685 = vrot.slane %v1678, 4
      %v1686 = vrot.slane %v1680, 4
      %v1687 = vrot.slane %v1682, 4
      %v1688 = vrot.slane %v1684, 4
      %v1689 = vsel %vm335, %v1685, %v1686
      %vm1690 = vcmask 244736
      %v1691 = vsel %vm1690, %v1678, %v1689
      %v1692 = vsel %vm1690, %v1680, %v1686
      %v1693 = vsel %vm335, %v1687, %v1688
      %v1694 = vsel %vm1690, %v1682, %v1693
      %v1695 = vsel %vm1690, %v1684, %v1688
      %1700 = vst [vmem:[#allocation2 + $0x240] sm:$0xff] %v1691
      %1701 = vst [vmem:[#allocation2 + $0x248] sm:$0xf] %v1692
      %1702 = vst [vmem:[#allocation2 + $0x250] sm:$0xff] %v1694
      %1703 = vst [vmem:[#allocation2 + $0x258] sm:$0xf] %v1695
      %1704 = vrot.lane.b32.xlu0 %v1208, 29
      %v1705 = vpop.permute.xlu0 %1704
      %1706 = vrot.lane.b32.xlu0 %v1223, 29
      %v1707 = vpop.permute.xlu0 %1706
      %1708 = vrot.lane.b32.xlu0 %v1210, 29
      %v1709 = vpop.permute.xlu0 %1708
      %1710 = vrot.lane.b32.xlu0 %v1224, 29
      %v1711 = vpop.permute.xlu0 %1710
      %v1712 = vrot.slane %v1705, 4
      %v1713 = vrot.slane %v1707, 4
      %v1714 = vrot.slane %v1709, 4
      %v1715 = vrot.slane %v1711, 4
      %v1716 = vsel %vm335, %v1712, %v1713
      %vm1717 = vcmask 236544
      %v1718 = vsel %vm1717, %v1705, %v1716
      %v1719 = vsel %vm1717, %v1707, %v1713
      %v1720 = vsel %vm335, %v1714, %v1715
      %v1721 = vsel %vm1717, %v1709, %v1720
      %v1722 = vsel %vm1717, %v1711, %v1715
      %1727 = vst [vmem:[#allocation2 + $0x260] sm:$0xff] %v1718
      %1728 = vst [vmem:[#allocation2 + $0x268] sm:$0xf] %v1719
      %1729 = vst [vmem:[#allocation2 + $0x270] sm:$0xff] %v1721
      %1730 = vst [vmem:[#allocation2 + $0x278] sm:$0xf] %v1722
      %1731 = vrot.lane.b32.xlu0 %v1208, 28
      %v1732 = vpop.permute.xlu0 %1731
      %1733 = vrot.lane.b32.xlu0 %v1223, 28
      %v1734 = vpop.permute.xlu0 %1733
      %1735 = vrot.lane.b32.xlu0 %v1210, 28
      %v1736 = vpop.permute.xlu0 %1735
      %1737 = vrot.lane.b32.xlu0 %v1224, 28
      %v1738 = vpop.permute.xlu0 %1737
      %v1739 = vrot.slane %v1732, 4
      %v1740 = vrot.slane %v1734, 4
      %v1741 = vrot.slane %v1736, 4
      %v1742 = vrot.slane %v1738, 4
      %v1743 = vsel %vm335, %v1739, %v1740
      %vm1744 = vcmask 228352
      %v1745 = vsel %vm1744, %v1732, %v1743
      %v1746 = vsel %vm1744, %v1734, %v1740
      %v1747 = vsel %vm335, %v1741, %v1742
      %v1748 = vsel %vm1744, %v1736, %v1747
      %v1749 = vsel %vm1744, %v1738, %v1742
      %1754 = vst [vmem:[#allocation2 + $0x280] sm:$0xff] %v1745
      %1755 = vst [vmem:[#allocation2 + $0x288] sm:$0xf] %v1746
      %1756 = vst [vmem:[#allocation2 + $0x290] sm:$0xff] %v1748
      %1757 = vst [vmem:[#allocation2 + $0x298] sm:$0xf] %v1749
      %1758 = vrot.lane.b32.xlu0 %v1208, 23
      %v1759 = vpop.permute.xlu0 %1758
      %1760 = vrot.lane.b32.xlu0 %v1223, 23
      %v1761 = vpop.permute.xlu0 %1760
      %1762 = vrot.lane.b32.xlu0 %v1210, 23
      %v1763 = vpop.permute.xlu0 %1762
      %1764 = vrot.lane.b32.xlu0 %v1224, 23
      %v1765 = vpop.permute.xlu0 %1764
      %v1766 = vrot.slane %v1759, 4
      %v1767 = vrot.slane %v1761, 4
      %v1768 = vrot.slane %v1763, 4
      %v1769 = vrot.slane %v1765, 4
      %v1770 = vsel %vm335, %v1766, %v1767
      %vm1771 = vcmask 187392
      %v1772 = vsel %vm1771, %v1759, %v1770
      %v1773 = vsel %vm1771, %v1761, %v1767
      %v1774 = vsel %vm335, %v1768, %v1769
      %v1775 = vsel %vm1771, %v1763, %v1774
      %v1776 = vsel %vm1771, %v1765, %v1769
      %1781 = vst [vmem:[#allocation2 + $0x2a0] sm:$0xff] %v1772
      %1782 = vst [vmem:[#allocation2 + $0x2a8] sm:$0xf] %v1773
      %1783 = vst [vmem:[#allocation2 + $0x2b0] sm:$0xff] %v1775
      %1784 = vst [vmem:[#allocation2 + $0x2b8] sm:$0xf] %v1776
      %1785 = vrot.lane.b32.xlu0 %v1208, 22
      %v1786 = vpop.permute.xlu0 %1785
      %1787 = vrot.lane.b32.xlu0 %v1223, 22
      %v1788 = vpop.permute.xlu0 %1787
      %1789 = vrot.lane.b32.xlu0 %v1210, 22
      %v1790 = vpop.permute.xlu0 %1789
      %1791 = vrot.lane.b32.xlu0 %v1224, 22
      %v1792 = vpop.permute.xlu0 %1791
      %v1793 = vrot.slane %v1786, 4
      %v1794 = vrot.slane %v1788, 4
      %v1795 = vrot.slane %v1790, 4
      %v1796 = vrot.slane %v1792, 4
      %v1797 = vsel %vm335, %v1793, %v1794
      %vm1798 = vcmask 179200
      %v1799 = vsel %vm1798, %v1786, %v1797
      %v1800 = vsel %vm1798, %v1788, %v1794
      %v1801 = vsel %vm335, %v1795, %v1796
      %v1802 = vsel %vm1798, %v1790, %v1801
      %v1803 = vsel %vm1798, %v1792, %v1796
      %1808 = vst [vmem:[#allocation2 + $0x2c0] sm:$0xff] %v1799
      %1809 = vst [vmem:[#allocation2 + $0x2c8] sm:$0xf] %v1800
      %1810 = vst [vmem:[#allocation2 + $0x2d0] sm:$0xff] %v1802
      %1811 = vst [vmem:[#allocation2 + $0x2d8] sm:$0xf] %v1803
      %1812 = vrot.lane.b32.xlu0 %v1208, 21
      %v1813 = vpop.permute.xlu0 %1812
      %1814 = vrot.lane.b32.xlu0 %v1223, 21
      %v1815 = vpop.permute.xlu0 %1814
      %1816 = vrot.lane.b32.xlu0 %v1210, 21
      %v1817 = vpop.permute.xlu0 %1816
      %1818 = vrot.lane.b32.xlu0 %v1224, 21
      %v1819 = vpop.permute.xlu0 %1818
      %v1820 = vrot.slane %v1813, 4
      %v1821 = vrot.slane %v1815, 4
      %v1822 = vrot.slane %v1817, 4
      %v1823 = vrot.slane %v1819, 4
      %v1824 = vsel %vm335, %v1820, %v1821
      %vm1825 = vcmask 171008
      %v1826 = vsel %vm1825, %v1813, %v1824
      %v1827 = vsel %vm1825, %v1815, %v1821
      %v1828 = vsel %vm335, %v1822, %v1823
      %v1829 = vsel %vm1825, %v1817, %v1828
      %v1830 = vsel %vm1825, %v1819, %v1823
      %1835 = vst [vmem:[#allocation2 + $0x2e0] sm:$0xff] %v1826
      %1836 = vst [vmem:[#allocation2 + $0x2e8] sm:$0xf] %v1827
      %1837 = vst [vmem:[#allocation2 + $0x2f0] sm:$0xff] %v1829
      %1838 = vst [vmem:[#allocation2 + $0x2f8] sm:$0xf] %v1830
      %1839 = vrot.lane.b32.xlu0 %v1208, 16
      %v1840 = vpop.permute.xlu0 %1839
      %1841 = vrot.lane.b32.xlu0 %v1223, 16
      %v1842 = vpop.permute.xlu0 %1841
      %1843 = vrot.lane.b32.xlu0 %v1210, 16
      %v1844 = vpop.permute.xlu0 %1843
      %1845 = vrot.lane.b32.xlu0 %v1224, 16
      %v1846 = vpop.permute.xlu0 %1845
      %v1847 = vrot.slane %v1840, 4
      %v1848 = vrot.slane %v1842, 4
      %v1849 = vrot.slane %v1844, 4
      %v1850 = vrot.slane %v1846, 4
      %v1851 = vsel %vm335, %v1847, %v1848
      %vm1852 = vcmask 130048
      %v1853 = vsel %vm1852, %v1840, %v1851
      %v1854 = vsel %vm1852, %v1842, %v1848
      %v1855 = vsel %vm335, %v1849, %v1850
      %v1856 = vsel %vm1852, %v1844, %v1855
      %v1857 = vsel %vm1852, %v1846, %v1850
      %1862 = vst [vmem:[#allocation2 + $0x300] sm:$0xff] %v1853
      %1863 = vst [vmem:[#allocation2 + $0x308] sm:$0xf] %v1854
      %1864 = vst [vmem:[#allocation2 + $0x310] sm:$0xff] %v1856
      %1865 = vst [vmem:[#allocation2 + $0x318] sm:$0xf] %v1857
      %1866 = vrot.lane.b32.xlu0 %v1208, 15
      %v1867 = vpop.permute.xlu0 %1866
      %1868 = vrot.lane.b32.xlu0 %v1223, 15
      %v1869 = vpop.permute.xlu0 %1868
      %1870 = vrot.lane.b32.xlu0 %v1210, 15
      %v1871 = vpop.permute.xlu0 %1870
      %1872 = vrot.lane.b32.xlu0 %v1224, 15
      %v1873 = vpop.permute.xlu0 %1872
      %v1874 = vrot.slane %v1867, 4
      %v1875 = vrot.slane %v1869, 4
      %v1876 = vrot.slane %v1871, 4
      %v1877 = vrot.slane %v1873, 4
      %v1878 = vsel %vm335, %v1874, %v1875
      %vm1879 = vcmask 121856
      %v1880 = vsel %vm1879, %v1867, %v1878
      %v1881 = vsel %vm1879, %v1869, %v1875
      %v1882 = vsel %vm335, %v1876, %v1877
      %v1883 = vsel %vm1879, %v1871, %v1882
      %v1884 = vsel %vm1879, %v1873, %v1877
      %1889 = vst [vmem:[#allocation2 + $0x320] sm:$0xff] %v1880
      %1890 = vst [vmem:[#allocation2 + $0x328] sm:$0xf] %v1881
      %1891 = vst [vmem:[#allocation2 + $0x330] sm:$0xff] %v1883
      %1892 = vst [vmem:[#allocation2 + $0x338] sm:$0xf] %v1884
      %1893 = vrot.lane.b32.xlu0 %v1208, 14
      %v1894 = vpop.permute.xlu0 %1893
      %1895 = vrot.lane.b32.xlu0 %v1223, 14
      %v1896 = vpop.permute.xlu0 %1895
      %1897 = vrot.lane.b32.xlu0 %v1210, 14
      %v1898 = vpop.permute.xlu0 %1897
      %1899 = vrot.lane.b32.xlu0 %v1224, 14
      %v1900 = vpop.permute.xlu0 %1899
      %v1901 = vrot.slane %v1894, 4
      %v1902 = vrot.slane %v1896, 4
      %v1903 = vrot.slane %v1898, 4
      %v1904 = vrot.slane %v1900, 4
      %v1905 = vsel %vm335, %v1901, %v1902
      %vm1906 = vcmask 113664
      %v1907 = vsel %vm1906, %v1894, %v1905
      %v1908 = vsel %vm1906, %v1896, %v1902
      %v1909 = vsel %vm335, %v1903, %v1904
      %v1910 = vsel %vm1906, %v1898, %v1909
      %v1911 = vsel %vm1906, %v1900, %v1904
      %1916 = vst [vmem:[#allocation2 + $0x340] sm:$0xff] %v1907
      %1917 = vst [vmem:[#allocation2 + $0x348] sm:$0xf] %v1908
      %1918 = vst [vmem:[#allocation2 + $0x350] sm:$0xff] %v1910
      %1919 = vst [vmem:[#allocation2 + $0x358] sm:$0xf] %v1911
      %v1920 = vld [vmem:[%s3] sm:$0xff]
      %v1921 = vld [vmem:[%s3 + $0x8] sm:$0xff]
      %v1922 = vld [vmem:[%s3 + $0x10] sm:$0xff]
      %v1923 = vld [vmem:[%s3 + $0x18] sm:$0xff]
      %v1924 = vld [vmem:[#allocation2] sm:$0xff]
      %v1925 = vld [vmem:[#allocation2 + $0x8] sm:$0xf]
      %v1926 = vld [vmem:[#allocation2 + $0x10] sm:$0xff]
      %v1927 = vld [vmem:[#allocation2 + $0x18] sm:$0xf]
      %v1928 = vld [vmem:[#allocation2 + $0x20] sm:$0xff]
      %v1929 = vld [vmem:[#allocation2 + $0x28] sm:$0xf]
      %v1930 = vld [vmem:[#allocation2 + $0x30] sm:$0xff]
      %v1931 = vld [vmem:[#allocation2 + $0x38] sm:$0xf]
      %v1932 = vld [vmem:[#allocation2 + $0x40] sm:$0xff]
      %v1933 = vld [vmem:[#allocation2 + $0x48] sm:$0xf]
      %v1934 = vld [vmem:[#allocation2 + $0x50] sm:$0xff]
      %v1935 = vld [vmem:[#allocation2 + $0x58] sm:$0xf]
      %v1936 = vld [vmem:[#allocation2 + $0x60] sm:$0xff]
      %v1937 = vld [vmem:[#allocation2 + $0x68] sm:$0xf]
      %v1938 = vld [vmem:[#allocation2 + $0x70] sm:$0xff]
      %v1939 = vld [vmem:[#allocation2 + $0x78] sm:$0xf]
      %v1940 = vld [vmem:[#allocation2 + $0x80] sm:$0xff]
      %v1941 = vld [vmem:[#allocation2 + $0x88] sm:$0xf]
      %v1942 = vld [vmem:[#allocation2 + $0x90] sm:$0xff]
      %v1943 = vld [vmem:[#allocation2 + $0x98] sm:$0xf]
      %v1944 = vld [vmem:[#allocation2 + $0xa0] sm:$0xff]
      %v1945 = vld [vmem:[#allocation2 + $0xa8] sm:$0xf]
      %v1946 = vld [vmem:[#allocation2 + $0xb0] sm:$0xff]
      %v1947 = vld [vmem:[#allocation2 + $0xb8] sm:$0xf]
      %v1948 = vld [vmem:[#allocation2 + $0xc0] sm:$0xff]
      %v1949 = vld [vmem:[#allocation2 + $0xc8] sm:$0xf]
      %v1950 = vld [vmem:[#allocation2 + $0xd0] sm:$0xff]
      %v1951 = vld [vmem:[#allocation2 + $0xd8] sm:$0xf]
      %v1952 = vld [vmem:[#allocation2 + $0xe0] sm:$0xff]
      %v1953 = vld [vmem:[#allocation2 + $0xe8] sm:$0xf]
      %v1954 = vld [vmem:[#allocation2 + $0xf0] sm:$0xff]
      %v1955 = vld [vmem:[#allocation2 + $0xf8] sm:$0xf]
      %v1956 = vld [vmem:[#allocation2 + $0x100] sm:$0xff]
      %v1957 = vld [vmem:[#allocation2 + $0x108] sm:$0xf]
      %v1958 = vld [vmem:[#allocation2 + $0x110] sm:$0xff]
      %v1959 = vld [vmem:[#allocation2 + $0x118] sm:$0xf]
      %v1960 = vld [vmem:[#allocation2 + $0x120] sm:$0xff]
      %v1961 = vld [vmem:[#allocation2 + $0x128] sm:$0xf]
      %v1962 = vld [vmem:[#allocation2 + $0x130] sm:$0xff]
      %v1963 = vld [vmem:[#allocation2 + $0x138] sm:$0xf]
      %v1964 = vld [vmem:[#allocation2 + $0x140] sm:$0xff]
      %v1965 = vld [vmem:[#allocation2 + $0x148] sm:$0xf]
      %v1966 = vld [vmem:[#allocation2 + $0x150] sm:$0xff]
      %v1967 = vld [vmem:[#allocation2 + $0x158] sm:$0xf]
      %v1968 = vld [vmem:[#allocation2 + $0x160] sm:$0xff]
      %v1969 = vld [vmem:[#allocation2 + $0x168] sm:$0xf]
      %v1970 = vld [vmem:[#allocation2 + $0x170] sm:$0xff]
      %v1971 = vld [vmem:[#allocation2 + $0x178] sm:$0xf]
      %v1972 = vld [vmem:[#allocation2 + $0x180] sm:$0xff]
      %v1973 = vld [vmem:[#allocation2 + $0x188] sm:$0xf]
      %v1974 = vld [vmem:[#allocation2 + $0x190] sm:$0xff]
      %v1975 = vld [vmem:[#allocation2 + $0x198] sm:$0xf]
      %v1976 = vld [vmem:[#allocation2 + $0x1a0] sm:$0xff]
      %v1977 = vld [vmem:[#allocation2 + $0x1a8] sm:$0xf]
      %v1978 = vld [vmem:[#allocation2 + $0x1b0] sm:$0xff]
      %v1979 = vld [vmem:[#allocation2 + $0x1b8] sm:$0xf]
      %v1980 = vld [vmem:[#allocation2 + $0x1c0] sm:$0xff]
      %v1981 = vld [vmem:[#allocation2 + $0x1c8] sm:$0xf]
      %v1982 = vld [vmem:[#allocation2 + $0x1d0] sm:$0xff]
      %v1983 = vld [vmem:[#allocation2 + $0x1d8] sm:$0xf]
      %v1984 = vld [vmem:[#allocation2 + $0x1e0] sm:$0xff]
      %v1985 = vld [vmem:[#allocation2 + $0x1e8] sm:$0xf]
      %v1986 = vld [vmem:[#allocation2 + $0x1f0] sm:$0xff]
      %v1987 = vld [vmem:[#allocation2 + $0x1f8] sm:$0xf]
      %v1988 = vld [vmem:[#allocation2 + $0x200] sm:$0xff]
      %v1989 = vld [vmem:[#allocation2 + $0x208] sm:$0xf]
      %v1990 = vld [vmem:[#allocation2 + $0x210] sm:$0xff]
      %v1991 = vld [vmem:[#allocation2 + $0x218] sm:$0xf]
      %v1992 = vld [vmem:[#allocation2 + $0x220] sm:$0xff]
      %v1993 = vld [vmem:[#allocation2 + $0x228] sm:$0xf]
      %v1994 = vld [vmem:[#allocation2 + $0x230] sm:$0xff]
      %v1995 = vld [vmem:[#allocation2 + $0x238] sm:$0xf]
      %v1996 = vld [vmem:[#allocation2 + $0x240] sm:$0xff]
      %v1997 = vld [vmem:[#allocation2 + $0x248] sm:$0xf]
      %v1998 = vld [vmem:[#allocation2 + $0x250] sm:$0xff]
      %v1999 = vld [vmem:[#allocation2 + $0x258] sm:$0xf]
      %v2000 = vld [vmem:[#allocation2 + $0x260] sm:$0xff]
      %v2001 = vld [vmem:[#allocation2 + $0x268] sm:$0xf]
      %v2002 = vld [vmem:[#allocation2 + $0x270] sm:$0xff]
      %v2003 = vld [vmem:[#allocation2 + $0x278] sm:$0xf]
      %v2004 = vld [vmem:[#allocation2 + $0x280] sm:$0xff]
      %v2005 = vld [vmem:[#allocation2 + $0x288] sm:$0xf]
      %v2006 = vld [vmem:[#allocation2 + $0x290] sm:$0xff]
      %v2007 = vld [vmem:[#allocation2 + $0x298] sm:$0xf]
      %v2008 = vld [vmem:[#allocation2 + $0x2a0] sm:$0xff]
      %v2009 = vld [vmem:[#allocation2 + $0x2a8] sm:$0xf]
      %v2010 = vld [vmem:[#allocation2 + $0x2b0] sm:$0xff]
      %v2011 = vld [vmem:[#allocation2 + $0x2b8] sm:$0xf]
      %v2012 = vld [vmem:[#allocation2 + $0x2c0] sm:$0xff]
      %v2013 = vld [vmem:[#allocation2 + $0x2c8] sm:$0xf]
      %v2014 = vld [vmem:[#allocation2 + $0x2d0] sm:$0xff]
      %v2015 = vld [vmem:[#allocation2 + $0x2d8] sm:$0xf]
      %v2016 = vld [vmem:[#allocation2 + $0x2e0] sm:$0xff]
      %v2017 = vld [vmem:[#allocation2 + $0x2e8] sm:$0xf]
      %v2018 = vld [vmem:[#allocation2 + $0x2f0] sm:$0xff]
      %v2019 = vld [vmem:[#allocation2 + $0x2f8] sm:$0xf]
      %v2020 = vld [vmem:[#allocation2 + $0x300] sm:$0xff]
      %v2021 = vld [vmem:[#allocation2 + $0x308] sm:$0xf]
      %v2022 = vld [vmem:[#allocation2 + $0x310] sm:$0xff]
      %v2023 = vld [vmem:[#allocation2 + $0x318] sm:$0xf]
      %v2024 = vld [vmem:[#allocation2 + $0x320] sm:$0xff]
      %v2025 = vld [vmem:[#allocation2 + $0x328] sm:$0xf]
      %v2026 = vld [vmem:[#allocation2 + $0x330] sm:$0xff]
      %v2027 = vld [vmem:[#allocation2 + $0x338] sm:$0xf]
      %v2028 = vld [vmem:[#allocation2 + $0x340] sm:$0xff]
      %v2029 = vld [vmem:[#allocation2 + $0x348] sm:$0xf]
      %v2030 = vld [vmem:[#allocation2 + $0x350] sm:$0xff]
      %v2031 = vld [vmem:[#allocation2 + $0x358] sm:$0xf]
      %v2032 = vld [vmem:[%s4] sm:$0xff]
      %v2033 = vld [vmem:[%s4 + $0x8] sm:$0xff]
      %2035 = vset.pattern.permute.xlu0 0
      %2036 = vperm.xlu0 %2035, %v2032
      %v2037 = vpop.permute.xlu0 %2036
      %2040 = vset.pattern.permute.xlu0 0
      %2041 = vperm.xlu0 %2040, %v2033
      %v2042 = vpop.permute.xlu0 %2041
      %v2048 = vunpack.c.l.b16 %v1920
      %v2049 = vunpack.c.h.b16 %v1920
      %v2050 = vunpack.c.l.b16 %v1921
      %v2051 = vunpack.c.h.b16 %v1921
      %v2052 = vunpack.c.l.b16 %v1922
      %v2053 = vunpack.c.h.b16 %v1922
      %v2054 = vunpack.c.l.b16 %v1923
      %v2055 = vunpack.c.h.b16 %v1923
      %v2056 = vpack.c.b16 %v2052, %v2048
      %v2057 = vpack.c.b16 %v2053, %v2049
      %v2058 = vpack.c.b16 %v2054, %v2050
      %v2059 = vpack.c.b16 %v2055, %v2051
      %v2171 = vunpack.c.l.b16 %v1924
      %v2172 = vunpack.c.h.b16 %v1924
      %v2173 = vunpack.c.l.b16 %v1925
      %v2174 = vunpack.c.l.b16 %v1926
      %v2175 = vunpack.c.h.b16 %v1926
      %v2176 = vunpack.c.l.b16 %v1927
      %v2177 = vunpack.c.l.b16 %v1928
      %v2178 = vunpack.c.h.b16 %v1928
      %v2179 = vunpack.c.l.b16 %v1929
      %v2180 = vunpack.c.l.b16 %v1930
      %v2181 = vunpack.c.h.b16 %v1930
      %v2182 = vunpack.c.l.b16 %v1931
      %v2183 = vunpack.c.l.b16 %v1932
      %v2184 = vunpack.c.h.b16 %v1932
      %v2185 = vunpack.c.l.b16 %v1933
      %v2186 = vunpack.c.l.b16 %v1934
      %v2187 = vunpack.c.h.b16 %v1934
      %v2188 = vunpack.c.l.b16 %v1935
      %v2189 = vunpack.c.l.b16 %v1936
      %v2190 = vunpack.c.h.b16 %v1936
      %v2191 = vunpack.c.l.b16 %v1937
      %v2192 = vunpack.c.l.b16 %v1938
      %v2193 = vunpack.c.h.b16 %v1938
      %v2194 = vunpack.c.l.b16 %v1939
      %v2195 = vunpack.c.l.b16 %v1940
      %v2196 = vunpack.c.h.b16 %v1940
      %v2197 = vunpack.c.l.b16 %v1941
      %v2198 = vunpack.c.l.b16 %v1942
      %v2199 = vunpack.c.h.b16 %v1942
      %v2200 = vunpack.c.l.b16 %v1943
      %v2201 = vunpack.c.l.b16 %v1944
      %v2202 = vunpack.c.h.b16 %v1944
      %v2203 = vunpack.c.l.b16 %v1945
      %v2204 = vunpack.c.l.b16 %v1946
      %v2205 = vunpack.c.h.b16 %v1946
      %v2206 = vunpack.c.l.b16 %v1947
      %v2207 = vunpack.c.l.b16 %v1948
      %v2208 = vunpack.c.h.b16 %v1948
      %v2209 = vunpack.c.l.b16 %v1949
      %v2210 = vunpack.c.l.b16 %v1950
      %v2211 = vunpack.c.h.b16 %v1950
      %v2212 = vunpack.c.l.b16 %v1951
      %v2213 = vunpack.c.l.b16 %v1952
      %v2214 = vunpack.c.h.b16 %v1952
      %v2215 = vunpack.c.l.b16 %v1953
      %v2216 = vunpack.c.l.b16 %v1954
      %v2217 = vunpack.c.h.b16 %v1954
      %v2218 = vunpack.c.l.b16 %v1955
      %v2219 = vunpack.c.l.b16 %v1956
      %v2220 = vunpack.c.h.b16 %v1956
      %v2221 = vunpack.c.l.b16 %v1957
      %v2222 = vunpack.c.l.b16 %v1958
      %v2223 = vunpack.c.h.b16 %v1958
      %v2224 = vunpack.c.l.b16 %v1959
      %v2225 = vunpack.c.l.b16 %v1960
      %v2226 = vunpack.c.h.b16 %v1960
      %v2227 = vunpack.c.l.b16 %v1961
      %v2228 = vunpack.c.l.b16 %v1962
      %v2229 = vunpack.c.h.b16 %v1962
      %v2230 = vunpack.c.l.b16 %v1963
      %v2231 = vunpack.c.l.b16 %v1964
      %v2232 = vunpack.c.h.b16 %v1964
      %v2233 = vunpack.c.l.b16 %v1965
      %v2234 = vunpack.c.l.b16 %v1966
      %v2235 = vunpack.c.h.b16 %v1966
      %v2236 = vunpack.c.l.b16 %v1967
      %v2237 = vunpack.c.l.b16 %v1968
      %v2238 = vunpack.c.h.b16 %v1968
      %v2239 = vunpack.c.l.b16 %v1969
      %v2240 = vunpack.c.l.b16 %v1970
      %v2241 = vunpack.c.h.b16 %v1970
      %v2242 = vunpack.c.l.b16 %v1971
      %v2243 = vunpack.c.l.b16 %v1972
      %v2244 = vunpack.c.h.b16 %v1972
      %v2245 = vunpack.c.l.b16 %v1973
      %v2246 = vunpack.c.l.b16 %v1974
      %v2247 = vunpack.c.h.b16 %v1974
      %v2248 = vunpack.c.l.b16 %v1975
      %v2249 = vunpack.c.l.b16 %v1976
      %v2250 = vunpack.c.h.b16 %v1976
      %v2251 = vunpack.c.l.b16 %v1977
      %v2252 = vunpack.c.l.b16 %v1978
      %v2253 = vunpack.c.h.b16 %v1978
      %v2254 = vunpack.c.l.b16 %v1979
      %v2255 = vunpack.c.l.b16 %v1980
      %v2256 = vunpack.c.h.b16 %v1980
      %v2257 = vunpack.c.l.b16 %v1981
      %v2258 = vunpack.c.l.b16 %v1982
      %v2259 = vunpack.c.h.b16 %v1982
      %v2260 = vunpack.c.l.b16 %v1983
      %v2261 = vunpack.c.l.b16 %v1984
      %v2262 = vunpack.c.h.b16 %v1984
      %v2263 = vunpack.c.l.b16 %v1985
      %v2264 = vunpack.c.l.b16 %v1986
      %v2265 = vunpack.c.h.b16 %v1986
      %v2266 = vunpack.c.l.b16 %v1987
      %v2267 = vunpack.c.l.b16 %v1988
      %v2268 = vunpack.c.h.b16 %v1988
      %v2269 = vunpack.c.l.b16 %v1989
      %v2270 = vunpack.c.l.b16 %v1990
      %v2271 = vunpack.c.h.b16 %v1990
      %v2272 = vunpack.c.l.b16 %v1991
      %v2273 = vunpack.c.l.b16 %v1992
      %v2274 = vunpack.c.h.b16 %v1992
      %v2275 = vunpack.c.l.b16 %v1993
      %v2276 = vunpack.c.l.b16 %v1994
      %v2277 = vunpack.c.h.b16 %v1994
      %v2278 = vunpack.c.l.b16 %v1995
      %v2279 = vunpack.c.l.b16 %v1996
      %v2280 = vunpack.c.h.b16 %v1996
      %v2281 = vunpack.c.l.b16 %v1997
      %v2282 = vunpack.c.l.b16 %v1998
      %v2283 = vunpack.c.h.b16 %v1998
      %v2284 = vunpack.c.l.b16 %v1999
      %v2285 = vunpack.c.l.b16 %v2000
      %v2286 = vunpack.c.h.b16 %v2000
      %v2287 = vunpack.c.l.b16 %v2001
      %v2288 = vunpack.c.l.b16 %v2002
      %v2289 = vunpack.c.h.b16 %v2002
      %v2290 = vunpack.c.l.b16 %v2003
      %v2291 = vunpack.c.l.b16 %v2004
      %v2292 = vunpack.c.h.b16 %v2004
      %v2293 = vunpack.c.l.b16 %v2005
      %v2294 = vunpack.c.l.b16 %v2006
      %v2295 = vunpack.c.h.b16 %v2006
      %v2296 = vunpack.c.l.b16 %v2007
      %v2297 = vunpack.c.l.b16 %v2008
      %v2298 = vunpack.c.h.b16 %v2008
      %v2299 = vunpack.c.l.b16 %v2009
      %v2300 = vunpack.c.l.b16 %v2010
      %v2301 = vunpack.c.h.b16 %v2010
      %v2302 = vunpack.c.l.b16 %v2011
      %v2303 = vunpack.c.l.b16 %v2012
      %v2304 = vunpack.c.h.b16 %v2012
      %v2305 = vunpack.c.l.b16 %v2013
      %v2306 = vunpack.c.l.b16 %v2014
      %v2307 = vunpack.c.h.b16 %v2014
      %v2308 = vunpack.c.l.b16 %v2015
      %v2309 = vunpack.c.l.b16 %v2016
      %v2310 = vunpack.c.h.b16 %v2016
      %v2311 = vunpack.c.l.b16 %v2017
      %v2312 = vunpack.c.l.b16 %v2018
      %v2313 = vunpack.c.h.b16 %v2018
      %v2314 = vunpack.c.l.b16 %v2019
      %v2315 = vunpack.c.l.b16 %v2020
      %v2316 = vunpack.c.h.b16 %v2020
      %v2317 = vunpack.c.l.b16 %v2021
      %v2318 = vunpack.c.l.b16 %v2022
      %v2319 = vunpack.c.h.b16 %v2022
      %v2320 = vunpack.c.l.b16 %v2023
      %v2321 = vunpack.c.l.b16 %v2024
      %v2322 = vunpack.c.h.b16 %v2024
      %v2323 = vunpack.c.l.b16 %v2025
      %v2324 = vunpack.c.l.b16 %v2026
      %v2325 = vunpack.c.h.b16 %v2026
      %v2326 = vunpack.c.l.b16 %v2027
      %v2327 = vunpack.c.l.b16 %v2028
      %v2328 = vunpack.c.h.b16 %v2028
      %v2329 = vunpack.c.l.b16 %v2029
      %v2330 = vunpack.c.l.b16 %v2030
      %v2331 = vunpack.c.h.b16 %v2030
      %v2332 = vunpack.c.l.b16 %v2031
      %v2333 = vpack.c.b16 %v2174, %v2171
      %v2334 = vpack.c.b16 %v2175, %v2172
      %v2335 = vpack.c.b16 %v2176, %v2173
      %v2336 = vpack.c.b16 %v2180, %v2177
      %v2337 = vpack.c.b16 %v2181, %v2178
      %v2338 = vpack.c.b16 %v2182, %v2179
      %v2339 = vpack.c.b16 %v2186, %v2183
      %v2340 = vpack.c.b16 %v2187, %v2184
      %v2341 = vpack.c.b16 %v2188, %v2185
      %v2342 = vpack.c.b16 %v2192, %v2189
      %v2343 = vpack.c.b16 %v2193, %v2190
      %v2344 = vpack.c.b16 %v2194, %v2191
      %v2345 = vpack.c.b16 %v2198, %v2195
      %v2346 = vpack.c.b16 %v2199, %v2196
      %v2347 = vpack.c.b16 %v2200, %v2197
      %v2348 = vpack.c.b16 %v2204, %v2201
      %v2349 = vpack.c.b16 %v2205, %v2202
      %v2350 = vpack.c.b16 %v2206, %v2203
      %v2351 = vpack.c.b16 %v2210, %v2207
      %v2352 = vpack.c.b16 %v2211, %v2208
      %v2353 = vpack.c.b16 %v2212, %v2209
      %v2354 = vpack.c.b16 %v2216, %v2213
      %v2355 = vpack.c.b16 %v2217, %v2214
      %v2356 = vpack.c.b16 %v2218, %v2215
      %v2357 = vpack.c.b16 %v2222, %v2219
      %v2358 = vpack.c.b16 %v2223, %v2220
      %v2359 = vpack.c.b16 %v2224, %v2221
      %v2360 = vpack.c.b16 %v2228, %v2225
      %v2361 = vpack.c.b16 %v2229, %v2226
      %v2362 = vpack.c.b16 %v2230, %v2227
      %v2363 = vpack.c.b16 %v2234, %v2231
      %v2364 = vpack.c.b16 %v2235, %v2232
      %v2365 = vpack.c.b16 %v2236, %v2233
      %v2366 = vpack.c.b16 %v2240, %v2237
      %v2367 = vpack.c.b16 %v2241, %v2238
      %v2368 = vpack.c.b16 %v2242, %v2239
      %v2369 = vpack.c.b16 %v2246, %v2243
      %v2370 = vpack.c.b16 %v2247, %v2244
      %v2371 = vpack.c.b16 %v2248, %v2245
      %v2372 = vpack.c.b16 %v2252, %v2249
      %v2373 = vpack.c.b16 %v2253, %v2250
      %v2374 = vpack.c.b16 %v2254, %v2251
      %v2375 = vpack.c.b16 %v2258, %v2255
      %v2376 = vpack.c.b16 %v2259, %v2256
      %v2377 = vpack.c.b16 %v2260, %v2257
      %v2378 = vpack.c.b16 %v2264, %v2261
      %v2379 = vpack.c.b16 %v2265, %v2262
      %v2380 = vpack.c.b16 %v2266, %v2263
      %v2381 = vpack.c.b16 %v2270, %v2267
      %v2382 = vpack.c.b16 %v2271, %v2268
      %v2383 = vpack.c.b16 %v2272, %v2269
      %v2384 = vpack.c.b16 %v2276, %v2273
      %v2385 = vpack.c.b16 %v2277, %v2274
      %v2386 = vpack.c.b16 %v2278, %v2275
      %v2387 = vpack.c.b16 %v2282, %v2279
      %v2388 = vpack.c.b16 %v2283, %v2280
      %v2389 = vpack.c.b16 %v2284, %v2281
      %v2390 = vpack.c.b16 %v2288, %v2285
      %v2391 = vpack.c.b16 %v2289, %v2286
      %v2392 = vpack.c.b16 %v2290, %v2287
      %v2393 = vpack.c.b16 %v2294, %v2291
      %v2394 = vpack.c.b16 %v2295, %v2292
      %v2395 = vpack.c.b16 %v2296, %v2293
      %v2396 = vpack.c.b16 %v2300, %v2297
      %v2397 = vpack.c.b16 %v2301, %v2298
      %v2398 = vpack.c.b16 %v2302, %v2299
      %v2399 = vpack.c.b16 %v2306, %v2303
      %v2400 = vpack.c.b16 %v2307, %v2304
      %v2401 = vpack.c.b16 %v2308, %v2305
      %v2402 = vpack.c.b16 %v2312, %v2309
      %v2403 = vpack.c.b16 %v2313, %v2310
      %v2404 = vpack.c.b16 %v2314, %v2311
      %v2405 = vpack.c.b16 %v2318, %v2315
      %v2406 = vpack.c.b16 %v2319, %v2316
      %v2407 = vpack.c.b16 %v2320, %v2317
      %v2408 = vpack.c.b16 %v2324, %v2321
      %v2409 = vpack.c.b16 %v2325, %v2322
      %v2410 = vpack.c.b16 %v2326, %v2323
      %v2411 = vpack.c.b16 %v2330, %v2327
      %v2412 = vpack.c.b16 %v2331, %v2328
      %v2413 = vpack.c.b16 %v2332, %v2329
      %vm2495 = vcmask 392192
      %v2497 = vsel %vm2495, %v2059, 0
      %2499 = vmatprep.subr.bf16.mxu0 %v2355
      %2500 = vmatpush1.bf16.msra.mxu0 %v2354
      %2501 = vmatprep.subr.bf16.mxu0 %v2352
      %2502 = vmatpush1.bf16.msra.mxu0 %v2351
      %2503 = vmatprep.subr.bf16.mxu0 %v2349
      %2504 = vmatpush1.bf16.msra.mxu0 %v2348
      %2505 = vmatprep.subr.bf16.mxu0 %v2346
      %2506 = vmatpush1.bf16.msra.mxu0 %v2345
      %2507 = vmatprep.subr.bf16.mxu0 %v2343
      %2508 = vmatpush1.bf16.msra.mxu0 %v2342
      %2509 = vmatprep.subr.bf16.mxu0 %v2340
      %2510 = vmatpush1.bf16.msra.mxu0 %v2339
      %2511 = vmatprep.subr.bf16.mxu0 %v2337
      %2512 = vmatpush1.bf16.msra.mxu0 %v2336
      %2513 = vmatprep.subr.bf16.mxu0 %v2334
      %2514 = vmatpush1.bf16.msra.mxu0 %v2333
      %2515 = vmatprep.subr.bf16.mxu0 %v2379
      %2516 = vmatpush2.bf16.msra.mxu0 %v2378
      %2517 = vmatprep.subr.bf16.mxu0 %v2376
      %2518 = vmatpush2.bf16.msra.mxu0 %v2375
      %2519 = vmatprep.subr.bf16.mxu0 %v2373
      %2520 = vmatpush2.bf16.msra.mxu0 %v2372
      %2521 = vmatprep.subr.bf16.mxu0 %v2370
      %2522 = vmatpush2.bf16.msra.mxu0 %v2369
      %2523 = vmatprep.subr.bf16.mxu0 %v2367
      %2524 = vmatpush2.bf16.msra.mxu0 %v2366
      %2525 = vmatprep.subr.bf16.mxu0 %v2364
      %2526 = vmatpush2.bf16.msra.mxu0 %v2363
      %2527 = vmatprep.subr.bf16.mxu0 %v2361
      %2528 = vmatpush2.bf16.msra.mxu0 %v2360
      %2529 = vmatprep.subr.bf16.mxu0 %v2358
      %2530 = vmatpush2.bf16.msra.mxu0 %v2357
      %2531 = vmatprep.mubr.bf16.mxu0 %v2057
      %2532 = vmatmul.mubr.bf16.gmra.mxu0 %v2056
      %v2533 = vpop.f32.mrf.mxu0
      %v2534 = vadd.f32 %v2037, %v2533
      %v2535 = vpop.f32.mrf.mxu0
      %v2536 = vadd.f32 %v2037, %v2535
      %v2537 = vpop.f32.mrf.mxu0
      %v2538 = vadd.f32 %v2042, %v2537
      %v2539 = vpop.f32.mrf.mxu0
      %v2540 = vadd.f32 %v2042, %v2539
      %2541 = vdwg.mxu0
      %2542 = vmatprep.subr.bf16.mxu0 %v2403
      %2543 = vmatpush1.bf16.msra.mxu0 %v2402
      %2544 = vmatprep.subr.bf16.mxu0 %v2400
      %2545 = vmatpush1.bf16.msra.mxu0 %v2399
      %2546 = vmatprep.subr.bf16.mxu0 %v2397
      %2547 = vmatpush1.bf16.msra.mxu0 %v2396
      %2548 = vmatprep.subr.bf16.mxu0 %v2394
      %2549 = vmatpush1.bf16.msra.mxu0 %v2393
      %2550 = vmatprep.subr.bf16.mxu0 %v2391
      %2551 = vmatpush1.bf16.msra.mxu0 %v2390
      %2552 = vmatprep.subr.bf16.mxu0 %v2388
      %2553 = vmatpush1.bf16.msra.mxu0 %v2387
      %2554 = vmatprep.subr.bf16.mxu0 %v2385
      %2555 = vmatpush1.bf16.msra.mxu0 %v2384
      %2556 = vmatprep.subr.bf16.mxu0 %v2382
      %2557 = vmatpush1.bf16.msra.mxu0 %v2381
      %2558 = vmatprep.subr.bf16.mxu0 0
      %2559 = vmatpush2.bf16.msra.mxu0 0
      %2560 = vmatprep.subr.bf16.mxu0 0
      %2561 = vmatpush2.bf16.msra.mxu0 0
      %2562 = vmatprep.subr.bf16.mxu0 0
      %2563 = vmatpush2.bf16.msra.mxu0 0
      %2564 = vmatprep.subr.bf16.mxu0 0
      %2565 = vmatpush2.bf16.msra.mxu0 0
      %2566 = vmatprep.subr.bf16.mxu0 0
      %2567 = vmatpush2.bf16.msra.mxu0 0
      %2568 = vmatprep.subr.bf16.mxu0 %v2412
      %2569 = vmatpush2.bf16.msra.mxu0 %v2411
      %2570 = vmatprep.subr.bf16.mxu0 %v2409
      %2571 = vmatpush2.bf16.msra.mxu0 %v2408
      %2572 = vmatprep.subr.bf16.mxu0 %v2406
      %2573 = vmatpush2.bf16.msra.mxu0 %v2405
      %2574 = vmatprep.mubr.bf16.mxu0 %v2497
      %2575 = vmatmul.mubr.bf16.gmra.mxu0 %v2058
      %v2576 = vpop.f32.mrf.mxu0
      %v2577 = vadd.f32 %v2534, %v2576
      %v2578 = vpop.f32.mrf.mxu0
      %v2579 = vadd.f32 %v2536, %v2578
      %v2580 = vpop.f32.mrf.mxu0
      %v2581 = vadd.f32 %v2538, %v2580
      %v2582 = vpop.f32.mrf.mxu0
      %v2583 = vadd.f32 %v2540, %v2582
      %2584 = vdwg.mxu0
      %2585 = vmatprep.subr.bf16.mxu0 0
      %2586 = vmatpush1.bf16.msra.mxu0 %v2356
      %2587 = vmatprep.subr.bf16.mxu0 0
      %2588 = vmatpush1.bf16.msra.mxu0 %v2353
      %2589 = vmatprep.subr.bf16.mxu0 0
      %2590 = vmatpush1.bf16.msra.mxu0 %v2350
      %2591 = vmatprep.subr.bf16.mxu0 0
      %2592 = vmatpush1.bf16.msra.mxu0 %v2347
      %2593 = vmatprep.subr.bf16.mxu0 0
      %2594 = vmatpush1.bf16.msra.mxu0 %v2344
      %2595 = vmatprep.subr.bf16.mxu0 0
      %2596 = vmatpush1.bf16.msra.mxu0 %v2341
      %2597 = vmatprep.subr.bf16.mxu0 0
      %2598 = vmatpush1.bf16.msra.mxu0 %v2338
      %2599 = vmatprep.subr.bf16.mxu0 0
      %2600 = vmatpush1.bf16.msra.mxu0 %v2335
      %2601 = vmatprep.subr.bf16.mxu0 0
      %2602 = vmatpush2.bf16.msra.mxu0 %v2380
      %2603 = vmatprep.subr.bf16.mxu0 0
      %2604 = vmatpush2.bf16.msra.mxu0 %v2377
      %2605 = vmatprep.subr.bf16.mxu0 0
      %2606 = vmatpush2.bf16.msra.mxu0 %v2374
      %2607 = vmatprep.subr.bf16.mxu0 0
      %2608 = vmatpush2.bf16.msra.mxu0 %v2371
      %2609 = vmatprep.subr.bf16.mxu0 0
      %2610 = vmatpush2.bf16.msra.mxu0 %v2368
      %2611 = vmatprep.subr.bf16.mxu0 0
      %2612 = vmatpush2.bf16.msra.mxu0 %v2365
      %2613 = vmatprep.subr.bf16.mxu0 0
      %2614 = vmatpush2.bf16.msra.mxu0 %v2362
      %2615 = vmatprep.subr.bf16.mxu0 0
      %2616 = vmatpush2.bf16.msra.mxu0 %v2359
      %2617 = vmatprep.mubr.bf16.mxu0 %v2057
      %2618 = vmatmul.mubr.bf16.gmra.mxu0 %v2056
      %v2619 = vpop.f32.mrf.mxu0
      %v2620 = vadd.f32 %v2037, %v2619
      %v2621 = vpop.f32.mrf.mxu0
      %v2622 = vpop.f32.mrf.mxu0
      %v2623 = vadd.f32 %v2042, %v2622
      %v2624 = vpop.f32.mrf.mxu0
      %2625 = vdwg.mxu0
      %2626 = vmatprep.subr.bf16.mxu0 0
      %2627 = vmatpush1.bf16.msra.mxu0 %v2404
      %2628 = vmatprep.subr.bf16.mxu0 0
      %2629 = vmatpush1.bf16.msra.mxu0 %v2401
      %2630 = vmatprep.subr.bf16.mxu0 0
      %2631 = vmatpush1.bf16.msra.mxu0 %v2398
      %2632 = vmatprep.subr.bf16.mxu0 0
      %2633 = vmatpush1.bf16.msra.mxu0 %v2395
      %2634 = vmatprep.subr.bf16.mxu0 0
      %2635 = vmatpush1.bf16.msra.mxu0 %v2392
      %2636 = vmatprep.subr.bf16.mxu0 0
      %2637 = vmatpush1.bf16.msra.mxu0 %v2389
      %2638 = vmatprep.subr.bf16.mxu0 0
      %2639 = vmatpush1.bf16.msra.mxu0 %v2386
      %2640 = vmatprep.subr.bf16.mxu0 0
      %2641 = vmatpush1.bf16.msra.mxu0 %v2383
      %2642 = vmatprep.subr.bf16.mxu0 0
      %2643 = vmatpush2.bf16.msra.mxu0 0
      %2644 = vmatprep.subr.bf16.mxu0 0
      %2645 = vmatpush2.bf16.msra.mxu0 0
      %2646 = vmatprep.subr.bf16.mxu0 0
      %2647 = vmatpush2.bf16.msra.mxu0 0
      %2648 = vmatprep.subr.bf16.mxu0 0
      %2649 = vmatpush2.bf16.msra.mxu0 0
      %2650 = vmatprep.subr.bf16.mxu0 0
      %2651 = vmatpush2.bf16.msra.mxu0 0
      %2652 = vmatprep.subr.bf16.mxu0 0
      %2653 = vmatpush2.bf16.msra.mxu0 %v2413
      %2654 = vmatprep.subr.bf16.mxu0 0
      %2655 = vmatpush2.bf16.msra.mxu0 %v2410
      %2656 = vmatprep.subr.bf16.mxu0 0
      %2657 = vmatpush2.bf16.msra.mxu0 %v2407
      %2658 = vmatprep.mubr.bf16.mxu0 %v2497
      %2659 = vmatmul.mubr.bf16.gmra.mxu0 %v2058
      %v2660 = vpop.f32.mrf.mxu0
      %v2661 = vadd.f32 %v2620, %v2660
      %v2662 = vpop.f32.mrf.mxu0
      %v2663 = vpop.f32.mrf.mxu0
      %v2664 = vadd.f32 %v2623, %v2663
      %v2665 = vpop.f32.mrf.mxu0
      %2666 = vdwg.mxu0
      %v2667 = vld [vmem:[%s6] sm:$0xf]
      %v2668 = vld [vmem:[%s6 + $0x4] sm:$0xf]
      %v2671 = vunpack.c.l.b16 %v2667
      %v2672 = vunpack.c.l.b16 %v2668
      %v2673 = vpack.c.b16 %v2672, %v2671
      %v2674 = vunpack.c.h.b16 %v324
      %v2675 = vunpack.c.l.b16 %v325
      %v2676 = vunpack.c.h.b16 %v325
      %v2677 = vunpack.c.l.b16 %v326
      %v2678 = vpack.c.b16 %v2674, %v2674
      %v2679 = vpack.c.b16 %v2675, %v2675
      %v2680 = vpack.c.b16 %v2676, %v2676
      %v2681 = vpack.c.b16 %v2677, %v2677
      %2682 = vrot.lane.b32.xlu0 %v2678, 71
      %v2683 = vpop.permute.xlu0 %2682
      %2684 = vrot.lane.b32.xlu0 %v2679, 71
      %v2685 = vpop.permute.xlu0 %2684
      %2686 = vrot.lane.b32.xlu0 %v2680, 71
      %v2687 = vpop.permute.xlu0 %2686
      %2688 = vrot.lane.b32.xlu0 %v2681, 71
      %v2689 = vpop.permute.xlu0 %2688
      %v2690 = vsel %vm699, %v2683, %v2685
      %v2691 = vsel %vm699, %v2685, %v2687
      %v2692 = vsel %vm699, %v2687, %v2689
      %vm2693 = vcmask 64512
      %v2695 = vsel %vm2693, %v2673, 0
      %v2698 = vsel %vm1058, %v2690, 0
      %v2701 = vsel %vm1058, %v2691, 0
      %v2704 = vsel %vm1058, %v2692, 0
      %2706 = vmatprep.subr.bf16.mxu0 0
      %2707 = vmatpush1.bf16.msra.mxu0 0
      %2708 = vmatprep.subr.bf16.mxu0 0
      %2709 = vmatpush1.bf16.msra.mxu0 0
      %2710 = vmatprep.subr.bf16.mxu0 0
      %2711 = vmatpush1.bf16.msra.mxu0 0
      %2712 = vmatprep.subr.bf16.mxu0 0
      %2713 = vmatpush1.bf16.msra.mxu0 0
      %2714 = vmatprep.subr.bf16.mxu0 0
      %2715 = vmatpush1.bf16.msra.mxu0 0
      %2716 = vmatprep.subr.bf16.mxu0 0
      %2717 = vmatpush1.bf16.msra.mxu0 0
      %2718 = vmatprep.subr.bf16.mxu0 0
      %2719 = vmatpush1.bf16.msra.mxu0 0
      %2720 = vmatprep.subr.bf16.mxu0 %v2701
      %2721 = vmatpush1.bf16.msra.mxu0 %v2698
      %2722 = vmatprep.subr.bf16.mxu0 0
      %2723 = vmatpush2.bf16.msra.mxu0 0
      %2724 = vmatprep.subr.bf16.mxu0 0
      %2725 = vmatpush2.bf16.msra.mxu0 0
      %2726 = vmatprep.subr.bf16.mxu0 0
      %2727 = vmatpush2.bf16.msra.mxu0 0
      %2728 = vmatprep.subr.bf16.mxu0 0
      %2729 = vmatpush2.bf16.msra.mxu0 0
      %2730 = vmatprep.subr.bf16.mxu0 0
      %2731 = vmatpush2.bf16.msra.mxu0 0
      %2732 = vmatprep.subr.bf16.mxu0 0
      %2733 = vmatpush2.bf16.msra.mxu0 0
      %2734 = vmatprep.subr.bf16.mxu0 0
      %2735 = vmatpush2.bf16.msra.mxu0 0
      %2736 = vmatprep.subr.bf16.mxu0 0
      %2737 = vmatpush2.bf16.msra.mxu0 0
      %2738 = vmatprep.mubr.bf16.mxu0 0
      %2739 = vmatmul.mubr.bf16.gmra.mxu0 %v2695
      %v2740 = vpop.f32.mrf.mxu0
      %v2741 = vadd.f32 0.0, %v2740
      %v2742 = vpop.f32.mrf.mxu0
      %v2743 = vadd.f32 0.0, %v2742
      %v2744 = vpop.f32.mrf.mxu0
      %v2745 = vadd.f32 0.0, %v2744
      %v2746 = vpop.f32.mrf.mxu0
      %v2747 = vadd.f32 0.0, %v2746
      %2748 = vdwg.mxu0
      %2749 = vmatprep.subr.bf16.mxu0 0
      %2750 = vmatpush1.bf16.msra.mxu0 0
      %2751 = vmatprep.subr.bf16.mxu0 0
      %2752 = vmatpush1.bf16.msra.mxu0 0
      %2753 = vmatprep.subr.bf16.mxu0 0
      %2754 = vmatpush1.bf16.msra.mxu0 0
      %2755 = vmatprep.subr.bf16.mxu0 0
      %2756 = vmatpush1.bf16.msra.mxu0 0
      %2757 = vmatprep.subr.bf16.mxu0 0
      %2758 = vmatpush1.bf16.msra.mxu0 0
      %2759 = vmatprep.subr.bf16.mxu0 0
      %2760 = vmatpush1.bf16.msra.mxu0 0
      %2761 = vmatprep.subr.bf16.mxu0 0
      %2762 = vmatpush1.bf16.msra.mxu0 0
      %2763 = vmatprep.subr.bf16.mxu0 0
      %2764 = vmatpush1.bf16.msra.mxu0 %v2704
      %2765 = vmatprep.subr.bf16.mxu0 0
      %2766 = vmatpush2.bf16.msra.mxu0 0
      %2767 = vmatprep.subr.bf16.mxu0 0
      %2768 = vmatpush2.bf16.msra.mxu0 0
      %2769 = vmatprep.subr.bf16.mxu0 0
      %2770 = vmatpush2.bf16.msra.mxu0 0
      %2771 = vmatprep.subr.bf16.mxu0 0
      %2772 = vmatpush2.bf16.msra.mxu0 0
      %2773 = vmatprep.subr.bf16.mxu0 0
      %2774 = vmatpush2.bf16.msra.mxu0 0
      %2775 = vmatprep.subr.bf16.mxu0 0
      %2776 = vmatpush2.bf16.msra.mxu0 0
      %2777 = vmatprep.subr.bf16.mxu0 0
      %2778 = vmatpush2.bf16.msra.mxu0 0
      %2779 = vmatprep.subr.bf16.mxu0 0
      %2780 = vmatpush2.bf16.msra.mxu0 0
      %2781 = vmatprep.mubr.bf16.mxu0 0
      %2782 = vmatmul.mubr.bf16.gmra.mxu0 %v2695
      %v2783 = vpop.f32.mrf.mxu0
      %v2784 = vadd.f32 0.0, %v2783
      %v2785 = vpop.f32.mrf.mxu0
      %v2786 = vpop.f32.mrf.mxu0
      %v2787 = vadd.f32 0.0, %v2786
      %v2788 = vpop.f32.mrf.mxu0
      %2789 = vdwg.mxu0
      %v2790 = vadd.f32 %v2577, %v2741
      %v2791 = vadd.f32 %v2579, %v2743
      %v2792 = vadd.f32 %v2661, %v2784
      %v2793 = vadd.f32 %v2581, %v2745
      %v2794 = vadd.f32 %v2583, %v2747
      %v2795 = vadd.f32 %v2664, %v2787
      %v2796 = vld [vmem:[%s7] sm:$0xff]
      %v2797 = vld [vmem:[%s7 + $0x8] sm:$0xff]
      %2799 = vset.pattern.permute.xlu0 0
      %2800 = vperm.xlu0 %2799, %v2796
      %v2801 = vpop.permute.xlu0 %2800
      %2804 = vset.pattern.permute.xlu0 0
      %2805 = vperm.xlu0 %2804, %v2797
      %v2806 = vpop.permute.xlu0 %2805
      %v2808 = vadd.f32 %v2790, %v2801
      %v2809 = vadd.f32 %v2791, %v2801
      %v2810 = vadd.f32 %v2792, %v2801
      %v2811 = vadd.f32 %v2793, %v2806
      %v2812 = vadd.f32 %v2794, %v2806
      %v2813 = vadd.f32 %v2795, %v2806
      %v2814 = vmax.f32 %v2808, 0.0
      %v2815 = vmax.f32 %v2809, 0.0
      %v2816 = vmax.f32 %v2810, 0.0
      %v2817 = vmax.f32 %v2811, 0.0
      %v2818 = vmax.f32 %v2812, 0.0
      %v2819 = vmax.f32 %v2813, 0.0
      %2820 = vst [vmem:[%s305] sm:$0xff] %v2814
      %2821 = vst [vmem:[%s305 + $0x8] sm:$0xff] %v2815
      %2822 = vst [vmem:[%s305 + $0x10] sm:$0xff] %v2816
      %2823 = vst [vmem:[%s305 + $0x18] sm:$0xff] %v2817
      %2824 = vst [vmem:[%s305 + $0x20] sm:$0xff] %v2818
      %2825 = vst [vmem:[%s305 + $0x28] sm:$0xff] %v2819
      %p2826 = scmp.lt.s32.totalorder %s19, 1
      %s2827 = scalar_select %p2826, %s19, 1
      %s2828 = smul.addr %s2827, 6
      %s2829 = smul.addr %s2828, 8
      %s2830 = scalar_lea.vmem %s8, %s2829
      // Predicated region
      $region53: #{model_forward.3} parent=51 // pred_check
        %p2831 = pneg %p210
      $region54: #{model_forward.3} parent=51 // pred_check_branch
        %2833 = sbr.rel (%p2831) target = $region56
      $region55: #{model_forward.3} parent=51 // pred_region
        _
      $region56: #{model_forward.3} parent=51 // pred_fallthru
        _
    $region52: #{model_forward.3} parent=5 // pred_fallthru
      _
    %p2834 = scmp.le.s32.totalorder 2, %s14
    // Predicated region
    $region57: #{model_forward.3} parent=5 // pred_check
      %p2835 = pneg %p2834
    $region58: #{model_forward.3} parent=5 // pred_check_branch
      %2837 = sbr.rel (%p2835) target = $region60
    $region59: #{model_forward.3} parent=5 // pred_region
      %s2838 = ssub.s32 %s14, 2
      // Predicated region
      $region61: #{model_forward.3} parent=59 // pred_check
        %p2839 = pneg %p216
      $region62: #{model_forward.3} parent=59 // pred_check_branch
        %2841 = sbr.rel (%p2839) target = $region64
      $region63: #{model_forward.3} parent=59 // pred_region
        %p2842 = scmp.lt.s32.totalorder %s20, 1
        %s2843 = scalar_select %p2842, %s20, 1
        %s2844 = smul.addr %s2843, 6
        %s2845 = smul.addr %s2844, 8
        %s2846 = scalar_lea.vmem %s8, %s2845
      $region64: #{model_forward.3} parent=59 // pred_fallthru
        _
    $region60: #{model_forward.3} parent=5 // pred_fallthru
      _
  $region6: #{model_forward.3} parent=0 // loop_footer
    %s18 = sadd.s32 1, %s14
  $region7: #{model_forward.3} parent=0 // loop_footer_branch
    %13 = sbr.rel target = $region3
  $region8: #{model_forward.3} parent=0 // loop_exit
    _

</llo_original>
